<compile_context>
chip_gen: v7x
topology: tpu7x:2x2x1
jax: 0.10.0
libtpu: 0.0.40
codegen_flags: <defaults>
</compile_context>

<pallas_src>
import jax
import jax.numpy as jnp
from jax.experimental import pallas as pl
from jax.experimental.pallas import tpu as pltpu

BN_EPS = 1e-5


def _basic_block_kernel(p1_ref, xres_ref, w1_ref, g1_ref, b1_ref,
                        w2_ref, g2_ref, b2_ref, o_ref, h1p_ref):
    # p1_ref   : (R, n_blk1*B1)     dense-K packed conv1 im2col patches
    # xres_ref : (R, Cp)            unpadded input (residual), lane-dense
    # w1_ref   : (n_blk1, B1, Cp)   conv1 weights, one (B1, Cp) slab per K block
    # g*_ref, b*_ref : (1, Cp)      BN gamma / beta (zero-padded)
    # w2_ref   : (9, Cp, Cp)        conv2 weights, one (Cp, Cp) slab per tap
    # o_ref    : (R, Cp)
    # h1p_ref  : (N, H+2, W+16, Cp) VMEM scratch: conv1 output + zero halo,
    #                               interior at sublane offset 8 (tile aligned)
    N, Hp, Ws, Cp = h1p_ref.shape
    H, W = Hp - 2, Ws - 16
    R = N * H * W
    inv_r = 1.0 / R

    def batchnorm(x2d, g_ref, b_ref):
        # Training-mode BN: single-pass stats + one fused scale/shift pass.
        # Padded lanes: sums are 0 -> mean=0, var=0, scale=gamma*rsqrt(eps)=0,
        # shift=beta=0, so dead channels stay exactly 0.
        s = jnp.sum(x2d, axis=0, keepdims=True)
        ss = jnp.sum(x2d * x2d, axis=0, keepdims=True)
        mean = s * inv_r
        var = ss * inv_r - mean * mean                   # biased variance
        inv = jax.lax.rsqrt(var + BN_EPS)                # EUP (free slot)
        scale = g_ref[...] * inv
        shift = b_ref[...] - mean * scale
        return x2d * scale + shift

    # ---- conv1 -> bn1 -> relu : dense-K packed accumulated matmuls ---------
    n_blk1, B1, _ = w1_ref.shape
    h1 = jnp.dot(p1_ref[:, 0:B1], w1_ref[0],
                 preferred_element_type=jnp.float32)      # (R, Cp)
    for b in range(1, n_blk1):
        h1 = h1 + jnp.dot(p1_ref[:, b * B1:(b + 1) * B1], w1_ref[b],
                          preferred_element_type=jnp.float32)
    h1 = jnp.maximum(batchnorm(h1, g1_ref, b1_ref), 0.0)

    # ---- re-pad the intermediate into the persistent VMEM scratch ----------
    # Zero only the halo (tile-aligned 8-wide bands + the two border rows),
    # then store the interior once with a fully aligned static slice.
    if W % 8 == 0:
        zrow = jnp.zeros((N, 1, Ws, Cp), jnp.float32)
        h1p_ref[:, 0:1, :, :] = zrow
        h1p_ref[:, Hp - 1:Hp, :, :] = zrow
        zband = jnp.zeros((N, Hp, 8, Cp), jnp.float32)
        h1p_ref[:, :, 0:8, :] = zband
        h1p_ref[:, :, Ws - 8:Ws, :] = zband
    else:
        # TODO(synk): non-multiple-of-8 W -> single aligned full zero fill.
        h1p_ref[...] = jnp.zeros_like(h1p_ref)
    h1p_ref[:, 1:H + 1, 8:8 + W, :] = h1.reshape(N, H, W, Cp)
    h1p = h1p_ref[...]                                    # read back once

    # ---- conv2 -> bn2 : 9 accumulated per-tap matmuls (no (R, 9*Cp) slab) ---
    h2 = None
    for dy in range(3):
        for dx in range(3):
            tap = h1p[:, dy:dy + H, 7 + dx:7 + dx + W, :].reshape(R, Cp)
            part = jnp.dot(tap, w2_ref[dy * 3 + dx],
                           preferred_element_type=jnp.float32)
            h2 = part if h2 is None else h2 + part
    h2 = batchnorm(h2, g2_ref, b2_ref)

    # ---- residual add + relu, lane-dense unmasked store --------------------
    o_ref[...] = jnp.maximum(h2 + xres_ref[...], 0.0)


def _round_up(v, m):
    return ((v + m - 1) // m) * m


def _pack_conv1(x_nhwc, w_oihw, Cp):
    """Dense-K im2col packing for conv1, done in the wrapper (XLA).

    Several taps' real channels share each 128-lane K block so that for small
    C the MXU does not multiply zero padding (C=4: one K=128 block holds all
    9 taps; C=64: 2 taps/block; C>=128: one tap per Cp-wide block).
    Returns (patches (R, n_blk*B), weights (n_blk, B, Cp)).
    """
    N, H, W, C = x_nhwc.shape
    Cout = w_oihw.shape[0]
    R = N * H * W
    if C >= 128:
        g, B = 1, Cp
    else:
        g, B = min(9, 128 // C), 128
    n_blk = -(-9 // g)

    x_sp = jnp.pad(x_nhwc, ((0, 0), (1, 1), (1, 1), (0, 0)))
    taps = [x_sp[:, dy:dy + H, dx:dx + W, :].reshape(R, C)
            for dy in range(3) for dx in range(3)]
    w_hwio = jnp.transpose(w_oihw, (2, 3, 1, 0)).astype(jnp.float32)  # (3,3,C,Co)
    w_taps = [w_hwio[dy, dx] for dy in range(3) for dx in range(3)]

    p_blocks, w_blocks = [], []
    for b in range(n_blk):
        members = list(range(b * g, min((b + 1) * g, 9)))
        pb = jnp.concatenate([taps[t] for t in members], axis=1)     # (R, m*C)
        wb = jnp.concatenate([w_taps[t] for t in members], axis=0)   # (m*C, Co)
        pb = jnp.pad(pb, ((0, 0), (0, B - pb.shape[1])))
        wb = jnp.pad(wb, ((0, B - wb.shape[0]), (0, Cp - Cout)))
        p_blocks.append(pb)
        w_blocks.append(wb)
    return jnp.concatenate(p_blocks, axis=1), jnp.stack(w_blocks)


def basic_block_pallas(x_nchw, w1_oihw, g1, b1, w2_oihw, g2, b2):
    """x_nchw: (N, C, H, W) float32. Returns (N, C, H, W) float32."""
    N, C, H, W = x_nchw.shape
    Cout = w1_oihw.shape[0]
    assert Cout == C, "residual add (downsample=None) requires in==out channels"

    Cp = _round_up(C, 128)                 # lane-dense channel padding
    R = N * H * W
    Hp, Ws = H + 2, W + 16

    # TODO(synk): when chaining blocks, keep activations in this lane-dense
    # NHWC/(R, Cp) layout end-to-end and drop the NCHW<->NHWC plumbing.
    x_nhwc = jnp.transpose(x_nchw, (0, 2, 3, 1)).astype(jnp.float32)
    x_res = jnp.pad(x_nhwc, ((0, 0), (0, 0), (0, 0), (0, Cp - C))).reshape(R, Cp)

    p1, w1 = _pack_conv1(x_nhwc, w1_oihw, Cp)

    # conv2 weights: OIHW -> HWIO, zero-pad Cin/Cout to Cp, one slab per tap.
    w2_hwio = jnp.transpose(w2_oihw, (2, 3, 1, 0)).astype(jnp.float32)
    w2_hwio = jnp.pad(w2_hwio, ((0, 0), (0, 0), (0, Cp - C), (0, Cp - Cout)))
    w2 = w2_hwio.reshape(9, Cp, Cp)

    def prep_affine(p):
        return jnp.pad(p.astype(jnp.float32), (0, Cp - Cout)).reshape(1, Cp)

    g1_, b1_ = prep_affine(g1), prep_affine(b1)
    g2_, b2_ = prep_affine(g2), prep_affine(b2)

    vmem_spec = pl.BlockSpec(memory_space=pltpu.MemorySpace.VMEM)

    out2d = pl.pallas_call(
        _basic_block_kernel,
        out_shape=jax.ShapeDtypeStruct((R, Cp), jnp.float32),
        in_specs=[vmem_spec] * 8,
        out_specs=vmem_spec,
        scratch_shapes=[pltpu.VMEM((N, Hp, Ws, Cp), jnp.float32)],
        # 32 MiB fits every chip's scoped budget (v5e default 16, v6e 32,
        # v7x <= ~48 usable); raise toward ~100 MiB only on v5e/v6e if larger
        # monolithic shapes are used.  Working set here is < 4 MiB.
        compiler_params=pltpu.CompilerParams(
            vmem_limit_bytes=32 * 1024 * 1024),
    )(p1, x_res, w1, g1_, b1_, w2, g2_, b2_)

    out_nhwc = out2d.reshape(N, H, W, Cp)[:, :, :, :C]
    return jnp.transpose(out_nhwc, (0, 3, 1, 2))


def basic_block_reference(x_nchw, w1_oihw, g1, b1, w2_oihw, g2, b2):
    """Pure-JAX/XLA reference mirroring the PyTorch forward (training-mode BN)."""
    def conv(x, w):
        return jax.lax.conv_general_dilated(
            x, w, window_strides=(1, 1), padding=((1, 1), (1, 1)),
            dimension_numbers=("NCHW", "OIHW", "NCHW"))

    def bn(x, g, b):
        mean = jnp.mean(x, axis=(0, 2, 3), keepdims=True)
        var = jnp.mean((x - mean) ** 2, axis=(0, 2, 3), keepdims=True)
        return (x - mean) / jnp.sqrt(var + BN_EPS) * g.reshape(1, -1, 1, 1) \
            + b.reshape(1, -1, 1, 1)

    out = jax.nn.relu(bn(conv(x_nchw, w1_oihw), g1, b1))
    out = bn(conv(out, w2_oihw), g2, b2)
    return jax.nn.relu(out + x_nchw)


if __name__ == "__main__":
    N, C, H, W = 2, 4, 16, 16   # in_channels == out_channels == 4
    key = jax.random.PRNGKey(0)
    kx, kw1, kw2, kg1, kb1, kg2, kb2 = jax.random.split(key, 7)

    x = jax.random.normal(kx, (N, C, H, W), dtype=jnp.float32)
    # deterministic parameter init (OIHW conv weights, BN affine params)
    w1 = 0.1 * jax.random.normal(kw1, (C, C, 3, 3), dtype=jnp.float32)
    w2 = 0.1 * jax.random.normal(kw2, (C, C, 3, 3), dtype=jnp.float32)
    g1 = 1.0 + 0.1 * jax.random.normal(kg1, (C,), dtype=jnp.float32)
    b1 = 0.1 * jax.random.normal(kb1, (C,), dtype=jnp.float32)
    g2 = 1.0 + 0.1 * jax.random.normal(kg2, (C,), dtype=jnp.float32)
    b2 = 0.1 * jax.random.normal(kb2, (C,), dtype=jnp.float32)

    out = basic_block_pallas(x, w1, g1, b1, w2, g2, b2)
    out = jax.block_until_ready(out)

    ref = jax.block_until_ready(basic_block_reference(x, w1, g1, b1, w2, g2, b2))
    assert out.shape == (N, C, H, W)
    assert jnp.allclose(out, ref, atol=1e-4, rtol=1e-4), (
        f"max abs diff = {jnp.max(jnp.abs(out - ref))}")

    print("KERNEL_OK")
</pallas_src>

<mosaic_0001>
module attributes {stable_mosaic.version = 11 : i64} {
  func.func @_basic_block_kernel(%arg0: memref<512x128xf32, #tpu.memory_space<vmem>>, %arg1: memref<512x128xf32, #tpu.memory_space<vmem>>, %arg2: memref<1x128x128xf32, #tpu.memory_space<vmem>>, %arg3: memref<1x128xf32, #tpu.memory_space<vmem>>, %arg4: memref<1x128xf32, #tpu.memory_space<vmem>>, %arg5: memref<9x128x128xf32, #tpu.memory_space<vmem>>, %arg6: memref<1x128xf32, #tpu.memory_space<vmem>>, %arg7: memref<1x128xf32, #tpu.memory_space<vmem>>, %arg8: memref<512x128xf32, #tpu.memory_space<vmem>>, %arg9: memref<2x18x32x128xf32, #tpu.memory_space<vmem>>) attributes {dimension_semantics = [], scalar_prefetch = 0 : i64, scratch_operands = 1 : i64, tpu.core_type = #tpu.core_type<tc>} {
    %c0 = arith.constant 0 : index
    %c0_0 = arith.constant 0 : index
    %0 = vector.load %arg0[%c0, %c0_0] : memref<512x128xf32, #tpu.memory_space<vmem>>, vector<512x128xf32>
    %c0_1 = arith.constant 0 : index
    %c0_2 = arith.constant 0 : index
    %c0_3 = arith.constant 0 : index
    %1 = vector.load %arg2[%c0_1, %c0_2, %c0_3] : memref<1x128x128xf32, #tpu.memory_space<vmem>>, vector<1x128x128xf32>
    %2 = vector.shape_cast %1 : vector<1x128x128xf32> to vector<128x128xf32>
    %cst = arith.constant dense<0.000000e+00> : vector<512x128xf32>
    %3 = tpu.matmul %0, %2, %cst {dimension_numbers = #tpu.dot_dimension_numbers<[1], [0], [0], [1], [0, 0, 1, 1], [], []>} : vector<512x128xf32>, vector<128x128xf32>, vector<512x128xf32> -> vector<512x128xf32>
    %cst_4 = arith.constant dense<0.000000e+00> : vector<128xf32>
    %4 = vector.multi_reduction <add>, %3, %cst_4 [0] : vector<512x128xf32> to vector<128xf32>
    %5 = vector.shape_cast %4 : vector<128xf32> to vector<1x128xf32>
    %6 = arith.mulf %3, %3 : vector<512x128xf32>
    %cst_5 = arith.constant dense<0.000000e+00> : vector<128xf32>
    %7 = vector.multi_reduction <add>, %6, %cst_5 [0] : vector<512x128xf32> to vector<128xf32>
    %8 = vector.shape_cast %7 : vector<128xf32> to vector<1x128xf32>
    %cst_6 = arith.constant 0.001953125 : f32
    %9 = vector.broadcast %cst_6 : f32 to vector<1x128xf32>
    %10 = arith.mulf %5, %9 : vector<1x128xf32>
    %cst_7 = arith.constant 0.001953125 : f32
    %11 = vector.broadcast %cst_7 : f32 to vector<1x128xf32>
    %12 = arith.mulf %8, %11 : vector<1x128xf32>
    %13 = arith.mulf %10, %10 : vector<1x128xf32>
    %14 = arith.subf %12, %13 : vector<1x128xf32>
    %cst_8 = arith.constant 9.99999974E-6 : f32
    %15 = vector.broadcast %cst_8 : f32 to vector<1x128xf32>
    %16 = arith.addf %14, %15 : vector<1x128xf32>
    %17 = math.rsqrt %16 : vector<1x128xf32>
    %c0_9 = arith.constant 0 : index
    %c0_10 = arith.constant 0 : index
    %18 = vector.load %arg3[%c0_9, %c0_10] : memref<1x128xf32, #tpu.memory_space<vmem>>, vector<1x128xf32>
    %19 = arith.mulf %18, %17 : vector<1x128xf32>
    %c0_11 = arith.constant 0 : index
    %c0_12 = arith.constant 0 : index
    %20 = vector.load %arg4[%c0_11, %c0_12] : memref<1x128xf32, #tpu.memory_space<vmem>>, vector<1x128xf32>
    %21 = arith.mulf %10, %19 : vector<1x128xf32>
    %22 = arith.subf %20, %21 : vector<1x128xf32>
    %23 = vector.broadcast %19 : vector<1x128xf32> to vector<512x128xf32>
    %24 = arith.mulf %3, %23 : vector<512x128xf32>
    %25 = vector.broadcast %22 : vector<1x128xf32> to vector<512x128xf32>
    %26 = arith.addf %24, %25 : vector<512x128xf32>
    %cst_13 = arith.constant 0.000000e+00 : f32
    %27 = vector.broadcast %cst_13 : f32 to vector<512x128xf32>
    %28 = arith.maximumf %26, %27 : vector<512x128xf32>
    %cst_14 = arith.constant 0.000000e+00 : f32
    %29 = vector.broadcast %cst_14 : f32 to vector<2x1x32x128xf32>
    %c0_15 = arith.constant 0 : index
    %c0_16 = arith.constant 0 : index
    %c0_17 = arith.constant 0 : index
    %c0_18 = arith.constant 0 : index
    %30 = vector.load %arg9[%c0_15, %c0_16, %c0_17, %c0_18] : memref<2x18x32x128xf32, #tpu.memory_space<vmem>>, vector<2x1x32x128xf32>
    tpu.vector_store %arg9[%c0_15, %c0_16, %c0_17, %c0_18], %29 {strides = array<i32>} : memref<2x18x32x128xf32, #tpu.memory_space<vmem>>, vector<2x1x32x128xf32>,
    %c0_19 = arith.constant 0 : index
    %c17 = arith.constant 17 : index
    %c0_20 = arith.constant 0 : index
    %c0_21 = arith.constant 0 : index
    %31 = vector.load %arg9[%c0_19, %c17, %c0_20, %c0_21] : memref<2x18x32x128xf32, #tpu.memory_space<vmem>>, vector<2x1x32x128xf32>
    tpu.vector_store %arg9[%c0_19, %c17, %c0_20, %c0_21], %29 {strides = array<i32>} : memref<2x18x32x128xf32, #tpu.memory_space<vmem>>, vector<2x1x32x128xf32>,
    %cst_22 = arith.constant 0.000000e+00 : f32
    %32 = vector.broadcast %cst_22 : f32 to vector<2x18x8x128xf32>
    %c0_23 = arith.constant 0 : index
    %c0_24 = arith.constant 0 : index
    %c0_25 = arith.constant 0 : index
    %c0_26 = arith.constant 0 : index
    %33 = vector.load %arg9[%c0_23, %c0_24, %c0_25, %c0_26] : memref<2x18x32x128xf32, #tpu.memory_space<vmem>>, vector<2x18x8x128xf32>
    tpu.vector_store %arg9[%c0_23, %c0_24, %c0_25, %c0_26], %32 {strides = array<i32>} : memref<2x18x32x128xf32, #tpu.memory_space<vmem>>, vector<2x18x8x128xf32>,
    %c0_27 = arith.constant 0 : index
    %c0_28 = arith.constant 0 : index
    %c24 = arith.constant 24 : index
    %c0_29 = arith.constant 0 : index
    %34 = vector.load %arg9[%c0_27, %c0_28, %c24, %c0_29] : memref<2x18x32x128xf32, #tpu.memory_space<vmem>>, vector<2x18x8x128xf32>
    tpu.vector_store %arg9[%c0_27, %c0_28, %c24, %c0_29], %32 {strides = array<i32>} : memref<2x18x32x128xf32, #tpu.memory_space<vmem>>, vector<2x18x8x128xf32>,
    %35 = vector.shape_cast %28 : vector<512x128xf32> to vector<2x16x16x128xf32>
    %c0_30 = arith.constant 0 : index
    %c1 = arith.constant 1 : index
    %c8 = arith.constant 8 : index
    %c0_31 = arith.constant 0 : index
    %36 = vector.load %arg9[%c0_30, %c1, %c8, %c0_31] : memref<2x18x32x128xf32, #tpu.memory_space<vmem>>, vector<2x16x16x128xf32>
    tpu.vector_store %arg9[%c0_30, %c1, %c8, %c0_31], %35 {strides = array<i32>} : memref<2x18x32x128xf32, #tpu.memory_space<vmem>>, vector<2x16x16x128xf32>,
    %c0_32 = arith.constant 0 : index
    %c0_33 = arith.constant 0 : index
    %c0_34 = arith.constant 0 : index
    %c0_35 = arith.constant 0 : index
    %37 = vector.load %arg9[%c0_32, %c0_33, %c0_34, %c0_35] : memref<2x18x32x128xf32, #tpu.memory_space<vmem>>, vector<2x18x32x128xf32>
    %38 = vector.extract_strided_slice %37 {offsets = [0, 0, 7, 0], sizes = [2, 16, 16, 128], strides = [1, 1, 1, 1]} : vector<2x18x32x128xf32> to vector<2x16x16x128xf32>
    %39 = vector.shape_cast %38 : vector<2x16x16x128xf32> to vector<512x128xf32>
    %c0_36 = arith.constant 0 : index
    %c0_37 = arith.constant 0 : index
    %c0_38 = arith.constant 0 : index
    %40 = vector.load %arg5[%c0_36, %c0_37, %c0_38] : memref<9x128x128xf32, #tpu.memory_space<vmem>>, vector<1x128x128xf32>
    %41 = vector.shape_cast %40 : vector<1x128x128xf32> to vector<128x128xf32>
    %cst_39 = arith.constant dense<0.000000e+00> : vector<512x128xf32>
    %42 = tpu.matmul %39, %41, %cst_39 {dimension_numbers = #tpu.dot_dimension_numbers<[1], [0], [0], [1], [0, 0, 1, 1], [], []>} : vector<512x128xf32>, vector<128x128xf32>, vector<512x128xf32> -> vector<512x128xf32>
    %43 = vector.extract_strided_slice %37 {offsets = [0, 0, 8, 0], sizes = [2, 16, 16, 128], strides = [1, 1, 1, 1]} : vector<2x18x32x128xf32> to vector<2x16x16x128xf32>
    %44 = vector.shape_cast %43 : vector<2x16x16x128xf32> to vector<512x128xf32>
    %c1_40 = arith.constant 1 : index
    %c0_41 = arith.constant 0 : index
    %c0_42 = arith.constant 0 : index
    %45 = vector.load %arg5[%c1_40, %c0_41, %c0_42] : memref<9x128x128xf32, #tpu.memory_space<vmem>>, vector<1x128x128xf32>
    %46 = vector.shape_cast %45 : vector<1x128x128xf32> to vector<128x128xf32>
    %cst_43 = arith.constant dense<0.000000e+00> : vector<512x128xf32>
    %47 = tpu.matmul %44, %46, %cst_43 {dimension_numbers = #tpu.dot_dimension_numbers<[1], [0], [0], [1], [0, 0, 1, 1], [], []>} : vector<512x128xf32>, vector<128x128xf32>, vector<512x128xf32> -> vector<512x128xf32>
    %48 = arith.addf %42, %47 : vector<512x128xf32>
    %49 = vector.extract_strided_slice %37 {offsets = [0, 0, 9, 0], sizes = [2, 16, 16, 128], strides = [1, 1, 1, 1]} : vector<2x18x32x128xf32> to vector<2x16x16x128xf32>
    %50 = vector.shape_cast %49 : vector<2x16x16x128xf32> to vector<512x128xf32>
    %c2 = arith.constant 2 : index
    %c0_44 = arith.constant 0 : index
    %c0_45 = arith.constant 0 : index
    %51 = vector.load %arg5[%c2, %c0_44, %c0_45] : memref<9x128x128xf32, #tpu.memory_space<vmem>>, vector<1x128x128xf32>
    %52 = vector.shape_cast %51 : vector<1x128x128xf32> to vector<128x128xf32>
    %cst_46 = arith.constant dense<0.000000e+00> : vector<512x128xf32>
    %53 = tpu.matmul %50, %52, %cst_46 {dimension_numbers = #tpu.dot_dimension_numbers<[1], [0], [0], [1], [0, 0, 1, 1], [], []>} : vector<512x128xf32>, vector<128x128xf32>, vector<512x128xf32> -> vector<512x128xf32>
    %54 = arith.addf %48, %53 : vector<512x128xf32>
    %55 = vector.extract_strided_slice %37 {offsets = [0, 1, 7, 0], sizes = [2, 16, 16, 128], strides = [1, 1, 1, 1]} : vector<2x18x32x128xf32> to vector<2x16x16x128xf32>
    %56 = vector.shape_cast %55 : vector<2x16x16x128xf32> to vector<512x128xf32>
    %c3 = arith.constant 3 : index
    %c0_47 = arith.constant 0 : index
    %c0_48 = arith.constant 0 : index
    %57 = vector.load %arg5[%c3, %c0_47, %c0_48] : memref<9x128x128xf32, #tpu.memory_space<vmem>>, vector<1x128x128xf32>
    %58 = vector.shape_cast %57 : vector<1x128x128xf32> to vector<128x128xf32>
    %cst_49 = arith.constant dense<0.000000e+00> : vector<512x128xf32>
    %59 = tpu.matmul %56, %58, %cst_49 {dimension_numbers = #tpu.dot_dimension_numbers<[1], [0], [0], [1], [0, 0, 1, 1], [], []>} : vector<512x128xf32>, vector<128x128xf32>, vector<512x128xf32> -> vector<512x128xf32>
    %60 = arith.addf %54, %59 : vector<512x128xf32>
    %61 = vector.extract_strided_slice %37 {offsets = [0, 1, 8, 0], sizes = [2, 16, 16, 128], strides = [1, 1, 1, 1]} : vector<2x18x32x128xf32> to vector<2x16x16x128xf32>
    %62 = vector.shape_cast %61 : vector<2x16x16x128xf32> to vector<512x128xf32>
    %c4 = arith.constant 4 : index
    %c0_50 = arith.constant 0 : index
    %c0_51 = arith.constant 0 : index
    %63 = vector.load %arg5[%c4, %c0_50, %c0_51] : memref<9x128x128xf32, #tpu.memory_space<vmem>>, vector<1x128x128xf32>
    %64 = vector.shape_cast %63 : vector<1x128x128xf32> to vector<128x128xf32>
    %cst_52 = arith.constant dense<0.000000e+00> : vector<512x128xf32>
    %65 = tpu.matmul %62, %64, %cst_52 {dimension_numbers = #tpu.dot_dimension_numbers<[1], [0], [0], [1], [0, 0, 1, 1], [], []>} : vector<512x128xf32>, vector<128x128xf32>, vector<512x128xf32> -> vector<512x128xf32>
    %66 = arith.addf %60, %65 : vector<512x128xf32>
    %67 = vector.extract_strided_slice %37 {offsets = [0, 1, 9, 0], sizes = [2, 16, 16, 128], strides = [1, 1, 1, 1]} : vector<2x18x32x128xf32> to vector<2x16x16x128xf32>
    %68 = vector.shape_cast %67 : vector<2x16x16x128xf32> to vector<512x128xf32>
    %c5 = arith.constant 5 : index
    %c0_53 = arith.constant 0 : index
    %c0_54 = arith.constant 0 : index
    %69 = vector.load %arg5[%c5, %c0_53, %c0_54] : memref<9x128x128xf32, #tpu.memory_space<vmem>>, vector<1x128x128xf32>
    %70 = vector.shape_cast %69 : vector<1x128x128xf32> to vector<128x128xf32>
    %cst_55 = arith.constant dense<0.000000e+00> : vector<512x128xf32>
    %71 = tpu.matmul %68, %70, %cst_55 {dimension_numbers = #tpu.dot_dimension_numbers<[1], [0], [0], [1], [0, 0, 1, 1], [], []>} : vector<512x128xf32>, vector<128x128xf32>, vector<512x128xf32> -> vector<512x128xf32>
    %72 = arith.addf %66, %71 : vector<512x128xf32>
    %73 = vector.extract_strided_slice %37 {offsets = [0, 2, 7, 0], sizes = [2, 16, 16, 128], strides = [1, 1, 1, 1]} : vector<2x18x32x128xf32> to vector<2x16x16x128xf32>
    %74 = vector.shape_cast %73 : vector<2x16x16x128xf32> to vector<512x128xf32>
    %c6 = arith.constant 6 : index
    %c0_56 = arith.constant 0 : index
    %c0_57 = arith.constant 0 : index
    %75 = vector.load %arg5[%c6, %c0_56, %c0_57] : memref<9x128x128xf32, #tpu.memory_space<vmem>>, vector<1x128x128xf32>
    %76 = vector.shape_cast %75 : vector<1x128x128xf32> to vector<128x128xf32>
    %cst_58 = arith.constant dense<0.000000e+00> : vector<512x128xf32>
    %77 = tpu.matmul %74, %76, %cst_58 {dimension_numbers = #tpu.dot_dimension_numbers<[1], [0], [0], [1], [0, 0, 1, 1], [], []>} : vector<512x128xf32>, vector<128x128xf32>, vector<512x128xf32> -> vector<512x128xf32>
    %78 = arith.addf %72, %77 : vector<512x128xf32>
    %79 = vector.extract_strided_slice %37 {offsets = [0, 2, 8, 0], sizes = [2, 16, 16, 128], strides = [1, 1, 1, 1]} : vector<2x18x32x128xf32> to vector<2x16x16x128xf32>
    %80 = vector.shape_cast %79 : vector<2x16x16x128xf32> to vector<512x128xf32>
    %c7 = arith.constant 7 : index
    %c0_59 = arith.constant 0 : index
    %c0_60 = arith.constant 0 : index
    %81 = vector.load %arg5[%c7, %c0_59, %c0_60] : memref<9x128x128xf32, #tpu.memory_space<vmem>>, vector<1x128x128xf32>
    %82 = vector.shape_cast %81 : vector<1x128x128xf32> to vector<128x128xf32>
    %cst_61 = arith.constant dense<0.000000e+00> : vector<512x128xf32>
    %83 = tpu.matmul %80, %82, %cst_61 {dimension_numbers = #tpu.dot_dimension_numbers<[1], [0], [0], [1], [0, 0, 1, 1], [], []>} : vector<512x128xf32>, vector<128x128xf32>, vector<512x128xf32> -> vector<512x128xf32>
    %84 = arith.addf %78, %83 : vector<512x128xf32>
    %85 = vector.extract_strided_slice %37 {offsets = [0, 2, 9, 0], sizes = [2, 16, 16, 128], strides = [1, 1, 1, 1]} : vector<2x18x32x128xf32> to vector<2x16x16x128xf32>
    %86 = vector.shape_cast %85 : vector<2x16x16x128xf32> to vector<512x128xf32>
    %c8_62 = arith.constant 8 : index
    %c0_63 = arith.constant 0 : index
    %c0_64 = arith.constant 0 : index
    %87 = vector.load %arg5[%c8_62, %c0_63, %c0_64] : memref<9x128x128xf32, #tpu.memory_space<vmem>>, vector<1x128x128xf32>
    %88 = vector.shape_cast %87 : vector<1x128x128xf32> to vector<128x128xf32>
    %cst_65 = arith.constant dense<0.000000e+00> : vector<512x128xf32>
    %89 = tpu.matmul %86, %88, %cst_65 {dimension_numbers = #tpu.dot_dimension_numbers<[1], [0], [0], [1], [0, 0, 1, 1], [], []>} : vector<512x128xf32>, vector<128x128xf32>, vector<512x128xf32> -> vector<512x128xf32>
    %90 = arith.addf %84, %89 : vector<512x128xf32>
    %cst_66 = arith.constant dense<0.000000e+00> : vector<128xf32>
    %91 = vector.multi_reduction <add>, %90, %cst_66 [0] : vector<512x128xf32> to vector<128xf32>
    %92 = vector.shape_cast %91 : vector<128xf32> to vector<1x128xf32>
    %93 = arith.mulf %90, %90 : vector<512x128xf32>
    %cst_67 = arith.constant dense<0.000000e+00> : vector<128xf32>
    %94 = vector.multi_reduction <add>, %93, %cst_67 [0] : vector<512x128xf32> to vector<128xf32>
    %95 = vector.shape_cast %94 : vector<128xf32> to vector<1x128xf32>
    %cst_68 = arith.constant 0.001953125 : f32
    %96 = vector.broadcast %cst_68 : f32 to vector<1x128xf32>
    %97 = arith.mulf %92, %96 : vector<1x128xf32>
    %cst_69 = arith.constant 0.001953125 : f32
    %98 = vector.broadcast %cst_69 : f32 to vector<1x128xf32>
    %99 = arith.mulf %95, %98 : vector<1x128xf32>
    %100 = arith.mulf %97, %97 : vector<1x128xf32>
    %101 = arith.subf %99, %100 : vector<1x128xf32>
    %cst_70 = arith.constant 9.99999974E-6 : f32
    %102 = vector.broadcast %cst_70 : f32 to vector<1x128xf32>
    %103 = arith.addf %101, %102 : vector<1x128xf32>
    %104 = math.rsqrt %103 : vector<1x128xf32>
    %c0_71 = arith.constant 0 : index
    %c0_72 = arith.constant 0 : index
    %105 = vector.load %arg6[%c0_71, %c0_72] : memref<1x128xf32, #tpu.memory_space<vmem>>, vector<1x128xf32>
    %106 = arith.mulf %105, %104 : vector<1x128xf32>
    %c0_73 = arith.constant 0 : index
    %c0_74 = arith.constant 0 : index
    %107 = vector.load %arg7[%c0_73, %c0_74] : memref<1x128xf32, #tpu.memory_space<vmem>>, vector<1x128xf32>
    %108 = arith.mulf %97, %106 : vector<1x128xf32>
    %109 = arith.subf %107, %108 : vector<1x128xf32>
    %110 = vector.broadcast %106 : vector<1x128xf32> to vector<512x128xf32>
    %111 = arith.mulf %90, %110 : vector<512x128xf32>
    %112 = vector.broadcast %109 : vector<1x128xf32> to vector<512x128xf32>
    %113 = arith.addf %111, %112 : vector<512x128xf32>
    %c0_75 = arith.constant 0 : index
    %c0_76 = arith.constant 0 : index
    %114 = vector.load %arg1[%c0_75, %c0_76] : memref<512x128xf32, #tpu.memory_space<vmem>>, vector<512x128xf32>
    %115 = arith.addf %113, %114 : vector<512x128xf32>
    %cst_77 = arith.constant 0.000000e+00 : f32
    %116 = vector.broadcast %cst_77 : f32 to vector<512x128xf32>
    %117 = arith.maximumf %115, %116 : vector<512x128xf32>
    %c0_78 = arith.constant 0 : index
    %c0_79 = arith.constant 0 : index
    %118 = vector.load %arg8[%c0_78, %c0_79] : memref<512x128xf32, #tpu.memory_space<vmem>>, vector<512x128xf32>
    tpu.vector_store %arg8[%c0_78, %c0_79], %117 {strides = array<i32>} : memref<512x128xf32, #tpu.memory_space<vmem>>, vector<512x128xf32>,
    return
  }
}

</mosaic_0001>

<llo_original>
// kernel: tpu_custom_call.1
$region0: #{tpu_custom_call.1}
  #allocation0 [shape = 'u32[]', space=smem, size = 0x4, offset = 0x4, fixed_abs, tag = 'smem constant byte address 0x4 - core index']
  #allocation1 [shape = 'u32[144,128]{1,0:T(1,128)}', space=vmem, size = 0x12000, scoped, tag = 'internal scratch']
  #allocation2 [shape = 'f32[2,18,32,128]{3,2,1,0:T(8,128)}', space=vmem, size = 0x90000, scoped, tag = 'scratch operand']
  %s0 = inlined_call_operand.hbm [shape: f32[512,128], index: 0, kind: input, shape index: {}]
  %s1 = inlined_call_operand.hbm [shape: f32[512,128], index: 1, kind: input, shape index: {}]
  %s2 = inlined_call_operand.hbm [shape: f32[1,128,128], index: 2, kind: input, shape index: {}]
  %s3 = inlined_call_operand.vmem [shape: f32[1,128], index: 3, kind: input, shape index: {}]
  %s4 = inlined_call_operand.vmem [shape: f32[1,128], index: 4, kind: input, shape index: {}]
  %s5 = inlined_call_operand.hbm [shape: f32[9,128,128], index: 5, kind: input, shape index: {}]
  %s6 = inlined_call_operand.vmem [shape: f32[1,128], index: 6, kind: input, shape index: {}]
  %s7 = inlined_call_operand.vmem [shape: f32[1,128], index: 7, kind: input, shape index: {}]
  %s8 = inlined_call_operand.hbm [shape: f32[512,128], index: 8, kind: output, shape index: {}]
  %s9 = sld [smem:[#allocation0]]
  $region58: #{tpu_custom_call.1} parent=0
    _
  %s11 = ssub.s32 1, %s9
  %s12 = scalar_select 0, %s11, %s9
  $region1: #{tpu_custom_call.1} parent=0
    #allocation3 [shape = 'u8[262144]{0}', space=vmem, size = 0x40000, scoped, tag = 'input window, operand 0, single buffered']
    #allocation4 [shape = 's32[1]{0}', space=sflag, size = 0x4, scoped, tag = 'scoped memory for tpu_custom_call.1']
    #allocation5 [shape = 's32[1]{0}', space=sflag, size = 0x4, scoped, tag = 'scoped memory for tpu_custom_call.1']
    #allocation6 [shape = 'u8[262144]{0}', space=vmem, size = 0x40000, scoped, tag = 'input window, operand 1, single buffered']
    #allocation7 [shape = 's32[1]{0}', space=sflag, size = 0x4, scoped, tag = 'scoped memory for tpu_custom_call.1']
    #allocation8 [shape = 'u8[65536]{0}', space=vmem, size = 0x10000, scoped, tag = 'input window, operand 2, single buffered']
    #allocation9 [shape = 'u8[589824]{0}', space=vmem, size = 0x90000, scoped, tag = 'input window, operand 5, single buffered']
    #allocation10 [shape = 's32[1]{0}', space=sflag, size = 0x4, scoped, tag = 'scoped memory for tpu_custom_call.1']
    #allocation11 [shape = 'u8[262144]{0}', space=vmem, size = 0x40000, scoped, tag = 'output window, operand 0, single buffered']
    %13 = vsyncpa [#allocation4], 0
    %14 = vsyncpa [#allocation7], 0
    %15 = vsyncpa [#allocation10], 0
    %16 = vsyncpa [#allocation5], 0
    // Predicated region
    $region2: #{tpu_custom_call.1} parent=1 // pred_check
      _
    $region3: #{tpu_custom_call.1} parent=1 // pred_check_branch
      %18 = sbr.rel (0) target = $region5
    $region4: #{tpu_custom_call.1} parent=1 // pred_region
      %s20 = ssub.s32 8192, 8192
      %21 = vsyncadd [#allocation4], %s20
      %s22 = sshll.u32 [#allocation3], 4
      %s23 = int_to_ptr.vmem [resolvable:$true] %s22
      %28 = dma.hbm_to_vmem [thread:$0]  %s0, 8192, %s23, [#allocation4], 128, 128, 8
    $region5: #{tpu_custom_call.1} parent=1 // pred_fallthru
      _
    // Predicated region
    $region6: #{tpu_custom_call.1} parent=1 // pred_check
      _
    $region7: #{tpu_custom_call.1} parent=1 // pred_check_branch
      %30 = sbr.rel (0) target = $region9
    $region8: #{tpu_custom_call.1} parent=1 // pred_region
      %s32 = ssub.s32 8192, 8192
      %33 = vsyncadd [#allocation7], %s32
      %s34 = sshll.u32 [#allocation6], 4
      %s35 = int_to_ptr.vmem [resolvable:$true] %s34
      %40 = dma.hbm_to_vmem [thread:$0]  %s1, 8192, %s35, [#allocation7], 128, 128, 8
    $region9: #{tpu_custom_call.1} parent=1 // pred_fallthru
      _
    // Predicated region
    $region10: #{tpu_custom_call.1} parent=1 // pred_check
      _
    $region11: #{tpu_custom_call.1} parent=1 // pred_check_branch
      %42 = sbr.rel (0) target = $region13
    $region12: #{tpu_custom_call.1} parent=1 // pred_region
      %s44 = ssub.s32 2048, 2048
      %45 = vsyncadd [#allocation7], %s44
      %s46 = sshll.u32 [#allocation8], 4
      %s47 = int_to_ptr.vmem [resolvable:$true] %s46
      %52 = dma.hbm_to_vmem [thread:$0]  %s2, 2048, %s47, [#allocation7], 128, 128, 8
    $region13: #{tpu_custom_call.1} parent=1 // pred_fallthru
      _
    // Predicated region
    $region14: #{tpu_custom_call.1} parent=1 // pred_check
      _
    $region15: #{tpu_custom_call.1} parent=1 // pred_check_branch
      %54 = sbr.rel (0) target = $region17
    $region16: #{tpu_custom_call.1} parent=1 // pred_region
      _
    $region17: #{tpu_custom_call.1} parent=1 // pred_fallthru
      _
    // Predicated region
    $region18: #{tpu_custom_call.1} parent=1 // pred_check
      _
    $region19: #{tpu_custom_call.1} parent=1 // pred_check_branch
      %56 = sbr.rel (0) target = $region21
    $region20: #{tpu_custom_call.1} parent=1 // pred_region
      _
    $region21: #{tpu_custom_call.1} parent=1 // pred_fallthru
      _
    // Predicated region
    $region22: #{tpu_custom_call.1} parent=1 // pred_check
      _
    $region23: #{tpu_custom_call.1} parent=1 // pred_check_branch
      %58 = sbr.rel (0) target = $region25
    $region24: #{tpu_custom_call.1} parent=1 // pred_region
      %s60 = ssub.s32 18432, 18432
      %61 = vsyncadd [#allocation10], %s60
      %s62 = sshll.u32 [#allocation9], 4
      %s63 = int_to_ptr.vmem [resolvable:$true] %s62
      %68 = dma.hbm_to_vmem [thread:$0]  %s5, 18432, %s63, [#allocation10], 128, 128, 8
    $region25: #{tpu_custom_call.1} parent=1 // pred_fallthru
      _
    // Predicated region
    $region26: #{tpu_custom_call.1} parent=1 // pred_check
      _
    $region27: #{tpu_custom_call.1} parent=1 // pred_check_branch
      %70 = sbr.rel (0) target = $region29
    $region28: #{tpu_custom_call.1} parent=1 // pred_region
      _
    $region29: #{tpu_custom_call.1} parent=1 // pred_fallthru
      _
    // Predicated region
    $region30: #{tpu_custom_call.1} parent=1 // pred_check
      _
    $region31: #{tpu_custom_call.1} parent=1 // pred_check_branch
      %72 = sbr.rel (0) target = $region33
    $region32: #{tpu_custom_call.1} parent=1 // pred_region
      _
    $region33: #{tpu_custom_call.1} parent=1 // pred_fallthru
      _
    // Predicated region
    $region34: #{tpu_custom_call.1} parent=1 // pred_check
      _
    $region35: #{tpu_custom_call.1} parent=1 // pred_check_branch
      %74 = sbr.rel (0) target = $region37
    $region36: #{tpu_custom_call.1} parent=1 // pred_region
      %75 = dma.done [#allocation4], 8192
    $region37: #{tpu_custom_call.1} parent=1 // pred_fallthru
      _
    // Predicated region
    $region38: #{tpu_custom_call.1} parent=1 // pred_check
      _
    $region39: #{tpu_custom_call.1} parent=1 // pred_check_branch
      %77 = sbr.rel (0) target = $region41
    $region40: #{tpu_custom_call.1} parent=1 // pred_region
      %78 = dma.done [#allocation7], 8192
    $region41: #{tpu_custom_call.1} parent=1 // pred_fallthru
      _
    // Predicated region
    $region42: #{tpu_custom_call.1} parent=1 // pred_check
      _
    $region43: #{tpu_custom_call.1} parent=1 // pred_check_branch
      %80 = sbr.rel (0) target = $region45
    $region44: #{tpu_custom_call.1} parent=1 // pred_region
      %81 = dma.done [#allocation7], 2048
    $region45: #{tpu_custom_call.1} parent=1 // pred_fallthru
      _
    // Predicated region
    $region46: #{tpu_custom_call.1} parent=1 // pred_check
      _
    $region47: #{tpu_custom_call.1} parent=1 // pred_check_branch
      %83 = sbr.rel (0) target = $region49
    $region48: #{tpu_custom_call.1} parent=1 // pred_region
      %84 = dma.done [#allocation10], 18432
    $region49: #{tpu_custom_call.1} parent=1 // pred_fallthru
      _
    %v85 = vld [vmem:[#allocation3] sm:$0xff]
    %v86 = vld [vmem:[#allocation3 + $0x8] sm:$0xff]
    %v87 = vld [vmem:[#allocation3 + $0x10] sm:$0xff]
    %v88 = vld [vmem:[#allocation3 + $0x18] sm:$0xff]
    %v89 = vld [vmem:[#allocation3 + $0x20] sm:$0xff]
    %v90 = vld [vmem:[#allocation3 + $0x28] sm:$0xff]
    %v91 = vld [vmem:[#allocation3 + $0x30] sm:$0xff]
    %v92 = vld [vmem:[#allocation3 + $0x38] sm:$0xff]
    %v93 = vld [vmem:[#allocation3 + $0x40] sm:$0xff]
    %v94 = vld [vmem:[#allocation3 + $0x48] sm:$0xff]
    %v95 = vld [vmem:[#allocation3 + $0x50] sm:$0xff]
    %v96 = vld [vmem:[#allocation3 + $0x58] sm:$0xff]
    %v97 = vld [vmem:[#allocation3 + $0x60] sm:$0xff]
    %v98 = vld [vmem:[#allocation3 + $0x68] sm:$0xff]
    %v99 = vld [vmem:[#allocation3 + $0x70] sm:$0xff]
    %v100 = vld [vmem:[#allocation3 + $0x78] sm:$0xff]
    %v101 = vld [vmem:[#allocation3 + $0x80] sm:$0xff]
    %v102 = vld [vmem:[#allocation3 + $0x88] sm:$0xff]
    %v103 = vld [vmem:[#allocation3 + $0x90] sm:$0xff]
    %v104 = vld [vmem:[#allocation3 + $0x98] sm:$0xff]
    %v105 = vld [vmem:[#allocation3 + $0xa0] sm:$0xff]
    %v106 = vld [vmem:[#allocation3 + $0xa8] sm:$0xff]
    %v107 = vld [vmem:[#allocation3 + $0xb0] sm:$0xff]
    %v108 = vld [vmem:[#allocation3 + $0xb8] sm:$0xff]
    %v109 = vld [vmem:[#allocation3 + $0xc0] sm:$0xff]
    %v110 = vld [vmem:[#allocation3 + $0xc8] sm:$0xff]
    %v111 = vld [vmem:[#allocation3 + $0xd0] sm:$0xff]
    %v112 = vld [vmem:[#allocation3 + $0xd8] sm:$0xff]
    %v113 = vld [vmem:[#allocation3 + $0xe0] sm:$0xff]
    %v114 = vld [vmem:[#allocation3 + $0xe8] sm:$0xff]
    %v115 = vld [vmem:[#allocation3 + $0xf0] sm:$0xff]
    %v116 = vld [vmem:[#allocation3 + $0xf8] sm:$0xff]
    %v117 = vld [vmem:[#allocation3 + $0x100] sm:$0xff]
    %v118 = vld [vmem:[#allocation3 + $0x108] sm:$0xff]
    %v119 = vld [vmem:[#allocation3 + $0x110] sm:$0xff]
    %v120 = vld [vmem:[#allocation3 + $0x118] sm:$0xff]
    %v121 = vld [vmem:[#allocation3 + $0x120] sm:$0xff]
    %v122 = vld [vmem:[#allocation3 + $0x128] sm:$0xff]
    %v123 = vld [vmem:[#allocation3 + $0x130] sm:$0xff]
    %v124 = vld [vmem:[#allocation3 + $0x138] sm:$0xff]
    %v125 = vld [vmem:[#allocation3 + $0x140] sm:$0xff]
    %v126 = vld [vmem:[#allocation3 + $0x148] sm:$0xff]
    %v127 = vld [vmem:[#allocation3 + $0x150] sm:$0xff]
    %v128 = vld [vmem:[#allocation3 + $0x158] sm:$0xff]
    %v129 = vld [vmem:[#allocation3 + $0x160] sm:$0xff]
    %v130 = vld [vmem:[#allocation3 + $0x168] sm:$0xff]
    %v131 = vld [vmem:[#allocation3 + $0x170] sm:$0xff]
    %v132 = vld [vmem:[#allocation3 + $0x178] sm:$0xff]
    %v133 = vld [vmem:[#allocation3 + $0x180] sm:$0xff]
    %v134 = vld [vmem:[#allocation3 + $0x188] sm:$0xff]
    %v135 = vld [vmem:[#allocation3 + $0x190] sm:$0xff]
    %v136 = vld [vmem:[#allocation3 + $0x198] sm:$0xff]
    %v137 = vld [vmem:[#allocation3 + $0x1a0] sm:$0xff]
    %v138 = vld [vmem:[#allocation3 + $0x1a8] sm:$0xff]
    %v139 = vld [vmem:[#allocation3 + $0x1b0] sm:$0xff]
    %v140 = vld [vmem:[#allocation3 + $0x1b8] sm:$0xff]
    %v141 = vld [vmem:[#allocation3 + $0x1c0] sm:$0xff]
    %v142 = vld [vmem:[#allocation3 + $0x1c8] sm:$0xff]
    %v143 = vld [vmem:[#allocation3 + $0x1d0] sm:$0xff]
    %v144 = vld [vmem:[#allocation3 + $0x1d8] sm:$0xff]
    %v145 = vld [vmem:[#allocation3 + $0x1e0] sm:$0xff]
    %v146 = vld [vmem:[#allocation3 + $0x1e8] sm:$0xff]
    %v147 = vld [vmem:[#allocation3 + $0x1f0] sm:$0xff]
    %v148 = vld [vmem:[#allocation3 + $0x1f8] sm:$0xff]
    %v149 = vld [vmem:[#allocation8] sm:$0xff]
    %v150 = vld [vmem:[#allocation8 + $0x8] sm:$0xff]
    %v151 = vld [vmem:[#allocation8 + $0x10] sm:$0xff]
    %v152 = vld [vmem:[#allocation8 + $0x18] sm:$0xff]
    %v153 = vld [vmem:[#allocation8 + $0x20] sm:$0xff]
    %v154 = vld [vmem:[#allocation8 + $0x28] sm:$0xff]
    %v155 = vld [vmem:[#allocation8 + $0x30] sm:$0xff]
    %v156 = vld [vmem:[#allocation8 + $0x38] sm:$0xff]
    %v157 = vld [vmem:[#allocation8 + $0x40] sm:$0xff]
    %v158 = vld [vmem:[#allocation8 + $0x48] sm:$0xff]
    %v159 = vld [vmem:[#allocation8 + $0x50] sm:$0xff]
    %v160 = vld [vmem:[#allocation8 + $0x58] sm:$0xff]
    %v161 = vld [vmem:[#allocation8 + $0x60] sm:$0xff]
    %v162 = vld [vmem:[#allocation8 + $0x68] sm:$0xff]
    %v163 = vld [vmem:[#allocation8 + $0x70] sm:$0xff]
    %v164 = vld [vmem:[#allocation8 + $0x78] sm:$0xff]
    %165 = vmatprep.subr.mxu0 0.0
    %166 = vmatpush1.msra.mxu0 %v149
    %167 = vmatprep.subr.mxu0 0.0
    %168 = vmatpush1.msra.mxu0 %v150
    %169 = vmatprep.subr.mxu0 0.0
    %170 = vmatpush1.msra.mxu0 %v151
    %171 = vmatprep.subr.mxu0 0.0
    %172 = vmatpush1.msra.mxu0 %v152
    %173 = vmatprep.subr.mxu0 0.0
    %174 = vmatpush1.msra.mxu0 %v153
    %175 = vmatprep.subr.mxu0 0.0
    %176 = vmatpush1.msra.mxu0 %v154
    %177 = vmatprep.subr.mxu0 0.0
    %178 = vmatpush1.msra.mxu0 %v155
    %179 = vmatprep.subr.mxu0 0.0
    %180 = vmatpush1.msra.mxu0 %v156
    %181 = vmatprep.subr.mxu0 0.0
    %182 = vmatpush1.msra.mxu0 %v157
    %183 = vmatprep.subr.mxu0 0.0
    %184 = vmatpush1.msra.mxu0 %v158
    %185 = vmatprep.subr.mxu0 0.0
    %186 = vmatpush1.msra.mxu0 %v159
    %187 = vmatprep.subr.mxu0 0.0
    %188 = vmatpush1.msra.mxu0 %v160
    %189 = vmatprep.subr.mxu0 0.0
    %190 = vmatpush1.msra.mxu0 %v161
    %191 = vmatprep.subr.mxu0 0.0
    %192 = vmatpush1.msra.mxu0 %v162
    %193 = vmatprep.subr.mxu0 0.0
    %194 = vmatpush1.msra.mxu0 %v163
    %195 = vmatprep.subr.mxu0 0.0
    %196 = vmatpush1.msra.mxu0 %v164
    %197 = vmatprep.subr.mxu0 0.0
    %198 = vmatpush1.msra.mxu0 0.0
    %199 = vmatprep.subr.mxu0 0.0
    %200 = vmatpush1.msra.mxu0 0.0
    %201 = vmatprep.subr.mxu0 0.0
    %202 = vmatpush1.msra.mxu0 0.0
    %203 = vmatprep.subr.mxu0 0.0
    %204 = vmatpush1.msra.mxu0 0.0
    %205 = vmatprep.subr.mxu0 0.0
    %206 = vmatpush1.msra.mxu0 0.0
    %207 = vmatprep.subr.mxu0 0.0
    %208 = vmatpush1.msra.mxu0 0.0
    %209 = vmatprep.subr.mxu0 0.0
    %210 = vmatpush1.msra.mxu0 0.0
    %211 = vmatprep.subr.mxu0 0.0
    %212 = vmatpush1.msra.mxu0 0.0
    %213 = vmatprep.subr.mxu0 0.0
    %214 = vmatpush1.msra.mxu0 0.0
    %215 = vmatprep.subr.mxu0 0.0
    %216 = vmatpush1.msra.mxu0 0.0
    %217 = vmatprep.subr.mxu0 0.0
    %218 = vmatpush1.msra.mxu0 0.0
    %219 = vmatprep.subr.mxu0 0.0
    %220 = vmatpush1.msra.mxu0 0.0
    %221 = vmatprep.subr.mxu0 0.0
    %222 = vmatpush1.msra.mxu0 0.0
    %223 = vmatprep.subr.mxu0 0.0
    %224 = vmatpush1.msra.mxu0 0.0
    %225 = vmatprep.subr.mxu0 0.0
    %226 = vmatpush1.msra.mxu0 0.0
    %227 = vmatprep.subr.mxu0 0.0
    %228 = vmatpush1.msra.mxu0 0.0
    %229 = vmatprep.mubr.f32.mxu0 0.0
    %230 = vmatmul.mubr.f32.gmra.mrb[0].mxu0 %v85
    %v231 = vpop.f32.mrb[0].mxu0
    %v232 = vadd.f32 0.0, %v231
    %v233 = vpop.f32.mrb[0].mxu0
    %234 = vmatprep.mubr.f32.mxu0 0.0
    %235 = vmatmul.mubr.f32.gmra.mrb[0].mxu0 %v86
    %v236 = vpop.f32.mrb[0].mxu0
    %v237 = vadd.f32 0.0, %v236
    %v238 = vpop.f32.mrb[0].mxu0
    %239 = vmatprep.mubr.f32.mxu0 0.0
    %240 = vmatmul.mubr.f32.gmra.mrb[0].mxu0 %v87
    %v241 = vpop.f32.mrb[0].mxu0
    %v242 = vadd.f32 0.0, %v241
    %v243 = vpop.f32.mrb[0].mxu0
    %244 = vmatprep.mubr.f32.mxu0 0.0
    %245 = vmatmul.mubr.f32.gmra.mrb[0].mxu0 %v88
    %v246 = vpop.f32.mrb[0].mxu0
    %v247 = vadd.f32 0.0, %v246
    %v248 = vpop.f32.mrb[0].mxu0
    %249 = vmatprep.mubr.f32.mxu0 0.0
    %250 = vmatmul.mubr.f32.gmra.mrb[0].mxu0 %v89
    %v251 = vpop.f32.mrb[0].mxu0
    %v252 = vadd.f32 0.0, %v251
    %v253 = vpop.f32.mrb[0].mxu0
    %254 = vmatprep.mubr.f32.mxu0 0.0
    %255 = vmatmul.mubr.f32.gmra.mrb[0].mxu0 %v90
    %v256 = vpop.f32.mrb[0].mxu0
    %v257 = vadd.f32 0.0, %v256
    %v258 = vpop.f32.mrb[0].mxu0
    %259 = vmatprep.mubr.f32.mxu0 0.0
    %260 = vmatmul.mubr.f32.gmra.mrb[0].mxu0 %v91
    %v261 = vpop.f32.mrb[0].mxu0
    %v262 = vadd.f32 0.0, %v261
    %v263 = vpop.f32.mrb[0].mxu0
    %264 = vmatprep.mubr.f32.mxu0 0.0
    %265 = vmatmul.mubr.f32.gmra.mrb[0].mxu0 %v92
    %v266 = vpop.f32.mrb[0].mxu0
    %v267 = vadd.f32 0.0, %v266
    %v268 = vpop.f32.mrb[0].mxu0
    %269 = vmatprep.mubr.f32.mxu0 0.0
    %270 = vmatmul.mubr.f32.gmra.mrb[0].mxu0 %v93
    %v271 = vpop.f32.mrb[0].mxu0
    %v272 = vadd.f32 0.0, %v271
    %v273 = vpop.f32.mrb[0].mxu0
    %274 = vmatprep.mubr.f32.mxu0 0.0
    %275 = vmatmul.mubr.f32.gmra.mrb[0].mxu0 %v94
    %v276 = vpop.f32.mrb[0].mxu0
    %v277 = vadd.f32 0.0, %v276
    %v278 = vpop.f32.mrb[0].mxu0
    %279 = vmatprep.mubr.f32.mxu0 0.0
    %280 = vmatmul.mubr.f32.gmra.mrb[0].mxu0 %v95
    %v281 = vpop.f32.mrb[0].mxu0
    %v282 = vadd.f32 0.0, %v281
    %v283 = vpop.f32.mrb[0].mxu0
    %284 = vmatprep.mubr.f32.mxu0 0.0
    %285 = vmatmul.mubr.f32.gmra.mrb[0].mxu0 %v96
    %v286 = vpop.f32.mrb[0].mxu0
    %v287 = vadd.f32 0.0, %v286
    %v288 = vpop.f32.mrb[0].mxu0
    %289 = vmatprep.mubr.f32.mxu0 0.0
    %290 = vmatmul.mubr.f32.gmra.mrb[0].mxu0 %v97
    %v291 = vpop.f32.mrb[0].mxu0
    %v292 = vadd.f32 0.0, %v291
    %v293 = vpop.f32.mrb[0].mxu0
    %294 = vmatprep.mubr.f32.mxu0 0.0
    %295 = vmatmul.mubr.f32.gmra.mrb[0].mxu0 %v98
    %v296 = vpop.f32.mrb[0].mxu0
    %v297 = vadd.f32 0.0, %v296
    %v298 = vpop.f32.mrb[0].mxu0
    %299 = vmatprep.mubr.f32.mxu0 0.0
    %300 = vmatmul.mubr.f32.gmra.mrb[0].mxu0 %v99
    %v301 = vpop.f32.mrb[0].mxu0
    %v302 = vadd.f32 0.0, %v301
    %v303 = vpop.f32.mrb[0].mxu0
    %304 = vmatprep.mubr.f32.mxu0 0.0
    %305 = vmatmul.mubr.f32.gmra.mrb[0].mxu0 %v100
    %v306 = vpop.f32.mrb[0].mxu0
    %v307 = vadd.f32 0.0, %v306
    %v308 = vpop.f32.mrb[0].mxu0
    %309 = vmatprep.mubr.f32.mxu0 0.0
    %310 = vmatmul.mubr.f32.gmra.mrb[0].mxu0 %v101
    %v311 = vpop.f32.mrb[0].mxu0
    %v312 = vadd.f32 0.0, %v311
    %v313 = vpop.f32.mrb[0].mxu0
    %314 = vmatprep.mubr.f32.mxu0 0.0
    %315 = vmatmul.mubr.f32.gmra.mrb[0].mxu0 %v102
    %v316 = vpop.f32.mrb[0].mxu0
    %v317 = vadd.f32 0.0, %v316
    %v318 = vpop.f32.mrb[0].mxu0
    %319 = vmatprep.mubr.f32.mxu0 0.0
    %320 = vmatmul.mubr.f32.gmra.mrb[0].mxu0 %v103
    %v321 = vpop.f32.mrb[0].mxu0
    %v322 = vadd.f32 0.0, %v321
    %v323 = vpop.f32.mrb[0].mxu0
    %324 = vmatprep.mubr.f32.mxu0 0.0
    %325 = vmatmul.mubr.f32.gmra.mrb[0].mxu0 %v104
    %v326 = vpop.f32.mrb[0].mxu0
    %v327 = vadd.f32 0.0, %v326
    %v328 = vpop.f32.mrb[0].mxu0
    %329 = vmatprep.mubr.f32.mxu0 0.0
    %330 = vmatmul.mubr.f32.gmra.mrb[0].mxu0 %v105
    %v331 = vpop.f32.mrb[0].mxu0
    %v332 = vadd.f32 0.0, %v331
    %v333 = vpop.f32.mrb[0].mxu0
    %334 = vmatprep.mubr.f32.mxu0 0.0
    %335 = vmatmul.mubr.f32.gmra.mrb[0].mxu0 %v106
    %v336 = vpop.f32.mrb[0].mxu0
    %v337 = vadd.f32 0.0, %v336
    %v338 = vpop.f32.mrb[0].mxu0
    %339 = vmatprep.mubr.f32.mxu0 0.0
    %340 = vmatmul.mubr.f32.gmra.mrb[0].mxu0 %v107
    %v341 = vpop.f32.mrb[0].mxu0
    %v342 = vadd.f32 0.0, %v341
    %v343 = vpop.f32.mrb[0].mxu0
    %344 = vmatprep.mubr.f32.mxu0 0.0
    %345 = vmatmul.mubr.f32.gmra.mrb[0].mxu0 %v108
    %v346 = vpop.f32.mrb[0].mxu0
    %v347 = vadd.f32 0.0, %v346
    %v348 = vpop.f32.mrb[0].mxu0
    %349 = vmatprep.mubr.f32.mxu0 0.0
    %350 = vmatmul.mubr.f32.gmra.mrb[0].mxu0 %v109
    %v351 = vpop.f32.mrb[0].mxu0
    %v352 = vadd.f32 0.0, %v351
    %v353 = vpop.f32.mrb[0].mxu0
    %354 = vmatprep.mubr.f32.mxu0 0.0
    %355 = vmatmul.mubr.f32.gmra.mrb[0].mxu0 %v110
    %v356 = vpop.f32.mrb[0].mxu0
    %v357 = vadd.f32 0.0, %v356
    %v358 = vpop.f32.mrb[0].mxu0
    %359 = vmatprep.mubr.f32.mxu0 0.0
    %360 = vmatmul.mubr.f32.gmra.mrb[0].mxu0 %v111
    %v361 = vpop.f32.mrb[0].mxu0
    %v362 = vadd.f32 0.0, %v361
    %v363 = vpop.f32.mrb[0].mxu0
    %364 = vmatprep.mubr.f32.mxu0 0.0
    %365 = vmatmul.mubr.f32.gmra.mrb[0].mxu0 %v112
    %v366 = vpop.f32.mrb[0].mxu0
    %v367 = vadd.f32 0.0, %v366
    %v368 = vpop.f32.mrb[0].mxu0
    %369 = vmatprep.mubr.f32.mxu0 0.0
    %370 = vmatmul.mubr.f32.gmra.mrb[0].mxu0 %v113
    %v371 = vpop.f32.mrb[0].mxu0
    %v372 = vadd.f32 0.0, %v371
    %v373 = vpop.f32.mrb[0].mxu0
    %374 = vmatprep.mubr.f32.mxu0 0.0
    %375 = vmatmul.mubr.f32.gmra.mrb[0].mxu0 %v114
    %v376 = vpop.f32.mrb[0].mxu0
    %v377 = vadd.f32 0.0, %v376
    %v378 = vpop.f32.mrb[0].mxu0
    %379 = vmatprep.mubr.f32.mxu0 0.0
    %380 = vmatmul.mubr.f32.gmra.mrb[0].mxu0 %v115
    %v381 = vpop.f32.mrb[0].mxu0
    %v382 = vadd.f32 0.0, %v381
    %v383 = vpop.f32.mrb[0].mxu0
    %384 = vmatprep.mubr.f32.mxu0 0.0
    %385 = vmatmul.mubr.f32.gmra.mrb[0].mxu0 %v116
    %v386 = vpop.f32.mrb[0].mxu0
    %v387 = vadd.f32 0.0, %v386
    %v388 = vpop.f32.mrb[0].mxu0
    %389 = vmatprep.mubr.f32.mxu0 0.0
    %390 = vmatmul.mubr.f32.gmra.mrb[0].mxu0 %v117
    %v391 = vpop.f32.mrb[0].mxu0
    %v392 = vadd.f32 0.0, %v391
    %v393 = vpop.f32.mrb[0].mxu0
    %394 = vmatprep.mubr.f32.mxu0 0.0
    %395 = vmatmul.mubr.f32.gmra.mrb[0].mxu0 %v118
    %v396 = vpop.f32.mrb[0].mxu0
    %v397 = vadd.f32 0.0, %v396
    %v398 = vpop.f32.mrb[0].mxu0
    %399 = vmatprep.mubr.f32.mxu0 0.0
    %400 = vmatmul.mubr.f32.gmra.mrb[0].mxu0 %v119
    %v401 = vpop.f32.mrb[0].mxu0
    %v402 = vadd.f32 0.0, %v401
    %v403 = vpop.f32.mrb[0].mxu0
    %404 = vmatprep.mubr.f32.mxu0 0.0
    %405 = vmatmul.mubr.f32.gmra.mrb[0].mxu0 %v120
    %v406 = vpop.f32.mrb[0].mxu0
    %v407 = vadd.f32 0.0, %v406
    %v408 = vpop.f32.mrb[0].mxu0
    %409 = vmatprep.mubr.f32.mxu0 0.0
    %410 = vmatmul.mubr.f32.gmra.mrb[0].mxu0 %v121
    %v411 = vpop.f32.mrb[0].mxu0
    %v412 = vadd.f32 0.0, %v411
    %v413 = vpop.f32.mrb[0].mxu0
    %414 = vmatprep.mubr.f32.mxu0 0.0
    %415 = vmatmul.mubr.f32.gmra.mrb[0].mxu0 %v122
    %v416 = vpop.f32.mrb[0].mxu0
    %v417 = vadd.f32 0.0, %v416
    %v418 = vpop.f32.mrb[0].mxu0
    %419 = vmatprep.mubr.f32.mxu0 0.0
    %420 = vmatmul.mubr.f32.gmra.mrb[0].mxu0 %v123
    %v421 = vpop.f32.mrb[0].mxu0
    %v422 = vadd.f32 0.0, %v421
    %v423 = vpop.f32.mrb[0].mxu0
    %424 = vmatprep.mubr.f32.mxu0 0.0
    %425 = vmatmul.mubr.f32.gmra.mrb[0].mxu0 %v124
    %v426 = vpop.f32.mrb[0].mxu0
    %v427 = vadd.f32 0.0, %v426
    %v428 = vpop.f32.mrb[0].mxu0
    %429 = vmatprep.mubr.f32.mxu0 0.0
    %430 = vmatmul.mubr.f32.gmra.mrb[0].mxu0 %v125
    %v431 = vpop.f32.mrb[0].mxu0
    %v432 = vadd.f32 0.0, %v431
    %v433 = vpop.f32.mrb[0].mxu0
    %434 = vmatprep.mubr.f32.mxu0 0.0
    %435 = vmatmul.mubr.f32.gmra.mrb[0].mxu0 %v126
    %v436 = vpop.f32.mrb[0].mxu0
    %v437 = vadd.f32 0.0, %v436
    %v438 = vpop.f32.mrb[0].mxu0
    %439 = vmatprep.mubr.f32.mxu0 0.0
    %440 = vmatmul.mubr.f32.gmra.mrb[0].mxu0 %v127
    %v441 = vpop.f32.mrb[0].mxu0
    %v442 = vadd.f32 0.0, %v441
    %v443 = vpop.f32.mrb[0].mxu0
    %444 = vmatprep.mubr.f32.mxu0 0.0
    %445 = vmatmul.mubr.f32.gmra.mrb[0].mxu0 %v128
    %v446 = vpop.f32.mrb[0].mxu0
    %v447 = vadd.f32 0.0, %v446
    %v448 = vpop.f32.mrb[0].mxu0
    %449 = vmatprep.mubr.f32.mxu0 0.0
    %450 = vmatmul.mubr.f32.gmra.mrb[0].mxu0 %v129
    %v451 = vpop.f32.mrb[0].mxu0
    %v452 = vadd.f32 0.0, %v451
    %v453 = vpop.f32.mrb[0].mxu0
    %454 = vmatprep.mubr.f32.mxu0 0.0
    %455 = vmatmul.mubr.f32.gmra.mrb[0].mxu0 %v130
    %v456 = vpop.f32.mrb[0].mxu0
    %v457 = vadd.f32 0.0, %v456
    %v458 = vpop.f32.mrb[0].mxu0
    %459 = vmatprep.mubr.f32.mxu0 0.0
    %460 = vmatmul.mubr.f32.gmra.mrb[0].mxu0 %v131
    %v461 = vpop.f32.mrb[0].mxu0
    %v462 = vadd.f32 0.0, %v461
    %v463 = vpop.f32.mrb[0].mxu0
    %464 = vmatprep.mubr.f32.mxu0 0.0
    %465 = vmatmul.mubr.f32.gmra.mrb[0].mxu0 %v132
    %v466 = vpop.f32.mrb[0].mxu0
    %v467 = vadd.f32 0.0, %v466
    %v468 = vpop.f32.mrb[0].mxu0
    %469 = vmatprep.mubr.f32.mxu0 0.0
    %470 = vmatmul.mubr.f32.gmra.mrb[0].mxu0 %v133
    %v471 = vpop.f32.mrb[0].mxu0
    %v472 = vadd.f32 0.0, %v471
    %v473 = vpop.f32.mrb[0].mxu0
    %474 = vmatprep.mubr.f32.mxu0 0.0
    %475 = vmatmul.mubr.f32.gmra.mrb[0].mxu0 %v134
    %v476 = vpop.f32.mrb[0].mxu0
    %v477 = vadd.f32 0.0, %v476
    %v478 = vpop.f32.mrb[0].mxu0
    %479 = vmatprep.mubr.f32.mxu0 0.0
    %480 = vmatmul.mubr.f32.gmra.mrb[0].mxu0 %v135
    %v481 = vpop.f32.mrb[0].mxu0
    %v482 = vadd.f32 0.0, %v481
    %v483 = vpop.f32.mrb[0].mxu0
    %484 = vmatprep.mubr.f32.mxu0 0.0
    %485 = vmatmul.mubr.f32.gmra.mrb[0].mxu0 %v136
    %v486 = vpop.f32.mrb[0].mxu0
    %v487 = vadd.f32 0.0, %v486
    %v488 = vpop.f32.mrb[0].mxu0
    %489 = vmatprep.mubr.f32.mxu0 0.0
    %490 = vmatmul.mubr.f32.gmra.mrb[0].mxu0 %v137
    %v491 = vpop.f32.mrb[0].mxu0
    %v492 = vadd.f32 0.0, %v491
    %v493 = vpop.f32.mrb[0].mxu0
    %494 = vmatprep.mubr.f32.mxu0 0.0
    %495 = vmatmul.mubr.f32.gmra.mrb[0].mxu0 %v138
    %v496 = vpop.f32.mrb[0].mxu0
    %v497 = vadd.f32 0.0, %v496
    %v498 = vpop.f32.mrb[0].mxu0
    %499 = vmatprep.mubr.f32.mxu0 0.0
    %500 = vmatmul.mubr.f32.gmra.mrb[0].mxu0 %v139
    %v501 = vpop.f32.mrb[0].mxu0
    %v502 = vadd.f32 0.0, %v501
    %v503 = vpop.f32.mrb[0].mxu0
    %504 = vmatprep.mubr.f32.mxu0 0.0
    %505 = vmatmul.mubr.f32.gmra.mrb[0].mxu0 %v140
    %v506 = vpop.f32.mrb[0].mxu0
    %v507 = vadd.f32 0.0, %v506
    %v508 = vpop.f32.mrb[0].mxu0
    %509 = vmatprep.mubr.f32.mxu0 0.0
    %510 = vmatmul.mubr.f32.gmra.mrb[0].mxu0 %v141
    %v511 = vpop.f32.mrb[0].mxu0
    %v512 = vadd.f32 0.0, %v511
    %v513 = vpop.f32.mrb[0].mxu0
    %514 = vmatprep.mubr.f32.mxu0 0.0
    %515 = vmatmul.mubr.f32.gmra.mrb[0].mxu0 %v142
    %v516 = vpop.f32.mrb[0].mxu0
    %v517 = vadd.f32 0.0, %v516
    %v518 = vpop.f32.mrb[0].mxu0
    %519 = vmatprep.mubr.f32.mxu0 0.0
    %520 = vmatmul.mubr.f32.gmra.mrb[0].mxu0 %v143
    %v521 = vpop.f32.mrb[0].mxu0
    %v522 = vadd.f32 0.0, %v521
    %v523 = vpop.f32.mrb[0].mxu0
    %524 = vmatprep.mubr.f32.mxu0 0.0
    %525 = vmatmul.mubr.f32.gmra.mrb[0].mxu0 %v144
    %v526 = vpop.f32.mrb[0].mxu0
    %v527 = vadd.f32 0.0, %v526
    %v528 = vpop.f32.mrb[0].mxu0
    %529 = vmatprep.mubr.f32.mxu0 0.0
    %530 = vmatmul.mubr.f32.gmra.mrb[0].mxu0 %v145
    %v531 = vpop.f32.mrb[0].mxu0
    %v532 = vadd.f32 0.0, %v531
    %v533 = vpop.f32.mrb[0].mxu0
    %534 = vmatprep.mubr.f32.mxu0 0.0
    %535 = vmatmul.mubr.f32.gmra.mrb[0].mxu0 %v146
    %v536 = vpop.f32.mrb[0].mxu0
    %v537 = vadd.f32 0.0, %v536
    %v538 = vpop.f32.mrb[0].mxu0
    %539 = vmatprep.mubr.f32.mxu0 0.0
    %540 = vmatmul.mubr.f32.gmra.mrb[0].mxu0 %v147
    %v541 = vpop.f32.mrb[0].mxu0
    %v542 = vadd.f32 0.0, %v541
    %v543 = vpop.f32.mrb[0].mxu0
    %544 = vmatprep.mubr.f32.mxu0 0.0
    %545 = vmatmul.mubr.f32.gmra.mrb[0].mxu0 %v148
    %v546 = vpop.f32.mrb[0].mxu0
    %v547 = vadd.f32 0.0, %v546
    %v548 = vpop.f32.mrb[0].mxu0
    %549 = vdwg.mxu0
    %v550 = vadd.f32 %v232, %v237
    %v551 = vadd.f32 %v550, %v242
    %v552 = vadd.f32 %v551, %v247
    %v553 = vadd.f32 %v552, %v252
    %v554 = vadd.f32 %v553, %v257
    %v555 = vadd.f32 %v554, %v262
    %v556 = vadd.f32 %v555, %v267
    %v557 = vadd.f32 %v556, %v272
    %v558 = vadd.f32 %v557, %v277
    %v559 = vadd.f32 %v558, %v282
    %v560 = vadd.f32 %v559, %v287
    %v561 = vadd.f32 %v560, %v292
    %v562 = vadd.f32 %v561, %v297
    %v563 = vadd.f32 %v562, %v302
    %v564 = vadd.f32 %v563, %v307
    %v565 = vadd.f32 %v564, %v312
    %v566 = vadd.f32 %v565, %v317
    %v567 = vadd.f32 %v566, %v322
    %v568 = vadd.f32 %v567, %v327
    %v569 = vadd.f32 %v568, %v332
    %v570 = vadd.f32 %v569, %v337
    %v571 = vadd.f32 %v570, %v342
    %v572 = vadd.f32 %v571, %v347
    %v573 = vadd.f32 %v572, %v352
    %v574 = vadd.f32 %v573, %v357
    %v575 = vadd.f32 %v574, %v362
    %v576 = vadd.f32 %v575, %v367
    %v577 = vadd.f32 %v576, %v372
    %v578 = vadd.f32 %v577, %v377
    %v579 = vadd.f32 %v578, %v382
    %v580 = vadd.f32 %v579, %v387
    %v581 = vadd.f32 %v580, %v392
    %v582 = vadd.f32 %v581, %v397
    %v583 = vadd.f32 %v582, %v402
    %v584 = vadd.f32 %v583, %v407
    %v585 = vadd.f32 %v584, %v412
    %v586 = vadd.f32 %v585, %v417
    %v587 = vadd.f32 %v586, %v422
    %v588 = vadd.f32 %v587, %v427
    %v589 = vadd.f32 %v588, %v432
    %v590 = vadd.f32 %v589, %v437
    %v591 = vadd.f32 %v590, %v442
    %v592 = vadd.f32 %v591, %v447
    %v593 = vadd.f32 %v592, %v452
    %v594 = vadd.f32 %v593, %v457
    %v595 = vadd.f32 %v594, %v462
    %v596 = vadd.f32 %v595, %v467
    %v597 = vadd.f32 %v596, %v472
    %v598 = vadd.f32 %v597, %v477
    %v599 = vadd.f32 %v598, %v482
    %v600 = vadd.f32 %v599, %v487
    %v601 = vadd.f32 %v600, %v492
    %v602 = vadd.f32 %v601, %v497
    %v603 = vadd.f32 %v602, %v502
    %v604 = vadd.f32 %v603, %v507
    %v605 = vadd.f32 %v604, %v512
    %v606 = vadd.f32 %v605, %v517
    %v607 = vadd.f32 %v606, %v522
    %v608 = vadd.f32 %v607, %v527
    %v609 = vadd.f32 %v608, %v532
    %v610 = vadd.f32 %v609, %v537
    %v611 = vadd.f32 %v610, %v542
    %v612 = vadd.f32 %v611, %v547
    %v613 = vrot.slane %v612, 4
    %v614 = vadd.f32 %v612, %v613
    %v615 = vrot.slane %v614, 2
    %v616 = vadd.f32 %v614, %v615
    %v617 = vrot.slane %v616, 1
    %v618 = vadd.f32 %v616, %v617
    %v619 = vmul.f32 %v232, %v232
    %v620 = vmul.f32 %v237, %v237
    %v621 = vmul.f32 %v242, %v242
    %v622 = vmul.f32 %v247, %v247
    %v623 = vmul.f32 %v252, %v252
    %v624 = vmul.f32 %v257, %v257
    %v625 = vmul.f32 %v262, %v262
    %v626 = vmul.f32 %v267, %v267
    %v627 = vmul.f32 %v272, %v272
    %v628 = vmul.f32 %v277, %v277
    %v629 = vmul.f32 %v282, %v282
    %v630 = vmul.f32 %v287, %v287
    %v631 = vmul.f32 %v292, %v292
    %v632 = vmul.f32 %v297, %v297
    %v633 = vmul.f32 %v302, %v302
    %v634 = vmul.f32 %v307, %v307
    %v635 = vmul.f32 %v312, %v312
    %v636 = vmul.f32 %v317, %v317
    %v637 = vmul.f32 %v322, %v322
    %v638 = vmul.f32 %v327, %v327
    %v639 = vmul.f32 %v332, %v332
    %v640 = vmul.f32 %v337, %v337
    %v641 = vmul.f32 %v342, %v342
    %v642 = vmul.f32 %v347, %v347
    %v643 = vmul.f32 %v352, %v352
    %v644 = vmul.f32 %v357, %v357
    %v645 = vmul.f32 %v362, %v362
    %v646 = vmul.f32 %v367, %v367
    %v647 = vmul.f32 %v372, %v372
    %v648 = vmul.f32 %v377, %v377
    %v649 = vmul.f32 %v382, %v382
    %v650 = vmul.f32 %v387, %v387
    %v651 = vmul.f32 %v392, %v392
    %v652 = vmul.f32 %v397, %v397
    %v653 = vmul.f32 %v402, %v402
    %v654 = vmul.f32 %v407, %v407
    %v655 = vmul.f32 %v412, %v412
    %v656 = vmul.f32 %v417, %v417
    %v657 = vmul.f32 %v422, %v422
    %v658 = vmul.f32 %v427, %v427
    %v659 = vmul.f32 %v432, %v432
    %v660 = vmul.f32 %v437, %v437
    %v661 = vmul.f32 %v442, %v442
    %v662 = vmul.f32 %v447, %v447
    %v663 = vmul.f32 %v452, %v452
    %v664 = vmul.f32 %v457, %v457
    %v665 = vmul.f32 %v462, %v462
    %v666 = vmul.f32 %v467, %v467
    %v667 = vmul.f32 %v472, %v472
    %v668 = vmul.f32 %v477, %v477
    %v669 = vmul.f32 %v482, %v482
    %v670 = vmul.f32 %v487, %v487
    %v671 = vmul.f32 %v492, %v492
    %v672 = vmul.f32 %v497, %v497
    %v673 = vmul.f32 %v502, %v502
    %v674 = vmul.f32 %v507, %v507
    %v675 = vmul.f32 %v512, %v512
    %v676 = vmul.f32 %v517, %v517
    %v677 = vmul.f32 %v522, %v522
    %v678 = vmul.f32 %v527, %v527
    %v679 = vmul.f32 %v532, %v532
    %v680 = vmul.f32 %v537, %v537
    %v681 = vmul.f32 %v542, %v542
    %v682 = vmul.f32 %v547, %v547
    %v683 = vadd.f32 %v619, %v620
    %v684 = vadd.f32 %v683, %v621
    %v685 = vadd.f32 %v684, %v622
    %v686 = vadd.f32 %v685, %v623
    %v687 = vadd.f32 %v686, %v624
    %v688 = vadd.f32 %v687, %v625
    %v689 = vadd.f32 %v688, %v626
    %v690 = vadd.f32 %v689, %v627
    %v691 = vadd.f32 %v690, %v628
    %v692 = vadd.f32 %v691, %v629
    %v693 = vadd.f32 %v692, %v630
    %v694 = vadd.f32 %v693, %v631
    %v695 = vadd.f32 %v694, %v632
    %v696 = vadd.f32 %v695, %v633
    %v697 = vadd.f32 %v696, %v634
    %v698 = vadd.f32 %v697, %v635
    %v699 = vadd.f32 %v698, %v636
    %v700 = vadd.f32 %v699, %v637
    %v701 = vadd.f32 %v700, %v638
    %v702 = vadd.f32 %v701, %v639
    %v703 = vadd.f32 %v702, %v640
    %v704 = vadd.f32 %v703, %v641
    %v705 = vadd.f32 %v704, %v642
    %v706 = vadd.f32 %v705, %v643
    %v707 = vadd.f32 %v706, %v644
    %v708 = vadd.f32 %v707, %v645
    %v709 = vadd.f32 %v708, %v646
    %v710 = vadd.f32 %v709, %v647
    %v711 = vadd.f32 %v710, %v648
    %v712 = vadd.f32 %v711, %v649
    %v713 = vadd.f32 %v712, %v650
    %v714 = vadd.f32 %v713, %v651
    %v715 = vadd.f32 %v714, %v652
    %v716 = vadd.f32 %v715, %v653
    %v717 = vadd.f32 %v716, %v654
    %v718 = vadd.f32 %v717, %v655
    %v719 = vadd.f32 %v718, %v656
    %v720 = vadd.f32 %v719, %v657
    %v721 = vadd.f32 %v720, %v658
    %v722 = vadd.f32 %v721, %v659
    %v723 = vadd.f32 %v722, %v660
    %v724 = vadd.f32 %v723, %v661
    %v725 = vadd.f32 %v724, %v662
    %v726 = vadd.f32 %v725, %v663
    %v727 = vadd.f32 %v726, %v664
    %v728 = vadd.f32 %v727, %v665
    %v729 = vadd.f32 %v728, %v666
    %v730 = vadd.f32 %v729, %v667
    %v731 = vadd.f32 %v730, %v668
    %v732 = vadd.f32 %v731, %v669
    %v733 = vadd.f32 %v732, %v670
    %v734 = vadd.f32 %v733, %v671
    %v735 = vadd.f32 %v734, %v672
    %v736 = vadd.f32 %v735, %v673
    %v737 = vadd.f32 %v736, %v674
    %v738 = vadd.f32 %v737, %v675
    %v739 = vadd.f32 %v738, %v676
    %v740 = vadd.f32 %v739, %v677
    %v741 = vadd.f32 %v740, %v678
    %v742 = vadd.f32 %v741, %v679
    %v743 = vadd.f32 %v742, %v680
    %v744 = vadd.f32 %v743, %v681
    %v745 = vadd.f32 %v744, %v682
    %v746 = vrot.slane %v745, 4
    %v747 = vadd.f32 %v745, %v746
    %v748 = vrot.slane %v747, 2
    %v749 = vadd.f32 %v747, %v748
    %v750 = vrot.slane %v749, 1
    %v751 = vadd.f32 %v749, %v750
    %v752 = vmul.f32 %v618, 0.001953125
    %v753 = vmul.f32 %v751, 0.001953125
    %v754 = vmul.f32 %v752, %v752
    %v755 = vsub.f32 %v753, %v754
    %v756 = vadd.f32 %v755, 1e-05
    %v757 = vrsqrt.pop %v756
    %v758 = vld [vmem:[%s3] sm:$0x1]
    %v759 = vmul.f32 %v758, %v757
    %v760 = vld [vmem:[%s4] sm:$0x1]
    %v761 = vmul.f32 %v752, %v759
    %v762 = vsub.f32 %v760, %v761
    %v764 = vlaneseq
    %v765 = vshrl.u32 %v764, 7
    %v766 = vsub.s32 0, %v765
    %v767 = vrot.slane %v759, %v766
    %v769 = vmul.f32 %v232, %v767
    %v770 = vmul.f32 %v237, %v767
    %v771 = vmul.f32 %v242, %v767
    %v772 = vmul.f32 %v247, %v767
    %v773 = vmul.f32 %v252, %v767
    %v774 = vmul.f32 %v257, %v767
    %v775 = vmul.f32 %v262, %v767
    %v776 = vmul.f32 %v267, %v767
    %v777 = vmul.f32 %v272, %v767
    %v778 = vmul.f32 %v277, %v767
    %v779 = vmul.f32 %v282, %v767
    %v780 = vmul.f32 %v287, %v767
    %v781 = vmul.f32 %v292, %v767
    %v782 = vmul.f32 %v297, %v767
    %v783 = vmul.f32 %v302, %v767
    %v784 = vmul.f32 %v307, %v767
    %v785 = vmul.f32 %v312, %v767
    %v786 = vmul.f32 %v317, %v767
    %v787 = vmul.f32 %v322, %v767
    %v788 = vmul.f32 %v327, %v767
    %v789 = vmul.f32 %v332, %v767
    %v790 = vmul.f32 %v337, %v767
    %v791 = vmul.f32 %v342, %v767
    %v792 = vmul.f32 %v347, %v767
    %v793 = vmul.f32 %v352, %v767
    %v794 = vmul.f32 %v357, %v767
    %v795 = vmul.f32 %v362, %v767
    %v796 = vmul.f32 %v367, %v767
    %v797 = vmul.f32 %v372, %v767
    %v798 = vmul.f32 %v377, %v767
    %v799 = vmul.f32 %v382, %v767
    %v800 = vmul.f32 %v387, %v767
    %v801 = vmul.f32 %v392, %v767
    %v802 = vmul.f32 %v397, %v767
    %v803 = vmul.f32 %v402, %v767
    %v804 = vmul.f32 %v407, %v767
    %v805 = vmul.f32 %v412, %v767
    %v806 = vmul.f32 %v417, %v767
    %v807 = vmul.f32 %v422, %v767
    %v808 = vmul.f32 %v427, %v767
    %v809 = vmul.f32 %v432, %v767
    %v810 = vmul.f32 %v437, %v767
    %v811 = vmul.f32 %v442, %v767
    %v812 = vmul.f32 %v447, %v767
    %v813 = vmul.f32 %v452, %v767
    %v814 = vmul.f32 %v457, %v767
    %v815 = vmul.f32 %v462, %v767
    %v816 = vmul.f32 %v467, %v767
    %v817 = vmul.f32 %v472, %v767
    %v818 = vmul.f32 %v477, %v767
    %v819 = vmul.f32 %v482, %v767
    %v820 = vmul.f32 %v487, %v767
    %v821 = vmul.f32 %v492, %v767
    %v822 = vmul.f32 %v497, %v767
    %v823 = vmul.f32 %v502, %v767
    %v824 = vmul.f32 %v507, %v767
    %v825 = vmul.f32 %v512, %v767
    %v826 = vmul.f32 %v517, %v767
    %v827 = vmul.f32 %v522, %v767
    %v828 = vmul.f32 %v527, %v767
    %v829 = vmul.f32 %v532, %v767
    %v830 = vmul.f32 %v537, %v767
    %v831 = vmul.f32 %v542, %v767
    %v832 = vmul.f32 %v547, %v767
    %v834 = vlaneseq
    %v835 = vshrl.u32 %v834, 7
    %v836 = vsub.s32 0, %v835
    %v837 = vrot.slane %v762, %v836
    %v839 = vadd.f32 %v769, %v837
    %v840 = vadd.f32 %v770, %v837
    %v841 = vadd.f32 %v771, %v837
    %v842 = vadd.f32 %v772, %v837
    %v843 = vadd.f32 %v773, %v837
    %v844 = vadd.f32 %v774, %v837
    %v845 = vadd.f32 %v775, %v837
    %v846 = vadd.f32 %v776, %v837
    %v847 = vadd.f32 %v777, %v837
    %v848 = vadd.f32 %v778, %v837
    %v849 = vadd.f32 %v779, %v837
    %v850 = vadd.f32 %v780, %v837
    %v851 = vadd.f32 %v781, %v837
    %v852 = vadd.f32 %v782, %v837
    %v853 = vadd.f32 %v783, %v837
    %v854 = vadd.f32 %v784, %v837
    %v855 = vadd.f32 %v785, %v837
    %v856 = vadd.f32 %v786, %v837
    %v857 = vadd.f32 %v787, %v837
    %v858 = vadd.f32 %v788, %v837
    %v859 = vadd.f32 %v789, %v837
    %v860 = vadd.f32 %v790, %v837
    %v861 = vadd.f32 %v791, %v837
    %v862 = vadd.f32 %v792, %v837
    %v863 = vadd.f32 %v793, %v837
    %v864 = vadd.f32 %v794, %v837
    %v865 = vadd.f32 %v795, %v837
    %v866 = vadd.f32 %v796, %v837
    %v867 = vadd.f32 %v797, %v837
    %v868 = vadd.f32 %v798, %v837
    %v869 = vadd.f32 %v799, %v837
    %v870 = vadd.f32 %v800, %v837
    %v871 = vadd.f32 %v801, %v837
    %v872 = vadd.f32 %v802, %v837
    %v873 = vadd.f32 %v803, %v837
    %v874 = vadd.f32 %v804, %v837
    %v875 = vadd.f32 %v805, %v837
    %v876 = vadd.f32 %v806, %v837
    %v877 = vadd.f32 %v807, %v837
    %v878 = vadd.f32 %v808, %v837
    %v879 = vadd.f32 %v809, %v837
    %v880 = vadd.f32 %v810, %v837
    %v881 = vadd.f32 %v811, %v837
    %v882 = vadd.f32 %v812, %v837
    %v883 = vadd.f32 %v813, %v837
    %v884 = vadd.f32 %v814, %v837
    %v885 = vadd.f32 %v815, %v837
    %v886 = vadd.f32 %v816, %v837
    %v887 = vadd.f32 %v817, %v837
    %v888 = vadd.f32 %v818, %v837
    %v889 = vadd.f32 %v819, %v837
    %v890 = vadd.f32 %v820, %v837
    %v891 = vadd.f32 %v821, %v837
    %v892 = vadd.f32 %v822, %v837
    %v893 = vadd.f32 %v823, %v837
    %v894 = vadd.f32 %v824, %v837
    %v895 = vadd.f32 %v825, %v837
    %v896 = vadd.f32 %v826, %v837
    %v897 = vadd.f32 %v827, %v837
    %v898 = vadd.f32 %v828, %v837
    %v899 = vadd.f32 %v829, %v837
    %v900 = vadd.f32 %v830, %v837
    %v901 = vadd.f32 %v831, %v837
    %v902 = vadd.f32 %v832, %v837
    %v903 = vmax.f32 %v839, 0.0
    %v904 = vmax.f32 %v840, 0.0
    %v905 = vmax.f32 %v841, 0.0
    %v906 = vmax.f32 %v842, 0.0
    %v907 = vmax.f32 %v843, 0.0
    %v908 = vmax.f32 %v844, 0.0
    %v909 = vmax.f32 %v845, 0.0
    %v910 = vmax.f32 %v846, 0.0
    %v911 = vmax.f32 %v847, 0.0
    %v912 = vmax.f32 %v848, 0.0
    %v913 = vmax.f32 %v849, 0.0
    %v914 = vmax.f32 %v850, 0.0
    %v915 = vmax.f32 %v851, 0.0
    %v916 = vmax.f32 %v852, 0.0
    %v917 = vmax.f32 %v853, 0.0
    %v918 = vmax.f32 %v854, 0.0
    %v919 = vmax.f32 %v855, 0.0
    %v920 = vmax.f32 %v856, 0.0
    %v921 = vmax.f32 %v857, 0.0
    %v922 = vmax.f32 %v858, 0.0
    %v923 = vmax.f32 %v859, 0.0
    %v924 = vmax.f32 %v860, 0.0
    %v925 = vmax.f32 %v861, 0.0
    %v926 = vmax.f32 %v862, 0.0
    %v927 = vmax.f32 %v863, 0.0
    %v928 = vmax.f32 %v864, 0.0
    %v929 = vmax.f32 %v865, 0.0
    %v930 = vmax.f32 %v866, 0.0
    %v931 = vmax.f32 %v867, 0.0
    %v932 = vmax.f32 %v868, 0.0
    %v933 = vmax.f32 %v869, 0.0
    %v934 = vmax.f32 %v870, 0.0
    %v935 = vmax.f32 %v871, 0.0
    %v936 = vmax.f32 %v872, 0.0
    %v937 = vmax.f32 %v873, 0.0
    %v938 = vmax.f32 %v874, 0.0
    %v939 = vmax.f32 %v875, 0.0
    %v940 = vmax.f32 %v876, 0.0
    %v941 = vmax.f32 %v877, 0.0
    %v942 = vmax.f32 %v878, 0.0
    %v943 = vmax.f32 %v879, 0.0
    %v944 = vmax.f32 %v880, 0.0
    %v945 = vmax.f32 %v881, 0.0
    %v946 = vmax.f32 %v882, 0.0
    %v947 = vmax.f32 %v883, 0.0
    %v948 = vmax.f32 %v884, 0.0
    %v949 = vmax.f32 %v885, 0.0
    %v950 = vmax.f32 %v886, 0.0
    %v951 = vmax.f32 %v887, 0.0
    %v952 = vmax.f32 %v888, 0.0
    %v953 = vmax.f32 %v889, 0.0
    %v954 = vmax.f32 %v890, 0.0
    %v955 = vmax.f32 %v891, 0.0
    %v956 = vmax.f32 %v892, 0.0
    %v957 = vmax.f32 %v893, 0.0
    %v958 = vmax.f32 %v894, 0.0
    %v959 = vmax.f32 %v895, 0.0
    %v960 = vmax.f32 %v896, 0.0
    %v961 = vmax.f32 %v897, 0.0
    %v962 = vmax.f32 %v898, 0.0
    %v963 = vmax.f32 %v899, 0.0
    %v964 = vmax.f32 %v900, 0.0
    %v965 = vmax.f32 %v901, 0.0
    %v966 = vmax.f32 %v902, 0.0
    %967 = vst [vmem:[#allocation2] sm:$0xff] 0.0
    %968 = vst [vmem:[#allocation2 + $0x8] sm:$0xff] 0.0
    %969 = vst [vmem:[#allocation2 + $0x10] sm:$0xff] 0.0
    %970 = vst [vmem:[#allocation2 + $0x18] sm:$0xff] 0.0
    %971 = vst [vmem:[#allocation2 + $0x240] sm:$0xff] 0.0
    %972 = vst [vmem:[#allocation2 + $0x248] sm:$0xff] 0.0
    %973 = vst [vmem:[#allocation2 + $0x250] sm:$0xff] 0.0
    %974 = vst [vmem:[#allocation2 + $0x258] sm:$0xff] 0.0
    %s975 = scalar_lea.vmem [#allocation2], 544
    %976 = vst [vmem:[%s975] sm:$0xff] 0.0
    %977 = vst [vmem:[%s975 + $0x8] sm:$0xff] 0.0
    %978 = vst [vmem:[%s975 + $0x10] sm:$0xff] 0.0
    %979 = vst [vmem:[%s975 + $0x18] sm:$0xff] 0.0
    %980 = vst [vmem:[%s975 + $0x240] sm:$0xff] 0.0
    %981 = vst [vmem:[%s975 + $0x248] sm:$0xff] 0.0
    %982 = vst [vmem:[%s975 + $0x250] sm:$0xff] 0.0
    %983 = vst [vmem:[%s975 + $0x258] sm:$0xff] 0.0
    %984 = vst [vmem:[#allocation2] sm:$0xff] 0.0
    %985 = vst [vmem:[#allocation2 + $0x20] sm:$0xff] 0.0
    %986 = vst [vmem:[#allocation2 + $0x40] sm:$0xff] 0.0
    %987 = vst [vmem:[#allocation2 + $0x60] sm:$0xff] 0.0
    %988 = vst [vmem:[#allocation2 + $0x80] sm:$0xff] 0.0
    %989 = vst [vmem:[#allocation2 + $0xa0] sm:$0xff] 0.0
    %990 = vst [vmem:[#allocation2 + $0xc0] sm:$0xff] 0.0
    %991 = vst [vmem:[#allocation2 + $0xe0] sm:$0xff] 0.0
    %992 = vst [vmem:[#allocation2 + $0x100] sm:$0xff] 0.0
    %993 = vst [vmem:[#allocation2 + $0x120] sm:$0xff] 0.0
    %994 = vst [vmem:[#allocation2 + $0x140] sm:$0xff] 0.0
    %995 = vst [vmem:[#allocation2 + $0x160] sm:$0xff] 0.0
    %996 = vst [vmem:[#allocation2 + $0x180] sm:$0xff] 0.0
    %997 = vst [vmem:[#allocation2 + $0x1a0] sm:$0xff] 0.0
    %998 = vst [vmem:[#allocation2 + $0x1c0] sm:$0xff] 0.0
    %999 = vst [vmem:[#allocation2 + $0x1e0] sm:$0xff] 0.0
    %1000 = vst [vmem:[#allocation2 + $0x200] sm:$0xff] 0.0
    %1001 = vst [vmem:[#allocation2 + $0x220] sm:$0xff] 0.0
    %1002 = vst [vmem:[#allocation2 + $0x240] sm:$0xff] 0.0
    %1003 = vst [vmem:[#allocation2 + $0x260] sm:$0xff] 0.0
    %1004 = vst [vmem:[#allocation2 + $0x280] sm:$0xff] 0.0
    %1005 = vst [vmem:[#allocation2 + $0x2a0] sm:$0xff] 0.0
    %1006 = vst [vmem:[#allocation2 + $0x2c0] sm:$0xff] 0.0
    %1007 = vst [vmem:[#allocation2 + $0x2e0] sm:$0xff] 0.0
    %1008 = vst [vmem:[#allocation2 + $0x300] sm:$0xff] 0.0
    %1009 = vst [vmem:[#allocation2 + $0x320] sm:$0xff] 0.0
    %1010 = vst [vmem:[#allocation2 + $0x340] sm:$0xff] 0.0
    %1011 = vst [vmem:[#allocation2 + $0x360] sm:$0xff] 0.0
    %1012 = vst [vmem:[#allocation2 + $0x380] sm:$0xff] 0.0
    %1013 = vst [vmem:[#allocation2 + $0x3a0] sm:$0xff] 0.0
    %1014 = vst [vmem:[#allocation2 + $0x3c0] sm:$0xff] 0.0
    %1015 = vst [vmem:[#allocation2 + $0x3e0] sm:$0xff] 0.0
    %1016 = vst [vmem:[#allocation2 + $0x400] sm:$0xff] 0.0
    %1017 = vst [vmem:[#allocation2 + $0x420] sm:$0xff] 0.0
    %1018 = vst [vmem:[#allocation2 + $0x440] sm:$0xff] 0.0
    %1019 = vst [vmem:[#allocation2 + $0x460] sm:$0xff] 0.0
    %1020 = vst [vmem:[#allocation2 + $0x18] sm:$0xff] 0.0
    %1021 = vst [vmem:[#allocation2 + $0x38] sm:$0xff] 0.0
    %1022 = vst [vmem:[#allocation2 + $0x58] sm:$0xff] 0.0
    %1023 = vst [vmem:[#allocation2 + $0x78] sm:$0xff] 0.0
    %1024 = vst [vmem:[#allocation2 + $0x98] sm:$0xff] 0.0
    %1025 = vst [vmem:[#allocation2 + $0xb8] sm:$0xff] 0.0
    %1026 = vst [vmem:[#allocation2 + $0xd8] sm:$0xff] 0.0
    %1027 = vst [vmem:[#allocation2 + $0xf8] sm:$0xff] 0.0
    %1028 = vst [vmem:[#allocation2 + $0x118] sm:$0xff] 0.0
    %1029 = vst [vmem:[#allocation2 + $0x138] sm:$0xff] 0.0
    %1030 = vst [vmem:[#allocation2 + $0x158] sm:$0xff] 0.0
    %1031 = vst [vmem:[#allocation2 + $0x178] sm:$0xff] 0.0
    %1032 = vst [vmem:[#allocation2 + $0x198] sm:$0xff] 0.0
    %1033 = vst [vmem:[#allocation2 + $0x1b8] sm:$0xff] 0.0
    %1034 = vst [vmem:[#allocation2 + $0x1d8] sm:$0xff] 0.0
    %1035 = vst [vmem:[#allocation2 + $0x1f8] sm:$0xff] 0.0
    %1036 = vst [vmem:[#allocation2 + $0x218] sm:$0xff] 0.0
    %1037 = vst [vmem:[#allocation2 + $0x238] sm:$0xff] 0.0
    %1038 = vst [vmem:[#allocation2 + $0x258] sm:$0xff] 0.0
    %1039 = vst [vmem:[#allocation2 + $0x278] sm:$0xff] 0.0
    %1040 = vst [vmem:[#allocation2 + $0x298] sm:$0xff] 0.0
    %1041 = vst [vmem:[#allocation2 + $0x2b8] sm:$0xff] 0.0
    %1042 = vst [vmem:[#allocation2 + $0x2d8] sm:$0xff] 0.0
    %1043 = vst [vmem:[#allocation2 + $0x2f8] sm:$0xff] 0.0
    %1044 = vst [vmem:[#allocation2 + $0x318] sm:$0xff] 0.0
    %1045 = vst [vmem:[#allocation2 + $0x338] sm:$0xff] 0.0
    %1046 = vst [vmem:[#allocation2 + $0x358] sm:$0xff] 0.0
    %1047 = vst [vmem:[#allocation2 + $0x378] sm:$0xff] 0.0
    %1048 = vst [vmem:[#allocation2 + $0x398] sm:$0xff] 0.0
    %1049 = vst [vmem:[#allocation2 + $0x3b8] sm:$0xff] 0.0
    %1050 = vst [vmem:[#allocation2 + $0x3d8] sm:$0xff] 0.0
    %1051 = vst [vmem:[#allocation2 + $0x3f8] sm:$0xff] 0.0
    %1052 = vst [vmem:[#allocation2 + $0x418] sm:$0xff] 0.0
    %1053 = vst [vmem:[#allocation2 + $0x438] sm:$0xff] 0.0
    %1054 = vst [vmem:[#allocation2 + $0x458] sm:$0xff] 0.0
    %1055 = vst [vmem:[#allocation2 + $0x478] sm:$0xff] 0.0
    %s1056 = scalar_lea.vmem [#allocation2], 32
    %1057 = vst [vmem:[%s1056 + $0x8] sm:$0xff] %v903
    %1058 = vst [vmem:[%s1056 + $0x10] sm:$0xff] %v904
    %1059 = vst [vmem:[%s1056 + $0x28] sm:$0xff] %v905
    %1060 = vst [vmem:[%s1056 + $0x30] sm:$0xff] %v906
    %1061 = vst [vmem:[%s1056 + $0x48] sm:$0xff] %v907
    %1062 = vst [vmem:[%s1056 + $0x50] sm:$0xff] %v908
    %1063 = vst [vmem:[%s1056 + $0x68] sm:$0xff] %v909
    %1064 = vst [vmem:[%s1056 + $0x70] sm:$0xff] %v910
    %1065 = vst [vmem:[%s1056 + $0x88] sm:$0xff] %v911
    %1066 = vst [vmem:[%s1056 + $0x90] sm:$0xff] %v912
    %1067 = vst [vmem:[%s1056 + $0xa8] sm:$0xff] %v913
    %1068 = vst [vmem:[%s1056 + $0xb0] sm:$0xff] %v914
    %1069 = vst [vmem:[%s1056 + $0xc8] sm:$0xff] %v915
    %1070 = vst [vmem:[%s1056 + $0xd0] sm:$0xff] %v916
    %1071 = vst [vmem:[%s1056 + $0xe8] sm:$0xff] %v917
    %1072 = vst [vmem:[%s1056 + $0xf0] sm:$0xff] %v918
    %1073 = vst [vmem:[%s1056 + $0x108] sm:$0xff] %v919
    %1074 = vst [vmem:[%s1056 + $0x110] sm:$0xff] %v920
    %1075 = vst [vmem:[%s1056 + $0x128] sm:$0xff] %v921
    %1076 = vst [vmem:[%s1056 + $0x130] sm:$0xff] %v922
    %1077 = vst [vmem:[%s1056 + $0x148] sm:$0xff] %v923
    %1078 = vst [vmem:[%s1056 + $0x150] sm:$0xff] %v924
    %1079 = vst [vmem:[%s1056 + $0x168] sm:$0xff] %v925
    %1080 = vst [vmem:[%s1056 + $0x170] sm:$0xff] %v926
    %1081 = vst [vmem:[%s1056 + $0x188] sm:$0xff] %v927
    %1082 = vst [vmem:[%s1056 + $0x190] sm:$0xff] %v928
    %1083 = vst [vmem:[%s1056 + $0x1a8] sm:$0xff] %v929
    %1084 = vst [vmem:[%s1056 + $0x1b0] sm:$0xff] %v930
    %1085 = vst [vmem:[%s1056 + $0x1c8] sm:$0xff] %v931
    %1086 = vst [vmem:[%s1056 + $0x1d0] sm:$0xff] %v932
    %1087 = vst [vmem:[%s1056 + $0x1e8] sm:$0xff] %v933
    %1088 = vst [vmem:[%s1056 + $0x1f0] sm:$0xff] %v934
    %1089 = vst [vmem:[%s1056 + $0x248] sm:$0xff] %v935
    %1090 = vst [vmem:[%s1056 + $0x250] sm:$0xff] %v936
    %1091 = vst [vmem:[%s1056 + $0x268] sm:$0xff] %v937
    %1092 = vst [vmem:[%s1056 + $0x270] sm:$0xff] %v938
    %1093 = vst [vmem:[%s1056 + $0x288] sm:$0xff] %v939
    %1094 = vst [vmem:[%s1056 + $0x290] sm:$0xff] %v940
    %1095 = vst [vmem:[%s1056 + $0x2a8] sm:$0xff] %v941
    %1096 = vst [vmem:[%s1056 + $0x2b0] sm:$0xff] %v942
    %1097 = vst [vmem:[%s1056 + $0x2c8] sm:$0xff] %v943
    %1098 = vst [vmem:[%s1056 + $0x2d0] sm:$0xff] %v944
    %1099 = vst [vmem:[%s1056 + $0x2e8] sm:$0xff] %v945
    %1100 = vst [vmem:[%s1056 + $0x2f0] sm:$0xff] %v946
    %1101 = vst [vmem:[%s1056 + $0x308] sm:$0xff] %v947
    %1102 = vst [vmem:[%s1056 + $0x310] sm:$0xff] %v948
    %1103 = vst [vmem:[%s1056 + $0x328] sm:$0xff] %v949
    %1104 = vst [vmem:[%s1056 + $0x330] sm:$0xff] %v950
    %1105 = vst [vmem:[%s1056 + $0x348] sm:$0xff] %v951
    %1106 = vst [vmem:[%s1056 + $0x350] sm:$0xff] %v952
    %1107 = vst [vmem:[%s1056 + $0x368] sm:$0xff] %v953
    %1108 = vst [vmem:[%s1056 + $0x370] sm:$0xff] %v954
    %1109 = vst [vmem:[%s1056 + $0x388] sm:$0xff] %v955
    %1110 = vst [vmem:[%s1056 + $0x390] sm:$0xff] %v956
    %1111 = vst [vmem:[%s1056 + $0x3a8] sm:$0xff] %v957
    %1112 = vst [vmem:[%s1056 + $0x3b0] sm:$0xff] %v958
    %1113 = vst [vmem:[%s1056 + $0x3c8] sm:$0xff] %v959
    %1114 = vst [vmem:[%s1056 + $0x3d0] sm:$0xff] %v960
    %1115 = vst [vmem:[%s1056 + $0x3e8] sm:$0xff] %v961
    %1116 = vst [vmem:[%s1056 + $0x3f0] sm:$0xff] %v962
    %1117 = vst [vmem:[%s1056 + $0x408] sm:$0xff] %v963
    %1118 = vst [vmem:[%s1056 + $0x410] sm:$0xff] %v964
    %1119 = vst [vmem:[%s1056 + $0x428] sm:$0xff] %v965
    %1120 = vst [vmem:[%s1056 + $0x430] sm:$0xff] %v966
    %v1121 = vld [vmem:[#allocation2] sm:$0xff]
    %v1122 = vld [vmem:[#allocation2 + $0x8] sm:$0xff]
    %v1123 = vld [vmem:[#allocation2 + $0x10] sm:$0xff]
    %v1124 = vld [vmem:[#allocation2 + $0x18] sm:$0xff]
    %v1125 = vld [vmem:[#allocation2 + $0x20] sm:$0xff]
    %v1126 = vld [vmem:[#allocation2 + $0x28] sm:$0xff]
    %v1127 = vld [vmem:[#allocation2 + $0x30] sm:$0xff]
    %v1128 = vld [vmem:[#allocation2 + $0x38] sm:$0xff]
    %v1129 = vld [vmem:[#allocation2 + $0x40] sm:$0xff]
    %v1130 = vld [vmem:[#allocation2 + $0x48] sm:$0xff]
    %v1131 = vld [vmem:[#allocation2 + $0x50] sm:$0xff]
    %v1132 = vld [vmem:[#allocation2 + $0x58] sm:$0xff]
    %v1133 = vld [vmem:[#allocation2 + $0x60] sm:$0xff]
    %v1134 = vld [vmem:[#allocation2 + $0x68] sm:$0xff]
    %v1135 = vld [vmem:[#allocation2 + $0x70] sm:$0xff]
    %v1136 = vld [vmem:[#allocation2 + $0x78] sm:$0xff]
    %v1137 = vld [vmem:[#allocation2 + $0x80] sm:$0xff]
    %v1138 = vld [vmem:[#allocation2 + $0x88] sm:$0xff]
    %v1139 = vld [vmem:[#allocation2 + $0x90] sm:$0xff]
    %v1140 = vld [vmem:[#allocation2 + $0x98] sm:$0xff]
    %v1141 = vld [vmem:[#allocation2 + $0xa0] sm:$0xff]
    %v1142 = vld [vmem:[#allocation2 + $0xa8] sm:$0xff]
    %v1143 = vld [vmem:[#allocation2 + $0xb0] sm:$0xff]
    %v1144 = vld [vmem:[#allocation2 + $0xb8] sm:$0xff]
    %v1145 = vld [vmem:[#allocation2 + $0xc0] sm:$0xff]
    %v1146 = vld [vmem:[#allocation2 + $0xc8] sm:$0xff]
    %v1147 = vld [vmem:[#allocation2 + $0xd0] sm:$0xff]
    %v1148 = vld [vmem:[#allocation2 + $0xd8] sm:$0xff]
    %v1149 = vld [vmem:[#allocation2 + $0xe0] sm:$0xff]
    %v1150 = vld [vmem:[#allocation2 + $0xe8] sm:$0xff]
    %v1151 = vld [vmem:[#allocation2 + $0xf0] sm:$0xff]
    %v1152 = vld [vmem:[#allocation2 + $0xf8] sm:$0xff]
    %v1153 = vld [vmem:[#allocation2 + $0x100] sm:$0xff]
    %v1154 = vld [vmem:[#allocation2 + $0x108] sm:$0xff]
    %v1155 = vld [vmem:[#allocation2 + $0x110] sm:$0xff]
    %v1156 = vld [vmem:[#allocation2 + $0x118] sm:$0xff]
    %v1157 = vld [vmem:[#allocation2 + $0x120] sm:$0xff]
    %v1158 = vld [vmem:[#allocation2 + $0x128] sm:$0xff]
    %v1159 = vld [vmem:[#allocation2 + $0x130] sm:$0xff]
    %v1160 = vld [vmem:[#allocation2 + $0x138] sm:$0xff]
    %v1161 = vld [vmem:[#allocation2 + $0x140] sm:$0xff]
    %v1162 = vld [vmem:[#allocation2 + $0x148] sm:$0xff]
    %v1163 = vld [vmem:[#allocation2 + $0x150] sm:$0xff]
    %v1164 = vld [vmem:[#allocation2 + $0x158] sm:$0xff]
    %v1165 = vld [vmem:[#allocation2 + $0x160] sm:$0xff]
    %v1166 = vld [vmem:[#allocation2 + $0x168] sm:$0xff]
    %v1167 = vld [vmem:[#allocation2 + $0x170] sm:$0xff]
    %v1168 = vld [vmem:[#allocation2 + $0x178] sm:$0xff]
    %v1169 = vld [vmem:[#allocation2 + $0x180] sm:$0xff]
    %v1170 = vld [vmem:[#allocation2 + $0x188] sm:$0xff]
    %v1171 = vld [vmem:[#allocation2 + $0x190] sm:$0xff]
    %v1172 = vld [vmem:[#allocation2 + $0x198] sm:$0xff]
    %v1173 = vld [vmem:[#allocation2 + $0x1a0] sm:$0xff]
    %v1174 = vld [vmem:[#allocation2 + $0x1a8] sm:$0xff]
    %v1175 = vld [vmem:[#allocation2 + $0x1b0] sm:$0xff]
    %v1176 = vld [vmem:[#allocation2 + $0x1b8] sm:$0xff]
    %v1177 = vld [vmem:[#allocation2 + $0x1c0] sm:$0xff]
    %v1178 = vld [vmem:[#allocation2 + $0x1c8] sm:$0xff]
    %v1179 = vld [vmem:[#allocation2 + $0x1d0] sm:$0xff]
    %v1180 = vld [vmem:[#allocation2 + $0x1d8] sm:$0xff]
    %v1181 = vld [vmem:[#allocation2 + $0x1e0] sm:$0xff]
    %v1182 = vld [vmem:[#allocation2 + $0x1e8] sm:$0xff]
    %v1183 = vld [vmem:[#allocation2 + $0x1f0] sm:$0xff]
    %v1184 = vld [vmem:[#allocation2 + $0x1f8] sm:$0xff]
    %v1185 = vld [vmem:[#allocation2 + $0x200] sm:$0xff]
    %v1186 = vld [vmem:[#allocation2 + $0x208] sm:$0xff]
    %v1187 = vld [vmem:[#allocation2 + $0x210] sm:$0xff]
    %v1188 = vld [vmem:[#allocation2 + $0x218] sm:$0xff]
    %v1189 = vld [vmem:[#allocation2 + $0x220] sm:$0xff]
    %v1190 = vld [vmem:[#allocation2 + $0x228] sm:$0xff]
    %v1191 = vld [vmem:[#allocation2 + $0x230] sm:$0xff]
    %v1192 = vld [vmem:[#allocation2 + $0x238] sm:$0xff]
    %v1193 = vld [vmem:[#allocation2 + $0x240] sm:$0xff]
    %v1194 = vld [vmem:[#allocation2 + $0x248] sm:$0xff]
    %v1195 = vld [vmem:[#allocation2 + $0x250] sm:$0xff]
    %v1196 = vld [vmem:[#allocation2 + $0x258] sm:$0xff]
    %v1197 = vld [vmem:[#allocation2 + $0x260] sm:$0xff]
    %v1198 = vld [vmem:[#allocation2 + $0x268] sm:$0xff]
    %v1199 = vld [vmem:[#allocation2 + $0x270] sm:$0xff]
    %v1200 = vld [vmem:[#allocation2 + $0x278] sm:$0xff]
    %v1201 = vld [vmem:[#allocation2 + $0x280] sm:$0xff]
    %v1202 = vld [vmem:[#allocation2 + $0x288] sm:$0xff]
    %v1203 = vld [vmem:[#allocation2 + $0x290] sm:$0xff]
    %v1204 = vld [vmem:[#allocation2 + $0x298] sm:$0xff]
    %v1205 = vld [vmem:[#allocation2 + $0x2a0] sm:$0xff]
    %v1206 = vld [vmem:[#allocation2 + $0x2a8] sm:$0xff]
    %v1207 = vld [vmem:[#allocation2 + $0x2b0] sm:$0xff]
    %v1208 = vld [vmem:[#allocation2 + $0x2b8] sm:$0xff]
    %v1209 = vld [vmem:[#allocation2 + $0x2c0] sm:$0xff]
    %v1210 = vld [vmem:[#allocation2 + $0x2c8] sm:$0xff]
    %v1211 = vld [vmem:[#allocation2 + $0x2d0] sm:$0xff]
    %v1212 = vld [vmem:[#allocation2 + $0x2d8] sm:$0xff]
    %v1213 = vld [vmem:[#allocation2 + $0x2e0] sm:$0xff]
    %v1214 = vld [vmem:[#allocation2 + $0x2e8] sm:$0xff]
    %v1215 = vld [vmem:[#allocation2 + $0x2f0] sm:$0xff]
    %v1216 = vld [vmem:[#allocation2 + $0x2f8] sm:$0xff]
    %v1217 = vld [vmem:[#allocation2 + $0x300] sm:$0xff]
    %v1218 = vld [vmem:[#allocation2 + $0x308] sm:$0xff]
    %v1219 = vld [vmem:[#allocation2 + $0x310] sm:$0xff]
    %v1220 = vld [vmem:[#allocation2 + $0x318] sm:$0xff]
    %v1221 = vld [vmem:[#allocation2 + $0x320] sm:$0xff]
    %v1222 = vld [vmem:[#allocation2 + $0x328] sm:$0xff]
    %v1223 = vld [vmem:[#allocation2 + $0x330] sm:$0xff]
    %v1224 = vld [vmem:[#allocation2 + $0x338] sm:$0xff]
    %v1225 = vld [vmem:[#allocation2 + $0x340] sm:$0xff]
    %v1226 = vld [vmem:[#allocation2 + $0x348] sm:$0xff]
    %v1227 = vld [vmem:[#allocation2 + $0x350] sm:$0xff]
    %v1228 = vld [vmem:[#allocation2 + $0x358] sm:$0xff]
    %v1229 = vld [vmem:[#allocation2 + $0x360] sm:$0xff]
    %v1230 = vld [vmem:[#allocation2 + $0x368] sm:$0xff]
    %v1231 = vld [vmem:[#allocation2 + $0x370] sm:$0xff]
    %v1232 = vld [vmem:[#allocation2 + $0x378] sm:$0xff]
    %v1233 = vld [vmem:[#allocation2 + $0x380] sm:$0xff]
    %v1234 = vld [vmem:[#allocation2 + $0x388] sm:$0xff]
    %v1235 = vld [vmem:[#allocation2 + $0x390] sm:$0xff]
    %v1236 = vld [vmem:[#allocation2 + $0x398] sm:$0xff]
    %v1237 = vld [vmem:[#allocation2 + $0x3a0] sm:$0xff]
    %v1238 = vld [vmem:[#allocation2 + $0x3a8] sm:$0xff]
    %v1239 = vld [vmem:[#allocation2 + $0x3b0] sm:$0xff]
    %v1240 = vld [vmem:[#allocation2 + $0x3b8] sm:$0xff]
    %v1241 = vld [vmem:[#allocation2 + $0x3c0] sm:$0xff]
    %v1242 = vld [vmem:[#allocation2 + $0x3c8] sm:$0xff]
    %v1243 = vld [vmem:[#allocation2 + $0x3d0] sm:$0xff]
    %v1244 = vld [vmem:[#allocation2 + $0x3d8] sm:$0xff]
    %v1245 = vld [vmem:[#allocation2 + $0x3e0] sm:$0xff]
    %v1246 = vld [vmem:[#allocation2 + $0x3e8] sm:$0xff]
    %v1247 = vld [vmem:[#allocation2 + $0x3f0] sm:$0xff]
    %v1248 = vld [vmem:[#allocation2 + $0x3f8] sm:$0xff]
    %v1249 = vld [vmem:[#allocation2 + $0x400] sm:$0xff]
    %v1250 = vld [vmem:[#allocation2 + $0x408] sm:$0xff]
    %v1251 = vld [vmem:[#allocation2 + $0x410] sm:$0xff]
    %v1252 = vld [vmem:[#allocation2 + $0x418] sm:$0xff]
    %v1253 = vld [vmem:[#allocation2 + $0x420] sm:$0xff]
    %v1254 = vld [vmem:[#allocation2 + $0x428] sm:$0xff]
    %v1255 = vld [vmem:[#allocation2 + $0x430] sm:$0xff]
    %v1256 = vld [vmem:[#allocation2 + $0x438] sm:$0xff]
    %v1257 = vld [vmem:[#allocation2 + $0x440] sm:$0xff]
    %v1258 = vld [vmem:[#allocation2 + $0x448] sm:$0xff]
    %v1259 = vld [vmem:[#allocation2 + $0x450] sm:$0xff]
    %v1260 = vld [vmem:[#allocation2 + $0x458] sm:$0xff]
    %v1261 = vld [vmem:[#allocation2 + $0x460] sm:$0xff]
    %v1262 = vld [vmem:[#allocation2 + $0x468] sm:$0xff]
    %v1263 = vld [vmem:[#allocation2 + $0x470] sm:$0xff]
    %v1264 = vld [vmem:[#allocation2 + $0x478] sm:$0xff]
    %vm1361 = vcmask 1040384
    %v1362 = vrot.slane %v1121, 7
    %v1363 = vrot.slane %v1122, 7
    %v1364 = vsel %vm1361, %v1362, %v1363
    %v1365 = vrot.slane %v1123, 7
    %v1366 = vsel %vm1361, %v1363, %v1365
    %v1367 = vrot.slane %v1125, 7
    %v1368 = vrot.slane %v1126, 7
    %v1369 = vsel %vm1361, %v1367, %v1368
    %v1370 = vrot.slane %v1127, 7
    %v1371 = vsel %vm1361, %v1368, %v1370
    %v1372 = vrot.slane %v1129, 7
    %v1373 = vrot.slane %v1130, 7
    %v1374 = vsel %vm1361, %v1372, %v1373
    %v1375 = vrot.slane %v1131, 7
    %v1376 = vsel %vm1361, %v1373, %v1375
    %v1377 = vrot.slane %v1133, 7
    %v1378 = vrot.slane %v1134, 7
    %v1379 = vsel %vm1361, %v1377, %v1378
    %v1380 = vrot.slane %v1135, 7
    %v1381 = vsel %vm1361, %v1378, %v1380
    %v1382 = vrot.slane %v1137, 7
    %v1383 = vrot.slane %v1138, 7
    %v1384 = vsel %vm1361, %v1382, %v1383
    %v1385 = vrot.slane %v1139, 7
    %v1386 = vsel %vm1361, %v1383, %v1385
    %v1387 = vrot.slane %v1141, 7
    %v1388 = vrot.slane %v1142, 7
    %v1389 = vsel %vm1361, %v1387, %v1388
    %v1390 = vrot.slane %v1143, 7
    %v1391 = vsel %vm1361, %v1388, %v1390
    %v1392 = vrot.slane %v1145, 7
    %v1393 = vrot.slane %v1146, 7
    %v1394 = vsel %vm1361, %v1392, %v1393
    %v1395 = vrot.slane %v1147, 7
    %v1396 = vsel %vm1361, %v1393, %v1395
    %v1397 = vrot.slane %v1149, 7
    %v1398 = vrot.slane %v1150, 7
    %v1399 = vsel %vm1361, %v1397, %v1398
    %v1400 = vrot.slane %v1151, 7
    %v1401 = vsel %vm1361, %v1398, %v1400
    %v1402 = vrot.slane %v1153, 7
    %v1403 = vrot.slane %v1154, 7
    %v1404 = vsel %vm1361, %v1402, %v1403
    %v1405 = vrot.slane %v1155, 7
    %v1406 = vsel %vm1361, %v1403, %v1405
    %v1407 = vrot.slane %v1157, 7
    %v1408 = vrot.slane %v1158, 7
    %v1409 = vsel %vm1361, %v1407, %v1408
    %v1410 = vrot.slane %v1159, 7
    %v1411 = vsel %vm1361, %v1408, %v1410
    %v1412 = vrot.slane %v1161, 7
    %v1413 = vrot.slane %v1162, 7
    %v1414 = vsel %vm1361, %v1412, %v1413
    %v1415 = vrot.slane %v1163, 7
    %v1416 = vsel %vm1361, %v1413, %v1415
    %v1417 = vrot.slane %v1165, 7
    %v1418 = vrot.slane %v1166, 7
    %v1419 = vsel %vm1361, %v1417, %v1418
    %v1420 = vrot.slane %v1167, 7
    %v1421 = vsel %vm1361, %v1418, %v1420
    %v1422 = vrot.slane %v1169, 7
    %v1423 = vrot.slane %v1170, 7
    %v1424 = vsel %vm1361, %v1422, %v1423
    %v1425 = vrot.slane %v1171, 7
    %v1426 = vsel %vm1361, %v1423, %v1425
    %v1427 = vrot.slane %v1173, 7
    %v1428 = vrot.slane %v1174, 7
    %v1429 = vsel %vm1361, %v1427, %v1428
    %v1430 = vrot.slane %v1175, 7
    %v1431 = vsel %vm1361, %v1428, %v1430
    %v1432 = vrot.slane %v1177, 7
    %v1433 = vrot.slane %v1178, 7
    %v1434 = vsel %vm1361, %v1432, %v1433
    %v1435 = vrot.slane %v1179, 7
    %v1436 = vsel %vm1361, %v1433, %v1435
    %v1437 = vrot.slane %v1181, 7
    %v1438 = vrot.slane %v1182, 7
    %v1439 = vsel %vm1361, %v1437, %v1438
    %v1440 = vrot.slane %v1183, 7
    %v1441 = vsel %vm1361, %v1438, %v1440
    %v1442 = vrot.slane %v1193, 7
    %v1443 = vrot.slane %v1194, 7
    %v1444 = vsel %vm1361, %v1442, %v1443
    %v1445 = vrot.slane %v1195, 7
    %v1446 = vsel %vm1361, %v1443, %v1445
    %v1447 = vrot.slane %v1197, 7
    %v1448 = vrot.slane %v1198, 7
    %v1449 = vsel %vm1361, %v1447, %v1448
    %v1450 = vrot.slane %v1199, 7
    %v1451 = vsel %vm1361, %v1448, %v1450
    %v1452 = vrot.slane %v1201, 7
    %v1453 = vrot.slane %v1202, 7
    %v1454 = vsel %vm1361, %v1452, %v1453
    %v1455 = vrot.slane %v1203, 7
    %v1456 = vsel %vm1361, %v1453, %v1455
    %v1457 = vrot.slane %v1205, 7
    %v1458 = vrot.slane %v1206, 7
    %v1459 = vsel %vm1361, %v1457, %v1458
    %v1460 = vrot.slane %v1207, 7
    %v1461 = vsel %vm1361, %v1458, %v1460
    %v1462 = vrot.slane %v1209, 7
    %v1463 = vrot.slane %v1210, 7
    %v1464 = vsel %vm1361, %v1462, %v1463
    %v1465 = vrot.slane %v1211, 7
    %v1466 = vsel %vm1361, %v1463, %v1465
    %v1467 = vrot.slane %v1213, 7
    %v1468 = vrot.slane %v1214, 7
    %v1469 = vsel %vm1361, %v1467, %v1468
    %v1470 = vrot.slane %v1215, 7
    %v1471 = vsel %vm1361, %v1468, %v1470
    %v1472 = vrot.slane %v1217, 7
    %v1473 = vrot.slane %v1218, 7
    %v1474 = vsel %vm1361, %v1472, %v1473
    %v1475 = vrot.slane %v1219, 7
    %v1476 = vsel %vm1361, %v1473, %v1475
    %v1477 = vrot.slane %v1221, 7
    %v1478 = vrot.slane %v1222, 7
    %v1479 = vsel %vm1361, %v1477, %v1478
    %v1480 = vrot.slane %v1223, 7
    %v1481 = vsel %vm1361, %v1478, %v1480
    %v1482 = vrot.slane %v1225, 7
    %v1483 = vrot.slane %v1226, 7
    %v1484 = vsel %vm1361, %v1482, %v1483
    %v1485 = vrot.slane %v1227, 7
    %v1486 = vsel %vm1361, %v1483, %v1485
    %v1487 = vrot.slane %v1229, 7
    %v1488 = vrot.slane %v1230, 7
    %v1489 = vsel %vm1361, %v1487, %v1488
    %v1490 = vrot.slane %v1231, 7
    %v1491 = vsel %vm1361, %v1488, %v1490
    %v1492 = vrot.slane %v1233, 7
    %v1493 = vrot.slane %v1234, 7
    %v1494 = vsel %vm1361, %v1492, %v1493
    %v1495 = vrot.slane %v1235, 7
    %v1496 = vsel %vm1361, %v1493, %v1495
    %v1497 = vrot.slane %v1237, 7
    %v1498 = vrot.slane %v1238, 7
    %v1499 = vsel %vm1361, %v1497, %v1498
    %v1500 = vrot.slane %v1239, 7
    %v1501 = vsel %vm1361, %v1498, %v1500
    %v1502 = vrot.slane %v1241, 7
    %v1503 = vrot.slane %v1242, 7
    %v1504 = vsel %vm1361, %v1502, %v1503
    %v1505 = vrot.slane %v1243, 7
    %v1506 = vsel %vm1361, %v1503, %v1505
    %v1507 = vrot.slane %v1245, 7
    %v1508 = vrot.slane %v1246, 7
    %v1509 = vsel %vm1361, %v1507, %v1508
    %v1510 = vrot.slane %v1247, 7
    %v1511 = vsel %vm1361, %v1508, %v1510
    %v1512 = vrot.slane %v1249, 7
    %v1513 = vrot.slane %v1250, 7
    %v1514 = vsel %vm1361, %v1512, %v1513
    %v1515 = vrot.slane %v1251, 7
    %v1516 = vsel %vm1361, %v1513, %v1515
    %v1517 = vrot.slane %v1253, 7
    %v1518 = vrot.slane %v1254, 7
    %v1519 = vsel %vm1361, %v1517, %v1518
    %v1520 = vrot.slane %v1255, 7
    %v1521 = vsel %vm1361, %v1518, %v1520
    %v1586 = vld [vmem:[#allocation9] sm:$0xff]
    %v1587 = vld [vmem:[#allocation9 + $0x8] sm:$0xff]
    %v1588 = vld [vmem:[#allocation9 + $0x10] sm:$0xff]
    %v1589 = vld [vmem:[#allocation9 + $0x18] sm:$0xff]
    %v1590 = vld [vmem:[#allocation9 + $0x20] sm:$0xff]
    %v1591 = vld [vmem:[#allocation9 + $0x28] sm:$0xff]
    %v1592 = vld [vmem:[#allocation9 + $0x30] sm:$0xff]
    %v1593 = vld [vmem:[#allocation9 + $0x38] sm:$0xff]
    %v1594 = vld [vmem:[#allocation9 + $0x40] sm:$0xff]
    %v1595 = vld [vmem:[#allocation9 + $0x48] sm:$0xff]
    %v1596 = vld [vmem:[#allocation9 + $0x50] sm:$0xff]
    %v1597 = vld [vmem:[#allocation9 + $0x58] sm:$0xff]
    %v1598 = vld [vmem:[#allocation9 + $0x60] sm:$0xff]
    %v1599 = vld [vmem:[#allocation9 + $0x68] sm:$0xff]
    %v1600 = vld [vmem:[#allocation9 + $0x70] sm:$0xff]
    %v1601 = vld [vmem:[#allocation9 + $0x78] sm:$0xff]
    %s1602 = scalar_lea.vmem [#allocation9], 128
    %v1603 = vld [vmem:[%s1602] sm:$0xff]
    %v1604 = vld [vmem:[%s1602 + $0x8] sm:$0xff]
    %v1605 = vld [vmem:[%s1602 + $0x10] sm:$0xff]
    %v1606 = vld [vmem:[%s1602 + $0x18] sm:$0xff]
    %v1607 = vld [vmem:[%s1602 + $0x20] sm:$0xff]
    %v1608 = vld [vmem:[%s1602 + $0x28] sm:$0xff]
    %v1609 = vld [vmem:[%s1602 + $0x30] sm:$0xff]
    %v1610 = vld [vmem:[%s1602 + $0x38] sm:$0xff]
    %v1611 = vld [vmem:[%s1602 + $0x40] sm:$0xff]
    %v1612 = vld [vmem:[%s1602 + $0x48] sm:$0xff]
    %v1613 = vld [vmem:[%s1602 + $0x50] sm:$0xff]
    %v1614 = vld [vmem:[%s1602 + $0x58] sm:$0xff]
    %v1615 = vld [vmem:[%s1602 + $0x60] sm:$0xff]
    %v1616 = vld [vmem:[%s1602 + $0x68] sm:$0xff]
    %v1617 = vld [vmem:[%s1602 + $0x70] sm:$0xff]
    %v1618 = vld [vmem:[%s1602 + $0x78] sm:$0xff]
    %1619 = vmatprep.subr.mxu0 0.0
    %1620 = vmatpush1.msra.mxu0 %v1603
    %1621 = vmatprep.subr.mxu0 0.0
    %1622 = vmatpush1.msra.mxu0 %v1604
    %1623 = vmatprep.subr.mxu0 0.0
    %1624 = vmatpush1.msra.mxu0 %v1605
    %1625 = vmatprep.subr.mxu0 0.0
    %1626 = vmatpush1.msra.mxu0 %v1606
    %1627 = vmatprep.subr.mxu0 0.0
    %1628 = vmatpush1.msra.mxu0 %v1607
    %1629 = vmatprep.subr.mxu0 0.0
    %1630 = vmatpush1.msra.mxu0 %v1608
    %1631 = vmatprep.subr.mxu0 0.0
    %1632 = vmatpush1.msra.mxu0 %v1609
    %1633 = vmatprep.subr.mxu0 0.0
    %1634 = vmatpush1.msra.mxu0 %v1610
    %1635 = vmatprep.subr.mxu0 0.0
    %1636 = vmatpush1.msra.mxu0 %v1611
    %1637 = vmatprep.subr.mxu0 0.0
    %1638 = vmatpush1.msra.mxu0 %v1612
    %1639 = vmatprep.subr.mxu0 0.0
    %1640 = vmatpush1.msra.mxu0 %v1613
    %1641 = vmatprep.subr.mxu0 0.0
    %1642 = vmatpush1.msra.mxu0 %v1614
    %1643 = vmatprep.subr.mxu0 0.0
    %1644 = vmatpush1.msra.mxu0 %v1615
    %1645 = vmatprep.subr.mxu0 0.0
    %1646 = vmatpush1.msra.mxu0 %v1616
    %1647 = vmatprep.subr.mxu0 0.0
    %1648 = vmatpush1.msra.mxu0 %v1617
    %1649 = vmatprep.subr.mxu0 0.0
    %1650 = vmatpush1.msra.mxu0 %v1618
    %1651 = vmatprep.subr.mxu0 0.0
    %1652 = vmatpush1.msra.mxu0 0.0
    %1653 = vmatprep.subr.mxu0 0.0
    %1654 = vmatpush1.msra.mxu0 0.0
    %1655 = vmatprep.subr.mxu0 0.0
    %1656 = vmatpush1.msra.mxu0 0.0
    %1657 = vmatprep.subr.mxu0 0.0
    %1658 = vmatpush1.msra.mxu0 0.0
    %1659 = vmatprep.subr.mxu0 0.0
    %1660 = vmatpush1.msra.mxu0 0.0
    %1661 = vmatprep.subr.mxu0 0.0
    %1662 = vmatpush1.msra.mxu0 0.0
    %1663 = vmatprep.subr.mxu0 0.0
    %1664 = vmatpush1.msra.mxu0 0.0
    %1665 = vmatprep.subr.mxu0 0.0
    %1666 = vmatpush1.msra.mxu0 0.0
    %1667 = vmatprep.subr.mxu0 0.0
    %1668 = vmatpush1.msra.mxu0 0.0
    %1669 = vmatprep.subr.mxu0 0.0
    %1670 = vmatpush1.msra.mxu0 0.0
    %1671 = vmatprep.subr.mxu0 0.0
    %1672 = vmatpush1.msra.mxu0 0.0
    %1673 = vmatprep.subr.mxu0 0.0
    %1674 = vmatpush1.msra.mxu0 0.0
    %1675 = vmatprep.subr.mxu0 0.0
    %1676 = vmatpush1.msra.mxu0 0.0
    %1677 = vmatprep.subr.mxu0 0.0
    %1678 = vmatpush1.msra.mxu0 0.0
    %1679 = vmatprep.subr.mxu0 0.0
    %1680 = vmatpush1.msra.mxu0 0.0
    %1681 = vmatprep.subr.mxu0 0.0
    %1682 = vmatpush1.msra.mxu0 0.0
    %1683 = vmatprep.mubr.f32.mxu0 0.0
    %1684 = vmatmul.mubr.f32.gmra.mrb[0].mxu0 %v1122
    %v1685 = vpop.f32.mrb[0].mxu0
    %v1686 = vadd.f32 0.0, %v1685
    %v1687 = vpop.f32.mrb[0].mxu0
    %1688 = vmatprep.mubr.f32.mxu0 0.0
    %1689 = vmatmul.mubr.f32.gmra.mrb[0].mxu0 %v1123
    %v1690 = vpop.f32.mrb[0].mxu0
    %v1691 = vadd.f32 0.0, %v1690
    %v1692 = vpop.f32.mrb[0].mxu0
    %1693 = vmatprep.mubr.f32.mxu0 0.0
    %1694 = vmatmul.mubr.f32.gmra.mrb[0].mxu0 %v1126
    %v1695 = vpop.f32.mrb[0].mxu0
    %v1696 = vadd.f32 0.0, %v1695
    %v1697 = vpop.f32.mrb[0].mxu0
    %1698 = vmatprep.mubr.f32.mxu0 0.0
    %1699 = vmatmul.mubr.f32.gmra.mrb[0].mxu0 %v1127
    %v1700 = vpop.f32.mrb[0].mxu0
    %v1701 = vadd.f32 0.0, %v1700
    %v1702 = vpop.f32.mrb[0].mxu0
    %1703 = vmatprep.mubr.f32.mxu0 0.0
    %1704 = vmatmul.mubr.f32.gmra.mrb[0].mxu0 %v1130
    %v1705 = vpop.f32.mrb[0].mxu0
    %v1706 = vadd.f32 0.0, %v1705
    %v1707 = vpop.f32.mrb[0].mxu0
    %1708 = vmatprep.mubr.f32.mxu0 0.0
    %1709 = vmatmul.mubr.f32.gmra.mrb[0].mxu0 %v1131
    %v1710 = vpop.f32.mrb[0].mxu0
    %v1711 = vadd.f32 0.0, %v1710
    %v1712 = vpop.f32.mrb[0].mxu0
    %1713 = vmatprep.mubr.f32.mxu0 0.0
    %1714 = vmatmul.mubr.f32.gmra.mrb[0].mxu0 %v1134
    %v1715 = vpop.f32.mrb[0].mxu0
    %v1716 = vadd.f32 0.0, %v1715
    %v1717 = vpop.f32.mrb[0].mxu0
    %1718 = vmatprep.mubr.f32.mxu0 0.0
    %1719 = vmatmul.mubr.f32.gmra.mrb[0].mxu0 %v1135
    %v1720 = vpop.f32.mrb[0].mxu0
    %v1721 = vadd.f32 0.0, %v1720
    %v1722 = vpop.f32.mrb[0].mxu0
    %1723 = vmatprep.mubr.f32.mxu0 0.0
    %1724 = vmatmul.mubr.f32.gmra.mrb[0].mxu0 %v1138
    %v1725 = vpop.f32.mrb[0].mxu0
    %v1726 = vadd.f32 0.0, %v1725
    %v1727 = vpop.f32.mrb[0].mxu0
    %1728 = vmatprep.mubr.f32.mxu0 0.0
    %1729 = vmatmul.mubr.f32.gmra.mrb[0].mxu0 %v1139
    %v1730 = vpop.f32.mrb[0].mxu0
    %v1731 = vadd.f32 0.0, %v1730
    %v1732 = vpop.f32.mrb[0].mxu0
    %1733 = vmatprep.mubr.f32.mxu0 0.0
    %1734 = vmatmul.mubr.f32.gmra.mrb[0].mxu0 %v1142
    %v1735 = vpop.f32.mrb[0].mxu0
    %v1736 = vadd.f32 0.0, %v1735
    %v1737 = vpop.f32.mrb[0].mxu0
    %1738 = vmatprep.mubr.f32.mxu0 0.0
    %1739 = vmatmul.mubr.f32.gmra.mrb[0].mxu0 %v1143
    %v1740 = vpop.f32.mrb[0].mxu0
    %v1741 = vadd.f32 0.0, %v1740
    %v1742 = vpop.f32.mrb[0].mxu0
    %1743 = vmatprep.mubr.f32.mxu0 0.0
    %1744 = vmatmul.mubr.f32.gmra.mrb[0].mxu0 %v1146
    %v1745 = vpop.f32.mrb[0].mxu0
    %v1746 = vadd.f32 0.0, %v1745
    %v1747 = vpop.f32.mrb[0].mxu0
    %1748 = vmatprep.mubr.f32.mxu0 0.0
    %1749 = vmatmul.mubr.f32.gmra.mrb[0].mxu0 %v1147
    %v1750 = vpop.f32.mrb[0].mxu0
    %v1751 = vadd.f32 0.0, %v1750
    %v1752 = vpop.f32.mrb[0].mxu0
    %1753 = vmatprep.mubr.f32.mxu0 0.0
    %1754 = vmatmul.mubr.f32.gmra.mrb[0].mxu0 %v1150
    %v1755 = vpop.f32.mrb[0].mxu0
    %v1756 = vadd.f32 0.0, %v1755
    %v1757 = vpop.f32.mrb[0].mxu0
    %1758 = vmatprep.mubr.f32.mxu0 0.0
    %1759 = vmatmul.mubr.f32.gmra.mrb[0].mxu0 %v1151
    %v1760 = vpop.f32.mrb[0].mxu0
    %v1761 = vadd.f32 0.0, %v1760
    %v1762 = vpop.f32.mrb[0].mxu0
    %1763 = vmatprep.mubr.f32.mxu0 0.0
    %1764 = vmatmul.mubr.f32.gmra.mrb[0].mxu0 %v1154
    %v1765 = vpop.f32.mrb[0].mxu0
    %v1766 = vadd.f32 0.0, %v1765
    %v1767 = vpop.f32.mrb[0].mxu0
    %1768 = vmatprep.mubr.f32.mxu0 0.0
    %1769 = vmatmul.mubr.f32.gmra.mrb[0].mxu0 %v1155
    %v1770 = vpop.f32.mrb[0].mxu0
    %v1771 = vadd.f32 0.0, %v1770
    %v1772 = vpop.f32.mrb[0].mxu0
    %1773 = vmatprep.mubr.f32.mxu0 0.0
    %1774 = vmatmul.mubr.f32.gmra.mrb[0].mxu0 %v1158
    %v1775 = vpop.f32.mrb[0].mxu0
    %v1776 = vadd.f32 0.0, %v1775
    %v1777 = vpop.f32.mrb[0].mxu0
    %1778 = vmatprep.mubr.f32.mxu0 0.0
    %1779 = vmatmul.mubr.f32.gmra.mrb[0].mxu0 %v1159
    %v1780 = vpop.f32.mrb[0].mxu0
    %v1781 = vadd.f32 0.0, %v1780
    %v1782 = vpop.f32.mrb[0].mxu0
    %1783 = vmatprep.mubr.f32.mxu0 0.0
    %1784 = vmatmul.mubr.f32.gmra.mrb[0].mxu0 %v1162
    %v1785 = vpop.f32.mrb[0].mxu0
    %v1786 = vadd.f32 0.0, %v1785
    %v1787 = vpop.f32.mrb[0].mxu0
    %1788 = vmatprep.mubr.f32.mxu0 0.0
    %1789 = vmatmul.mubr.f32.gmra.mrb[0].mxu0 %v1163
    %v1790 = vpop.f32.mrb[0].mxu0
    %v1791 = vadd.f32 0.0, %v1790
    %v1792 = vpop.f32.mrb[0].mxu0
    %1793 = vmatprep.mubr.f32.mxu0 0.0
    %1794 = vmatmul.mubr.f32.gmra.mrb[0].mxu0 %v1166
    %v1795 = vpop.f32.mrb[0].mxu0
    %v1796 = vadd.f32 0.0, %v1795
    %v1797 = vpop.f32.mrb[0].mxu0
    %1798 = vmatprep.mubr.f32.mxu0 0.0
    %1799 = vmatmul.mubr.f32.gmra.mrb[0].mxu0 %v1167
    %v1800 = vpop.f32.mrb[0].mxu0
    %v1801 = vadd.f32 0.0, %v1800
    %v1802 = vpop.f32.mrb[0].mxu0
    %1803 = vmatprep.mubr.f32.mxu0 0.0
    %1804 = vmatmul.mubr.f32.gmra.mrb[0].mxu0 %v1170
    %v1805 = vpop.f32.mrb[0].mxu0
    %v1806 = vadd.f32 0.0, %v1805
    %v1807 = vpop.f32.mrb[0].mxu0
    %1808 = vmatprep.mubr.f32.mxu0 0.0
    %1809 = vmatmul.mubr.f32.gmra.mrb[0].mxu0 %v1171
    %v1810 = vpop.f32.mrb[0].mxu0
    %v1811 = vadd.f32 0.0, %v1810
    %v1812 = vpop.f32.mrb[0].mxu0
    %1813 = vmatprep.mubr.f32.mxu0 0.0
    %1814 = vmatmul.mubr.f32.gmra.mrb[0].mxu0 %v1174
    %v1815 = vpop.f32.mrb[0].mxu0
    %v1816 = vadd.f32 0.0, %v1815
    %v1817 = vpop.f32.mrb[0].mxu0
    %1818 = vmatprep.mubr.f32.mxu0 0.0
    %1819 = vmatmul.mubr.f32.gmra.mrb[0].mxu0 %v1175
    %v1820 = vpop.f32.mrb[0].mxu0
    %v1821 = vadd.f32 0.0, %v1820
    %v1822 = vpop.f32.mrb[0].mxu0
    %1823 = vmatprep.mubr.f32.mxu0 0.0
    %1824 = vmatmul.mubr.f32.gmra.mrb[0].mxu0 %v1178
    %v1825 = vpop.f32.mrb[0].mxu0
    %v1826 = vadd.f32 0.0, %v1825
    %v1827 = vpop.f32.mrb[0].mxu0
    %1828 = vmatprep.mubr.f32.mxu0 0.0
    %1829 = vmatmul.mubr.f32.gmra.mrb[0].mxu0 %v1179
    %v1830 = vpop.f32.mrb[0].mxu0
    %v1831 = vadd.f32 0.0, %v1830
    %v1832 = vpop.f32.mrb[0].mxu0
    %1833 = vmatprep.mubr.f32.mxu0 0.0
    %1834 = vmatmul.mubr.f32.gmra.mrb[0].mxu0 %v1182
    %v1835 = vpop.f32.mrb[0].mxu0
    %v1836 = vadd.f32 0.0, %v1835
    %v1837 = vpop.f32.mrb[0].mxu0
    %1838 = vmatprep.mubr.f32.mxu0 0.0
    %1839 = vmatmul.mubr.f32.gmra.mrb[0].mxu0 %v1183
    %v1840 = vpop.f32.mrb[0].mxu0
    %v1841 = vadd.f32 0.0, %v1840
    %v1842 = vpop.f32.mrb[0].mxu0
    %1843 = vmatprep.mubr.f32.mxu0 0.0
    %1844 = vmatmul.mubr.f32.gmra.mrb[0].mxu0 %v1194
    %v1845 = vpop.f32.mrb[0].mxu0
    %v1846 = vadd.f32 0.0, %v1845
    %v1847 = vpop.f32.mrb[0].mxu0
    %1848 = vmatprep.mubr.f32.mxu0 0.0
    %1849 = vmatmul.mubr.f32.gmra.mrb[0].mxu0 %v1195
    %v1850 = vpop.f32.mrb[0].mxu0
    %v1851 = vadd.f32 0.0, %v1850
    %v1852 = vpop.f32.mrb[0].mxu0
    %1853 = vmatprep.mubr.f32.mxu0 0.0
    %1854 = vmatmul.mubr.f32.gmra.mrb[0].mxu0 %v1198
    %v1855 = vpop.f32.mrb[0].mxu0
    %v1856 = vadd.f32 0.0, %v1855
    %v1857 = vpop.f32.mrb[0].mxu0
    %1858 = vmatprep.mubr.f32.mxu0 0.0
    %1859 = vmatmul.mubr.f32.gmra.mrb[0].mxu0 %v1199
    %v1860 = vpop.f32.mrb[0].mxu0
    %v1861 = vadd.f32 0.0, %v1860
    %v1862 = vpop.f32.mrb[0].mxu0
    %1863 = vmatprep.mubr.f32.mxu0 0.0
    %1864 = vmatmul.mubr.f32.gmra.mrb[0].mxu0 %v1202
    %v1865 = vpop.f32.mrb[0].mxu0
    %v1866 = vadd.f32 0.0, %v1865
    %v1867 = vpop.f32.mrb[0].mxu0
    %1868 = vmatprep.mubr.f32.mxu0 0.0
    %1869 = vmatmul.mubr.f32.gmra.mrb[0].mxu0 %v1203
    %v1870 = vpop.f32.mrb[0].mxu0
    %v1871 = vadd.f32 0.0, %v1870
    %v1872 = vpop.f32.mrb[0].mxu0
    %1873 = vmatprep.mubr.f32.mxu0 0.0
    %1874 = vmatmul.mubr.f32.gmra.mrb[0].mxu0 %v1206
    %v1875 = vpop.f32.mrb[0].mxu0
    %v1876 = vadd.f32 0.0, %v1875
    %v1877 = vpop.f32.mrb[0].mxu0
    %1878 = vmatprep.mubr.f32.mxu0 0.0
    %1879 = vmatmul.mubr.f32.gmra.mrb[0].mxu0 %v1207
    %v1880 = vpop.f32.mrb[0].mxu0
    %v1881 = vadd.f32 0.0, %v1880
    %v1882 = vpop.f32.mrb[0].mxu0
    %1883 = vmatprep.mubr.f32.mxu0 0.0
    %1884 = vmatmul.mubr.f32.gmra.mrb[0].mxu0 %v1210
    %v1885 = vpop.f32.mrb[0].mxu0
    %v1886 = vadd.f32 0.0, %v1885
    %v1887 = vpop.f32.mrb[0].mxu0
    %1888 = vmatprep.mubr.f32.mxu0 0.0
    %1889 = vmatmul.mubr.f32.gmra.mrb[0].mxu0 %v1211
    %v1890 = vpop.f32.mrb[0].mxu0
    %v1891 = vadd.f32 0.0, %v1890
    %v1892 = vpop.f32.mrb[0].mxu0
    %1893 = vmatprep.mubr.f32.mxu0 0.0
    %1894 = vmatmul.mubr.f32.gmra.mrb[0].mxu0 %v1214
    %v1895 = vpop.f32.mrb[0].mxu0
    %v1896 = vadd.f32 0.0, %v1895
    %v1897 = vpop.f32.mrb[0].mxu0
    %1898 = vmatprep.mubr.f32.mxu0 0.0
    %1899 = vmatmul.mubr.f32.gmra.mrb[0].mxu0 %v1215
    %v1900 = vpop.f32.mrb[0].mxu0
    %v1901 = vadd.f32 0.0, %v1900
    %v1902 = vpop.f32.mrb[0].mxu0
    %1903 = vmatprep.mubr.f32.mxu0 0.0
    %1904 = vmatmul.mubr.f32.gmra.mrb[0].mxu0 %v1218
    %v1905 = vpop.f32.mrb[0].mxu0
    %v1906 = vadd.f32 0.0, %v1905
    %v1907 = vpop.f32.mrb[0].mxu0
    %1908 = vmatprep.mubr.f32.mxu0 0.0
    %1909 = vmatmul.mubr.f32.gmra.mrb[0].mxu0 %v1219
    %v1910 = vpop.f32.mrb[0].mxu0
    %v1911 = vadd.f32 0.0, %v1910
    %v1912 = vpop.f32.mrb[0].mxu0
    %1913 = vmatprep.mubr.f32.mxu0 0.0
    %1914 = vmatmul.mubr.f32.gmra.mrb[0].mxu0 %v1222
    %v1915 = vpop.f32.mrb[0].mxu0
    %v1916 = vadd.f32 0.0, %v1915
    %v1917 = vpop.f32.mrb[0].mxu0
    %1918 = vmatprep.mubr.f32.mxu0 0.0
    %1919 = vmatmul.mubr.f32.gmra.mrb[0].mxu0 %v1223
    %v1920 = vpop.f32.mrb[0].mxu0
    %v1921 = vadd.f32 0.0, %v1920
    %v1922 = vpop.f32.mrb[0].mxu0
    %1923 = vmatprep.mubr.f32.mxu0 0.0
    %1924 = vmatmul.mubr.f32.gmra.mrb[0].mxu0 %v1226
    %v1925 = vpop.f32.mrb[0].mxu0
    %v1926 = vadd.f32 0.0, %v1925
    %v1927 = vpop.f32.mrb[0].mxu0
    %1928 = vmatprep.mubr.f32.mxu0 0.0
    %1929 = vmatmul.mubr.f32.gmra.mrb[0].mxu0 %v1227
    %v1930 = vpop.f32.mrb[0].mxu0
    %v1931 = vadd.f32 0.0, %v1930
    %v1932 = vpop.f32.mrb[0].mxu0
    %1933 = vmatprep.mubr.f32.mxu0 0.0
    %1934 = vmatmul.mubr.f32.gmra.mrb[0].mxu0 %v1230
    %v1935 = vpop.f32.mrb[0].mxu0
    %v1936 = vadd.f32 0.0, %v1935
    %v1937 = vpop.f32.mrb[0].mxu0
    %1938 = vmatprep.mubr.f32.mxu0 0.0
    %1939 = vmatmul.mubr.f32.gmra.mrb[0].mxu0 %v1231
    %v1940 = vpop.f32.mrb[0].mxu0
    %v1941 = vadd.f32 0.0, %v1940
    %v1942 = vpop.f32.mrb[0].mxu0
    %1943 = vmatprep.mubr.f32.mxu0 0.0
    %1944 = vmatmul.mubr.f32.gmra.mrb[0].mxu0 %v1234
    %v1945 = vpop.f32.mrb[0].mxu0
    %v1946 = vadd.f32 0.0, %v1945
    %v1947 = vpop.f32.mrb[0].mxu0
    %1948 = vmatprep.mubr.f32.mxu0 0.0
    %1949 = vmatmul.mubr.f32.gmra.mrb[0].mxu0 %v1235
    %v1950 = vpop.f32.mrb[0].mxu0
    %v1951 = vadd.f32 0.0, %v1950
    %v1952 = vpop.f32.mrb[0].mxu0
    %1953 = vmatprep.mubr.f32.mxu0 0.0
    %1954 = vmatmul.mubr.f32.gmra.mrb[0].mxu0 %v1238
    %v1955 = vpop.f32.mrb[0].mxu0
    %v1956 = vadd.f32 0.0, %v1955
    %v1957 = vpop.f32.mrb[0].mxu0
    %1958 = vmatprep.mubr.f32.mxu0 0.0
    %1959 = vmatmul.mubr.f32.gmra.mrb[0].mxu0 %v1239
    %v1960 = vpop.f32.mrb[0].mxu0
    %v1961 = vadd.f32 0.0, %v1960
    %v1962 = vpop.f32.mrb[0].mxu0
    %1963 = vmatprep.mubr.f32.mxu0 0.0
    %1964 = vmatmul.mubr.f32.gmra.mrb[0].mxu0 %v1242
    %v1965 = vpop.f32.mrb[0].mxu0
    %v1966 = vadd.f32 0.0, %v1965
    %v1967 = vpop.f32.mrb[0].mxu0
    %1968 = vmatprep.mubr.f32.mxu0 0.0
    %1969 = vmatmul.mubr.f32.gmra.mrb[0].mxu0 %v1243
    %v1970 = vpop.f32.mrb[0].mxu0
    %v1971 = vadd.f32 0.0, %v1970
    %v1972 = vpop.f32.mrb[0].mxu0
    %1973 = vmatprep.mubr.f32.mxu0 0.0
    %1974 = vmatmul.mubr.f32.gmra.mrb[0].mxu0 %v1246
    %v1975 = vpop.f32.mrb[0].mxu0
    %v1976 = vadd.f32 0.0, %v1975
    %v1977 = vpop.f32.mrb[0].mxu0
    %1978 = vmatprep.mubr.f32.mxu0 0.0
    %1979 = vmatmul.mubr.f32.gmra.mrb[0].mxu0 %v1247
    %v1980 = vpop.f32.mrb[0].mxu0
    %v1981 = vadd.f32 0.0, %v1980
    %v1982 = vpop.f32.mrb[0].mxu0
    %1983 = vmatprep.mubr.f32.mxu0 0.0
    %1984 = vmatmul.mubr.f32.gmra.mrb[0].mxu0 %v1250
    %v1985 = vpop.f32.mrb[0].mxu0
    %v1986 = vadd.f32 0.0, %v1985
    %v1987 = vpop.f32.mrb[0].mxu0
    %1988 = vmatprep.mubr.f32.mxu0 0.0
    %1989 = vmatmul.mubr.f32.gmra.mrb[0].mxu0 %v1251
    %v1990 = vpop.f32.mrb[0].mxu0
    %v1991 = vadd.f32 0.0, %v1990
    %v1992 = vpop.f32.mrb[0].mxu0
    %1993 = vmatprep.mubr.f32.mxu0 0.0
    %1994 = vmatmul.mubr.f32.gmra.mrb[0].mxu0 %v1254
    %v1995 = vpop.f32.mrb[0].mxu0
    %v1996 = vadd.f32 0.0, %v1995
    %v1997 = vpop.f32.mrb[0].mxu0
    %1998 = vmatprep.mubr.f32.mxu0 0.0
    %1999 = vmatmul.mubr.f32.gmra.mrb[0].mxu0 %v1255
    %v2000 = vpop.f32.mrb[0].mxu0
    %v2001 = vadd.f32 0.0, %v2000
    %v2002 = vpop.f32.mrb[0].mxu0
    %2003 = vdwg.mxu0
    %2004 = vmatprep.subr.mxu0 0.0
    %2005 = vmatpush1.msra.mxu0 %v1586
    %2006 = vmatprep.subr.mxu0 0.0
    %2007 = vmatpush1.msra.mxu0 %v1587
    %2008 = vmatprep.subr.mxu0 0.0
    %2009 = vmatpush1.msra.mxu0 %v1588
    %2010 = vmatprep.subr.mxu0 0.0
    %2011 = vmatpush1.msra.mxu0 %v1589
    %2012 = vmatprep.subr.mxu0 0.0
    %2013 = vmatpush1.msra.mxu0 %v1590
    %2014 = vmatprep.subr.mxu0 0.0
    %2015 = vmatpush1.msra.mxu0 %v1591
    %2016 = vmatprep.subr.mxu0 0.0
    %2017 = vmatpush1.msra.mxu0 %v1592
    %2018 = vmatprep.subr.mxu0 0.0
    %2019 = vmatpush1.msra.mxu0 %v1593
    %2020 = vmatprep.subr.mxu0 0.0
    %2021 = vmatpush1.msra.mxu0 %v1594
    %2022 = vmatprep.subr.mxu0 0.0
    %2023 = vmatpush1.msra.mxu0 %v1595
    %2024 = vmatprep.subr.mxu0 0.0
    %2025 = vmatpush1.msra.mxu0 %v1596
    %2026 = vmatprep.subr.mxu0 0.0
    %2027 = vmatpush1.msra.mxu0 %v1597
    %2028 = vmatprep.subr.mxu0 0.0
    %2029 = vmatpush1.msra.mxu0 %v1598
    %2030 = vmatprep.subr.mxu0 0.0
    %2031 = vmatpush1.msra.mxu0 %v1599
    %2032 = vmatprep.subr.mxu0 0.0
    %2033 = vmatpush1.msra.mxu0 %v1600
    %2034 = vmatprep.subr.mxu0 0.0
    %2035 = vmatpush1.msra.mxu0 %v1601
    %2036 = vmatprep.subr.mxu0 0.0
    %2037 = vmatpush1.msra.mxu0 0.0
    %2038 = vmatprep.subr.mxu0 0.0
    %2039 = vmatpush1.msra.mxu0 0.0
    %2040 = vmatprep.subr.mxu0 0.0
    %2041 = vmatpush1.msra.mxu0 0.0
    %2042 = vmatprep.subr.mxu0 0.0
    %2043 = vmatpush1.msra.mxu0 0.0
    %2044 = vmatprep.subr.mxu0 0.0
    %2045 = vmatpush1.msra.mxu0 0.0
    %2046 = vmatprep.subr.mxu0 0.0
    %2047 = vmatpush1.msra.mxu0 0.0
    %2048 = vmatprep.subr.mxu0 0.0
    %2049 = vmatpush1.msra.mxu0 0.0
    %2050 = vmatprep.subr.mxu0 0.0
    %2051 = vmatpush1.msra.mxu0 0.0
    %2052 = vmatprep.subr.mxu0 0.0
    %2053 = vmatpush1.msra.mxu0 0.0
    %2054 = vmatprep.subr.mxu0 0.0
    %2055 = vmatpush1.msra.mxu0 0.0
    %2056 = vmatprep.subr.mxu0 0.0
    %2057 = vmatpush1.msra.mxu0 0.0
    %2058 = vmatprep.subr.mxu0 0.0
    %2059 = vmatpush1.msra.mxu0 0.0
    %2060 = vmatprep.subr.mxu0 0.0
    %2061 = vmatpush1.msra.mxu0 0.0
    %2062 = vmatprep.subr.mxu0 0.0
    %2063 = vmatpush1.msra.mxu0 0.0
    %2064 = vmatprep.subr.mxu0 0.0
    %2065 = vmatpush1.msra.mxu0 0.0
    %2066 = vmatprep.subr.mxu0 0.0
    %2067 = vmatpush1.msra.mxu0 0.0
    %2068 = vmatprep.mubr.f32.mxu0 0.0
    %2069 = vmatmul.mubr.f32.gmra.mrb[0].mxu0 %v1364
    %v2070 = vpop.f32.mrb[0].mxu0
    %v2071 = vadd.f32 %v1686, %v2070
    %v2072 = vpop.f32.mrb[0].mxu0
    %2073 = vmatprep.mubr.f32.mxu0 0.0
    %2074 = vmatmul.mubr.f32.gmra.mrb[0].mxu0 %v1366
    %v2075 = vpop.f32.mrb[0].mxu0
    %v2076 = vadd.f32 %v1691, %v2075
    %v2077 = vpop.f32.mrb[0].mxu0
    %2078 = vmatprep.mubr.f32.mxu0 0.0
    %2079 = vmatmul.mubr.f32.gmra.mrb[0].mxu0 %v1369
    %v2080 = vpop.f32.mrb[0].mxu0
    %v2081 = vadd.f32 %v1696, %v2080
    %v2082 = vpop.f32.mrb[0].mxu0
    %2083 = vmatprep.mubr.f32.mxu0 0.0
    %2084 = vmatmul.mubr.f32.gmra.mrb[0].mxu0 %v1371
    %v2085 = vpop.f32.mrb[0].mxu0
    %v2086 = vadd.f32 %v1701, %v2085
    %v2087 = vpop.f32.mrb[0].mxu0
    %2088 = vmatprep.mubr.f32.mxu0 0.0
    %2089 = vmatmul.mubr.f32.gmra.mrb[0].mxu0 %v1374
    %v2090 = vpop.f32.mrb[0].mxu0
    %v2091 = vadd.f32 %v1706, %v2090
    %v2092 = vpop.f32.mrb[0].mxu0
    %2093 = vmatprep.mubr.f32.mxu0 0.0
    %2094 = vmatmul.mubr.f32.gmra.mrb[0].mxu0 %v1376
    %v2095 = vpop.f32.mrb[0].mxu0
    %v2096 = vadd.f32 %v1711, %v2095
    %v2097 = vpop.f32.mrb[0].mxu0
    %2098 = vmatprep.mubr.f32.mxu0 0.0
    %2099 = vmatmul.mubr.f32.gmra.mrb[0].mxu0 %v1379
    %v2100 = vpop.f32.mrb[0].mxu0
    %v2101 = vadd.f32 %v1716, %v2100
    %v2102 = vpop.f32.mrb[0].mxu0
    %2103 = vmatprep.mubr.f32.mxu0 0.0
    %2104 = vmatmul.mubr.f32.gmra.mrb[0].mxu0 %v1381
    %v2105 = vpop.f32.mrb[0].mxu0
    %v2106 = vadd.f32 %v1721, %v2105
    %v2107 = vpop.f32.mrb[0].mxu0
    %2108 = vmatprep.mubr.f32.mxu0 0.0
    %2109 = vmatmul.mubr.f32.gmra.mrb[0].mxu0 %v1384
    %v2110 = vpop.f32.mrb[0].mxu0
    %v2111 = vadd.f32 %v1726, %v2110
    %v2112 = vpop.f32.mrb[0].mxu0
    %2113 = vmatprep.mubr.f32.mxu0 0.0
    %2114 = vmatmul.mubr.f32.gmra.mrb[0].mxu0 %v1386
    %v2115 = vpop.f32.mrb[0].mxu0
    %v2116 = vadd.f32 %v1731, %v2115
    %v2117 = vpop.f32.mrb[0].mxu0
    %2118 = vmatprep.mubr.f32.mxu0 0.0
    %2119 = vmatmul.mubr.f32.gmra.mrb[0].mxu0 %v1389
    %v2120 = vpop.f32.mrb[0].mxu0
    %v2121 = vadd.f32 %v1736, %v2120
    %v2122 = vpop.f32.mrb[0].mxu0
    %2123 = vmatprep.mubr.f32.mxu0 0.0
    %2124 = vmatmul.mubr.f32.gmra.mrb[0].mxu0 %v1391
    %v2125 = vpop.f32.mrb[0].mxu0
    %v2126 = vadd.f32 %v1741, %v2125
    %v2127 = vpop.f32.mrb[0].mxu0
    %2128 = vmatprep.mubr.f32.mxu0 0.0
    %2129 = vmatmul.mubr.f32.gmra.mrb[0].mxu0 %v1394
    %v2130 = vpop.f32.mrb[0].mxu0
    %v2131 = vadd.f32 %v1746, %v2130
    %v2132 = vpop.f32.mrb[0].mxu0
    %2133 = vmatprep.mubr.f32.mxu0 0.0
    %2134 = vmatmul.mubr.f32.gmra.mrb[0].mxu0 %v1396
    %v2135 = vpop.f32.mrb[0].mxu0
    %v2136 = vadd.f32 %v1751, %v2135
    %v2137 = vpop.f32.mrb[0].mxu0
    %2138 = vmatprep.mubr.f32.mxu0 0.0
    %2139 = vmatmul.mubr.f32.gmra.mrb[0].mxu0 %v1399
    %v2140 = vpop.f32.mrb[0].mxu0
    %v2141 = vadd.f32 %v1756, %v2140
    %v2142 = vpop.f32.mrb[0].mxu0
    %2143 = vmatprep.mubr.f32.mxu0 0.0
    %2144 = vmatmul.mubr.f32.gmra.mrb[0].mxu0 %v1401
    %v2145 = vpop.f32.mrb[0].mxu0
    %v2146 = vadd.f32 %v1761, %v2145
    %v2147 = vpop.f32.mrb[0].mxu0
    %2148 = vmatprep.mubr.f32.mxu0 0.0
    %2149 = vmatmul.mubr.f32.gmra.mrb[0].mxu0 %v1404
    %v2150 = vpop.f32.mrb[0].mxu0
    %v2151 = vadd.f32 %v1766, %v2150
    %v2152 = vpop.f32.mrb[0].mxu0
    %2153 = vmatprep.mubr.f32.mxu0 0.0
    %2154 = vmatmul.mubr.f32.gmra.mrb[0].mxu0 %v1406
    %v2155 = vpop.f32.mrb[0].mxu0
    %v2156 = vadd.f32 %v1771, %v2155
    %v2157 = vpop.f32.mrb[0].mxu0
    %2158 = vmatprep.mubr.f32.mxu0 0.0
    %2159 = vmatmul.mubr.f32.gmra.mrb[0].mxu0 %v1409
    %v2160 = vpop.f32.mrb[0].mxu0
    %v2161 = vadd.f32 %v1776, %v2160
    %v2162 = vpop.f32.mrb[0].mxu0
    %2163 = vmatprep.mubr.f32.mxu0 0.0
    %2164 = vmatmul.mubr.f32.gmra.mrb[0].mxu0 %v1411
    %v2165 = vpop.f32.mrb[0].mxu0
    %v2166 = vadd.f32 %v1781, %v2165
    %v2167 = vpop.f32.mrb[0].mxu0
    %2168 = vmatprep.mubr.f32.mxu0 0.0
    %2169 = vmatmul.mubr.f32.gmra.mrb[0].mxu0 %v1414
    %v2170 = vpop.f32.mrb[0].mxu0
    %v2171 = vadd.f32 %v1786, %v2170
    %v2172 = vpop.f32.mrb[0].mxu0
    %2173 = vmatprep.mubr.f32.mxu0 0.0
    %2174 = vmatmul.mubr.f32.gmra.mrb[0].mxu0 %v1416
    %v2175 = vpop.f32.mrb[0].mxu0
    %v2176 = vadd.f32 %v1791, %v2175
    %v2177 = vpop.f32.mrb[0].mxu0
    %2178 = vmatprep.mubr.f32.mxu0 0.0
    %2179 = vmatmul.mubr.f32.gmra.mrb[0].mxu0 %v1419
    %v2180 = vpop.f32.mrb[0].mxu0
    %v2181 = vadd.f32 %v1796, %v2180
    %v2182 = vpop.f32.mrb[0].mxu0
    %2183 = vmatprep.mubr.f32.mxu0 0.0
    %2184 = vmatmul.mubr.f32.gmra.mrb[0].mxu0 %v1421
    %v2185 = vpop.f32.mrb[0].mxu0
    %v2186 = vadd.f32 %v1801, %v2185
    %v2187 = vpop.f32.mrb[0].mxu0
    %2188 = vmatprep.mubr.f32.mxu0 0.0
    %2189 = vmatmul.mubr.f32.gmra.mrb[0].mxu0 %v1424
    %v2190 = vpop.f32.mrb[0].mxu0
    %v2191 = vadd.f32 %v1806, %v2190
    %v2192 = vpop.f32.mrb[0].mxu0
    %2193 = vmatprep.mubr.f32.mxu0 0.0
    %2194 = vmatmul.mubr.f32.gmra.mrb[0].mxu0 %v1426
    %v2195 = vpop.f32.mrb[0].mxu0
    %v2196 = vadd.f32 %v1811, %v2195
    %v2197 = vpop.f32.mrb[0].mxu0
    %2198 = vmatprep.mubr.f32.mxu0 0.0
    %2199 = vmatmul.mubr.f32.gmra.mrb[0].mxu0 %v1429
    %v2200 = vpop.f32.mrb[0].mxu0
    %v2201 = vadd.f32 %v1816, %v2200
    %v2202 = vpop.f32.mrb[0].mxu0
    %2203 = vmatprep.mubr.f32.mxu0 0.0
    %2204 = vmatmul.mubr.f32.gmra.mrb[0].mxu0 %v1431
    %v2205 = vpop.f32.mrb[0].mxu0
    %v2206 = vadd.f32 %v1821, %v2205
    %v2207 = vpop.f32.mrb[0].mxu0
    %2208 = vmatprep.mubr.f32.mxu0 0.0
    %2209 = vmatmul.mubr.f32.gmra.mrb[0].mxu0 %v1434
    %v2210 = vpop.f32.mrb[0].mxu0
    %v2211 = vadd.f32 %v1826, %v2210
    %v2212 = vpop.f32.mrb[0].mxu0
    %2213 = vmatprep.mubr.f32.mxu0 0.0
    %2214 = vmatmul.mubr.f32.gmra.mrb[0].mxu0 %v1436
    %v2215 = vpop.f32.mrb[0].mxu0
    %v2216 = vadd.f32 %v1831, %v2215
    %v2217 = vpop.f32.mrb[0].mxu0
    %2218 = vmatprep.mubr.f32.mxu0 0.0
    %2219 = vmatmul.mubr.f32.gmra.mrb[0].mxu0 %v1439
    %v2220 = vpop.f32.mrb[0].mxu0
    %v2221 = vadd.f32 %v1836, %v2220
    %v2222 = vpop.f32.mrb[0].mxu0
    %2223 = vmatprep.mubr.f32.mxu0 0.0
    %2224 = vmatmul.mubr.f32.gmra.mrb[0].mxu0 %v1441
    %v2225 = vpop.f32.mrb[0].mxu0
    %v2226 = vadd.f32 %v1841, %v2225
    %v2227 = vpop.f32.mrb[0].mxu0
    %2228 = vmatprep.mubr.f32.mxu0 0.0
    %2229 = vmatmul.mubr.f32.gmra.mrb[0].mxu0 %v1444
    %v2230 = vpop.f32.mrb[0].mxu0
    %v2231 = vadd.f32 %v1846, %v2230
    %v2232 = vpop.f32.mrb[0].mxu0
    %2233 = vmatprep.mubr.f32.mxu0 0.0
    %2234 = vmatmul.mubr.f32.gmra.mrb[0].mxu0 %v1446
    %v2235 = vpop.f32.mrb[0].mxu0
    %v2236 = vadd.f32 %v1851, %v2235
    %v2237 = vpop.f32.mrb[0].mxu0
    %2238 = vmatprep.mubr.f32.mxu0 0.0
    %2239 = vmatmul.mubr.f32.gmra.mrb[0].mxu0 %v1449
    %v2240 = vpop.f32.mrb[0].mxu0
    %v2241 = vadd.f32 %v1856, %v2240
    %v2242 = vpop.f32.mrb[0].mxu0
    %2243 = vmatprep.mubr.f32.mxu0 0.0
    %2244 = vmatmul.mubr.f32.gmra.mrb[0].mxu0 %v1451
    %v2245 = vpop.f32.mrb[0].mxu0
    %v2246 = vadd.f32 %v1861, %v2245
    %v2247 = vpop.f32.mrb[0].mxu0
    %2248 = vmatprep.mubr.f32.mxu0 0.0
    %2249 = vmatmul.mubr.f32.gmra.mrb[0].mxu0 %v1454
    %v2250 = vpop.f32.mrb[0].mxu0
    %v2251 = vadd.f32 %v1866, %v2250
    %v2252 = vpop.f32.mrb[0].mxu0
    %2253 = vmatprep.mubr.f32.mxu0 0.0
    %2254 = vmatmul.mubr.f32.gmra.mrb[0].mxu0 %v1456
    %v2255 = vpop.f32.mrb[0].mxu0
    %v2256 = vadd.f32 %v1871, %v2255
    %v2257 = vpop.f32.mrb[0].mxu0
    %2258 = vmatprep.mubr.f32.mxu0 0.0
    %2259 = vmatmul.mubr.f32.gmra.mrb[0].mxu0 %v1459
    %v2260 = vpop.f32.mrb[0].mxu0
    %v2261 = vadd.f32 %v1876, %v2260
    %v2262 = vpop.f32.mrb[0].mxu0
    %2263 = vmatprep.mubr.f32.mxu0 0.0
    %2264 = vmatmul.mubr.f32.gmra.mrb[0].mxu0 %v1461
    %v2265 = vpop.f32.mrb[0].mxu0
    %v2266 = vadd.f32 %v1881, %v2265
    %v2267 = vpop.f32.mrb[0].mxu0
    %2268 = vmatprep.mubr.f32.mxu0 0.0
    %2269 = vmatmul.mubr.f32.gmra.mrb[0].mxu0 %v1464
    %v2270 = vpop.f32.mrb[0].mxu0
    %v2271 = vadd.f32 %v1886, %v2270
    %v2272 = vpop.f32.mrb[0].mxu0
    %2273 = vmatprep.mubr.f32.mxu0 0.0
    %2274 = vmatmul.mubr.f32.gmra.mrb[0].mxu0 %v1466
    %v2275 = vpop.f32.mrb[0].mxu0
    %v2276 = vadd.f32 %v1891, %v2275
    %v2277 = vpop.f32.mrb[0].mxu0
    %2278 = vmatprep.mubr.f32.mxu0 0.0
    %2279 = vmatmul.mubr.f32.gmra.mrb[0].mxu0 %v1469
    %v2280 = vpop.f32.mrb[0].mxu0
    %v2281 = vadd.f32 %v1896, %v2280
    %v2282 = vpop.f32.mrb[0].mxu0
    %2283 = vmatprep.mubr.f32.mxu0 0.0
    %2284 = vmatmul.mubr.f32.gmra.mrb[0].mxu0 %v1471
    %v2285 = vpop.f32.mrb[0].mxu0
    %v2286 = vadd.f32 %v1901, %v2285
    %v2287 = vpop.f32.mrb[0].mxu0
    %2288 = vmatprep.mubr.f32.mxu0 0.0
    %2289 = vmatmul.mubr.f32.gmra.mrb[0].mxu0 %v1474
    %v2290 = vpop.f32.mrb[0].mxu0
    %v2291 = vadd.f32 %v1906, %v2290
    %v2292 = vpop.f32.mrb[0].mxu0
    %2293 = vmatprep.mubr.f32.mxu0 0.0
    %2294 = vmatmul.mubr.f32.gmra.mrb[0].mxu0 %v1476
    %v2295 = vpop.f32.mrb[0].mxu0
    %v2296 = vadd.f32 %v1911, %v2295
    %v2297 = vpop.f32.mrb[0].mxu0
    %2298 = vmatprep.mubr.f32.mxu0 0.0
    %2299 = vmatmul.mubr.f32.gmra.mrb[0].mxu0 %v1479
    %v2300 = vpop.f32.mrb[0].mxu0
    %v2301 = vadd.f32 %v1916, %v2300
    %v2302 = vpop.f32.mrb[0].mxu0
    %2303 = vmatprep.mubr.f32.mxu0 0.0
    %2304 = vmatmul.mubr.f32.gmra.mrb[0].mxu0 %v1481
    %v2305 = vpop.f32.mrb[0].mxu0
    %v2306 = vadd.f32 %v1921, %v2305
    %v2307 = vpop.f32.mrb[0].mxu0
    %2308 = vmatprep.mubr.f32.mxu0 0.0
    %2309 = vmatmul.mubr.f32.gmra.mrb[0].mxu0 %v1484
    %v2310 = vpop.f32.mrb[0].mxu0
    %v2311 = vadd.f32 %v1926, %v2310
    %v2312 = vpop.f32.mrb[0].mxu0
    %2313 = vmatprep.mubr.f32.mxu0 0.0
    %2314 = vmatmul.mubr.f32.gmra.mrb[0].mxu0 %v1486
    %v2315 = vpop.f32.mrb[0].mxu0
    %v2316 = vadd.f32 %v1931, %v2315
    %v2317 = vpop.f32.mrb[0].mxu0
    %2318 = vmatprep.mubr.f32.mxu0 0.0
    %2319 = vmatmul.mubr.f32.gmra.mrb[0].mxu0 %v1489
    %v2320 = vpop.f32.mrb[0].mxu0
    %v2321 = vadd.f32 %v1936, %v2320
    %v2322 = vpop.f32.mrb[0].mxu0
    %2323 = vmatprep.mubr.f32.mxu0 0.0
    %2324 = vmatmul.mubr.f32.gmra.mrb[0].mxu0 %v1491
    %v2325 = vpop.f32.mrb[0].mxu0
    %v2326 = vadd.f32 %v1941, %v2325
    %v2327 = vpop.f32.mrb[0].mxu0
    %2328 = vmatprep.mubr.f32.mxu0 0.0
    %2329 = vmatmul.mubr.f32.gmra.mrb[0].mxu0 %v1494
    %v2330 = vpop.f32.mrb[0].mxu0
    %v2331 = vadd.f32 %v1946, %v2330
    %v2332 = vpop.f32.mrb[0].mxu0
    %2333 = vmatprep.mubr.f32.mxu0 0.0
    %2334 = vmatmul.mubr.f32.gmra.mrb[0].mxu0 %v1496
    %v2335 = vpop.f32.mrb[0].mxu0
    %v2336 = vadd.f32 %v1951, %v2335
    %v2337 = vpop.f32.mrb[0].mxu0
    %2338 = vmatprep.mubr.f32.mxu0 0.0
    %2339 = vmatmul.mubr.f32.gmra.mrb[0].mxu0 %v1499
    %v2340 = vpop.f32.mrb[0].mxu0
    %v2341 = vadd.f32 %v1956, %v2340
    %v2342 = vpop.f32.mrb[0].mxu0
    %2343 = vmatprep.mubr.f32.mxu0 0.0
    %2344 = vmatmul.mubr.f32.gmra.mrb[0].mxu0 %v1501
    %v2345 = vpop.f32.mrb[0].mxu0
    %v2346 = vadd.f32 %v1961, %v2345
    %v2347 = vpop.f32.mrb[0].mxu0
    %2348 = vmatprep.mubr.f32.mxu0 0.0
    %2349 = vmatmul.mubr.f32.gmra.mrb[0].mxu0 %v1504
    %v2350 = vpop.f32.mrb[0].mxu0
    %v2351 = vadd.f32 %v1966, %v2350
    %v2352 = vpop.f32.mrb[0].mxu0
    %2353 = vmatprep.mubr.f32.mxu0 0.0
    %2354 = vmatmul.mubr.f32.gmra.mrb[0].mxu0 %v1506
    %v2355 = vpop.f32.mrb[0].mxu0
    %v2356 = vadd.f32 %v1971, %v2355
    %v2357 = vpop.f32.mrb[0].mxu0
    %2358 = vmatprep.mubr.f32.mxu0 0.0
    %2359 = vmatmul.mubr.f32.gmra.mrb[0].mxu0 %v1509
    %v2360 = vpop.f32.mrb[0].mxu0
    %v2361 = vadd.f32 %v1976, %v2360
    %v2362 = vpop.f32.mrb[0].mxu0
    %2363 = vmatprep.mubr.f32.mxu0 0.0
    %2364 = vmatmul.mubr.f32.gmra.mrb[0].mxu0 %v1511
    %v2365 = vpop.f32.mrb[0].mxu0
    %v2366 = vadd.f32 %v1981, %v2365
    %v2367 = vpop.f32.mrb[0].mxu0
    %2368 = vmatprep.mubr.f32.mxu0 0.0
    %2369 = vmatmul.mubr.f32.gmra.mrb[0].mxu0 %v1514
    %v2370 = vpop.f32.mrb[0].mxu0
    %v2371 = vadd.f32 %v1986, %v2370
    %v2372 = vpop.f32.mrb[0].mxu0
    %2373 = vmatprep.mubr.f32.mxu0 0.0
    %2374 = vmatmul.mubr.f32.gmra.mrb[0].mxu0 %v1516
    %v2375 = vpop.f32.mrb[0].mxu0
    %v2376 = vadd.f32 %v1991, %v2375
    %v2377 = vpop.f32.mrb[0].mxu0
    %2378 = vmatprep.mubr.f32.mxu0 0.0
    %2379 = vmatmul.mubr.f32.gmra.mrb[0].mxu0 %v1519
    %v2380 = vpop.f32.mrb[0].mxu0
    %v2381 = vadd.f32 %v1996, %v2380
    %v2382 = vpop.f32.mrb[0].mxu0
    %2383 = vmatprep.mubr.f32.mxu0 0.0
    %2384 = vmatmul.mubr.f32.gmra.mrb[0].mxu0 %v1521
    %v2385 = vpop.f32.mrb[0].mxu0
    %v2386 = vadd.f32 %v2001, %v2385
    %v2387 = vpop.f32.mrb[0].mxu0
    %2388 = vdwg.mxu0
    %vm2421 = vcmask 1046528
    %v2422 = vrot.slane %v1122, 1
    %v2423 = vrot.slane %v1123, 1
    %v2424 = vsel %vm2421, %v2422, %v2423
    %v2425 = vrot.slane %v1124, 1
    %v2426 = vsel %vm2421, %v2423, %v2425
    %v2427 = vrot.slane %v1126, 1
    %v2428 = vrot.slane %v1127, 1
    %v2429 = vsel %vm2421, %v2427, %v2428
    %v2430 = vrot.slane %v1128, 1
    %v2431 = vsel %vm2421, %v2428, %v2430
    %v2432 = vrot.slane %v1130, 1
    %v2433 = vrot.slane %v1131, 1
    %v2434 = vsel %vm2421, %v2432, %v2433
    %v2435 = vrot.slane %v1132, 1
    %v2436 = vsel %vm2421, %v2433, %v2435
    %v2437 = vrot.slane %v1134, 1
    %v2438 = vrot.slane %v1135, 1
    %v2439 = vsel %vm2421, %v2437, %v2438
    %v2440 = vrot.slane %v1136, 1
    %v2441 = vsel %vm2421, %v2438, %v2440
    %v2442 = vrot.slane %v1138, 1
    %v2443 = vrot.slane %v1139, 1
    %v2444 = vsel %vm2421, %v2442, %v2443
    %v2445 = vrot.slane %v1140, 1
    %v2446 = vsel %vm2421, %v2443, %v2445
    %v2447 = vrot.slane %v1142, 1
    %v2448 = vrot.slane %v1143, 1
    %v2449 = vsel %vm2421, %v2447, %v2448
    %v2450 = vrot.slane %v1144, 1
    %v2451 = vsel %vm2421, %v2448, %v2450
    %v2452 = vrot.slane %v1146, 1
    %v2453 = vrot.slane %v1147, 1
    %v2454 = vsel %vm2421, %v2452, %v2453
    %v2455 = vrot.slane %v1148, 1
    %v2456 = vsel %vm2421, %v2453, %v2455
    %v2457 = vrot.slane %v1150, 1
    %v2458 = vrot.slane %v1151, 1
    %v2459 = vsel %vm2421, %v2457, %v2458
    %v2460 = vrot.slane %v1152, 1
    %v2461 = vsel %vm2421, %v2458, %v2460
    %v2462 = vrot.slane %v1154, 1
    %v2463 = vrot.slane %v1155, 1
    %v2464 = vsel %vm2421, %v2462, %v2463
    %v2465 = vrot.slane %v1156, 1
    %v2466 = vsel %vm2421, %v2463, %v2465
    %v2467 = vrot.slane %v1158, 1
    %v2468 = vrot.slane %v1159, 1
    %v2469 = vsel %vm2421, %v2467, %v2468
    %v2470 = vrot.slane %v1160, 1
    %v2471 = vsel %vm2421, %v2468, %v2470
    %v2472 = vrot.slane %v1162, 1
    %v2473 = vrot.slane %v1163, 1
    %v2474 = vsel %vm2421, %v2472, %v2473
    %v2475 = vrot.slane %v1164, 1
    %v2476 = vsel %vm2421, %v2473, %v2475
    %v2477 = vrot.slane %v1166, 1
    %v2478 = vrot.slane %v1167, 1
    %v2479 = vsel %vm2421, %v2477, %v2478
    %v2480 = vrot.slane %v1168, 1
    %v2481 = vsel %vm2421, %v2478, %v2480
    %v2482 = vrot.slane %v1170, 1
    %v2483 = vrot.slane %v1171, 1
    %v2484 = vsel %vm2421, %v2482, %v2483
    %v2485 = vrot.slane %v1172, 1
    %v2486 = vsel %vm2421, %v2483, %v2485
    %v2487 = vrot.slane %v1174, 1
    %v2488 = vrot.slane %v1175, 1
    %v2489 = vsel %vm2421, %v2487, %v2488
    %v2490 = vrot.slane %v1176, 1
    %v2491 = vsel %vm2421, %v2488, %v2490
    %v2492 = vrot.slane %v1178, 1
    %v2493 = vrot.slane %v1179, 1
    %v2494 = vsel %vm2421, %v2492, %v2493
    %v2495 = vrot.slane %v1180, 1
    %v2496 = vsel %vm2421, %v2493, %v2495
    %v2497 = vrot.slane %v1182, 1
    %v2498 = vrot.slane %v1183, 1
    %v2499 = vsel %vm2421, %v2497, %v2498
    %v2500 = vrot.slane %v1184, 1
    %v2501 = vsel %vm2421, %v2498, %v2500
    %v2502 = vrot.slane %v1194, 1
    %v2503 = vrot.slane %v1195, 1
    %v2504 = vsel %vm2421, %v2502, %v2503
    %v2505 = vrot.slane %v1196, 1
    %v2506 = vsel %vm2421, %v2503, %v2505
    %v2507 = vrot.slane %v1198, 1
    %v2508 = vrot.slane %v1199, 1
    %v2509 = vsel %vm2421, %v2507, %v2508
    %v2510 = vrot.slane %v1200, 1
    %v2511 = vsel %vm2421, %v2508, %v2510
    %v2512 = vrot.slane %v1202, 1
    %v2513 = vrot.slane %v1203, 1
    %v2514 = vsel %vm2421, %v2512, %v2513
    %v2515 = vrot.slane %v1204, 1
    %v2516 = vsel %vm2421, %v2513, %v2515
    %v2517 = vrot.slane %v1206, 1
    %v2518 = vrot.slane %v1207, 1
    %v2519 = vsel %vm2421, %v2517, %v2518
    %v2520 = vrot.slane %v1208, 1
    %v2521 = vsel %vm2421, %v2518, %v2520
    %v2522 = vrot.slane %v1210, 1
    %v2523 = vrot.slane %v1211, 1
    %v2524 = vsel %vm2421, %v2522, %v2523
    %v2525 = vrot.slane %v1212, 1
    %v2526 = vsel %vm2421, %v2523, %v2525
    %v2527 = vrot.slane %v1214, 1
    %v2528 = vrot.slane %v1215, 1
    %v2529 = vsel %vm2421, %v2527, %v2528
    %v2530 = vrot.slane %v1216, 1
    %v2531 = vsel %vm2421, %v2528, %v2530
    %v2532 = vrot.slane %v1218, 1
    %v2533 = vrot.slane %v1219, 1
    %v2534 = vsel %vm2421, %v2532, %v2533
    %v2535 = vrot.slane %v1220, 1
    %v2536 = vsel %vm2421, %v2533, %v2535
    %v2537 = vrot.slane %v1222, 1
    %v2538 = vrot.slane %v1223, 1
    %v2539 = vsel %vm2421, %v2537, %v2538
    %v2540 = vrot.slane %v1224, 1
    %v2541 = vsel %vm2421, %v2538, %v2540
    %v2542 = vrot.slane %v1226, 1
    %v2543 = vrot.slane %v1227, 1
    %v2544 = vsel %vm2421, %v2542, %v2543
    %v2545 = vrot.slane %v1228, 1
    %v2546 = vsel %vm2421, %v2543, %v2545
    %v2547 = vrot.slane %v1230, 1
    %v2548 = vrot.slane %v1231, 1
    %v2549 = vsel %vm2421, %v2547, %v2548
    %v2550 = vrot.slane %v1232, 1
    %v2551 = vsel %vm2421, %v2548, %v2550
    %v2552 = vrot.slane %v1234, 1
    %v2553 = vrot.slane %v1235, 1
    %v2554 = vsel %vm2421, %v2552, %v2553
    %v2555 = vrot.slane %v1236, 1
    %v2556 = vsel %vm2421, %v2553, %v2555
    %v2557 = vrot.slane %v1238, 1
    %v2558 = vrot.slane %v1239, 1
    %v2559 = vsel %vm2421, %v2557, %v2558
    %v2560 = vrot.slane %v1240, 1
    %v2561 = vsel %vm2421, %v2558, %v2560
    %v2562 = vrot.slane %v1242, 1
    %v2563 = vrot.slane %v1243, 1
    %v2564 = vsel %vm2421, %v2562, %v2563
    %v2565 = vrot.slane %v1244, 1
    %v2566 = vsel %vm2421, %v2563, %v2565
    %v2567 = vrot.slane %v1246, 1
    %v2568 = vrot.slane %v1247, 1
    %v2569 = vsel %vm2421, %v2567, %v2568
    %v2570 = vrot.slane %v1248, 1
    %v2571 = vsel %vm2421, %v2568, %v2570
    %v2572 = vrot.slane %v1250, 1
    %v2573 = vrot.slane %v1251, 1
    %v2574 = vsel %vm2421, %v2572, %v2573
    %v2575 = vrot.slane %v1252, 1
    %v2576 = vsel %vm2421, %v2573, %v2575
    %v2577 = vrot.slane %v1254, 1
    %v2578 = vrot.slane %v1255, 1
    %v2579 = vsel %vm2421, %v2577, %v2578
    %v2580 = vrot.slane %v1256, 1
    %v2581 = vsel %vm2421, %v2578, %v2580
    %s2646 = scalar_lea.vmem [#allocation9], 256
    %v2647 = vld [vmem:[%s2646] sm:$0xff]
    %v2648 = vld [vmem:[%s2646 + $0x8] sm:$0xff]
    %v2649 = vld [vmem:[%s2646 + $0x10] sm:$0xff]
    %v2650 = vld [vmem:[%s2646 + $0x18] sm:$0xff]
    %v2651 = vld [vmem:[%s2646 + $0x20] sm:$0xff]
    %v2652 = vld [vmem:[%s2646 + $0x28] sm:$0xff]
    %v2653 = vld [vmem:[%s2646 + $0x30] sm:$0xff]
    %v2654 = vld [vmem:[%s2646 + $0x38] sm:$0xff]
    %v2655 = vld [vmem:[%s2646 + $0x40] sm:$0xff]
    %v2656 = vld [vmem:[%s2646 + $0x48] sm:$0xff]
    %v2657 = vld [vmem:[%s2646 + $0x50] sm:$0xff]
    %v2658 = vld [vmem:[%s2646 + $0x58] sm:$0xff]
    %v2659 = vld [vmem:[%s2646 + $0x60] sm:$0xff]
    %v2660 = vld [vmem:[%s2646 + $0x68] sm:$0xff]
    %v2661 = vld [vmem:[%s2646 + $0x70] sm:$0xff]
    %v2662 = vld [vmem:[%s2646 + $0x78] sm:$0xff]
    %2663 = vmatprep.subr.mxu0 0.0
    %2664 = vmatpush1.msra.mxu0 %v2647
    %2665 = vmatprep.subr.mxu0 0.0
    %2666 = vmatpush1.msra.mxu0 %v2648
    %2667 = vmatprep.subr.mxu0 0.0
    %2668 = vmatpush1.msra.mxu0 %v2649
    %2669 = vmatprep.subr.mxu0 0.0
    %2670 = vmatpush1.msra.mxu0 %v2650
    %2671 = vmatprep.subr.mxu0 0.0
    %2672 = vmatpush1.msra.mxu0 %v2651
    %2673 = vmatprep.subr.mxu0 0.0
    %2674 = vmatpush1.msra.mxu0 %v2652
    %2675 = vmatprep.subr.mxu0 0.0
    %2676 = vmatpush1.msra.mxu0 %v2653
    %2677 = vmatprep.subr.mxu0 0.0
    %2678 = vmatpush1.msra.mxu0 %v2654
    %2679 = vmatprep.subr.mxu0 0.0
    %2680 = vmatpush1.msra.mxu0 %v2655
    %2681 = vmatprep.subr.mxu0 0.0
    %2682 = vmatpush1.msra.mxu0 %v2656
    %2683 = vmatprep.subr.mxu0 0.0
    %2684 = vmatpush1.msra.mxu0 %v2657
    %2685 = vmatprep.subr.mxu0 0.0
    %2686 = vmatpush1.msra.mxu0 %v2658
    %2687 = vmatprep.subr.mxu0 0.0
    %2688 = vmatpush1.msra.mxu0 %v2659
    %2689 = vmatprep.subr.mxu0 0.0
    %2690 = vmatpush1.msra.mxu0 %v2660
    %2691 = vmatprep.subr.mxu0 0.0
    %2692 = vmatpush1.msra.mxu0 %v2661
    %2693 = vmatprep.subr.mxu0 0.0
    %2694 = vmatpush1.msra.mxu0 %v2662
    %2695 = vmatprep.subr.mxu0 0.0
    %2696 = vmatpush1.msra.mxu0 0.0
    %2697 = vmatprep.subr.mxu0 0.0
    %2698 = vmatpush1.msra.mxu0 0.0
    %2699 = vmatprep.subr.mxu0 0.0
    %2700 = vmatpush1.msra.mxu0 0.0
    %2701 = vmatprep.subr.mxu0 0.0
    %2702 = vmatpush1.msra.mxu0 0.0
    %2703 = vmatprep.subr.mxu0 0.0
    %2704 = vmatpush1.msra.mxu0 0.0
    %2705 = vmatprep.subr.mxu0 0.0
    %2706 = vmatpush1.msra.mxu0 0.0
    %2707 = vmatprep.subr.mxu0 0.0
    %2708 = vmatpush1.msra.mxu0 0.0
    %2709 = vmatprep.subr.mxu0 0.0
    %2710 = vmatpush1.msra.mxu0 0.0
    %2711 = vmatprep.subr.mxu0 0.0
    %2712 = vmatpush1.msra.mxu0 0.0
    %2713 = vmatprep.subr.mxu0 0.0
    %2714 = vmatpush1.msra.mxu0 0.0
    %2715 = vmatprep.subr.mxu0 0.0
    %2716 = vmatpush1.msra.mxu0 0.0
    %2717 = vmatprep.subr.mxu0 0.0
    %2718 = vmatpush1.msra.mxu0 0.0
    %2719 = vmatprep.subr.mxu0 0.0
    %2720 = vmatpush1.msra.mxu0 0.0
    %2721 = vmatprep.subr.mxu0 0.0
    %2722 = vmatpush1.msra.mxu0 0.0
    %2723 = vmatprep.subr.mxu0 0.0
    %2724 = vmatpush1.msra.mxu0 0.0
    %2725 = vmatprep.subr.mxu0 0.0
    %2726 = vmatpush1.msra.mxu0 0.0
    %2727 = vmatprep.mubr.f32.mxu0 0.0
    %2728 = vmatmul.mubr.f32.gmra.mrb[0].mxu0 %v2424
    %v2729 = vpop.f32.mrb[0].mxu0
    %v2730 = vadd.f32 0.0, %v2729
    %v2731 = vpop.f32.mrb[0].mxu0
    %2732 = vmatprep.mubr.f32.mxu0 0.0
    %2733 = vmatmul.mubr.f32.gmra.mrb[0].mxu0 %v2426
    %v2734 = vpop.f32.mrb[0].mxu0
    %v2735 = vadd.f32 0.0, %v2734
    %v2736 = vpop.f32.mrb[0].mxu0
    %2737 = vmatprep.mubr.f32.mxu0 0.0
    %2738 = vmatmul.mubr.f32.gmra.mrb[0].mxu0 %v2429
    %v2739 = vpop.f32.mrb[0].mxu0
    %v2740 = vadd.f32 0.0, %v2739
    %v2741 = vpop.f32.mrb[0].mxu0
    %2742 = vmatprep.mubr.f32.mxu0 0.0
    %2743 = vmatmul.mubr.f32.gmra.mrb[0].mxu0 %v2431
    %v2744 = vpop.f32.mrb[0].mxu0
    %v2745 = vadd.f32 0.0, %v2744
    %v2746 = vpop.f32.mrb[0].mxu0
    %2747 = vmatprep.mubr.f32.mxu0 0.0
    %2748 = vmatmul.mubr.f32.gmra.mrb[0].mxu0 %v2434
    %v2749 = vpop.f32.mrb[0].mxu0
    %v2750 = vadd.f32 0.0, %v2749
    %v2751 = vpop.f32.mrb[0].mxu0
    %2752 = vmatprep.mubr.f32.mxu0 0.0
    %2753 = vmatmul.mubr.f32.gmra.mrb[0].mxu0 %v2436
    %v2754 = vpop.f32.mrb[0].mxu0
    %v2755 = vadd.f32 0.0, %v2754
    %v2756 = vpop.f32.mrb[0].mxu0
    %2757 = vmatprep.mubr.f32.mxu0 0.0
    %2758 = vmatmul.mubr.f32.gmra.mrb[0].mxu0 %v2439
    %v2759 = vpop.f32.mrb[0].mxu0
    %v2760 = vadd.f32 0.0, %v2759
    %v2761 = vpop.f32.mrb[0].mxu0
    %2762 = vmatprep.mubr.f32.mxu0 0.0
    %2763 = vmatmul.mubr.f32.gmra.mrb[0].mxu0 %v2441
    %v2764 = vpop.f32.mrb[0].mxu0
    %v2765 = vadd.f32 0.0, %v2764
    %v2766 = vpop.f32.mrb[0].mxu0
    %2767 = vmatprep.mubr.f32.mxu0 0.0
    %2768 = vmatmul.mubr.f32.gmra.mrb[0].mxu0 %v2444
    %v2769 = vpop.f32.mrb[0].mxu0
    %v2770 = vadd.f32 0.0, %v2769
    %v2771 = vpop.f32.mrb[0].mxu0
    %2772 = vmatprep.mubr.f32.mxu0 0.0
    %2773 = vmatmul.mubr.f32.gmra.mrb[0].mxu0 %v2446
    %v2774 = vpop.f32.mrb[0].mxu0
    %v2775 = vadd.f32 0.0, %v2774
    %v2776 = vpop.f32.mrb[0].mxu0
    %2777 = vmatprep.mubr.f32.mxu0 0.0
    %2778 = vmatmul.mubr.f32.gmra.mrb[0].mxu0 %v2449
    %v2779 = vpop.f32.mrb[0].mxu0
    %v2780 = vadd.f32 0.0, %v2779
    %v2781 = vpop.f32.mrb[0].mxu0
    %2782 = vmatprep.mubr.f32.mxu0 0.0
    %2783 = vmatmul.mubr.f32.gmra.mrb[0].mxu0 %v2451
    %v2784 = vpop.f32.mrb[0].mxu0
    %v2785 = vadd.f32 0.0, %v2784
    %v2786 = vpop.f32.mrb[0].mxu0
    %2787 = vmatprep.mubr.f32.mxu0 0.0
    %2788 = vmatmul.mubr.f32.gmra.mrb[0].mxu0 %v2454
    %v2789 = vpop.f32.mrb[0].mxu0
    %v2790 = vadd.f32 0.0, %v2789
    %v2791 = vpop.f32.mrb[0].mxu0
    %2792 = vmatprep.mubr.f32.mxu0 0.0
    %2793 = vmatmul.mubr.f32.gmra.mrb[0].mxu0 %v2456
    %v2794 = vpop.f32.mrb[0].mxu0
    %v2795 = vadd.f32 0.0, %v2794
    %v2796 = vpop.f32.mrb[0].mxu0
    %2797 = vmatprep.mubr.f32.mxu0 0.0
    %2798 = vmatmul.mubr.f32.gmra.mrb[0].mxu0 %v2459
    %v2799 = vpop.f32.mrb[0].mxu0
    %v2800 = vadd.f32 0.0, %v2799
    %v2801 = vpop.f32.mrb[0].mxu0
    %2802 = vmatprep.mubr.f32.mxu0 0.0
    %2803 = vmatmul.mubr.f32.gmra.mrb[0].mxu0 %v2461
    %v2804 = vpop.f32.mrb[0].mxu0
    %v2805 = vadd.f32 0.0, %v2804
    %v2806 = vpop.f32.mrb[0].mxu0
    %2807 = vmatprep.mubr.f32.mxu0 0.0
    %2808 = vmatmul.mubr.f32.gmra.mrb[0].mxu0 %v2464
    %v2809 = vpop.f32.mrb[0].mxu0
    %v2810 = vadd.f32 0.0, %v2809
    %v2811 = vpop.f32.mrb[0].mxu0
    %2812 = vmatprep.mubr.f32.mxu0 0.0
    %2813 = vmatmul.mubr.f32.gmra.mrb[0].mxu0 %v2466
    %v2814 = vpop.f32.mrb[0].mxu0
    %v2815 = vadd.f32 0.0, %v2814
    %v2816 = vpop.f32.mrb[0].mxu0
    %2817 = vmatprep.mubr.f32.mxu0 0.0
    %2818 = vmatmul.mubr.f32.gmra.mrb[0].mxu0 %v2469
    %v2819 = vpop.f32.mrb[0].mxu0
    %v2820 = vadd.f32 0.0, %v2819
    %v2821 = vpop.f32.mrb[0].mxu0
    %2822 = vmatprep.mubr.f32.mxu0 0.0
    %2823 = vmatmul.mubr.f32.gmra.mrb[0].mxu0 %v2471
    %v2824 = vpop.f32.mrb[0].mxu0
    %v2825 = vadd.f32 0.0, %v2824
    %v2826 = vpop.f32.mrb[0].mxu0
    %2827 = vmatprep.mubr.f32.mxu0 0.0
    %2828 = vmatmul.mubr.f32.gmra.mrb[0].mxu0 %v2474
    %v2829 = vpop.f32.mrb[0].mxu0
    %v2830 = vadd.f32 0.0, %v2829
    %v2831 = vpop.f32.mrb[0].mxu0
    %2832 = vmatprep.mubr.f32.mxu0 0.0
    %2833 = vmatmul.mubr.f32.gmra.mrb[0].mxu0 %v2476
    %v2834 = vpop.f32.mrb[0].mxu0
    %v2835 = vadd.f32 0.0, %v2834
    %v2836 = vpop.f32.mrb[0].mxu0
    %2837 = vmatprep.mubr.f32.mxu0 0.0
    %2838 = vmatmul.mubr.f32.gmra.mrb[0].mxu0 %v2479
    %v2839 = vpop.f32.mrb[0].mxu0
    %v2840 = vadd.f32 0.0, %v2839
    %v2841 = vpop.f32.mrb[0].mxu0
    %2842 = vmatprep.mubr.f32.mxu0 0.0
    %2843 = vmatmul.mubr.f32.gmra.mrb[0].mxu0 %v2481
    %v2844 = vpop.f32.mrb[0].mxu0
    %v2845 = vadd.f32 0.0, %v2844
    %v2846 = vpop.f32.mrb[0].mxu0
    %2847 = vmatprep.mubr.f32.mxu0 0.0
    %2848 = vmatmul.mubr.f32.gmra.mrb[0].mxu0 %v2484
    %v2849 = vpop.f32.mrb[0].mxu0
    %v2850 = vadd.f32 0.0, %v2849
    %v2851 = vpop.f32.mrb[0].mxu0
    %2852 = vmatprep.mubr.f32.mxu0 0.0
    %2853 = vmatmul.mubr.f32.gmra.mrb[0].mxu0 %v2486
    %v2854 = vpop.f32.mrb[0].mxu0
    %v2855 = vadd.f32 0.0, %v2854
    %v2856 = vpop.f32.mrb[0].mxu0
    %2857 = vmatprep.mubr.f32.mxu0 0.0
    %2858 = vmatmul.mubr.f32.gmra.mrb[0].mxu0 %v2489
    %v2859 = vpop.f32.mrb[0].mxu0
    %v2860 = vadd.f32 0.0, %v2859
    %v2861 = vpop.f32.mrb[0].mxu0
    %2862 = vmatprep.mubr.f32.mxu0 0.0
    %2863 = vmatmul.mubr.f32.gmra.mrb[0].mxu0 %v2491
    %v2864 = vpop.f32.mrb[0].mxu0
    %v2865 = vadd.f32 0.0, %v2864
    %v2866 = vpop.f32.mrb[0].mxu0
    %2867 = vmatprep.mubr.f32.mxu0 0.0
    %2868 = vmatmul.mubr.f32.gmra.mrb[0].mxu0 %v2494
    %v2869 = vpop.f32.mrb[0].mxu0
    %v2870 = vadd.f32 0.0, %v2869
    %v2871 = vpop.f32.mrb[0].mxu0
    %2872 = vmatprep.mubr.f32.mxu0 0.0
    %2873 = vmatmul.mubr.f32.gmra.mrb[0].mxu0 %v2496
    %v2874 = vpop.f32.mrb[0].mxu0
    %v2875 = vadd.f32 0.0, %v2874
    %v2876 = vpop.f32.mrb[0].mxu0
    %2877 = vmatprep.mubr.f32.mxu0 0.0
    %2878 = vmatmul.mubr.f32.gmra.mrb[0].mxu0 %v2499
    %v2879 = vpop.f32.mrb[0].mxu0
    %v2880 = vadd.f32 0.0, %v2879
    %v2881 = vpop.f32.mrb[0].mxu0
    %2882 = vmatprep.mubr.f32.mxu0 0.0
    %2883 = vmatmul.mubr.f32.gmra.mrb[0].mxu0 %v2501
    %v2884 = vpop.f32.mrb[0].mxu0
    %v2885 = vadd.f32 0.0, %v2884
    %v2886 = vpop.f32.mrb[0].mxu0
    %2887 = vmatprep.mubr.f32.mxu0 0.0
    %2888 = vmatmul.mubr.f32.gmra.mrb[0].mxu0 %v2504
    %v2889 = vpop.f32.mrb[0].mxu0
    %v2890 = vadd.f32 0.0, %v2889
    %v2891 = vpop.f32.mrb[0].mxu0
    %2892 = vmatprep.mubr.f32.mxu0 0.0
    %2893 = vmatmul.mubr.f32.gmra.mrb[0].mxu0 %v2506
    %v2894 = vpop.f32.mrb[0].mxu0
    %v2895 = vadd.f32 0.0, %v2894
    %v2896 = vpop.f32.mrb[0].mxu0
    %2897 = vmatprep.mubr.f32.mxu0 0.0
    %2898 = vmatmul.mubr.f32.gmra.mrb[0].mxu0 %v2509
    %v2899 = vpop.f32.mrb[0].mxu0
    %v2900 = vadd.f32 0.0, %v2899
    %v2901 = vpop.f32.mrb[0].mxu0
    %2902 = vmatprep.mubr.f32.mxu0 0.0
    %2903 = vmatmul.mubr.f32.gmra.mrb[0].mxu0 %v2511
    %v2904 = vpop.f32.mrb[0].mxu0
    %v2905 = vadd.f32 0.0, %v2904
    %v2906 = vpop.f32.mrb[0].mxu0
    %2907 = vmatprep.mubr.f32.mxu0 0.0
    %2908 = vmatmul.mubr.f32.gmra.mrb[0].mxu0 %v2514
    %v2909 = vpop.f32.mrb[0].mxu0
    %v2910 = vadd.f32 0.0, %v2909
    %v2911 = vpop.f32.mrb[0].mxu0
    %2912 = vmatprep.mubr.f32.mxu0 0.0
    %2913 = vmatmul.mubr.f32.gmra.mrb[0].mxu0 %v2516
    %v2914 = vpop.f32.mrb[0].mxu0
    %v2915 = vadd.f32 0.0, %v2914
    %v2916 = vpop.f32.mrb[0].mxu0
    %2917 = vmatprep.mubr.f32.mxu0 0.0
    %2918 = vmatmul.mubr.f32.gmra.mrb[0].mxu0 %v2519
    %v2919 = vpop.f32.mrb[0].mxu0
    %v2920 = vadd.f32 0.0, %v2919
    %v2921 = vpop.f32.mrb[0].mxu0
    %2922 = vmatprep.mubr.f32.mxu0 0.0
    %2923 = vmatmul.mubr.f32.gmra.mrb[0].mxu0 %v2521
    %v2924 = vpop.f32.mrb[0].mxu0
    %v2925 = vadd.f32 0.0, %v2924
    %v2926 = vpop.f32.mrb[0].mxu0
    %2927 = vmatprep.mubr.f32.mxu0 0.0
    %2928 = vmatmul.mubr.f32.gmra.mrb[0].mxu0 %v2524
    %v2929 = vpop.f32.mrb[0].mxu0
    %v2930 = vadd.f32 0.0, %v2929
    %v2931 = vpop.f32.mrb[0].mxu0
    %2932 = vmatprep.mubr.f32.mxu0 0.0
    %2933 = vmatmul.mubr.f32.gmra.mrb[0].mxu0 %v2526
    %v2934 = vpop.f32.mrb[0].mxu0
    %v2935 = vadd.f32 0.0, %v2934
    %v2936 = vpop.f32.mrb[0].mxu0
    %2937 = vmatprep.mubr.f32.mxu0 0.0
    %2938 = vmatmul.mubr.f32.gmra.mrb[0].mxu0 %v2529
    %v2939 = vpop.f32.mrb[0].mxu0
    %v2940 = vadd.f32 0.0, %v2939
    %v2941 = vpop.f32.mrb[0].mxu0
    %2942 = vmatprep.mubr.f32.mxu0 0.0
    %2943 = vmatmul.mubr.f32.gmra.mrb[0].mxu0 %v2531
    %v2944 = vpop.f32.mrb[0].mxu0
    %v2945 = vadd.f32 0.0, %v2944
    %v2946 = vpop.f32.mrb[0].mxu0
    %2947 = vmatprep.mubr.f32.mxu0 0.0
    %2948 = vmatmul.mubr.f32.gmra.mrb[0].mxu0 %v2534
    %v2949 = vpop.f32.mrb[0].mxu0
    %v2950 = vadd.f32 0.0, %v2949
    %v2951 = vpop.f32.mrb[0].mxu0
    %2952 = vmatprep.mubr.f32.mxu0 0.0
    %2953 = vmatmul.mubr.f32.gmra.mrb[0].mxu0 %v2536
    %v2954 = vpop.f32.mrb[0].mxu0
    %v2955 = vadd.f32 0.0, %v2954
    %v2956 = vpop.f32.mrb[0].mxu0
    %2957 = vmatprep.mubr.f32.mxu0 0.0
    %2958 = vmatmul.mubr.f32.gmra.mrb[0].mxu0 %v2539
    %v2959 = vpop.f32.mrb[0].mxu0
    %v2960 = vadd.f32 0.0, %v2959
    %v2961 = vpop.f32.mrb[0].mxu0
    %2962 = vmatprep.mubr.f32.mxu0 0.0
    %2963 = vmatmul.mubr.f32.gmra.mrb[0].mxu0 %v2541
    %v2964 = vpop.f32.mrb[0].mxu0
    %v2965 = vadd.f32 0.0, %v2964
    %v2966 = vpop.f32.mrb[0].mxu0
    %2967 = vmatprep.mubr.f32.mxu0 0.0
    %2968 = vmatmul.mubr.f32.gmra.mrb[0].mxu0 %v2544
    %v2969 = vpop.f32.mrb[0].mxu0
    %v2970 = vadd.f32 0.0, %v2969
    %v2971 = vpop.f32.mrb[0].mxu0
    %2972 = vmatprep.mubr.f32.mxu0 0.0
    %2973 = vmatmul.mubr.f32.gmra.mrb[0].mxu0 %v2546
    %v2974 = vpop.f32.mrb[0].mxu0
    %v2975 = vadd.f32 0.0, %v2974
    %v2976 = vpop.f32.mrb[0].mxu0
    %2977 = vmatprep.mubr.f32.mxu0 0.0
    %2978 = vmatmul.mubr.f32.gmra.mrb[0].mxu0 %v2549
    %v2979 = vpop.f32.mrb[0].mxu0
    %v2980 = vadd.f32 0.0, %v2979
    %v2981 = vpop.f32.mrb[0].mxu0
    %2982 = vmatprep.mubr.f32.mxu0 0.0
    %2983 = vmatmul.mubr.f32.gmra.mrb[0].mxu0 %v2551
    %v2984 = vpop.f32.mrb[0].mxu0
    %v2985 = vadd.f32 0.0, %v2984
    %v2986 = vpop.f32.mrb[0].mxu0
    %2987 = vmatprep.mubr.f32.mxu0 0.0
    %2988 = vmatmul.mubr.f32.gmra.mrb[0].mxu0 %v2554
    %v2989 = vpop.f32.mrb[0].mxu0
    %v2990 = vadd.f32 0.0, %v2989
    %v2991 = vpop.f32.mrb[0].mxu0
    %2992 = vmatprep.mubr.f32.mxu0 0.0
    %2993 = vmatmul.mubr.f32.gmra.mrb[0].mxu0 %v2556
    %v2994 = vpop.f32.mrb[0].mxu0
    %v2995 = vadd.f32 0.0, %v2994
    %v2996 = vpop.f32.mrb[0].mxu0
    %2997 = vmatprep.mubr.f32.mxu0 0.0
    %2998 = vmatmul.mubr.f32.gmra.mrb[0].mxu0 %v2559
    %v2999 = vpop.f32.mrb[0].mxu0
    %v3000 = vadd.f32 0.0, %v2999
    %v3001 = vpop.f32.mrb[0].mxu0
    %3002 = vmatprep.mubr.f32.mxu0 0.0
    %3003 = vmatmul.mubr.f32.gmra.mrb[0].mxu0 %v2561
    %v3004 = vpop.f32.mrb[0].mxu0
    %v3005 = vadd.f32 0.0, %v3004
    %v3006 = vpop.f32.mrb[0].mxu0
    %3007 = vmatprep.mubr.f32.mxu0 0.0
    %3008 = vmatmul.mubr.f32.gmra.mrb[0].mxu0 %v2564
    %v3009 = vpop.f32.mrb[0].mxu0
    %v3010 = vadd.f32 0.0, %v3009
    %v3011 = vpop.f32.mrb[0].mxu0
    %3012 = vmatprep.mubr.f32.mxu0 0.0
    %3013 = vmatmul.mubr.f32.gmra.mrb[0].mxu0 %v2566
    %v3014 = vpop.f32.mrb[0].mxu0
    %v3015 = vadd.f32 0.0, %v3014
    %v3016 = vpop.f32.mrb[0].mxu0
    %3017 = vmatprep.mubr.f32.mxu0 0.0
    %3018 = vmatmul.mubr.f32.gmra.mrb[0].mxu0 %v2569
    %v3019 = vpop.f32.mrb[0].mxu0
    %v3020 = vadd.f32 0.0, %v3019
    %v3021 = vpop.f32.mrb[0].mxu0
    %3022 = vmatprep.mubr.f32.mxu0 0.0
    %3023 = vmatmul.mubr.f32.gmra.mrb[0].mxu0 %v2571
    %v3024 = vpop.f32.mrb[0].mxu0
    %v3025 = vadd.f32 0.0, %v3024
    %v3026 = vpop.f32.mrb[0].mxu0
    %3027 = vmatprep.mubr.f32.mxu0 0.0
    %3028 = vmatmul.mubr.f32.gmra.mrb[0].mxu0 %v2574
    %v3029 = vpop.f32.mrb[0].mxu0
    %v3030 = vadd.f32 0.0, %v3029
    %v3031 = vpop.f32.mrb[0].mxu0
    %3032 = vmatprep.mubr.f32.mxu0 0.0
    %3033 = vmatmul.mubr.f32.gmra.mrb[0].mxu0 %v2576
    %v3034 = vpop.f32.mrb[0].mxu0
    %v3035 = vadd.f32 0.0, %v3034
    %v3036 = vpop.f32.mrb[0].mxu0
    %3037 = vmatprep.mubr.f32.mxu0 0.0
    %3038 = vmatmul.mubr.f32.gmra.mrb[0].mxu0 %v2579
    %v3039 = vpop.f32.mrb[0].mxu0
    %v3040 = vadd.f32 0.0, %v3039
    %v3041 = vpop.f32.mrb[0].mxu0
    %3042 = vmatprep.mubr.f32.mxu0 0.0
    %3043 = vmatmul.mubr.f32.gmra.mrb[0].mxu0 %v2581
    %v3044 = vpop.f32.mrb[0].mxu0
    %v3045 = vadd.f32 0.0, %v3044
    %v3046 = vpop.f32.mrb[0].mxu0
    %3047 = vdwg.mxu0
    %v3048 = vadd.f32 %v2071, %v2730
    %v3049 = vadd.f32 %v2076, %v2735
    %v3050 = vadd.f32 %v2081, %v2740
    %v3051 = vadd.f32 %v2086, %v2745
    %v3052 = vadd.f32 %v2091, %v2750
    %v3053 = vadd.f32 %v2096, %v2755
    %v3054 = vadd.f32 %v2101, %v2760
    %v3055 = vadd.f32 %v2106, %v2765
    %v3056 = vadd.f32 %v2111, %v2770
    %v3057 = vadd.f32 %v2116, %v2775
    %v3058 = vadd.f32 %v2121, %v2780
    %v3059 = vadd.f32 %v2126, %v2785
    %v3060 = vadd.f32 %v2131, %v2790
    %v3061 = vadd.f32 %v2136, %v2795
    %v3062 = vadd.f32 %v2141, %v2800
    %v3063 = vadd.f32 %v2146, %v2805
    %v3064 = vadd.f32 %v2151, %v2810
    %v3065 = vadd.f32 %v2156, %v2815
    %v3066 = vadd.f32 %v2161, %v2820
    %v3067 = vadd.f32 %v2166, %v2825
    %v3068 = vadd.f32 %v2171, %v2830
    %v3069 = vadd.f32 %v2176, %v2835
    %v3070 = vadd.f32 %v2181, %v2840
    %v3071 = vadd.f32 %v2186, %v2845
    %v3072 = vadd.f32 %v2191, %v2850
    %v3073 = vadd.f32 %v2196, %v2855
    %v3074 = vadd.f32 %v2201, %v2860
    %v3075 = vadd.f32 %v2206, %v2865
    %v3076 = vadd.f32 %v2211, %v2870
    %v3077 = vadd.f32 %v2216, %v2875
    %v3078 = vadd.f32 %v2221, %v2880
    %v3079 = vadd.f32 %v2226, %v2885
    %v3080 = vadd.f32 %v2231, %v2890
    %v3081 = vadd.f32 %v2236, %v2895
    %v3082 = vadd.f32 %v2241, %v2900
    %v3083 = vadd.f32 %v2246, %v2905
    %v3084 = vadd.f32 %v2251, %v2910
    %v3085 = vadd.f32 %v2256, %v2915
    %v3086 = vadd.f32 %v2261, %v2920
    %v3087 = vadd.f32 %v2266, %v2925
    %v3088 = vadd.f32 %v2271, %v2930
    %v3089 = vadd.f32 %v2276, %v2935
    %v3090 = vadd.f32 %v2281, %v2940
    %v3091 = vadd.f32 %v2286, %v2945
    %v3092 = vadd.f32 %v2291, %v2950
    %v3093 = vadd.f32 %v2296, %v2955
    %v3094 = vadd.f32 %v2301, %v2960
    %v3095 = vadd.f32 %v2306, %v2965
    %v3096 = vadd.f32 %v2311, %v2970
    %v3097 = vadd.f32 %v2316, %v2975
    %v3098 = vadd.f32 %v2321, %v2980
    %v3099 = vadd.f32 %v2326, %v2985
    %v3100 = vadd.f32 %v2331, %v2990
    %v3101 = vadd.f32 %v2336, %v2995
    %v3102 = vadd.f32 %v2341, %v3000
    %v3103 = vadd.f32 %v2346, %v3005
    %v3104 = vadd.f32 %v2351, %v3010
    %v3105 = vadd.f32 %v2356, %v3015
    %v3106 = vadd.f32 %v2361, %v3020
    %v3107 = vadd.f32 %v2366, %v3025
    %v3108 = vadd.f32 %v2371, %v3030
    %v3109 = vadd.f32 %v2376, %v3035
    %v3110 = vadd.f32 %v2381, %v3040
    %v3111 = vadd.f32 %v2386, %v3045
    %v3118 = vrot.slane %v1185, 7
    %v3119 = vrot.slane %v1186, 7
    %v3120 = vsel %vm1361, %v3118, %v3119
    %v3121 = vrot.slane %v1187, 7
    %v3122 = vsel %vm1361, %v3119, %v3121
    %v3123 = vrot.slane %v1257, 7
    %v3124 = vrot.slane %v1258, 7
    %v3125 = vsel %vm1361, %v3123, %v3124
    %v3126 = vrot.slane %v1259, 7
    %v3127 = vsel %vm1361, %v3124, %v3126
    %s3132 = scalar_lea.vmem [#allocation9], 384
    %v3133 = vld [vmem:[%s3132] sm:$0xff]
    %v3134 = vld [vmem:[%s3132 + $0x8] sm:$0xff]
    %v3135 = vld [vmem:[%s3132 + $0x10] sm:$0xff]
    %v3136 = vld [vmem:[%s3132 + $0x18] sm:$0xff]
    %v3137 = vld [vmem:[%s3132 + $0x20] sm:$0xff]
    %v3138 = vld [vmem:[%s3132 + $0x28] sm:$0xff]
    %v3139 = vld [vmem:[%s3132 + $0x30] sm:$0xff]
    %v3140 = vld [vmem:[%s3132 + $0x38] sm:$0xff]
    %v3141 = vld [vmem:[%s3132 + $0x40] sm:$0xff]
    %v3142 = vld [vmem:[%s3132 + $0x48] sm:$0xff]
    %v3143 = vld [vmem:[%s3132 + $0x50] sm:$0xff]
    %v3144 = vld [vmem:[%s3132 + $0x58] sm:$0xff]
    %v3145 = vld [vmem:[%s3132 + $0x60] sm:$0xff]
    %v3146 = vld [vmem:[%s3132 + $0x68] sm:$0xff]
    %v3147 = vld [vmem:[%s3132 + $0x70] sm:$0xff]
    %v3148 = vld [vmem:[%s3132 + $0x78] sm:$0xff]
    %3149 = vmatprep.subr.mxu0 0.0
    %3150 = vmatpush1.msra.mxu0 %v3133
    %3151 = vmatprep.subr.mxu0 0.0
    %3152 = vmatpush1.msra.mxu0 %v3134
    %3153 = vmatprep.subr.mxu0 0.0
    %3154 = vmatpush1.msra.mxu0 %v3135
    %3155 = vmatprep.subr.mxu0 0.0
    %3156 = vmatpush1.msra.mxu0 %v3136
    %3157 = vmatprep.subr.mxu0 0.0
    %3158 = vmatpush1.msra.mxu0 %v3137
    %3159 = vmatprep.subr.mxu0 0.0
    %3160 = vmatpush1.msra.mxu0 %v3138
    %3161 = vmatprep.subr.mxu0 0.0
    %3162 = vmatpush1.msra.mxu0 %v3139
    %3163 = vmatprep.subr.mxu0 0.0
    %3164 = vmatpush1.msra.mxu0 %v3140
    %3165 = vmatprep.subr.mxu0 0.0
    %3166 = vmatpush1.msra.mxu0 %v3141
    %3167 = vmatprep.subr.mxu0 0.0
    %3168 = vmatpush1.msra.mxu0 %v3142
    %3169 = vmatprep.subr.mxu0 0.0
    %3170 = vmatpush1.msra.mxu0 %v3143
    %3171 = vmatprep.subr.mxu0 0.0
    %3172 = vmatpush1.msra.mxu0 %v3144
    %3173 = vmatprep.subr.mxu0 0.0
    %3174 = vmatpush1.msra.mxu0 %v3145
    %3175 = vmatprep.subr.mxu0 0.0
    %3176 = vmatpush1.msra.mxu0 %v3146
    %3177 = vmatprep.subr.mxu0 0.0
    %3178 = vmatpush1.msra.mxu0 %v3147
    %3179 = vmatprep.subr.mxu0 0.0
    %3180 = vmatpush1.msra.mxu0 %v3148
    %3181 = vmatprep.subr.mxu0 0.0
    %3182 = vmatpush1.msra.mxu0 0.0
    %3183 = vmatprep.subr.mxu0 0.0
    %3184 = vmatpush1.msra.mxu0 0.0
    %3185 = vmatprep.subr.mxu0 0.0
    %3186 = vmatpush1.msra.mxu0 0.0
    %3187 = vmatprep.subr.mxu0 0.0
    %3188 = vmatpush1.msra.mxu0 0.0
    %3189 = vmatprep.subr.mxu0 0.0
    %3190 = vmatpush1.msra.mxu0 0.0
    %3191 = vmatprep.subr.mxu0 0.0
    %3192 = vmatpush1.msra.mxu0 0.0
    %3193 = vmatprep.subr.mxu0 0.0
    %3194 = vmatpush1.msra.mxu0 0.0
    %3195 = vmatprep.subr.mxu0 0.0
    %3196 = vmatpush1.msra.mxu0 0.0
    %3197 = vmatprep.subr.mxu0 0.0
    %3198 = vmatpush1.msra.mxu0 0.0
    %3199 = vmatprep.subr.mxu0 0.0
    %3200 = vmatpush1.msra.mxu0 0.0
    %3201 = vmatprep.subr.mxu0 0.0
    %3202 = vmatpush1.msra.mxu0 0.0
    %3203 = vmatprep.subr.mxu0 0.0
    %3204 = vmatpush1.msra.mxu0 0.0
    %3205 = vmatprep.subr.mxu0 0.0
    %3206 = vmatpush1.msra.mxu0 0.0
    %3207 = vmatprep.subr.mxu0 0.0
    %3208 = vmatpush1.msra.mxu0 0.0
    %3209 = vmatprep.subr.mxu0 0.0
    %3210 = vmatpush1.msra.mxu0 0.0
    %3211 = vmatprep.subr.mxu0 0.0
    %3212 = vmatpush1.msra.mxu0 0.0
    %3213 = vmatprep.mubr.f32.mxu0 0.0
    %3214 = vmatmul.mubr.f32.gmra.mrb[0].mxu0 %v1369
    %v3215 = vpop.f32.mrb[0].mxu0
    %v3216 = vadd.f32 0.0, %v3215
    %v3217 = vpop.f32.mrb[0].mxu0
    %3218 = vmatprep.mubr.f32.mxu0 0.0
    %3219 = vmatmul.mubr.f32.gmra.mrb[0].mxu0 %v1371
    %v3220 = vpop.f32.mrb[0].mxu0
    %v3221 = vadd.f32 0.0, %v3220
    %v3222 = vpop.f32.mrb[0].mxu0
    %3223 = vmatprep.mubr.f32.mxu0 0.0
    %3224 = vmatmul.mubr.f32.gmra.mrb[0].mxu0 %v1374
    %v3225 = vpop.f32.mrb[0].mxu0
    %v3226 = vadd.f32 0.0, %v3225
    %v3227 = vpop.f32.mrb[0].mxu0
    %3228 = vmatprep.mubr.f32.mxu0 0.0
    %3229 = vmatmul.mubr.f32.gmra.mrb[0].mxu0 %v1376
    %v3230 = vpop.f32.mrb[0].mxu0
    %v3231 = vadd.f32 0.0, %v3230
    %v3232 = vpop.f32.mrb[0].mxu0
    %3233 = vmatprep.mubr.f32.mxu0 0.0
    %3234 = vmatmul.mubr.f32.gmra.mrb[0].mxu0 %v1379
    %v3235 = vpop.f32.mrb[0].mxu0
    %v3236 = vadd.f32 0.0, %v3235
    %v3237 = vpop.f32.mrb[0].mxu0
    %3238 = vmatprep.mubr.f32.mxu0 0.0
    %3239 = vmatmul.mubr.f32.gmra.mrb[0].mxu0 %v1381
    %v3240 = vpop.f32.mrb[0].mxu0
    %v3241 = vadd.f32 0.0, %v3240
    %v3242 = vpop.f32.mrb[0].mxu0
    %3243 = vmatprep.mubr.f32.mxu0 0.0
    %3244 = vmatmul.mubr.f32.gmra.mrb[0].mxu0 %v1384
    %v3245 = vpop.f32.mrb[0].mxu0
    %v3246 = vadd.f32 0.0, %v3245
    %v3247 = vpop.f32.mrb[0].mxu0
    %3248 = vmatprep.mubr.f32.mxu0 0.0
    %3249 = vmatmul.mubr.f32.gmra.mrb[0].mxu0 %v1386
    %v3250 = vpop.f32.mrb[0].mxu0
    %v3251 = vadd.f32 0.0, %v3250
    %v3252 = vpop.f32.mrb[0].mxu0
    %3253 = vmatprep.mubr.f32.mxu0 0.0
    %3254 = vmatmul.mubr.f32.gmra.mrb[0].mxu0 %v1389
    %v3255 = vpop.f32.mrb[0].mxu0
    %v3256 = vadd.f32 0.0, %v3255
    %v3257 = vpop.f32.mrb[0].mxu0
    %3258 = vmatprep.mubr.f32.mxu0 0.0
    %3259 = vmatmul.mubr.f32.gmra.mrb[0].mxu0 %v1391
    %v3260 = vpop.f32.mrb[0].mxu0
    %v3261 = vadd.f32 0.0, %v3260
    %v3262 = vpop.f32.mrb[0].mxu0
    %3263 = vmatprep.mubr.f32.mxu0 0.0
    %3264 = vmatmul.mubr.f32.gmra.mrb[0].mxu0 %v1394
    %v3265 = vpop.f32.mrb[0].mxu0
    %v3266 = vadd.f32 0.0, %v3265
    %v3267 = vpop.f32.mrb[0].mxu0
    %3268 = vmatprep.mubr.f32.mxu0 0.0
    %3269 = vmatmul.mubr.f32.gmra.mrb[0].mxu0 %v1396
    %v3270 = vpop.f32.mrb[0].mxu0
    %v3271 = vadd.f32 0.0, %v3270
    %v3272 = vpop.f32.mrb[0].mxu0
    %3273 = vmatprep.mubr.f32.mxu0 0.0
    %3274 = vmatmul.mubr.f32.gmra.mrb[0].mxu0 %v1399
    %v3275 = vpop.f32.mrb[0].mxu0
    %v3276 = vadd.f32 0.0, %v3275
    %v3277 = vpop.f32.mrb[0].mxu0
    %3278 = vmatprep.mubr.f32.mxu0 0.0
    %3279 = vmatmul.mubr.f32.gmra.mrb[0].mxu0 %v1401
    %v3280 = vpop.f32.mrb[0].mxu0
    %v3281 = vadd.f32 0.0, %v3280
    %v3282 = vpop.f32.mrb[0].mxu0
    %3283 = vmatprep.mubr.f32.mxu0 0.0
    %3284 = vmatmul.mubr.f32.gmra.mrb[0].mxu0 %v1404
    %v3285 = vpop.f32.mrb[0].mxu0
    %v3286 = vadd.f32 0.0, %v3285
    %v3287 = vpop.f32.mrb[0].mxu0
    %3288 = vmatprep.mubr.f32.mxu0 0.0
    %3289 = vmatmul.mubr.f32.gmra.mrb[0].mxu0 %v1406
    %v3290 = vpop.f32.mrb[0].mxu0
    %v3291 = vadd.f32 0.0, %v3290
    %v3292 = vpop.f32.mrb[0].mxu0
    %3293 = vmatprep.mubr.f32.mxu0 0.0
    %3294 = vmatmul.mubr.f32.gmra.mrb[0].mxu0 %v1409
    %v3295 = vpop.f32.mrb[0].mxu0
    %v3296 = vadd.f32 0.0, %v3295
    %v3297 = vpop.f32.mrb[0].mxu0
    %3298 = vmatprep.mubr.f32.mxu0 0.0
    %3299 = vmatmul.mubr.f32.gmra.mrb[0].mxu0 %v1411
    %v3300 = vpop.f32.mrb[0].mxu0
    %v3301 = vadd.f32 0.0, %v3300
    %v3302 = vpop.f32.mrb[0].mxu0
    %3303 = vmatprep.mubr.f32.mxu0 0.0
    %3304 = vmatmul.mubr.f32.gmra.mrb[0].mxu0 %v1414
    %v3305 = vpop.f32.mrb[0].mxu0
    %v3306 = vadd.f32 0.0, %v3305
    %v3307 = vpop.f32.mrb[0].mxu0
    %3308 = vmatprep.mubr.f32.mxu0 0.0
    %3309 = vmatmul.mubr.f32.gmra.mrb[0].mxu0 %v1416
    %v3310 = vpop.f32.mrb[0].mxu0
    %v3311 = vadd.f32 0.0, %v3310
    %v3312 = vpop.f32.mrb[0].mxu0
    %3313 = vmatprep.mubr.f32.mxu0 0.0
    %3314 = vmatmul.mubr.f32.gmra.mrb[0].mxu0 %v1419
    %v3315 = vpop.f32.mrb[0].mxu0
    %v3316 = vadd.f32 0.0, %v3315
    %v3317 = vpop.f32.mrb[0].mxu0
    %3318 = vmatprep.mubr.f32.mxu0 0.0
    %3319 = vmatmul.mubr.f32.gmra.mrb[0].mxu0 %v1421
    %v3320 = vpop.f32.mrb[0].mxu0
    %v3321 = vadd.f32 0.0, %v3320
    %v3322 = vpop.f32.mrb[0].mxu0
    %3323 = vmatprep.mubr.f32.mxu0 0.0
    %3324 = vmatmul.mubr.f32.gmra.mrb[0].mxu0 %v1424
    %v3325 = vpop.f32.mrb[0].mxu0
    %v3326 = vadd.f32 0.0, %v3325
    %v3327 = vpop.f32.mrb[0].mxu0
    %3328 = vmatprep.mubr.f32.mxu0 0.0
    %3329 = vmatmul.mubr.f32.gmra.mrb[0].mxu0 %v1426
    %v3330 = vpop.f32.mrb[0].mxu0
    %v3331 = vadd.f32 0.0, %v3330
    %v3332 = vpop.f32.mrb[0].mxu0
    %3333 = vmatprep.mubr.f32.mxu0 0.0
    %3334 = vmatmul.mubr.f32.gmra.mrb[0].mxu0 %v1429
    %v3335 = vpop.f32.mrb[0].mxu0
    %v3336 = vadd.f32 0.0, %v3335
    %v3337 = vpop.f32.mrb[0].mxu0
    %3338 = vmatprep.mubr.f32.mxu0 0.0
    %3339 = vmatmul.mubr.f32.gmra.mrb[0].mxu0 %v1431
    %v3340 = vpop.f32.mrb[0].mxu0
    %v3341 = vadd.f32 0.0, %v3340
    %v3342 = vpop.f32.mrb[0].mxu0
    %3343 = vmatprep.mubr.f32.mxu0 0.0
    %3344 = vmatmul.mubr.f32.gmra.mrb[0].mxu0 %v1434
    %v3345 = vpop.f32.mrb[0].mxu0
    %v3346 = vadd.f32 0.0, %v3345
    %v3347 = vpop.f32.mrb[0].mxu0
    %3348 = vmatprep.mubr.f32.mxu0 0.0
    %3349 = vmatmul.mubr.f32.gmra.mrb[0].mxu0 %v1436
    %v3350 = vpop.f32.mrb[0].mxu0
    %v3351 = vadd.f32 0.0, %v3350
    %v3352 = vpop.f32.mrb[0].mxu0
    %3353 = vmatprep.mubr.f32.mxu0 0.0
    %3354 = vmatmul.mubr.f32.gmra.mrb[0].mxu0 %v1439
    %v3355 = vpop.f32.mrb[0].mxu0
    %v3356 = vadd.f32 0.0, %v3355
    %v3357 = vpop.f32.mrb[0].mxu0
    %3358 = vmatprep.mubr.f32.mxu0 0.0
    %3359 = vmatmul.mubr.f32.gmra.mrb[0].mxu0 %v1441
    %v3360 = vpop.f32.mrb[0].mxu0
    %v3361 = vadd.f32 0.0, %v3360
    %v3362 = vpop.f32.mrb[0].mxu0
    %3363 = vmatprep.mubr.f32.mxu0 0.0
    %3364 = vmatmul.mubr.f32.gmra.mrb[0].mxu0 %v3120
    %v3365 = vpop.f32.mrb[0].mxu0
    %v3366 = vadd.f32 0.0, %v3365
    %v3367 = vpop.f32.mrb[0].mxu0
    %3368 = vmatprep.mubr.f32.mxu0 0.0
    %3369 = vmatmul.mubr.f32.gmra.mrb[0].mxu0 %v3122
    %v3370 = vpop.f32.mrb[0].mxu0
    %v3371 = vadd.f32 0.0, %v3370
    %v3372 = vpop.f32.mrb[0].mxu0
    %3373 = vmatprep.mubr.f32.mxu0 0.0
    %3374 = vmatmul.mubr.f32.gmra.mrb[0].mxu0 %v1449
    %v3375 = vpop.f32.mrb[0].mxu0
    %v3376 = vadd.f32 0.0, %v3375
    %v3377 = vpop.f32.mrb[0].mxu0
    %3378 = vmatprep.mubr.f32.mxu0 0.0
    %3379 = vmatmul.mubr.f32.gmra.mrb[0].mxu0 %v1451
    %v3380 = vpop.f32.mrb[0].mxu0
    %v3381 = vadd.f32 0.0, %v3380
    %v3382 = vpop.f32.mrb[0].mxu0
    %3383 = vmatprep.mubr.f32.mxu0 0.0
    %3384 = vmatmul.mubr.f32.gmra.mrb[0].mxu0 %v1454
    %v3385 = vpop.f32.mrb[0].mxu0
    %v3386 = vadd.f32 0.0, %v3385
    %v3387 = vpop.f32.mrb[0].mxu0
    %3388 = vmatprep.mubr.f32.mxu0 0.0
    %3389 = vmatmul.mubr.f32.gmra.mrb[0].mxu0 %v1456
    %v3390 = vpop.f32.mrb[0].mxu0
    %v3391 = vadd.f32 0.0, %v3390
    %v3392 = vpop.f32.mrb[0].mxu0
    %3393 = vmatprep.mubr.f32.mxu0 0.0
    %3394 = vmatmul.mubr.f32.gmra.mrb[0].mxu0 %v1459
    %v3395 = vpop.f32.mrb[0].mxu0
    %v3396 = vadd.f32 0.0, %v3395
    %v3397 = vpop.f32.mrb[0].mxu0
    %3398 = vmatprep.mubr.f32.mxu0 0.0
    %3399 = vmatmul.mubr.f32.gmra.mrb[0].mxu0 %v1461
    %v3400 = vpop.f32.mrb[0].mxu0
    %v3401 = vadd.f32 0.0, %v3400
    %v3402 = vpop.f32.mrb[0].mxu0
    %3403 = vmatprep.mubr.f32.mxu0 0.0
    %3404 = vmatmul.mubr.f32.gmra.mrb[0].mxu0 %v1464
    %v3405 = vpop.f32.mrb[0].mxu0
    %v3406 = vadd.f32 0.0, %v3405
    %v3407 = vpop.f32.mrb[0].mxu0
    %3408 = vmatprep.mubr.f32.mxu0 0.0
    %3409 = vmatmul.mubr.f32.gmra.mrb[0].mxu0 %v1466
    %v3410 = vpop.f32.mrb[0].mxu0
    %v3411 = vadd.f32 0.0, %v3410
    %v3412 = vpop.f32.mrb[0].mxu0
    %3413 = vmatprep.mubr.f32.mxu0 0.0
    %3414 = vmatmul.mubr.f32.gmra.mrb[0].mxu0 %v1469
    %v3415 = vpop.f32.mrb[0].mxu0
    %v3416 = vadd.f32 0.0, %v3415
    %v3417 = vpop.f32.mrb[0].mxu0
    %3418 = vmatprep.mubr.f32.mxu0 0.0
    %3419 = vmatmul.mubr.f32.gmra.mrb[0].mxu0 %v1471
    %v3420 = vpop.f32.mrb[0].mxu0
    %v3421 = vadd.f32 0.0, %v3420
    %v3422 = vpop.f32.mrb[0].mxu0
    %3423 = vmatprep.mubr.f32.mxu0 0.0
    %3424 = vmatmul.mubr.f32.gmra.mrb[0].mxu0 %v1474
    %v3425 = vpop.f32.mrb[0].mxu0
    %v3426 = vadd.f32 0.0, %v3425
    %v3427 = vpop.f32.mrb[0].mxu0
    %3428 = vmatprep.mubr.f32.mxu0 0.0
    %3429 = vmatmul.mubr.f32.gmra.mrb[0].mxu0 %v1476
    %v3430 = vpop.f32.mrb[0].mxu0
    %v3431 = vadd.f32 0.0, %v3430
    %v3432 = vpop.f32.mrb[0].mxu0
    %3433 = vmatprep.mubr.f32.mxu0 0.0
    %3434 = vmatmul.mubr.f32.gmra.mrb[0].mxu0 %v1479
    %v3435 = vpop.f32.mrb[0].mxu0
    %v3436 = vadd.f32 0.0, %v3435
    %v3437 = vpop.f32.mrb[0].mxu0
    %3438 = vmatprep.mubr.f32.mxu0 0.0
    %3439 = vmatmul.mubr.f32.gmra.mrb[0].mxu0 %v1481
    %v3440 = vpop.f32.mrb[0].mxu0
    %v3441 = vadd.f32 0.0, %v3440
    %v3442 = vpop.f32.mrb[0].mxu0
    %3443 = vmatprep.mubr.f32.mxu0 0.0
    %3444 = vmatmul.mubr.f32.gmra.mrb[0].mxu0 %v1484
    %v3445 = vpop.f32.mrb[0].mxu0
    %v3446 = vadd.f32 0.0, %v3445
    %v3447 = vpop.f32.mrb[0].mxu0
    %3448 = vmatprep.mubr.f32.mxu0 0.0
    %3449 = vmatmul.mubr.f32.gmra.mrb[0].mxu0 %v1486
    %v3450 = vpop.f32.mrb[0].mxu0
    %v3451 = vadd.f32 0.0, %v3450
    %v3452 = vpop.f32.mrb[0].mxu0
    %3453 = vmatprep.mubr.f32.mxu0 0.0
    %3454 = vmatmul.mubr.f32.gmra.mrb[0].mxu0 %v1489
    %v3455 = vpop.f32.mrb[0].mxu0
    %v3456 = vadd.f32 0.0, %v3455
    %v3457 = vpop.f32.mrb[0].mxu0
    %3458 = vmatprep.mubr.f32.mxu0 0.0
    %3459 = vmatmul.mubr.f32.gmra.mrb[0].mxu0 %v1491
    %v3460 = vpop.f32.mrb[0].mxu0
    %v3461 = vadd.f32 0.0, %v3460
    %v3462 = vpop.f32.mrb[0].mxu0
    %3463 = vmatprep.mubr.f32.mxu0 0.0
    %3464 = vmatmul.mubr.f32.gmra.mrb[0].mxu0 %v1494
    %v3465 = vpop.f32.mrb[0].mxu0
    %v3466 = vadd.f32 0.0, %v3465
    %v3467 = vpop.f32.mrb[0].mxu0
    %3468 = vmatprep.mubr.f32.mxu0 0.0
    %3469 = vmatmul.mubr.f32.gmra.mrb[0].mxu0 %v1496
    %v3470 = vpop.f32.mrb[0].mxu0
    %v3471 = vadd.f32 0.0, %v3470
    %v3472 = vpop.f32.mrb[0].mxu0
    %3473 = vmatprep.mubr.f32.mxu0 0.0
    %3474 = vmatmul.mubr.f32.gmra.mrb[0].mxu0 %v1499
    %v3475 = vpop.f32.mrb[0].mxu0
    %v3476 = vadd.f32 0.0, %v3475
    %v3477 = vpop.f32.mrb[0].mxu0
    %3478 = vmatprep.mubr.f32.mxu0 0.0
    %3479 = vmatmul.mubr.f32.gmra.mrb[0].mxu0 %v1501
    %v3480 = vpop.f32.mrb[0].mxu0
    %v3481 = vadd.f32 0.0, %v3480
    %v3482 = vpop.f32.mrb[0].mxu0
    %3483 = vmatprep.mubr.f32.mxu0 0.0
    %3484 = vmatmul.mubr.f32.gmra.mrb[0].mxu0 %v1504
    %v3485 = vpop.f32.mrb[0].mxu0
    %v3486 = vadd.f32 0.0, %v3485
    %v3487 = vpop.f32.mrb[0].mxu0
    %3488 = vmatprep.mubr.f32.mxu0 0.0
    %3489 = vmatmul.mubr.f32.gmra.mrb[0].mxu0 %v1506
    %v3490 = vpop.f32.mrb[0].mxu0
    %v3491 = vadd.f32 0.0, %v3490
    %v3492 = vpop.f32.mrb[0].mxu0
    %3493 = vmatprep.mubr.f32.mxu0 0.0
    %3494 = vmatmul.mubr.f32.gmra.mrb[0].mxu0 %v1509
    %v3495 = vpop.f32.mrb[0].mxu0
    %v3496 = vadd.f32 0.0, %v3495
    %v3497 = vpop.f32.mrb[0].mxu0
    %3498 = vmatprep.mubr.f32.mxu0 0.0
    %3499 = vmatmul.mubr.f32.gmra.mrb[0].mxu0 %v1511
    %v3500 = vpop.f32.mrb[0].mxu0
    %v3501 = vadd.f32 0.0, %v3500
    %v3502 = vpop.f32.mrb[0].mxu0
    %3503 = vmatprep.mubr.f32.mxu0 0.0
    %3504 = vmatmul.mubr.f32.gmra.mrb[0].mxu0 %v1514
    %v3505 = vpop.f32.mrb[0].mxu0
    %v3506 = vadd.f32 0.0, %v3505
    %v3507 = vpop.f32.mrb[0].mxu0
    %3508 = vmatprep.mubr.f32.mxu0 0.0
    %3509 = vmatmul.mubr.f32.gmra.mrb[0].mxu0 %v1516
    %v3510 = vpop.f32.mrb[0].mxu0
    %v3511 = vadd.f32 0.0, %v3510
    %v3512 = vpop.f32.mrb[0].mxu0
    %3513 = vmatprep.mubr.f32.mxu0 0.0
    %3514 = vmatmul.mubr.f32.gmra.mrb[0].mxu0 %v1519
    %v3515 = vpop.f32.mrb[0].mxu0
    %v3516 = vadd.f32 0.0, %v3515
    %v3517 = vpop.f32.mrb[0].mxu0
    %3518 = vmatprep.mubr.f32.mxu0 0.0
    %3519 = vmatmul.mubr.f32.gmra.mrb[0].mxu0 %v1521
    %v3520 = vpop.f32.mrb[0].mxu0
    %v3521 = vadd.f32 0.0, %v3520
    %v3522 = vpop.f32.mrb[0].mxu0
    %3523 = vmatprep.mubr.f32.mxu0 0.0
    %3524 = vmatmul.mubr.f32.gmra.mrb[0].mxu0 %v3125
    %v3525 = vpop.f32.mrb[0].mxu0
    %v3526 = vadd.f32 0.0, %v3525
    %v3527 = vpop.f32.mrb[0].mxu0
    %3528 = vmatprep.mubr.f32.mxu0 0.0
    %3529 = vmatmul.mubr.f32.gmra.mrb[0].mxu0 %v3127
    %v3530 = vpop.f32.mrb[0].mxu0
    %v3531 = vadd.f32 0.0, %v3530
    %v3532 = vpop.f32.mrb[0].mxu0
    %3533 = vdwg.mxu0
    %v3534 = vadd.f32 %v3048, %v3216
    %v3535 = vadd.f32 %v3049, %v3221
    %v3536 = vadd.f32 %v3050, %v3226
    %v3537 = vadd.f32 %v3051, %v3231
    %v3538 = vadd.f32 %v3052, %v3236
    %v3539 = vadd.f32 %v3053, %v3241
    %v3540 = vadd.f32 %v3054, %v3246
    %v3541 = vadd.f32 %v3055, %v3251
    %v3542 = vadd.f32 %v3056, %v3256
    %v3543 = vadd.f32 %v3057, %v3261
    %v3544 = vadd.f32 %v3058, %v3266
    %v3545 = vadd.f32 %v3059, %v3271
    %v3546 = vadd.f32 %v3060, %v3276
    %v3547 = vadd.f32 %v3061, %v3281
    %v3548 = vadd.f32 %v3062, %v3286
    %v3549 = vadd.f32 %v3063, %v3291
    %v3550 = vadd.f32 %v3064, %v3296
    %v3551 = vadd.f32 %v3065, %v3301
    %v3552 = vadd.f32 %v3066, %v3306
    %v3553 = vadd.f32 %v3067, %v3311
    %v3554 = vadd.f32 %v3068, %v3316
    %v3555 = vadd.f32 %v3069, %v3321
    %v3556 = vadd.f32 %v3070, %v3326
    %v3557 = vadd.f32 %v3071, %v3331
    %v3558 = vadd.f32 %v3072, %v3336
    %v3559 = vadd.f32 %v3073, %v3341
    %v3560 = vadd.f32 %v3074, %v3346
    %v3561 = vadd.f32 %v3075, %v3351
    %v3562 = vadd.f32 %v3076, %v3356
    %v3563 = vadd.f32 %v3077, %v3361
    %v3564 = vadd.f32 %v3078, %v3366
    %v3565 = vadd.f32 %v3079, %v3371
    %v3566 = vadd.f32 %v3080, %v3376
    %v3567 = vadd.f32 %v3081, %v3381
    %v3568 = vadd.f32 %v3082, %v3386
    %v3569 = vadd.f32 %v3083, %v3391
    %v3570 = vadd.f32 %v3084, %v3396
    %v3571 = vadd.f32 %v3085, %v3401
    %v3572 = vadd.f32 %v3086, %v3406
    %v3573 = vadd.f32 %v3087, %v3411
    %v3574 = vadd.f32 %v3088, %v3416
    %v3575 = vadd.f32 %v3089, %v3421
    %v3576 = vadd.f32 %v3090, %v3426
    %v3577 = vadd.f32 %v3091, %v3431
    %v3578 = vadd.f32 %v3092, %v3436
    %v3579 = vadd.f32 %v3093, %v3441
    %v3580 = vadd.f32 %v3094, %v3446
    %v3581 = vadd.f32 %v3095, %v3451
    %v3582 = vadd.f32 %v3096, %v3456
    %v3583 = vadd.f32 %v3097, %v3461
    %v3584 = vadd.f32 %v3098, %v3466
    %v3585 = vadd.f32 %v3099, %v3471
    %v3586 = vadd.f32 %v3100, %v3476
    %v3587 = vadd.f32 %v3101, %v3481
    %v3588 = vadd.f32 %v3102, %v3486
    %v3589 = vadd.f32 %v3103, %v3491
    %v3590 = vadd.f32 %v3104, %v3496
    %v3591 = vadd.f32 %v3105, %v3501
    %v3592 = vadd.f32 %v3106, %v3506
    %v3593 = vadd.f32 %v3107, %v3511
    %v3594 = vadd.f32 %v3108, %v3516
    %v3595 = vadd.f32 %v3109, %v3521
    %v3596 = vadd.f32 %v3110, %v3526
    %v3597 = vadd.f32 %v3111, %v3531
    %s3598 = scalar_lea.vmem [#allocation9], 512
    %v3599 = vld [vmem:[%s3598] sm:$0xff]
    %v3600 = vld [vmem:[%s3598 + $0x8] sm:$0xff]
    %v3601 = vld [vmem:[%s3598 + $0x10] sm:$0xff]
    %v3602 = vld [vmem:[%s3598 + $0x18] sm:$0xff]
    %v3603 = vld [vmem:[%s3598 + $0x20] sm:$0xff]
    %v3604 = vld [vmem:[%s3598 + $0x28] sm:$0xff]
    %v3605 = vld [vmem:[%s3598 + $0x30] sm:$0xff]
    %v3606 = vld [vmem:[%s3598 + $0x38] sm:$0xff]
    %v3607 = vld [vmem:[%s3598 + $0x40] sm:$0xff]
    %v3608 = vld [vmem:[%s3598 + $0x48] sm:$0xff]
    %v3609 = vld [vmem:[%s3598 + $0x50] sm:$0xff]
    %v3610 = vld [vmem:[%s3598 + $0x58] sm:$0xff]
    %v3611 = vld [vmem:[%s3598 + $0x60] sm:$0xff]
    %v3612 = vld [vmem:[%s3598 + $0x68] sm:$0xff]
    %v3613 = vld [vmem:[%s3598 + $0x70] sm:$0xff]
    %v3614 = vld [vmem:[%s3598 + $0x78] sm:$0xff]
    %3615 = vmatprep.subr.mxu0 0.0
    %3616 = vmatpush1.msra.mxu0 %v3599
    %3617 = vmatprep.subr.mxu0 0.0
    %3618 = vmatpush1.msra.mxu0 %v3600
    %3619 = vmatprep.subr.mxu0 0.0
    %3620 = vmatpush1.msra.mxu0 %v3601
    %3621 = vmatprep.subr.mxu0 0.0
    %3622 = vmatpush1.msra.mxu0 %v3602
    %3623 = vmatprep.subr.mxu0 0.0
    %3624 = vmatpush1.msra.mxu0 %v3603
    %3625 = vmatprep.subr.mxu0 0.0
    %3626 = vmatpush1.msra.mxu0 %v3604
    %3627 = vmatprep.subr.mxu0 0.0
    %3628 = vmatpush1.msra.mxu0 %v3605
    %3629 = vmatprep.subr.mxu0 0.0
    %3630 = vmatpush1.msra.mxu0 %v3606
    %3631 = vmatprep.subr.mxu0 0.0
    %3632 = vmatpush1.msra.mxu0 %v3607
    %3633 = vmatprep.subr.mxu0 0.0
    %3634 = vmatpush1.msra.mxu0 %v3608
    %3635 = vmatprep.subr.mxu0 0.0
    %3636 = vmatpush1.msra.mxu0 %v3609
    %3637 = vmatprep.subr.mxu0 0.0
    %3638 = vmatpush1.msra.mxu0 %v3610
    %3639 = vmatprep.subr.mxu0 0.0
    %3640 = vmatpush1.msra.mxu0 %v3611
    %3641 = vmatprep.subr.mxu0 0.0
    %3642 = vmatpush1.msra.mxu0 %v3612
    %3643 = vmatprep.subr.mxu0 0.0
    %3644 = vmatpush1.msra.mxu0 %v3613
    %3645 = vmatprep.subr.mxu0 0.0
    %3646 = vmatpush1.msra.mxu0 %v3614
    %3647 = vmatprep.subr.mxu0 0.0
    %3648 = vmatpush1.msra.mxu0 0.0
    %3649 = vmatprep.subr.mxu0 0.0
    %3650 = vmatpush1.msra.mxu0 0.0
    %3651 = vmatprep.subr.mxu0 0.0
    %3652 = vmatpush1.msra.mxu0 0.0
    %3653 = vmatprep.subr.mxu0 0.0
    %3654 = vmatpush1.msra.mxu0 0.0
    %3655 = vmatprep.subr.mxu0 0.0
    %3656 = vmatpush1.msra.mxu0 0.0
    %3657 = vmatprep.subr.mxu0 0.0
    %3658 = vmatpush1.msra.mxu0 0.0
    %3659 = vmatprep.subr.mxu0 0.0
    %3660 = vmatpush1.msra.mxu0 0.0
    %3661 = vmatprep.subr.mxu0 0.0
    %3662 = vmatpush1.msra.mxu0 0.0
    %3663 = vmatprep.subr.mxu0 0.0
    %3664 = vmatpush1.msra.mxu0 0.0
    %3665 = vmatprep.subr.mxu0 0.0
    %3666 = vmatpush1.msra.mxu0 0.0
    %3667 = vmatprep.subr.mxu0 0.0
    %3668 = vmatpush1.msra.mxu0 0.0
    %3669 = vmatprep.subr.mxu0 0.0
    %3670 = vmatpush1.msra.mxu0 0.0
    %3671 = vmatprep.subr.mxu0 0.0
    %3672 = vmatpush1.msra.mxu0 0.0
    %3673 = vmatprep.subr.mxu0 0.0
    %3674 = vmatpush1.msra.mxu0 0.0
    %3675 = vmatprep.subr.mxu0 0.0
    %3676 = vmatpush1.msra.mxu0 0.0
    %3677 = vmatprep.subr.mxu0 0.0
    %3678 = vmatpush1.msra.mxu0 0.0
    %3679 = vmatprep.mubr.f32.mxu0 0.0
    %3680 = vmatmul.mubr.f32.gmra.mrb[0].mxu0 %v1126
    %v3681 = vpop.f32.mrb[0].mxu0
    %v3682 = vadd.f32 0.0, %v3681
    %v3683 = vpop.f32.mrb[0].mxu0
    %3684 = vmatprep.mubr.f32.mxu0 0.0
    %3685 = vmatmul.mubr.f32.gmra.mrb[0].mxu0 %v1127
    %v3686 = vpop.f32.mrb[0].mxu0
    %v3687 = vadd.f32 0.0, %v3686
    %v3688 = vpop.f32.mrb[0].mxu0
    %3689 = vmatprep.mubr.f32.mxu0 0.0
    %3690 = vmatmul.mubr.f32.gmra.mrb[0].mxu0 %v1130
    %v3691 = vpop.f32.mrb[0].mxu0
    %v3692 = vadd.f32 0.0, %v3691
    %v3693 = vpop.f32.mrb[0].mxu0
    %3694 = vmatprep.mubr.f32.mxu0 0.0
    %3695 = vmatmul.mubr.f32.gmra.mrb[0].mxu0 %v1131
    %v3696 = vpop.f32.mrb[0].mxu0
    %v3697 = vadd.f32 0.0, %v3696
    %v3698 = vpop.f32.mrb[0].mxu0
    %3699 = vmatprep.mubr.f32.mxu0 0.0
    %3700 = vmatmul.mubr.f32.gmra.mrb[0].mxu0 %v1134
    %v3701 = vpop.f32.mrb[0].mxu0
    %v3702 = vadd.f32 0.0, %v3701
    %v3703 = vpop.f32.mrb[0].mxu0
    %3704 = vmatprep.mubr.f32.mxu0 0.0
    %3705 = vmatmul.mubr.f32.gmra.mrb[0].mxu0 %v1135
    %v3706 = vpop.f32.mrb[0].mxu0
    %v3707 = vadd.f32 0.0, %v3706
    %v3708 = vpop.f32.mrb[0].mxu0
    %3709 = vmatprep.mubr.f32.mxu0 0.0
    %3710 = vmatmul.mubr.f32.gmra.mrb[0].mxu0 %v1138
    %v3711 = vpop.f32.mrb[0].mxu0
    %v3712 = vadd.f32 0.0, %v3711
    %v3713 = vpop.f32.mrb[0].mxu0
    %3714 = vmatprep.mubr.f32.mxu0 0.0
    %3715 = vmatmul.mubr.f32.gmra.mrb[0].mxu0 %v1139
    %v3716 = vpop.f32.mrb[0].mxu0
    %v3717 = vadd.f32 0.0, %v3716
    %v3718 = vpop.f32.mrb[0].mxu0
    %3719 = vmatprep.mubr.f32.mxu0 0.0
    %3720 = vmatmul.mubr.f32.gmra.mrb[0].mxu0 %v1142
    %v3721 = vpop.f32.mrb[0].mxu0
    %v3722 = vadd.f32 0.0, %v3721
    %v3723 = vpop.f32.mrb[0].mxu0
    %3724 = vmatprep.mubr.f32.mxu0 0.0
    %3725 = vmatmul.mubr.f32.gmra.mrb[0].mxu0 %v1143
    %v3726 = vpop.f32.mrb[0].mxu0
    %v3727 = vadd.f32 0.0, %v3726
    %v3728 = vpop.f32.mrb[0].mxu0
    %3729 = vmatprep.mubr.f32.mxu0 0.0
    %3730 = vmatmul.mubr.f32.gmra.mrb[0].mxu0 %v1146
    %v3731 = vpop.f32.mrb[0].mxu0
    %v3732 = vadd.f32 0.0, %v3731
    %v3733 = vpop.f32.mrb[0].mxu0
    %3734 = vmatprep.mubr.f32.mxu0 0.0
    %3735 = vmatmul.mubr.f32.gmra.mrb[0].mxu0 %v1147
    %v3736 = vpop.f32.mrb[0].mxu0
    %v3737 = vadd.f32 0.0, %v3736
    %v3738 = vpop.f32.mrb[0].mxu0
    %3739 = vmatprep.mubr.f32.mxu0 0.0
    %3740 = vmatmul.mubr.f32.gmra.mrb[0].mxu0 %v1150
    %v3741 = vpop.f32.mrb[0].mxu0
    %v3742 = vadd.f32 0.0, %v3741
    %v3743 = vpop.f32.mrb[0].mxu0
    %3744 = vmatprep.mubr.f32.mxu0 0.0
    %3745 = vmatmul.mubr.f32.gmra.mrb[0].mxu0 %v1151
    %v3746 = vpop.f32.mrb[0].mxu0
    %v3747 = vadd.f32 0.0, %v3746
    %v3748 = vpop.f32.mrb[0].mxu0
    %3749 = vmatprep.mubr.f32.mxu0 0.0
    %3750 = vmatmul.mubr.f32.gmra.mrb[0].mxu0 %v1154
    %v3751 = vpop.f32.mrb[0].mxu0
    %v3752 = vadd.f32 0.0, %v3751
    %v3753 = vpop.f32.mrb[0].mxu0
    %3754 = vmatprep.mubr.f32.mxu0 0.0
    %3755 = vmatmul.mubr.f32.gmra.mrb[0].mxu0 %v1155
    %v3756 = vpop.f32.mrb[0].mxu0
    %v3757 = vadd.f32 0.0, %v3756
    %v3758 = vpop.f32.mrb[0].mxu0
    %3759 = vmatprep.mubr.f32.mxu0 0.0
    %3760 = vmatmul.mubr.f32.gmra.mrb[0].mxu0 %v1158
    %v3761 = vpop.f32.mrb[0].mxu0
    %v3762 = vadd.f32 0.0, %v3761
    %v3763 = vpop.f32.mrb[0].mxu0
    %3764 = vmatprep.mubr.f32.mxu0 0.0
    %3765 = vmatmul.mubr.f32.gmra.mrb[0].mxu0 %v1159
    %v3766 = vpop.f32.mrb[0].mxu0
    %v3767 = vadd.f32 0.0, %v3766
    %v3768 = vpop.f32.mrb[0].mxu0
    %3769 = vmatprep.mubr.f32.mxu0 0.0
    %3770 = vmatmul.mubr.f32.gmra.mrb[0].mxu0 %v1162
    %v3771 = vpop.f32.mrb[0].mxu0
    %v3772 = vadd.f32 0.0, %v3771
    %v3773 = vpop.f32.mrb[0].mxu0
    %3774 = vmatprep.mubr.f32.mxu0 0.0
    %3775 = vmatmul.mubr.f32.gmra.mrb[0].mxu0 %v1163
    %v3776 = vpop.f32.mrb[0].mxu0
    %v3777 = vadd.f32 0.0, %v3776
    %v3778 = vpop.f32.mrb[0].mxu0
    %3779 = vmatprep.mubr.f32.mxu0 0.0
    %3780 = vmatmul.mubr.f32.gmra.mrb[0].mxu0 %v1166
    %v3781 = vpop.f32.mrb[0].mxu0
    %v3782 = vadd.f32 0.0, %v3781
    %v3783 = vpop.f32.mrb[0].mxu0
    %3784 = vmatprep.mubr.f32.mxu0 0.0
    %3785 = vmatmul.mubr.f32.gmra.mrb[0].mxu0 %v1167
    %v3786 = vpop.f32.mrb[0].mxu0
    %v3787 = vadd.f32 0.0, %v3786
    %v3788 = vpop.f32.mrb[0].mxu0
    %3789 = vmatprep.mubr.f32.mxu0 0.0
    %3790 = vmatmul.mubr.f32.gmra.mrb[0].mxu0 %v1170
    %v3791 = vpop.f32.mrb[0].mxu0
    %v3792 = vadd.f32 0.0, %v3791
    %v3793 = vpop.f32.mrb[0].mxu0
    %3794 = vmatprep.mubr.f32.mxu0 0.0
    %3795 = vmatmul.mubr.f32.gmra.mrb[0].mxu0 %v1171
    %v3796 = vpop.f32.mrb[0].mxu0
    %v3797 = vadd.f32 0.0, %v3796
    %v3798 = vpop.f32.mrb[0].mxu0
    %3799 = vmatprep.mubr.f32.mxu0 0.0
    %3800 = vmatmul.mubr.f32.gmra.mrb[0].mxu0 %v1174
    %v3801 = vpop.f32.mrb[0].mxu0
    %v3802 = vadd.f32 0.0, %v3801
    %v3803 = vpop.f32.mrb[0].mxu0
    %3804 = vmatprep.mubr.f32.mxu0 0.0
    %3805 = vmatmul.mubr.f32.gmra.mrb[0].mxu0 %v1175
    %v3806 = vpop.f32.mrb[0].mxu0
    %v3807 = vadd.f32 0.0, %v3806
    %v3808 = vpop.f32.mrb[0].mxu0
    %3809 = vmatprep.mubr.f32.mxu0 0.0
    %3810 = vmatmul.mubr.f32.gmra.mrb[0].mxu0 %v1178
    %v3811 = vpop.f32.mrb[0].mxu0
    %v3812 = vadd.f32 0.0, %v3811
    %v3813 = vpop.f32.mrb[0].mxu0
    %3814 = vmatprep.mubr.f32.mxu0 0.0
    %3815 = vmatmul.mubr.f32.gmra.mrb[0].mxu0 %v1179
    %v3816 = vpop.f32.mrb[0].mxu0
    %v3817 = vadd.f32 0.0, %v3816
    %v3818 = vpop.f32.mrb[0].mxu0
    %3819 = vmatprep.mubr.f32.mxu0 0.0
    %3820 = vmatmul.mubr.f32.gmra.mrb[0].mxu0 %v1182
    %v3821 = vpop.f32.mrb[0].mxu0
    %v3822 = vadd.f32 0.0, %v3821
    %v3823 = vpop.f32.mrb[0].mxu0
    %3824 = vmatprep.mubr.f32.mxu0 0.0
    %3825 = vmatmul.mubr.f32.gmra.mrb[0].mxu0 %v1183
    %v3826 = vpop.f32.mrb[0].mxu0
    %v3827 = vadd.f32 0.0, %v3826
    %v3828 = vpop.f32.mrb[0].mxu0
    %3829 = vmatprep.mubr.f32.mxu0 0.0
    %3830 = vmatmul.mubr.f32.gmra.mrb[0].mxu0 %v1186
    %v3831 = vpop.f32.mrb[0].mxu0
    %v3832 = vadd.f32 0.0, %v3831
    %v3833 = vpop.f32.mrb[0].mxu0
    %3834 = vmatprep.mubr.f32.mxu0 0.0
    %3835 = vmatmul.mubr.f32.gmra.mrb[0].mxu0 %v1187
    %v3836 = vpop.f32.mrb[0].mxu0
    %v3837 = vadd.f32 0.0, %v3836
    %v3838 = vpop.f32.mrb[0].mxu0
    %3839 = vmatprep.mubr.f32.mxu0 0.0
    %3840 = vmatmul.mubr.f32.gmra.mrb[0].mxu0 %v1198
    %v3841 = vpop.f32.mrb[0].mxu0
    %v3842 = vadd.f32 0.0, %v3841
    %v3843 = vpop.f32.mrb[0].mxu0
    %3844 = vmatprep.mubr.f32.mxu0 0.0
    %3845 = vmatmul.mubr.f32.gmra.mrb[0].mxu0 %v1199
    %v3846 = vpop.f32.mrb[0].mxu0
    %v3847 = vadd.f32 0.0, %v3846
    %v3848 = vpop.f32.mrb[0].mxu0
    %3849 = vmatprep.mubr.f32.mxu0 0.0
    %3850 = vmatmul.mubr.f32.gmra.mrb[0].mxu0 %v1202
    %v3851 = vpop.f32.mrb[0].mxu0
    %v3852 = vadd.f32 0.0, %v3851
    %v3853 = vpop.f32.mrb[0].mxu0
    %3854 = vmatprep.mubr.f32.mxu0 0.0
    %3855 = vmatmul.mubr.f32.gmra.mrb[0].mxu0 %v1203
    %v3856 = vpop.f32.mrb[0].mxu0
    %v3857 = vadd.f32 0.0, %v3856
    %v3858 = vpop.f32.mrb[0].mxu0
    %3859 = vmatprep.mubr.f32.mxu0 0.0
    %3860 = vmatmul.mubr.f32.gmra.mrb[0].mxu0 %v1206
    %v3861 = vpop.f32.mrb[0].mxu0
    %v3862 = vadd.f32 0.0, %v3861
    %v3863 = vpop.f32.mrb[0].mxu0
    %3864 = vmatprep.mubr.f32.mxu0 0.0
    %3865 = vmatmul.mubr.f32.gmra.mrb[0].mxu0 %v1207
    %v3866 = vpop.f32.mrb[0].mxu0
    %v3867 = vadd.f32 0.0, %v3866
    %v3868 = vpop.f32.mrb[0].mxu0
    %3869 = vmatprep.mubr.f32.mxu0 0.0
    %3870 = vmatmul.mubr.f32.gmra.mrb[0].mxu0 %v1210
    %v3871 = vpop.f32.mrb[0].mxu0
    %v3872 = vadd.f32 0.0, %v3871
    %v3873 = vpop.f32.mrb[0].mxu0
    %3874 = vmatprep.mubr.f32.mxu0 0.0
    %3875 = vmatmul.mubr.f32.gmra.mrb[0].mxu0 %v1211
    %v3876 = vpop.f32.mrb[0].mxu0
    %v3877 = vadd.f32 0.0, %v3876
    %v3878 = vpop.f32.mrb[0].mxu0
    %3879 = vmatprep.mubr.f32.mxu0 0.0
    %3880 = vmatmul.mubr.f32.gmra.mrb[0].mxu0 %v1214
    %v3881 = vpop.f32.mrb[0].mxu0
    %v3882 = vadd.f32 0.0, %v3881
    %v3883 = vpop.f32.mrb[0].mxu0
    %3884 = vmatprep.mubr.f32.mxu0 0.0
    %3885 = vmatmul.mubr.f32.gmra.mrb[0].mxu0 %v1215
    %v3886 = vpop.f32.mrb[0].mxu0
    %v3887 = vadd.f32 0.0, %v3886
    %v3888 = vpop.f32.mrb[0].mxu0
    %3889 = vmatprep.mubr.f32.mxu0 0.0
    %3890 = vmatmul.mubr.f32.gmra.mrb[0].mxu0 %v1218
    %v3891 = vpop.f32.mrb[0].mxu0
    %v3892 = vadd.f32 0.0, %v3891
    %v3893 = vpop.f32.mrb[0].mxu0
    %3894 = vmatprep.mubr.f32.mxu0 0.0
    %3895 = vmatmul.mubr.f32.gmra.mrb[0].mxu0 %v1219
    %v3896 = vpop.f32.mrb[0].mxu0
    %v3897 = vadd.f32 0.0, %v3896
    %v3898 = vpop.f32.mrb[0].mxu0
    %3899 = vmatprep.mubr.f32.mxu0 0.0
    %3900 = vmatmul.mubr.f32.gmra.mrb[0].mxu0 %v1222
    %v3901 = vpop.f32.mrb[0].mxu0
    %v3902 = vadd.f32 0.0, %v3901
    %v3903 = vpop.f32.mrb[0].mxu0
    %3904 = vmatprep.mubr.f32.mxu0 0.0
    %3905 = vmatmul.mubr.f32.gmra.mrb[0].mxu0 %v1223
    %v3906 = vpop.f32.mrb[0].mxu0
    %v3907 = vadd.f32 0.0, %v3906
    %v3908 = vpop.f32.mrb[0].mxu0
    %3909 = vmatprep.mubr.f32.mxu0 0.0
    %3910 = vmatmul.mubr.f32.gmra.mrb[0].mxu0 %v1226
    %v3911 = vpop.f32.mrb[0].mxu0
    %v3912 = vadd.f32 0.0, %v3911
    %v3913 = vpop.f32.mrb[0].mxu0
    %3914 = vmatprep.mubr.f32.mxu0 0.0
    %3915 = vmatmul.mubr.f32.gmra.mrb[0].mxu0 %v1227
    %v3916 = vpop.f32.mrb[0].mxu0
    %v3917 = vadd.f32 0.0, %v3916
    %v3918 = vpop.f32.mrb[0].mxu0
    %3919 = vmatprep.mubr.f32.mxu0 0.0
    %3920 = vmatmul.mubr.f32.gmra.mrb[0].mxu0 %v1230
    %v3921 = vpop.f32.mrb[0].mxu0
    %v3922 = vadd.f32 0.0, %v3921
    %v3923 = vpop.f32.mrb[0].mxu0
    %3924 = vmatprep.mubr.f32.mxu0 0.0
    %3925 = vmatmul.mubr.f32.gmra.mrb[0].mxu0 %v1231
    %v3926 = vpop.f32.mrb[0].mxu0
    %v3927 = vadd.f32 0.0, %v3926
    %v3928 = vpop.f32.mrb[0].mxu0
    %3929 = vmatprep.mubr.f32.mxu0 0.0
    %3930 = vmatmul.mubr.f32.gmra.mrb[0].mxu0 %v1234
    %v3931 = vpop.f32.mrb[0].mxu0
    %v3932 = vadd.f32 0.0, %v3931
    %v3933 = vpop.f32.mrb[0].mxu0
    %3934 = vmatprep.mubr.f32.mxu0 0.0
    %3935 = vmatmul.mubr.f32.gmra.mrb[0].mxu0 %v1235
    %v3936 = vpop.f32.mrb[0].mxu0
    %v3937 = vadd.f32 0.0, %v3936
    %v3938 = vpop.f32.mrb[0].mxu0
    %3939 = vmatprep.mubr.f32.mxu0 0.0
    %3940 = vmatmul.mubr.f32.gmra.mrb[0].mxu0 %v1238
    %v3941 = vpop.f32.mrb[0].mxu0
    %v3942 = vadd.f32 0.0, %v3941
    %v3943 = vpop.f32.mrb[0].mxu0
    %3944 = vmatprep.mubr.f32.mxu0 0.0
    %3945 = vmatmul.mubr.f32.gmra.mrb[0].mxu0 %v1239
    %v3946 = vpop.f32.mrb[0].mxu0
    %v3947 = vadd.f32 0.0, %v3946
    %v3948 = vpop.f32.mrb[0].mxu0
    %3949 = vmatprep.mubr.f32.mxu0 0.0
    %3950 = vmatmul.mubr.f32.gmra.mrb[0].mxu0 %v1242
    %v3951 = vpop.f32.mrb[0].mxu0
    %v3952 = vadd.f32 0.0, %v3951
    %v3953 = vpop.f32.mrb[0].mxu0
    %3954 = vmatprep.mubr.f32.mxu0 0.0
    %3955 = vmatmul.mubr.f32.gmra.mrb[0].mxu0 %v1243
    %v3956 = vpop.f32.mrb[0].mxu0
    %v3957 = vadd.f32 0.0, %v3956
    %v3958 = vpop.f32.mrb[0].mxu0
    %3959 = vmatprep.mubr.f32.mxu0 0.0
    %3960 = vmatmul.mubr.f32.gmra.mrb[0].mxu0 %v1246
    %v3961 = vpop.f32.mrb[0].mxu0
    %v3962 = vadd.f32 0.0, %v3961
    %v3963 = vpop.f32.mrb[0].mxu0
    %3964 = vmatprep.mubr.f32.mxu0 0.0
    %3965 = vmatmul.mubr.f32.gmra.mrb[0].mxu0 %v1247
    %v3966 = vpop.f32.mrb[0].mxu0
    %v3967 = vadd.f32 0.0, %v3966
    %v3968 = vpop.f32.mrb[0].mxu0
    %3969 = vmatprep.mubr.f32.mxu0 0.0
    %3970 = vmatmul.mubr.f32.gmra.mrb[0].mxu0 %v1250
    %v3971 = vpop.f32.mrb[0].mxu0
    %v3972 = vadd.f32 0.0, %v3971
    %v3973 = vpop.f32.mrb[0].mxu0
    %3974 = vmatprep.mubr.f32.mxu0 0.0
    %3975 = vmatmul.mubr.f32.gmra.mrb[0].mxu0 %v1251
    %v3976 = vpop.f32.mrb[0].mxu0
    %v3977 = vadd.f32 0.0, %v3976
    %v3978 = vpop.f32.mrb[0].mxu0
    %3979 = vmatprep.mubr.f32.mxu0 0.0
    %3980 = vmatmul.mubr.f32.gmra.mrb[0].mxu0 %v1254
    %v3981 = vpop.f32.mrb[0].mxu0
    %v3982 = vadd.f32 0.0, %v3981
    %v3983 = vpop.f32.mrb[0].mxu0
    %3984 = vmatprep.mubr.f32.mxu0 0.0
    %3985 = vmatmul.mubr.f32.gmra.mrb[0].mxu0 %v1255
    %v3986 = vpop.f32.mrb[0].mxu0
    %v3987 = vadd.f32 0.0, %v3986
    %v3988 = vpop.f32.mrb[0].mxu0
    %3989 = vmatprep.mubr.f32.mxu0 0.0
    %3990 = vmatmul.mubr.f32.gmra.mrb[0].mxu0 %v1258
    %v3991 = vpop.f32.mrb[0].mxu0
    %v3992 = vadd.f32 0.0, %v3991
    %v3993 = vpop.f32.mrb[0].mxu0
    %3994 = vmatprep.mubr.f32.mxu0 0.0
    %3995 = vmatmul.mubr.f32.gmra.mrb[0].mxu0 %v1259
    %v3996 = vpop.f32.mrb[0].mxu0
    %v3997 = vadd.f32 0.0, %v3996
    %v3998 = vpop.f32.mrb[0].mxu0
    %3999 = vdwg.mxu0
    %v4000 = vadd.f32 %v3534, %v3682
    %v4001 = vadd.f32 %v3535, %v3687
    %v4002 = vadd.f32 %v3536, %v3692
    %v4003 = vadd.f32 %v3537, %v3697
    %v4004 = vadd.f32 %v3538, %v3702
    %v4005 = vadd.f32 %v3539, %v3707
    %v4006 = vadd.f32 %v3540, %v3712
    %v4007 = vadd.f32 %v3541, %v3717
    %v4008 = vadd.f32 %v3542, %v3722
    %v4009 = vadd.f32 %v3543, %v3727
    %v4010 = vadd.f32 %v3544, %v3732
    %v4011 = vadd.f32 %v3545, %v3737
    %v4012 = vadd.f32 %v3546, %v3742
    %v4013 = vadd.f32 %v3547, %v3747
    %v4014 = vadd.f32 %v3548, %v3752
    %v4015 = vadd.f32 %v3549, %v3757
    %v4016 = vadd.f32 %v3550, %v3762
    %v4017 = vadd.f32 %v3551, %v3767
    %v4018 = vadd.f32 %v3552, %v3772
    %v4019 = vadd.f32 %v3553, %v3777
    %v4020 = vadd.f32 %v3554, %v3782
    %v4021 = vadd.f32 %v3555, %v3787
    %v4022 = vadd.f32 %v3556, %v3792
    %v4023 = vadd.f32 %v3557, %v3797
    %v4024 = vadd.f32 %v3558, %v3802
    %v4025 = vadd.f32 %v3559, %v3807
    %v4026 = vadd.f32 %v3560, %v3812
    %v4027 = vadd.f32 %v3561, %v3817
    %v4028 = vadd.f32 %v3562, %v3822
    %v4029 = vadd.f32 %v3563, %v3827
    %v4030 = vadd.f32 %v3564, %v3832
    %v4031 = vadd.f32 %v3565, %v3837
    %v4032 = vadd.f32 %v3566, %v3842
    %v4033 = vadd.f32 %v3567, %v3847
    %v4034 = vadd.f32 %v3568, %v3852
    %v4035 = vadd.f32 %v3569, %v3857
    %v4036 = vadd.f32 %v3570, %v3862
    %v4037 = vadd.f32 %v3571, %v3867
    %v4038 = vadd.f32 %v3572, %v3872
    %v4039 = vadd.f32 %v3573, %v3877
    %v4040 = vadd.f32 %v3574, %v3882
    %v4041 = vadd.f32 %v3575, %v3887
    %v4042 = vadd.f32 %v3576, %v3892
    %v4043 = vadd.f32 %v3577, %v3897
    %v4044 = vadd.f32 %v3578, %v3902
    %v4045 = vadd.f32 %v3579, %v3907
    %v4046 = vadd.f32 %v3580, %v3912
    %v4047 = vadd.f32 %v3581, %v3917
    %v4048 = vadd.f32 %v3582, %v3922
    %v4049 = vadd.f32 %v3583, %v3927
    %v4050 = vadd.f32 %v3584, %v3932
    %v4051 = vadd.f32 %v3585, %v3937
    %v4052 = vadd.f32 %v3586, %v3942
    %v4053 = vadd.f32 %v3587, %v3947
    %v4054 = vadd.f32 %v3588, %v3952
    %v4055 = vadd.f32 %v3589, %v3957
    %v4056 = vadd.f32 %v3590, %v3962
    %v4057 = vadd.f32 %v3591, %v3967
    %v4058 = vadd.f32 %v3592, %v3972
    %v4059 = vadd.f32 %v3593, %v3977
    %v4060 = vadd.f32 %v3594, %v3982
    %v4061 = vadd.f32 %v3595, %v3987
    %v4062 = vadd.f32 %v3596, %v3992
    %v4063 = vadd.f32 %v3597, %v3997
    %v4066 = vrot.slane %v1186, 1
    %v4067 = vrot.slane %v1187, 1
    %v4068 = vsel %vm2421, %v4066, %v4067
    %v4069 = vrot.slane %v1188, 1
    %v4070 = vsel %vm2421, %v4067, %v4069
    %v4071 = vrot.slane %v1258, 1
    %v4072 = vrot.slane %v1259, 1
    %v4073 = vsel %vm2421, %v4071, %v4072
    %v4074 = vrot.slane %v1260, 1
    %v4075 = vsel %vm2421, %v4072, %v4074
    %s4080 = scalar_lea.vmem [#allocation9], 640
    %v4081 = vld [vmem:[%s4080] sm:$0xff]
    %v4082 = vld [vmem:[%s4080 + $0x8] sm:$0xff]
    %v4083 = vld [vmem:[%s4080 + $0x10] sm:$0xff]
    %v4084 = vld [vmem:[%s4080 + $0x18] sm:$0xff]
    %v4085 = vld [vmem:[%s4080 + $0x20] sm:$0xff]
    %v4086 = vld [vmem:[%s4080 + $0x28] sm:$0xff]
    %v4087 = vld [vmem:[%s4080 + $0x30] sm:$0xff]
    %v4088 = vld [vmem:[%s4080 + $0x38] sm:$0xff]
    %v4089 = vld [vmem:[%s4080 + $0x40] sm:$0xff]
    %v4090 = vld [vmem:[%s4080 + $0x48] sm:$0xff]
    %v4091 = vld [vmem:[%s4080 + $0x50] sm:$0xff]
    %v4092 = vld [vmem:[%s4080 + $0x58] sm:$0xff]
    %v4093 = vld [vmem:[%s4080 + $0x60] sm:$0xff]
    %v4094 = vld [vmem:[%s4080 + $0x68] sm:$0xff]
    %v4095 = vld [vmem:[%s4080 + $0x70] sm:$0xff]
    %v4096 = vld [vmem:[%s4080 + $0x78] sm:$0xff]
    %4097 = vmatprep.subr.mxu0 0.0
    %4098 = vmatpush1.msra.mxu0 %v4081
    %4099 = vmatprep.subr.mxu0 0.0
    %4100 = vmatpush1.msra.mxu0 %v4082
    %4101 = vmatprep.subr.mxu0 0.0
    %4102 = vmatpush1.msra.mxu0 %v4083
    %4103 = vmatprep.subr.mxu0 0.0
    %4104 = vmatpush1.msra.mxu0 %v4084
    %4105 = vmatprep.subr.mxu0 0.0
    %4106 = vmatpush1.msra.mxu0 %v4085
    %4107 = vmatprep.subr.mxu0 0.0
    %4108 = vmatpush1.msra.mxu0 %v4086
    %4109 = vmatprep.subr.mxu0 0.0
    %4110 = vmatpush1.msra.mxu0 %v4087
    %4111 = vmatprep.subr.mxu0 0.0
    %4112 = vmatpush1.msra.mxu0 %v4088
    %4113 = vmatprep.subr.mxu0 0.0
    %4114 = vmatpush1.msra.mxu0 %v4089
    %4115 = vmatprep.subr.mxu0 0.0
    %4116 = vmatpush1.msra.mxu0 %v4090
    %4117 = vmatprep.subr.mxu0 0.0
    %4118 = vmatpush1.msra.mxu0 %v4091
    %4119 = vmatprep.subr.mxu0 0.0
    %4120 = vmatpush1.msra.mxu0 %v4092
    %4121 = vmatprep.subr.mxu0 0.0
    %4122 = vmatpush1.msra.mxu0 %v4093
    %4123 = vmatprep.subr.mxu0 0.0
    %4124 = vmatpush1.msra.mxu0 %v4094
    %4125 = vmatprep.subr.mxu0 0.0
    %4126 = vmatpush1.msra.mxu0 %v4095
    %4127 = vmatprep.subr.mxu0 0.0
    %4128 = vmatpush1.msra.mxu0 %v4096
    %4129 = vmatprep.subr.mxu0 0.0
    %4130 = vmatpush1.msra.mxu0 0.0
    %4131 = vmatprep.subr.mxu0 0.0
    %4132 = vmatpush1.msra.mxu0 0.0
    %4133 = vmatprep.subr.mxu0 0.0
    %4134 = vmatpush1.msra.mxu0 0.0
    %4135 = vmatprep.subr.mxu0 0.0
    %4136 = vmatpush1.msra.mxu0 0.0
    %4137 = vmatprep.subr.mxu0 0.0
    %4138 = vmatpush1.msra.mxu0 0.0
    %4139 = vmatprep.subr.mxu0 0.0
    %4140 = vmatpush1.msra.mxu0 0.0
    %4141 = vmatprep.subr.mxu0 0.0
    %4142 = vmatpush1.msra.mxu0 0.0
    %4143 = vmatprep.subr.mxu0 0.0
    %4144 = vmatpush1.msra.mxu0 0.0
    %4145 = vmatprep.subr.mxu0 0.0
    %4146 = vmatpush1.msra.mxu0 0.0
    %4147 = vmatprep.subr.mxu0 0.0
    %4148 = vmatpush1.msra.mxu0 0.0
    %4149 = vmatprep.subr.mxu0 0.0
    %4150 = vmatpush1.msra.mxu0 0.0
    %4151 = vmatprep.subr.mxu0 0.0
    %4152 = vmatpush1.msra.mxu0 0.0
    %4153 = vmatprep.subr.mxu0 0.0
    %4154 = vmatpush1.msra.mxu0 0.0
    %4155 = vmatprep.subr.mxu0 0.0
    %4156 = vmatpush1.msra.mxu0 0.0
    %4157 = vmatprep.subr.mxu0 0.0
    %4158 = vmatpush1.msra.mxu0 0.0
    %4159 = vmatprep.subr.mxu0 0.0
    %4160 = vmatpush1.msra.mxu0 0.0
    %4161 = vmatprep.mubr.f32.mxu0 0.0
    %4162 = vmatmul.mubr.f32.gmra.mrb[0].mxu0 %v2429
    %v4163 = vpop.f32.mrb[0].mxu0
    %v4164 = vadd.f32 0.0, %v4163
    %v4165 = vpop.f32.mrb[0].mxu0
    %4166 = vmatprep.mubr.f32.mxu0 0.0
    %4167 = vmatmul.mubr.f32.gmra.mrb[0].mxu0 %v2431
    %v4168 = vpop.f32.mrb[0].mxu0
    %v4169 = vadd.f32 0.0, %v4168
    %v4170 = vpop.f32.mrb[0].mxu0
    %4171 = vmatprep.mubr.f32.mxu0 0.0
    %4172 = vmatmul.mubr.f32.gmra.mrb[0].mxu0 %v2434
    %v4173 = vpop.f32.mrb[0].mxu0
    %v4174 = vadd.f32 0.0, %v4173
    %v4175 = vpop.f32.mrb[0].mxu0
    %4176 = vmatprep.mubr.f32.mxu0 0.0
    %4177 = vmatmul.mubr.f32.gmra.mrb[0].mxu0 %v2436
    %v4178 = vpop.f32.mrb[0].mxu0
    %v4179 = vadd.f32 0.0, %v4178
    %v4180 = vpop.f32.mrb[0].mxu0
    %4181 = vmatprep.mubr.f32.mxu0 0.0
    %4182 = vmatmul.mubr.f32.gmra.mrb[0].mxu0 %v2439
    %v4183 = vpop.f32.mrb[0].mxu0
    %v4184 = vadd.f32 0.0, %v4183
    %v4185 = vpop.f32.mrb[0].mxu0
    %4186 = vmatprep.mubr.f32.mxu0 0.0
    %4187 = vmatmul.mubr.f32.gmra.mrb[0].mxu0 %v2441
    %v4188 = vpop.f32.mrb[0].mxu0
    %v4189 = vadd.f32 0.0, %v4188
    %v4190 = vpop.f32.mrb[0].mxu0
    %4191 = vmatprep.mubr.f32.mxu0 0.0
    %4192 = vmatmul.mubr.f32.gmra.mrb[0].mxu0 %v2444
    %v4193 = vpop.f32.mrb[0].mxu0
    %v4194 = vadd.f32 0.0, %v4193
    %v4195 = vpop.f32.mrb[0].mxu0
    %4196 = vmatprep.mubr.f32.mxu0 0.0
    %4197 = vmatmul.mubr.f32.gmra.mrb[0].mxu0 %v2446
    %v4198 = vpop.f32.mrb[0].mxu0
    %v4199 = vadd.f32 0.0, %v4198
    %v4200 = vpop.f32.mrb[0].mxu0
    %4201 = vmatprep.mubr.f32.mxu0 0.0
    %4202 = vmatmul.mubr.f32.gmra.mrb[0].mxu0 %v2449
    %v4203 = vpop.f32.mrb[0].mxu0
    %v4204 = vadd.f32 0.0, %v4203
    %v4205 = vpop.f32.mrb[0].mxu0
    %4206 = vmatprep.mubr.f32.mxu0 0.0
    %4207 = vmatmul.mubr.f32.gmra.mrb[0].mxu0 %v2451
    %v4208 = vpop.f32.mrb[0].mxu0
    %v4209 = vadd.f32 0.0, %v4208
    %v4210 = vpop.f32.mrb[0].mxu0
    %4211 = vmatprep.mubr.f32.mxu0 0.0
    %4212 = vmatmul.mubr.f32.gmra.mrb[0].mxu0 %v2454
    %v4213 = vpop.f32.mrb[0].mxu0
    %v4214 = vadd.f32 0.0, %v4213
    %v4215 = vpop.f32.mrb[0].mxu0
    %4216 = vmatprep.mubr.f32.mxu0 0.0
    %4217 = vmatmul.mubr.f32.gmra.mrb[0].mxu0 %v2456
    %v4218 = vpop.f32.mrb[0].mxu0
    %v4219 = vadd.f32 0.0, %v4218
    %v4220 = vpop.f32.mrb[0].mxu0
    %4221 = vmatprep.mubr.f32.mxu0 0.0
    %4222 = vmatmul.mubr.f32.gmra.mrb[0].mxu0 %v2459
    %v4223 = vpop.f32.mrb[0].mxu0
    %v4224 = vadd.f32 0.0, %v4223
    %v4225 = vpop.f32.mrb[0].mxu0
    %4226 = vmatprep.mubr.f32.mxu0 0.0
    %4227 = vmatmul.mubr.f32.gmra.mrb[0].mxu0 %v2461
    %v4228 = vpop.f32.mrb[0].mxu0
    %v4229 = vadd.f32 0.0, %v4228
    %v4230 = vpop.f32.mrb[0].mxu0
    %4231 = vmatprep.mubr.f32.mxu0 0.0
    %4232 = vmatmul.mubr.f32.gmra.mrb[0].mxu0 %v2464
    %v4233 = vpop.f32.mrb[0].mxu0
    %v4234 = vadd.f32 0.0, %v4233
    %v4235 = vpop.f32.mrb[0].mxu0
    %4236 = vmatprep.mubr.f32.mxu0 0.0
    %4237 = vmatmul.mubr.f32.gmra.mrb[0].mxu0 %v2466
    %v4238 = vpop.f32.mrb[0].mxu0
    %v4239 = vadd.f32 0.0, %v4238
    %v4240 = vpop.f32.mrb[0].mxu0
    %4241 = vmatprep.mubr.f32.mxu0 0.0
    %4242 = vmatmul.mubr.f32.gmra.mrb[0].mxu0 %v2469
    %v4243 = vpop.f32.mrb[0].mxu0
    %v4244 = vadd.f32 0.0, %v4243
    %v4245 = vpop.f32.mrb[0].mxu0
    %4246 = vmatprep.mubr.f32.mxu0 0.0
    %4247 = vmatmul.mubr.f32.gmra.mrb[0].mxu0 %v2471
    %v4248 = vpop.f32.mrb[0].mxu0
    %v4249 = vadd.f32 0.0, %v4248
    %v4250 = vpop.f32.mrb[0].mxu0
    %4251 = vmatprep.mubr.f32.mxu0 0.0
    %4252 = vmatmul.mubr.f32.gmra.mrb[0].mxu0 %v2474
    %v4253 = vpop.f32.mrb[0].mxu0
    %v4254 = vadd.f32 0.0, %v4253
    %v4255 = vpop.f32.mrb[0].mxu0
    %4256 = vmatprep.mubr.f32.mxu0 0.0
    %4257 = vmatmul.mubr.f32.gmra.mrb[0].mxu0 %v2476
    %v4258 = vpop.f32.mrb[0].mxu0
    %v4259 = vadd.f32 0.0, %v4258
    %v4260 = vpop.f32.mrb[0].mxu0
    %4261 = vmatprep.mubr.f32.mxu0 0.0
    %4262 = vmatmul.mubr.f32.gmra.mrb[0].mxu0 %v2479
    %v4263 = vpop.f32.mrb[0].mxu0
    %v4264 = vadd.f32 0.0, %v4263
    %v4265 = vpop.f32.mrb[0].mxu0
    %4266 = vmatprep.mubr.f32.mxu0 0.0
    %4267 = vmatmul.mubr.f32.gmra.mrb[0].mxu0 %v2481
    %v4268 = vpop.f32.mrb[0].mxu0
    %v4269 = vadd.f32 0.0, %v4268
    %v4270 = vpop.f32.mrb[0].mxu0
    %4271 = vmatprep.mubr.f32.mxu0 0.0
    %4272 = vmatmul.mubr.f32.gmra.mrb[0].mxu0 %v2484
    %v4273 = vpop.f32.mrb[0].mxu0
    %v4274 = vadd.f32 0.0, %v4273
    %v4275 = vpop.f32.mrb[0].mxu0
    %4276 = vmatprep.mubr.f32.mxu0 0.0
    %4277 = vmatmul.mubr.f32.gmra.mrb[0].mxu0 %v2486
    %v4278 = vpop.f32.mrb[0].mxu0
    %v4279 = vadd.f32 0.0, %v4278
    %v4280 = vpop.f32.mrb[0].mxu0
    %4281 = vmatprep.mubr.f32.mxu0 0.0
    %4282 = vmatmul.mubr.f32.gmra.mrb[0].mxu0 %v2489
    %v4283 = vpop.f32.mrb[0].mxu0
    %v4284 = vadd.f32 0.0, %v4283
    %v4285 = vpop.f32.mrb[0].mxu0
    %4286 = vmatprep.mubr.f32.mxu0 0.0
    %4287 = vmatmul.mubr.f32.gmra.mrb[0].mxu0 %v2491
    %v4288 = vpop.f32.mrb[0].mxu0
    %v4289 = vadd.f32 0.0, %v4288
    %v4290 = vpop.f32.mrb[0].mxu0
    %4291 = vmatprep.mubr.f32.mxu0 0.0
    %4292 = vmatmul.mubr.f32.gmra.mrb[0].mxu0 %v2494
    %v4293 = vpop.f32.mrb[0].mxu0
    %v4294 = vadd.f32 0.0, %v4293
    %v4295 = vpop.f32.mrb[0].mxu0
    %4296 = vmatprep.mubr.f32.mxu0 0.0
    %4297 = vmatmul.mubr.f32.gmra.mrb[0].mxu0 %v2496
    %v4298 = vpop.f32.mrb[0].mxu0
    %v4299 = vadd.f32 0.0, %v4298
    %v4300 = vpop.f32.mrb[0].mxu0
    %4301 = vmatprep.mubr.f32.mxu0 0.0
    %4302 = vmatmul.mubr.f32.gmra.mrb[0].mxu0 %v2499
    %v4303 = vpop.f32.mrb[0].mxu0
    %v4304 = vadd.f32 0.0, %v4303
    %v4305 = vpop.f32.mrb[0].mxu0
    %4306 = vmatprep.mubr.f32.mxu0 0.0
    %4307 = vmatmul.mubr.f32.gmra.mrb[0].mxu0 %v2501
    %v4308 = vpop.f32.mrb[0].mxu0
    %v4309 = vadd.f32 0.0, %v4308
    %v4310 = vpop.f32.mrb[0].mxu0
    %4311 = vmatprep.mubr.f32.mxu0 0.0
    %4312 = vmatmul.mubr.f32.gmra.mrb[0].mxu0 %v4068
    %v4313 = vpop.f32.mrb[0].mxu0
    %v4314 = vadd.f32 0.0, %v4313
    %v4315 = vpop.f32.mrb[0].mxu0
    %4316 = vmatprep.mubr.f32.mxu0 0.0
    %4317 = vmatmul.mubr.f32.gmra.mrb[0].mxu0 %v4070
    %v4318 = vpop.f32.mrb[0].mxu0
    %v4319 = vadd.f32 0.0, %v4318
    %v4320 = vpop.f32.mrb[0].mxu0
    %4321 = vmatprep.mubr.f32.mxu0 0.0
    %4322 = vmatmul.mubr.f32.gmra.mrb[0].mxu0 %v2509
    %v4323 = vpop.f32.mrb[0].mxu0
    %v4324 = vadd.f32 0.0, %v4323
    %v4325 = vpop.f32.mrb[0].mxu0
    %4326 = vmatprep.mubr.f32.mxu0 0.0
    %4327 = vmatmul.mubr.f32.gmra.mrb[0].mxu0 %v2511
    %v4328 = vpop.f32.mrb[0].mxu0
    %v4329 = vadd.f32 0.0, %v4328
    %v4330 = vpop.f32.mrb[0].mxu0
    %4331 = vmatprep.mubr.f32.mxu0 0.0
    %4332 = vmatmul.mubr.f32.gmra.mrb[0].mxu0 %v2514
    %v4333 = vpop.f32.mrb[0].mxu0
    %v4334 = vadd.f32 0.0, %v4333
    %v4335 = vpop.f32.mrb[0].mxu0
    %4336 = vmatprep.mubr.f32.mxu0 0.0
    %4337 = vmatmul.mubr.f32.gmra.mrb[0].mxu0 %v2516
    %v4338 = vpop.f32.mrb[0].mxu0
    %v4339 = vadd.f32 0.0, %v4338
    %v4340 = vpop.f32.mrb[0].mxu0
    %4341 = vmatprep.mubr.f32.mxu0 0.0
    %4342 = vmatmul.mubr.f32.gmra.mrb[0].mxu0 %v2519
    %v4343 = vpop.f32.mrb[0].mxu0
    %v4344 = vadd.f32 0.0, %v4343
    %v4345 = vpop.f32.mrb[0].mxu0
    %4346 = vmatprep.mubr.f32.mxu0 0.0
    %4347 = vmatmul.mubr.f32.gmra.mrb[0].mxu0 %v2521
    %v4348 = vpop.f32.mrb[0].mxu0
    %v4349 = vadd.f32 0.0, %v4348
    %v4350 = vpop.f32.mrb[0].mxu0
    %4351 = vmatprep.mubr.f32.mxu0 0.0
    %4352 = vmatmul.mubr.f32.gmra.mrb[0].mxu0 %v2524
    %v4353 = vpop.f32.mrb[0].mxu0
    %v4354 = vadd.f32 0.0, %v4353
    %v4355 = vpop.f32.mrb[0].mxu0
    %4356 = vmatprep.mubr.f32.mxu0 0.0
    %4357 = vmatmul.mubr.f32.gmra.mrb[0].mxu0 %v2526
    %v4358 = vpop.f32.mrb[0].mxu0
    %v4359 = vadd.f32 0.0, %v4358
    %v4360 = vpop.f32.mrb[0].mxu0
    %4361 = vmatprep.mubr.f32.mxu0 0.0
    %4362 = vmatmul.mubr.f32.gmra.mrb[0].mxu0 %v2529
    %v4363 = vpop.f32.mrb[0].mxu0
    %v4364 = vadd.f32 0.0, %v4363
    %v4365 = vpop.f32.mrb[0].mxu0
    %4366 = vmatprep.mubr.f32.mxu0 0.0
    %4367 = vmatmul.mubr.f32.gmra.mrb[0].mxu0 %v2531
    %v4368 = vpop.f32.mrb[0].mxu0
    %v4369 = vadd.f32 0.0, %v4368
    %v4370 = vpop.f32.mrb[0].mxu0
    %4371 = vmatprep.mubr.f32.mxu0 0.0
    %4372 = vmatmul.mubr.f32.gmra.mrb[0].mxu0 %v2534
    %v4373 = vpop.f32.mrb[0].mxu0
    %v4374 = vadd.f32 0.0, %v4373
    %v4375 = vpop.f32.mrb[0].mxu0
    %4376 = vmatprep.mubr.f32.mxu0 0.0
    %4377 = vmatmul.mubr.f32.gmra.mrb[0].mxu0 %v2536
    %v4378 = vpop.f32.mrb[0].mxu0
    %v4379 = vadd.f32 0.0, %v4378
    %v4380 = vpop.f32.mrb[0].mxu0
    %4381 = vmatprep.mubr.f32.mxu0 0.0
    %4382 = vmatmul.mubr.f32.gmra.mrb[0].mxu0 %v2539
    %v4383 = vpop.f32.mrb[0].mxu0
    %v4384 = vadd.f32 0.0, %v4383
    %v4385 = vpop.f32.mrb[0].mxu0
    %4386 = vmatprep.mubr.f32.mxu0 0.0
    %4387 = vmatmul.mubr.f32.gmra.mrb[0].mxu0 %v2541
    %v4388 = vpop.f32.mrb[0].mxu0
    %v4389 = vadd.f32 0.0, %v4388
    %v4390 = vpop.f32.mrb[0].mxu0
    %4391 = vmatprep.mubr.f32.mxu0 0.0
    %4392 = vmatmul.mubr.f32.gmra.mrb[0].mxu0 %v2544
    %v4393 = vpop.f32.mrb[0].mxu0
    %v4394 = vadd.f32 0.0, %v4393
    %v4395 = vpop.f32.mrb[0].mxu0
    %4396 = vmatprep.mubr.f32.mxu0 0.0
    %4397 = vmatmul.mubr.f32.gmra.mrb[0].mxu0 %v2546
    %v4398 = vpop.f32.mrb[0].mxu0
    %v4399 = vadd.f32 0.0, %v4398
    %v4400 = vpop.f32.mrb[0].mxu0
    %4401 = vmatprep.mubr.f32.mxu0 0.0
    %4402 = vmatmul.mubr.f32.gmra.mrb[0].mxu0 %v2549
    %v4403 = vpop.f32.mrb[0].mxu0
    %v4404 = vadd.f32 0.0, %v4403
    %v4405 = vpop.f32.mrb[0].mxu0
    %4406 = vmatprep.mubr.f32.mxu0 0.0
    %4407 = vmatmul.mubr.f32.gmra.mrb[0].mxu0 %v2551
    %v4408 = vpop.f32.mrb[0].mxu0
    %v4409 = vadd.f32 0.0, %v4408
    %v4410 = vpop.f32.mrb[0].mxu0
    %4411 = vmatprep.mubr.f32.mxu0 0.0
    %4412 = vmatmul.mubr.f32.gmra.mrb[0].mxu0 %v2554
    %v4413 = vpop.f32.mrb[0].mxu0
    %v4414 = vadd.f32 0.0, %v4413
    %v4415 = vpop.f32.mrb[0].mxu0
    %4416 = vmatprep.mubr.f32.mxu0 0.0
    %4417 = vmatmul.mubr.f32.gmra.mrb[0].mxu0 %v2556
    %v4418 = vpop.f32.mrb[0].mxu0
    %v4419 = vadd.f32 0.0, %v4418
    %v4420 = vpop.f32.mrb[0].mxu0
    %4421 = vmatprep.mubr.f32.mxu0 0.0
    %4422 = vmatmul.mubr.f32.gmra.mrb[0].mxu0 %v2559
    %v4423 = vpop.f32.mrb[0].mxu0
    %v4424 = vadd.f32 0.0, %v4423
    %v4425 = vpop.f32.mrb[0].mxu0
    %4426 = vmatprep.mubr.f32.mxu0 0.0
    %4427 = vmatmul.mubr.f32.gmra.mrb[0].mxu0 %v2561
    %v4428 = vpop.f32.mrb[0].mxu0
    %v4429 = vadd.f32 0.0, %v4428
    %v4430 = vpop.f32.mrb[0].mxu0
    %4431 = vmatprep.mubr.f32.mxu0 0.0
    %4432 = vmatmul.mubr.f32.gmra.mrb[0].mxu0 %v2564
    %v4433 = vpop.f32.mrb[0].mxu0
    %v4434 = vadd.f32 0.0, %v4433
    %v4435 = vpop.f32.mrb[0].mxu0
    %4436 = vmatprep.mubr.f32.mxu0 0.0
    %4437 = vmatmul.mubr.f32.gmra.mrb[0].mxu0 %v2566
    %v4438 = vpop.f32.mrb[0].mxu0
    %v4439 = vadd.f32 0.0, %v4438
    %v4440 = vpop.f32.mrb[0].mxu0
    %4441 = vmatprep.mubr.f32.mxu0 0.0
    %4442 = vmatmul.mubr.f32.gmra.mrb[0].mxu0 %v2569
    %v4443 = vpop.f32.mrb[0].mxu0
    %v4444 = vadd.f32 0.0, %v4443
    %v4445 = vpop.f32.mrb[0].mxu0
    %4446 = vmatprep.mubr.f32.mxu0 0.0
    %4447 = vmatmul.mubr.f32.gmra.mrb[0].mxu0 %v2571
    %v4448 = vpop.f32.mrb[0].mxu0
    %v4449 = vadd.f32 0.0, %v4448
    %v4450 = vpop.f32.mrb[0].mxu0
    %4451 = vmatprep.mubr.f32.mxu0 0.0
    %4452 = vmatmul.mubr.f32.gmra.mrb[0].mxu0 %v2574
    %v4453 = vpop.f32.mrb[0].mxu0
    %v4454 = vadd.f32 0.0, %v4453
    %v4455 = vpop.f32.mrb[0].mxu0
    %4456 = vmatprep.mubr.f32.mxu0 0.0
    %4457 = vmatmul.mubr.f32.gmra.mrb[0].mxu0 %v2576
    %v4458 = vpop.f32.mrb[0].mxu0
    %v4459 = vadd.f32 0.0, %v4458
    %v4460 = vpop.f32.mrb[0].mxu0
    %4461 = vmatprep.mubr.f32.mxu0 0.0
    %4462 = vmatmul.mubr.f32.gmra.mrb[0].mxu0 %v2579
    %v4463 = vpop.f32.mrb[0].mxu0
    %v4464 = vadd.f32 0.0, %v4463
    %v4465 = vpop.f32.mrb[0].mxu0
    %4466 = vmatprep.mubr.f32.mxu0 0.0
    %4467 = vmatmul.mubr.f32.gmra.mrb[0].mxu0 %v2581
    %v4468 = vpop.f32.mrb[0].mxu0
    %v4469 = vadd.f32 0.0, %v4468
    %v4470 = vpop.f32.mrb[0].mxu0
    %4471 = vmatprep.mubr.f32.mxu0 0.0
    %4472 = vmatmul.mubr.f32.gmra.mrb[0].mxu0 %v4073
    %v4473 = vpop.f32.mrb[0].mxu0
    %v4474 = vadd.f32 0.0, %v4473
    %v4475 = vpop.f32.mrb[0].mxu0
    %4476 = vmatprep.mubr.f32.mxu0 0.0
    %4477 = vmatmul.mubr.f32.gmra.mrb[0].mxu0 %v4075
    %v4478 = vpop.f32.mrb[0].mxu0
    %v4479 = vadd.f32 0.0, %v4478
    %v4480 = vpop.f32.mrb[0].mxu0
    %4481 = vdwg.mxu0
    %v4482 = vadd.f32 %v4000, %v4164
    %v4483 = vadd.f32 %v4001, %v4169
    %v4484 = vadd.f32 %v4002, %v4174
    %v4485 = vadd.f32 %v4003, %v4179
    %v4486 = vadd.f32 %v4004, %v4184
    %v4487 = vadd.f32 %v4005, %v4189
    %v4488 = vadd.f32 %v4006, %v4194
    %v4489 = vadd.f32 %v4007, %v4199
    %v4490 = vadd.f32 %v4008, %v4204
    %v4491 = vadd.f32 %v4009, %v4209
    %v4492 = vadd.f32 %v4010, %v4214
    %v4493 = vadd.f32 %v4011, %v4219
    %v4494 = vadd.f32 %v4012, %v4224
    %v4495 = vadd.f32 %v4013, %v4229
    %v4496 = vadd.f32 %v4014, %v4234
    %v4497 = vadd.f32 %v4015, %v4239
    %v4498 = vadd.f32 %v4016, %v4244
    %v4499 = vadd.f32 %v4017, %v4249
    %v4500 = vadd.f32 %v4018, %v4254
    %v4501 = vadd.f32 %v4019, %v4259
    %v4502 = vadd.f32 %v4020, %v4264
    %v4503 = vadd.f32 %v4021, %v4269
    %v4504 = vadd.f32 %v4022, %v4274
    %v4505 = vadd.f32 %v4023, %v4279
    %v4506 = vadd.f32 %v4024, %v4284
    %v4507 = vadd.f32 %v4025, %v4289
    %v4508 = vadd.f32 %v4026, %v4294
    %v4509 = vadd.f32 %v4027, %v4299
    %v4510 = vadd.f32 %v4028, %v4304
    %v4511 = vadd.f32 %v4029, %v4309
    %v4512 = vadd.f32 %v4030, %v4314
    %v4513 = vadd.f32 %v4031, %v4319
    %v4514 = vadd.f32 %v4032, %v4324
    %v4515 = vadd.f32 %v4033, %v4329
    %v4516 = vadd.f32 %v4034, %v4334
    %v4517 = vadd.f32 %v4035, %v4339
    %v4518 = vadd.f32 %v4036, %v4344
    %v4519 = vadd.f32 %v4037, %v4349
    %v4520 = vadd.f32 %v4038, %v4354
    %v4521 = vadd.f32 %v4039, %v4359
    %v4522 = vadd.f32 %v4040, %v4364
    %v4523 = vadd.f32 %v4041, %v4369
    %v4524 = vadd.f32 %v4042, %v4374
    %v4525 = vadd.f32 %v4043, %v4379
    %v4526 = vadd.f32 %v4044, %v4384
    %v4527 = vadd.f32 %v4045, %v4389
    %v4528 = vadd.f32 %v4046, %v4394
    %v4529 = vadd.f32 %v4047, %v4399
    %v4530 = vadd.f32 %v4048, %v4404
    %v4531 = vadd.f32 %v4049, %v4409
    %v4532 = vadd.f32 %v4050, %v4414
    %v4533 = vadd.f32 %v4051, %v4419
    %v4534 = vadd.f32 %v4052, %v4424
    %v4535 = vadd.f32 %v4053, %v4429
    %v4536 = vadd.f32 %v4054, %v4434
    %v4537 = vadd.f32 %v4055, %v4439
    %v4538 = vadd.f32 %v4056, %v4444
    %v4539 = vadd.f32 %v4057, %v4449
    %v4540 = vadd.f32 %v4058, %v4454
    %v4541 = vadd.f32 %v4059, %v4459
    %v4542 = vadd.f32 %v4060, %v4464
    %v4543 = vadd.f32 %v4061, %v4469
    %v4544 = vadd.f32 %v4062, %v4474
    %v4545 = vadd.f32 %v4063, %v4479
    %v4552 = vrot.slane %v1189, 7
    %v4553 = vrot.slane %v1190, 7
    %v4554 = vsel %vm1361, %v4552, %v4553
    %v4555 = vrot.slane %v1191, 7
    %v4556 = vsel %vm1361, %v4553, %v4555
    %v4557 = vrot.slane %v1261, 7
    %v4558 = vrot.slane %v1262, 7
    %v4559 = vsel %vm1361, %v4557, %v4558
    %v4560 = vrot.slane %v1263, 7
    %v4561 = vsel %vm1361, %v4558, %v4560
    %s4566 = scalar_lea.vmem [#allocation9], 768
    %v4567 = vld [vmem:[%s4566] sm:$0xff]
    %v4568 = vld [vmem:[%s4566 + $0x8] sm:$0xff]
    %v4569 = vld [vmem:[%s4566 + $0x10] sm:$0xff]
    %v4570 = vld [vmem:[%s4566 + $0x18] sm:$0xff]
    %v4571 = vld [vmem:[%s4566 + $0x20] sm:$0xff]
    %v4572 = vld [vmem:[%s4566 + $0x28] sm:$0xff]
    %v4573 = vld [vmem:[%s4566 + $0x30] sm:$0xff]
    %v4574 = vld [vmem:[%s4566 + $0x38] sm:$0xff]
    %v4575 = vld [vmem:[%s4566 + $0x40] sm:$0xff]
    %v4576 = vld [vmem:[%s4566 + $0x48] sm:$0xff]
    %v4577 = vld [vmem:[%s4566 + $0x50] sm:$0xff]
    %v4578 = vld [vmem:[%s4566 + $0x58] sm:$0xff]
    %v4579 = vld [vmem:[%s4566 + $0x60] sm:$0xff]
    %v4580 = vld [vmem:[%s4566 + $0x68] sm:$0xff]
    %v4581 = vld [vmem:[%s4566 + $0x70] sm:$0xff]
    %v4582 = vld [vmem:[%s4566 + $0x78] sm:$0xff]
    %4583 = vmatprep.subr.mxu0 0.0
    %4584 = vmatpush1.msra.mxu0 %v4567
    %4585 = vmatprep.subr.mxu0 0.0
    %4586 = vmatpush1.msra.mxu0 %v4568
    %4587 = vmatprep.subr.mxu0 0.0
    %4588 = vmatpush1.msra.mxu0 %v4569
    %4589 = vmatprep.subr.mxu0 0.0
    %4590 = vmatpush1.msra.mxu0 %v4570
    %4591 = vmatprep.subr.mxu0 0.0
    %4592 = vmatpush1.msra.mxu0 %v4571
    %4593 = vmatprep.subr.mxu0 0.0
    %4594 = vmatpush1.msra.mxu0 %v4572
    %4595 = vmatprep.subr.mxu0 0.0
    %4596 = vmatpush1.msra.mxu0 %v4573
    %4597 = vmatprep.subr.mxu0 0.0
    %4598 = vmatpush1.msra.mxu0 %v4574
    %4599 = vmatprep.subr.mxu0 0.0
    %4600 = vmatpush1.msra.mxu0 %v4575
    %4601 = vmatprep.subr.mxu0 0.0
    %4602 = vmatpush1.msra.mxu0 %v4576
    %4603 = vmatprep.subr.mxu0 0.0
    %4604 = vmatpush1.msra.mxu0 %v4577
    %4605 = vmatprep.subr.mxu0 0.0
    %4606 = vmatpush1.msra.mxu0 %v4578
    %4607 = vmatprep.subr.mxu0 0.0
    %4608 = vmatpush1.msra.mxu0 %v4579
    %4609 = vmatprep.subr.mxu0 0.0
    %4610 = vmatpush1.msra.mxu0 %v4580
    %4611 = vmatprep.subr.mxu0 0.0
    %4612 = vmatpush1.msra.mxu0 %v4581
    %4613 = vmatprep.subr.mxu0 0.0
    %4614 = vmatpush1.msra.mxu0 %v4582
    %4615 = vmatprep.subr.mxu0 0.0
    %4616 = vmatpush1.msra.mxu0 0.0
    %4617 = vmatprep.subr.mxu0 0.0
    %4618 = vmatpush1.msra.mxu0 0.0
    %4619 = vmatprep.subr.mxu0 0.0
    %4620 = vmatpush1.msra.mxu0 0.0
    %4621 = vmatprep.subr.mxu0 0.0
    %4622 = vmatpush1.msra.mxu0 0.0
    %4623 = vmatprep.subr.mxu0 0.0
    %4624 = vmatpush1.msra.mxu0 0.0
    %4625 = vmatprep.subr.mxu0 0.0
    %4626 = vmatpush1.msra.mxu0 0.0
    %4627 = vmatprep.subr.mxu0 0.0
    %4628 = vmatpush1.msra.mxu0 0.0
    %4629 = vmatprep.subr.mxu0 0.0
    %4630 = vmatpush1.msra.mxu0 0.0
    %4631 = vmatprep.subr.mxu0 0.0
    %4632 = vmatpush1.msra.mxu0 0.0
    %4633 = vmatprep.subr.mxu0 0.0
    %4634 = vmatpush1.msra.mxu0 0.0
    %4635 = vmatprep.subr.mxu0 0.0
    %4636 = vmatpush1.msra.mxu0 0.0
    %4637 = vmatprep.subr.mxu0 0.0
    %4638 = vmatpush1.msra.mxu0 0.0
    %4639 = vmatprep.subr.mxu0 0.0
    %4640 = vmatpush1.msra.mxu0 0.0
    %4641 = vmatprep.subr.mxu0 0.0
    %4642 = vmatpush1.msra.mxu0 0.0
    %4643 = vmatprep.subr.mxu0 0.0
    %4644 = vmatpush1.msra.mxu0 0.0
    %4645 = vmatprep.subr.mxu0 0.0
    %4646 = vmatpush1.msra.mxu0 0.0
    %4647 = vmatprep.mubr.f32.mxu0 0.0
    %4648 = vmatmul.mubr.f32.gmra.mrb[0].mxu0 %v1374
    %v4649 = vpop.f32.mrb[0].mxu0
    %v4650 = vadd.f32 0.0, %v4649
    %v4651 = vpop.f32.mrb[0].mxu0
    %4652 = vmatprep.mubr.f32.mxu0 0.0
    %4653 = vmatmul.mubr.f32.gmra.mrb[0].mxu0 %v1376
    %v4654 = vpop.f32.mrb[0].mxu0
    %v4655 = vadd.f32 0.0, %v4654
    %v4656 = vpop.f32.mrb[0].mxu0
    %4657 = vmatprep.mubr.f32.mxu0 0.0
    %4658 = vmatmul.mubr.f32.gmra.mrb[0].mxu0 %v1379
    %v4659 = vpop.f32.mrb[0].mxu0
    %v4660 = vadd.f32 0.0, %v4659
    %v4661 = vpop.f32.mrb[0].mxu0
    %4662 = vmatprep.mubr.f32.mxu0 0.0
    %4663 = vmatmul.mubr.f32.gmra.mrb[0].mxu0 %v1381
    %v4664 = vpop.f32.mrb[0].mxu0
    %v4665 = vadd.f32 0.0, %v4664
    %v4666 = vpop.f32.mrb[0].mxu0
    %4667 = vmatprep.mubr.f32.mxu0 0.0
    %4668 = vmatmul.mubr.f32.gmra.mrb[0].mxu0 %v1384
    %v4669 = vpop.f32.mrb[0].mxu0
    %v4670 = vadd.f32 0.0, %v4669
    %v4671 = vpop.f32.mrb[0].mxu0
    %4672 = vmatprep.mubr.f32.mxu0 0.0
    %4673 = vmatmul.mubr.f32.gmra.mrb[0].mxu0 %v1386
    %v4674 = vpop.f32.mrb[0].mxu0
    %v4675 = vadd.f32 0.0, %v4674
    %v4676 = vpop.f32.mrb[0].mxu0
    %4677 = vmatprep.mubr.f32.mxu0 0.0
    %4678 = vmatmul.mubr.f32.gmra.mrb[0].mxu0 %v1389
    %v4679 = vpop.f32.mrb[0].mxu0
    %v4680 = vadd.f32 0.0, %v4679
    %v4681 = vpop.f32.mrb[0].mxu0
    %4682 = vmatprep.mubr.f32.mxu0 0.0
    %4683 = vmatmul.mubr.f32.gmra.mrb[0].mxu0 %v1391
    %v4684 = vpop.f32.mrb[0].mxu0
    %v4685 = vadd.f32 0.0, %v4684
    %v4686 = vpop.f32.mrb[0].mxu0
    %4687 = vmatprep.mubr.f32.mxu0 0.0
    %4688 = vmatmul.mubr.f32.gmra.mrb[0].mxu0 %v1394
    %v4689 = vpop.f32.mrb[0].mxu0
    %v4690 = vadd.f32 0.0, %v4689
    %v4691 = vpop.f32.mrb[0].mxu0
    %4692 = vmatprep.mubr.f32.mxu0 0.0
    %4693 = vmatmul.mubr.f32.gmra.mrb[0].mxu0 %v1396
    %v4694 = vpop.f32.mrb[0].mxu0
    %v4695 = vadd.f32 0.0, %v4694
    %v4696 = vpop.f32.mrb[0].mxu0
    %4697 = vmatprep.mubr.f32.mxu0 0.0
    %4698 = vmatmul.mubr.f32.gmra.mrb[0].mxu0 %v1399
    %v4699 = vpop.f32.mrb[0].mxu0
    %v4700 = vadd.f32 0.0, %v4699
    %v4701 = vpop.f32.mrb[0].mxu0
    %4702 = vmatprep.mubr.f32.mxu0 0.0
    %4703 = vmatmul.mubr.f32.gmra.mrb[0].mxu0 %v1401
    %v4704 = vpop.f32.mrb[0].mxu0
    %v4705 = vadd.f32 0.0, %v4704
    %v4706 = vpop.f32.mrb[0].mxu0
    %4707 = vmatprep.mubr.f32.mxu0 0.0
    %4708 = vmatmul.mubr.f32.gmra.mrb[0].mxu0 %v1404
    %v4709 = vpop.f32.mrb[0].mxu0
    %v4710 = vadd.f32 0.0, %v4709
    %v4711 = vpop.f32.mrb[0].mxu0
    %4712 = vmatprep.mubr.f32.mxu0 0.0
    %4713 = vmatmul.mubr.f32.gmra.mrb[0].mxu0 %v1406
    %v4714 = vpop.f32.mrb[0].mxu0
    %v4715 = vadd.f32 0.0, %v4714
    %v4716 = vpop.f32.mrb[0].mxu0
    %4717 = vmatprep.mubr.f32.mxu0 0.0
    %4718 = vmatmul.mubr.f32.gmra.mrb[0].mxu0 %v1409
    %v4719 = vpop.f32.mrb[0].mxu0
    %v4720 = vadd.f32 0.0, %v4719
    %v4721 = vpop.f32.mrb[0].mxu0
    %4722 = vmatprep.mubr.f32.mxu0 0.0
    %4723 = vmatmul.mubr.f32.gmra.mrb[0].mxu0 %v1411
    %v4724 = vpop.f32.mrb[0].mxu0
    %v4725 = vadd.f32 0.0, %v4724
    %v4726 = vpop.f32.mrb[0].mxu0
    %4727 = vmatprep.mubr.f32.mxu0 0.0
    %4728 = vmatmul.mubr.f32.gmra.mrb[0].mxu0 %v1414
    %v4729 = vpop.f32.mrb[0].mxu0
    %v4730 = vadd.f32 0.0, %v4729
    %v4731 = vpop.f32.mrb[0].mxu0
    %4732 = vmatprep.mubr.f32.mxu0 0.0
    %4733 = vmatmul.mubr.f32.gmra.mrb[0].mxu0 %v1416
    %v4734 = vpop.f32.mrb[0].mxu0
    %v4735 = vadd.f32 0.0, %v4734
    %v4736 = vpop.f32.mrb[0].mxu0
    %4737 = vmatprep.mubr.f32.mxu0 0.0
    %4738 = vmatmul.mubr.f32.gmra.mrb[0].mxu0 %v1419
    %v4739 = vpop.f32.mrb[0].mxu0
    %v4740 = vadd.f32 0.0, %v4739
    %v4741 = vpop.f32.mrb[0].mxu0
    %4742 = vmatprep.mubr.f32.mxu0 0.0
    %4743 = vmatmul.mubr.f32.gmra.mrb[0].mxu0 %v1421
    %v4744 = vpop.f32.mrb[0].mxu0
    %v4745 = vadd.f32 0.0, %v4744
    %v4746 = vpop.f32.mrb[0].mxu0
    %4747 = vmatprep.mubr.f32.mxu0 0.0
    %4748 = vmatmul.mubr.f32.gmra.mrb[0].mxu0 %v1424
    %v4749 = vpop.f32.mrb[0].mxu0
    %v4750 = vadd.f32 0.0, %v4749
    %v4751 = vpop.f32.mrb[0].mxu0
    %4752 = vmatprep.mubr.f32.mxu0 0.0
    %4753 = vmatmul.mubr.f32.gmra.mrb[0].mxu0 %v1426
    %v4754 = vpop.f32.mrb[0].mxu0
    %v4755 = vadd.f32 0.0, %v4754
    %v4756 = vpop.f32.mrb[0].mxu0
    %4757 = vmatprep.mubr.f32.mxu0 0.0
    %4758 = vmatmul.mubr.f32.gmra.mrb[0].mxu0 %v1429
    %v4759 = vpop.f32.mrb[0].mxu0
    %v4760 = vadd.f32 0.0, %v4759
    %v4761 = vpop.f32.mrb[0].mxu0
    %4762 = vmatprep.mubr.f32.mxu0 0.0
    %4763 = vmatmul.mubr.f32.gmra.mrb[0].mxu0 %v1431
    %v4764 = vpop.f32.mrb[0].mxu0
    %v4765 = vadd.f32 0.0, %v4764
    %v4766 = vpop.f32.mrb[0].mxu0
    %4767 = vmatprep.mubr.f32.mxu0 0.0
    %4768 = vmatmul.mubr.f32.gmra.mrb[0].mxu0 %v1434
    %v4769 = vpop.f32.mrb[0].mxu0
    %v4770 = vadd.f32 0.0, %v4769
    %v4771 = vpop.f32.mrb[0].mxu0
    %4772 = vmatprep.mubr.f32.mxu0 0.0
    %4773 = vmatmul.mubr.f32.gmra.mrb[0].mxu0 %v1436
    %v4774 = vpop.f32.mrb[0].mxu0
    %v4775 = vadd.f32 0.0, %v4774
    %v4776 = vpop.f32.mrb[0].mxu0
    %4777 = vmatprep.mubr.f32.mxu0 0.0
    %4778 = vmatmul.mubr.f32.gmra.mrb[0].mxu0 %v1439
    %v4779 = vpop.f32.mrb[0].mxu0
    %v4780 = vadd.f32 0.0, %v4779
    %v4781 = vpop.f32.mrb[0].mxu0
    %4782 = vmatprep.mubr.f32.mxu0 0.0
    %4783 = vmatmul.mubr.f32.gmra.mrb[0].mxu0 %v1441
    %v4784 = vpop.f32.mrb[0].mxu0
    %v4785 = vadd.f32 0.0, %v4784
    %v4786 = vpop.f32.mrb[0].mxu0
    %4787 = vmatprep.mubr.f32.mxu0 0.0
    %4788 = vmatmul.mubr.f32.gmra.mrb[0].mxu0 %v3120
    %v4789 = vpop.f32.mrb[0].mxu0
    %v4790 = vadd.f32 0.0, %v4789
    %v4791 = vpop.f32.mrb[0].mxu0
    %4792 = vmatprep.mubr.f32.mxu0 0.0
    %4793 = vmatmul.mubr.f32.gmra.mrb[0].mxu0 %v3122
    %v4794 = vpop.f32.mrb[0].mxu0
    %v4795 = vadd.f32 0.0, %v4794
    %v4796 = vpop.f32.mrb[0].mxu0
    %4797 = vmatprep.mubr.f32.mxu0 0.0
    %4798 = vmatmul.mubr.f32.gmra.mrb[0].mxu0 %v4554
    %v4799 = vpop.f32.mrb[0].mxu0
    %v4800 = vadd.f32 0.0, %v4799
    %v4801 = vpop.f32.mrb[0].mxu0
    %4802 = vmatprep.mubr.f32.mxu0 0.0
    %4803 = vmatmul.mubr.f32.gmra.mrb[0].mxu0 %v4556
    %v4804 = vpop.f32.mrb[0].mxu0
    %v4805 = vadd.f32 0.0, %v4804
    %v4806 = vpop.f32.mrb[0].mxu0
    %4807 = vmatprep.mubr.f32.mxu0 0.0
    %4808 = vmatmul.mubr.f32.gmra.mrb[0].mxu0 %v1454
    %v4809 = vpop.f32.mrb[0].mxu0
    %v4810 = vadd.f32 0.0, %v4809
    %v4811 = vpop.f32.mrb[0].mxu0
    %4812 = vmatprep.mubr.f32.mxu0 0.0
    %4813 = vmatmul.mubr.f32.gmra.mrb[0].mxu0 %v1456
    %v4814 = vpop.f32.mrb[0].mxu0
    %v4815 = vadd.f32 0.0, %v4814
    %v4816 = vpop.f32.mrb[0].mxu0
    %4817 = vmatprep.mubr.f32.mxu0 0.0
    %4818 = vmatmul.mubr.f32.gmra.mrb[0].mxu0 %v1459
    %v4819 = vpop.f32.mrb[0].mxu0
    %v4820 = vadd.f32 0.0, %v4819
    %v4821 = vpop.f32.mrb[0].mxu0
    %4822 = vmatprep.mubr.f32.mxu0 0.0
    %4823 = vmatmul.mubr.f32.gmra.mrb[0].mxu0 %v1461
    %v4824 = vpop.f32.mrb[0].mxu0
    %v4825 = vadd.f32 0.0, %v4824
    %v4826 = vpop.f32.mrb[0].mxu0
    %4827 = vmatprep.mubr.f32.mxu0 0.0
    %4828 = vmatmul.mubr.f32.gmra.mrb[0].mxu0 %v1464
    %v4829 = vpop.f32.mrb[0].mxu0
    %v4830 = vadd.f32 0.0, %v4829
    %v4831 = vpop.f32.mrb[0].mxu0
    %4832 = vmatprep.mubr.f32.mxu0 0.0
    %4833 = vmatmul.mubr.f32.gmra.mrb[0].mxu0 %v1466
    %v4834 = vpop.f32.mrb[0].mxu0
    %v4835 = vadd.f32 0.0, %v4834
    %v4836 = vpop.f32.mrb[0].mxu0
    %4837 = vmatprep.mubr.f32.mxu0 0.0
    %4838 = vmatmul.mubr.f32.gmra.mrb[0].mxu0 %v1469
    %v4839 = vpop.f32.mrb[0].mxu0
    %v4840 = vadd.f32 0.0, %v4839
    %v4841 = vpop.f32.mrb[0].mxu0
    %4842 = vmatprep.mubr.f32.mxu0 0.0
    %4843 = vmatmul.mubr.f32.gmra.mrb[0].mxu0 %v1471
    %v4844 = vpop.f32.mrb[0].mxu0
    %v4845 = vadd.f32 0.0, %v4844
    %v4846 = vpop.f32.mrb[0].mxu0
    %4847 = vmatprep.mubr.f32.mxu0 0.0
    %4848 = vmatmul.mubr.f32.gmra.mrb[0].mxu0 %v1474
    %v4849 = vpop.f32.mrb[0].mxu0
    %v4850 = vadd.f32 0.0, %v4849
    %v4851 = vpop.f32.mrb[0].mxu0
    %4852 = vmatprep.mubr.f32.mxu0 0.0
    %4853 = vmatmul.mubr.f32.gmra.mrb[0].mxu0 %v1476
    %v4854 = vpop.f32.mrb[0].mxu0
    %v4855 = vadd.f32 0.0, %v4854
    %v4856 = vpop.f32.mrb[0].mxu0
    %4857 = vmatprep.mubr.f32.mxu0 0.0
    %4858 = vmatmul.mubr.f32.gmra.mrb[0].mxu0 %v1479
    %v4859 = vpop.f32.mrb[0].mxu0
    %v4860 = vadd.f32 0.0, %v4859
    %v4861 = vpop.f32.mrb[0].mxu0
    %4862 = vmatprep.mubr.f32.mxu0 0.0
    %4863 = vmatmul.mubr.f32.gmra.mrb[0].mxu0 %v1481
    %v4864 = vpop.f32.mrb[0].mxu0
    %v4865 = vadd.f32 0.0, %v4864
    %v4866 = vpop.f32.mrb[0].mxu0
    %4867 = vmatprep.mubr.f32.mxu0 0.0
    %4868 = vmatmul.mubr.f32.gmra.mrb[0].mxu0 %v1484
    %v4869 = vpop.f32.mrb[0].mxu0
    %v4870 = vadd.f32 0.0, %v4869
    %v4871 = vpop.f32.mrb[0].mxu0
    %4872 = vmatprep.mubr.f32.mxu0 0.0
    %4873 = vmatmul.mubr.f32.gmra.mrb[0].mxu0 %v1486
    %v4874 = vpop.f32.mrb[0].mxu0
    %v4875 = vadd.f32 0.0, %v4874
    %v4876 = vpop.f32.mrb[0].mxu0
    %4877 = vmatprep.mubr.f32.mxu0 0.0
    %4878 = vmatmul.mubr.f32.gmra.mrb[0].mxu0 %v1489
    %v4879 = vpop.f32.mrb[0].mxu0
    %v4880 = vadd.f32 0.0, %v4879
    %v4881 = vpop.f32.mrb[0].mxu0
    %4882 = vmatprep.mubr.f32.mxu0 0.0
    %4883 = vmatmul.mubr.f32.gmra.mrb[0].mxu0 %v1491
    %v4884 = vpop.f32.mrb[0].mxu0
    %v4885 = vadd.f32 0.0, %v4884
    %v4886 = vpop.f32.mrb[0].mxu0
    %4887 = vmatprep.mubr.f32.mxu0 0.0
    %4888 = vmatmul.mubr.f32.gmra.mrb[0].mxu0 %v1494
    %v4889 = vpop.f32.mrb[0].mxu0
    %v4890 = vadd.f32 0.0, %v4889
    %v4891 = vpop.f32.mrb[0].mxu0
    %4892 = vmatprep.mubr.f32.mxu0 0.0
    %4893 = vmatmul.mubr.f32.gmra.mrb[0].mxu0 %v1496
    %v4894 = vpop.f32.mrb[0].mxu0
    %v4895 = vadd.f32 0.0, %v4894
    %v4896 = vpop.f32.mrb[0].mxu0
    %4897 = vmatprep.mubr.f32.mxu0 0.0
    %4898 = vmatmul.mubr.f32.gmra.mrb[0].mxu0 %v1499
    %v4899 = vpop.f32.mrb[0].mxu0
    %v4900 = vadd.f32 0.0, %v4899
    %v4901 = vpop.f32.mrb[0].mxu0
    %4902 = vmatprep.mubr.f32.mxu0 0.0
    %4903 = vmatmul.mubr.f32.gmra.mrb[0].mxu0 %v1501
    %v4904 = vpop.f32.mrb[0].mxu0
    %v4905 = vadd.f32 0.0, %v4904
    %v4906 = vpop.f32.mrb[0].mxu0
    %4907 = vmatprep.mubr.f32.mxu0 0.0
    %4908 = vmatmul.mubr.f32.gmra.mrb[0].mxu0 %v1504
    %v4909 = vpop.f32.mrb[0].mxu0
    %v4910 = vadd.f32 0.0, %v4909
    %v4911 = vpop.f32.mrb[0].mxu0
    %4912 = vmatprep.mubr.f32.mxu0 0.0
    %4913 = vmatmul.mubr.f32.gmra.mrb[0].mxu0 %v1506
    %v4914 = vpop.f32.mrb[0].mxu0
    %v4915 = vadd.f32 0.0, %v4914
    %v4916 = vpop.f32.mrb[0].mxu0
    %4917 = vmatprep.mubr.f32.mxu0 0.0
    %4918 = vmatmul.mubr.f32.gmra.mrb[0].mxu0 %v1509
    %v4919 = vpop.f32.mrb[0].mxu0
    %v4920 = vadd.f32 0.0, %v4919
    %v4921 = vpop.f32.mrb[0].mxu0
    %4922 = vmatprep.mubr.f32.mxu0 0.0
    %4923 = vmatmul.mubr.f32.gmra.mrb[0].mxu0 %v1511
    %v4924 = vpop.f32.mrb[0].mxu0
    %v4925 = vadd.f32 0.0, %v4924
    %v4926 = vpop.f32.mrb[0].mxu0
    %4927 = vmatprep.mubr.f32.mxu0 0.0
    %4928 = vmatmul.mubr.f32.gmra.mrb[0].mxu0 %v1514
    %v4929 = vpop.f32.mrb[0].mxu0
    %v4930 = vadd.f32 0.0, %v4929
    %v4931 = vpop.f32.mrb[0].mxu0
    %4932 = vmatprep.mubr.f32.mxu0 0.0
    %4933 = vmatmul.mubr.f32.gmra.mrb[0].mxu0 %v1516
    %v4934 = vpop.f32.mrb[0].mxu0
    %v4935 = vadd.f32 0.0, %v4934
    %v4936 = vpop.f32.mrb[0].mxu0
    %4937 = vmatprep.mubr.f32.mxu0 0.0
    %4938 = vmatmul.mubr.f32.gmra.mrb[0].mxu0 %v1519
    %v4939 = vpop.f32.mrb[0].mxu0
    %v4940 = vadd.f32 0.0, %v4939
    %v4941 = vpop.f32.mrb[0].mxu0
    %4942 = vmatprep.mubr.f32.mxu0 0.0
    %4943 = vmatmul.mubr.f32.gmra.mrb[0].mxu0 %v1521
    %v4944 = vpop.f32.mrb[0].mxu0
    %v4945 = vadd.f32 0.0, %v4944
    %v4946 = vpop.f32.mrb[0].mxu0
    %4947 = vmatprep.mubr.f32.mxu0 0.0
    %4948 = vmatmul.mubr.f32.gmra.mrb[0].mxu0 %v3125
    %v4949 = vpop.f32.mrb[0].mxu0
    %v4950 = vadd.f32 0.0, %v4949
    %v4951 = vpop.f32.mrb[0].mxu0
    %4952 = vmatprep.mubr.f32.mxu0 0.0
    %4953 = vmatmul.mubr.f32.gmra.mrb[0].mxu0 %v3127
    %v4954 = vpop.f32.mrb[0].mxu0
    %v4955 = vadd.f32 0.0, %v4954
    %v4956 = vpop.f32.mrb[0].mxu0
    %4957 = vmatprep.mubr.f32.mxu0 0.0
    %4958 = vmatmul.mubr.f32.gmra.mrb[0].mxu0 %v4559
    %v4959 = vpop.f32.mrb[0].mxu0
    %v4960 = vadd.f32 0.0, %v4959
    %v4961 = vpop.f32.mrb[0].mxu0
    %4962 = vmatprep.mubr.f32.mxu0 0.0
    %4963 = vmatmul.mubr.f32.gmra.mrb[0].mxu0 %v4561
    %v4964 = vpop.f32.mrb[0].mxu0
    %v4965 = vadd.f32 0.0, %v4964
    %v4966 = vpop.f32.mrb[0].mxu0
    %4967 = vdwg.mxu0
    %v4968 = vadd.f32 %v4482, %v4650
    %v4969 = vadd.f32 %v4483, %v4655
    %v4970 = vadd.f32 %v4484, %v4660
    %v4971 = vadd.f32 %v4485, %v4665
    %v4972 = vadd.f32 %v4486, %v4670
    %v4973 = vadd.f32 %v4487, %v4675
    %v4974 = vadd.f32 %v4488, %v4680
    %v4975 = vadd.f32 %v4489, %v4685
    %v4976 = vadd.f32 %v4490, %v4690
    %v4977 = vadd.f32 %v4491, %v4695
    %v4978 = vadd.f32 %v4492, %v4700
    %v4979 = vadd.f32 %v4493, %v4705
    %v4980 = vadd.f32 %v4494, %v4710
    %v4981 = vadd.f32 %v4495, %v4715
    %v4982 = vadd.f32 %v4496, %v4720
    %v4983 = vadd.f32 %v4497, %v4725
    %v4984 = vadd.f32 %v4498, %v4730
    %v4985 = vadd.f32 %v4499, %v4735
    %v4986 = vadd.f32 %v4500, %v4740
    %v4987 = vadd.f32 %v4501, %v4745
    %v4988 = vadd.f32 %v4502, %v4750
    %v4989 = vadd.f32 %v4503, %v4755
    %v4990 = vadd.f32 %v4504, %v4760
    %v4991 = vadd.f32 %v4505, %v4765
    %v4992 = vadd.f32 %v4506, %v4770
    %v4993 = vadd.f32 %v4507, %v4775
    %v4994 = vadd.f32 %v4508, %v4780
    %v4995 = vadd.f32 %v4509, %v4785
    %v4996 = vadd.f32 %v4510, %v4790
    %v4997 = vadd.f32 %v4511, %v4795
    %v4998 = vadd.f32 %v4512, %v4800
    %v4999 = vadd.f32 %v4513, %v4805
    %v5000 = vadd.f32 %v4514, %v4810
    %v5001 = vadd.f32 %v4515, %v4815
    %v5002 = vadd.f32 %v4516, %v4820
    %v5003 = vadd.f32 %v4517, %v4825
    %v5004 = vadd.f32 %v4518, %v4830
    %v5005 = vadd.f32 %v4519, %v4835
    %v5006 = vadd.f32 %v4520, %v4840
    %v5007 = vadd.f32 %v4521, %v4845
    %v5008 = vadd.f32 %v4522, %v4850
    %v5009 = vadd.f32 %v4523, %v4855
    %v5010 = vadd.f32 %v4524, %v4860
    %v5011 = vadd.f32 %v4525, %v4865
    %v5012 = vadd.f32 %v4526, %v4870
    %v5013 = vadd.f32 %v4527, %v4875
    %v5014 = vadd.f32 %v4528, %v4880
    %v5015 = vadd.f32 %v4529, %v4885
    %v5016 = vadd.f32 %v4530, %v4890
    %v5017 = vadd.f32 %v4531, %v4895
    %v5018 = vadd.f32 %v4532, %v4900
    %v5019 = vadd.f32 %v4533, %v4905
    %v5020 = vadd.f32 %v4534, %v4910
    %v5021 = vadd.f32 %v4535, %v4915
    %v5022 = vadd.f32 %v4536, %v4920
    %v5023 = vadd.f32 %v4537, %v4925
    %v5024 = vadd.f32 %v4538, %v4930
    %v5025 = vadd.f32 %v4539, %v4935
    %v5026 = vadd.f32 %v4540, %v4940
    %v5027 = vadd.f32 %v4541, %v4945
    %v5028 = vadd.f32 %v4542, %v4950
    %v5029 = vadd.f32 %v4543, %v4955
    %v5030 = vadd.f32 %v4544, %v4960
    %v5031 = vadd.f32 %v4545, %v4965
    %s5032 = scalar_lea.vmem [#allocation9], 896
    %v5033 = vld [vmem:[%s5032] sm:$0xff]
    %v5034 = vld [vmem:[%s5032 + $0x8] sm:$0xff]
    %v5035 = vld [vmem:[%s5032 + $0x10] sm:$0xff]
    %v5036 = vld [vmem:[%s5032 + $0x18] sm:$0xff]
    %v5037 = vld [vmem:[%s5032 + $0x20] sm:$0xff]
    %v5038 = vld [vmem:[%s5032 + $0x28] sm:$0xff]
    %v5039 = vld [vmem:[%s5032 + $0x30] sm:$0xff]
    %v5040 = vld [vmem:[%s5032 + $0x38] sm:$0xff]
    %v5041 = vld [vmem:[%s5032 + $0x40] sm:$0xff]
    %v5042 = vld [vmem:[%s5032 + $0x48] sm:$0xff]
    %v5043 = vld [vmem:[%s5032 + $0x50] sm:$0xff]
    %v5044 = vld [vmem:[%s5032 + $0x58] sm:$0xff]
    %v5045 = vld [vmem:[%s5032 + $0x60] sm:$0xff]
    %v5046 = vld [vmem:[%s5032 + $0x68] sm:$0xff]
    %v5047 = vld [vmem:[%s5032 + $0x70] sm:$0xff]
    %v5048 = vld [vmem:[%s5032 + $0x78] sm:$0xff]
    %5049 = vmatprep.subr.mxu0 0.0
    %5050 = vmatpush1.msra.mxu0 %v5033
    %5051 = vmatprep.subr.mxu0 0.0
    %5052 = vmatpush1.msra.mxu0 %v5034
    %5053 = vmatprep.subr.mxu0 0.0
    %5054 = vmatpush1.msra.mxu0 %v5035
    %5055 = vmatprep.subr.mxu0 0.0
    %5056 = vmatpush1.msra.mxu0 %v5036
    %5057 = vmatprep.subr.mxu0 0.0
    %5058 = vmatpush1.msra.mxu0 %v5037
    %5059 = vmatprep.subr.mxu0 0.0
    %5060 = vmatpush1.msra.mxu0 %v5038
    %5061 = vmatprep.subr.mxu0 0.0
    %5062 = vmatpush1.msra.mxu0 %v5039
    %5063 = vmatprep.subr.mxu0 0.0
    %5064 = vmatpush1.msra.mxu0 %v5040
    %5065 = vmatprep.subr.mxu0 0.0
    %5066 = vmatpush1.msra.mxu0 %v5041
    %5067 = vmatprep.subr.mxu0 0.0
    %5068 = vmatpush1.msra.mxu0 %v5042
    %5069 = vmatprep.subr.mxu0 0.0
    %5070 = vmatpush1.msra.mxu0 %v5043
    %5071 = vmatprep.subr.mxu0 0.0
    %5072 = vmatpush1.msra.mxu0 %v5044
    %5073 = vmatprep.subr.mxu0 0.0
    %5074 = vmatpush1.msra.mxu0 %v5045
    %5075 = vmatprep.subr.mxu0 0.0
    %5076 = vmatpush1.msra.mxu0 %v5046
    %5077 = vmatprep.subr.mxu0 0.0
    %5078 = vmatpush1.msra.mxu0 %v5047
    %5079 = vmatprep.subr.mxu0 0.0
    %5080 = vmatpush1.msra.mxu0 %v5048
    %5081 = vmatprep.subr.mxu0 0.0
    %5082 = vmatpush1.msra.mxu0 0.0
    %5083 = vmatprep.subr.mxu0 0.0
    %5084 = vmatpush1.msra.mxu0 0.0
    %5085 = vmatprep.subr.mxu0 0.0
    %5086 = vmatpush1.msra.mxu0 0.0
    %5087 = vmatprep.subr.mxu0 0.0
    %5088 = vmatpush1.msra.mxu0 0.0
    %5089 = vmatprep.subr.mxu0 0.0
    %5090 = vmatpush1.msra.mxu0 0.0
    %5091 = vmatprep.subr.mxu0 0.0
    %5092 = vmatpush1.msra.mxu0 0.0
    %5093 = vmatprep.subr.mxu0 0.0
    %5094 = vmatpush1.msra.mxu0 0.0
    %5095 = vmatprep.subr.mxu0 0.0
    %5096 = vmatpush1.msra.mxu0 0.0
    %5097 = vmatprep.subr.mxu0 0.0
    %5098 = vmatpush1.msra.mxu0 0.0
    %5099 = vmatprep.subr.mxu0 0.0
    %5100 = vmatpush1.msra.mxu0 0.0
    %5101 = vmatprep.subr.mxu0 0.0
    %5102 = vmatpush1.msra.mxu0 0.0
    %5103 = vmatprep.subr.mxu0 0.0
    %5104 = vmatpush1.msra.mxu0 0.0
    %5105 = vmatprep.subr.mxu0 0.0
    %5106 = vmatpush1.msra.mxu0 0.0
    %5107 = vmatprep.subr.mxu0 0.0
    %5108 = vmatpush1.msra.mxu0 0.0
    %5109 = vmatprep.subr.mxu0 0.0
    %5110 = vmatpush1.msra.mxu0 0.0
    %5111 = vmatprep.subr.mxu0 0.0
    %5112 = vmatpush1.msra.mxu0 0.0
    %5113 = vmatprep.mubr.f32.mxu0 0.0
    %5114 = vmatmul.mubr.f32.gmra.mrb[0].mxu0 %v1130
    %v5115 = vpop.f32.mrb[0].mxu0
    %v5116 = vadd.f32 0.0, %v5115
    %v5117 = vpop.f32.mrb[0].mxu0
    %5118 = vmatprep.mubr.f32.mxu0 0.0
    %5119 = vmatmul.mubr.f32.gmra.mrb[0].mxu0 %v1131
    %v5120 = vpop.f32.mrb[0].mxu0
    %v5121 = vadd.f32 0.0, %v5120
    %v5122 = vpop.f32.mrb[0].mxu0
    %5123 = vmatprep.mubr.f32.mxu0 0.0
    %5124 = vmatmul.mubr.f32.gmra.mrb[0].mxu0 %v1134
    %v5125 = vpop.f32.mrb[0].mxu0
    %v5126 = vadd.f32 0.0, %v5125
    %v5127 = vpop.f32.mrb[0].mxu0
    %5128 = vmatprep.mubr.f32.mxu0 0.0
    %5129 = vmatmul.mubr.f32.gmra.mrb[0].mxu0 %v1135
    %v5130 = vpop.f32.mrb[0].mxu0
    %v5131 = vadd.f32 0.0, %v5130
    %v5132 = vpop.f32.mrb[0].mxu0
    %5133 = vmatprep.mubr.f32.mxu0 0.0
    %5134 = vmatmul.mubr.f32.gmra.mrb[0].mxu0 %v1138
    %v5135 = vpop.f32.mrb[0].mxu0
    %v5136 = vadd.f32 0.0, %v5135
    %v5137 = vpop.f32.mrb[0].mxu0
    %5138 = vmatprep.mubr.f32.mxu0 0.0
    %5139 = vmatmul.mubr.f32.gmra.mrb[0].mxu0 %v1139
    %v5140 = vpop.f32.mrb[0].mxu0
    %v5141 = vadd.f32 0.0, %v5140
    %v5142 = vpop.f32.mrb[0].mxu0
    %5143 = vmatprep.mubr.f32.mxu0 0.0
    %5144 = vmatmul.mubr.f32.gmra.mrb[0].mxu0 %v1142
    %v5145 = vpop.f32.mrb[0].mxu0
    %v5146 = vadd.f32 0.0, %v5145
    %v5147 = vpop.f32.mrb[0].mxu0
    %5148 = vmatprep.mubr.f32.mxu0 0.0
    %5149 = vmatmul.mubr.f32.gmra.mrb[0].mxu0 %v1143
    %v5150 = vpop.f32.mrb[0].mxu0
    %v5151 = vadd.f32 0.0, %v5150
    %v5152 = vpop.f32.mrb[0].mxu0
    %5153 = vmatprep.mubr.f32.mxu0 0.0
    %5154 = vmatmul.mubr.f32.gmra.mrb[0].mxu0 %v1146
    %v5155 = vpop.f32.mrb[0].mxu0
    %v5156 = vadd.f32 0.0, %v5155
    %v5157 = vpop.f32.mrb[0].mxu0
    %5158 = vmatprep.mubr.f32.mxu0 0.0
    %5159 = vmatmul.mubr.f32.gmra.mrb[0].mxu0 %v1147
    %v5160 = vpop.f32.mrb[0].mxu0
    %v5161 = vadd.f32 0.0, %v5160
    %v5162 = vpop.f32.mrb[0].mxu0
    %5163 = vmatprep.mubr.f32.mxu0 0.0
    %5164 = vmatmul.mubr.f32.gmra.mrb[0].mxu0 %v1150
    %v5165 = vpop.f32.mrb[0].mxu0
    %v5166 = vadd.f32 0.0, %v5165
    %v5167 = vpop.f32.mrb[0].mxu0
    %5168 = vmatprep.mubr.f32.mxu0 0.0
    %5169 = vmatmul.mubr.f32.gmra.mrb[0].mxu0 %v1151
    %v5170 = vpop.f32.mrb[0].mxu0
    %v5171 = vadd.f32 0.0, %v5170
    %v5172 = vpop.f32.mrb[0].mxu0
    %5173 = vmatprep.mubr.f32.mxu0 0.0
    %5174 = vmatmul.mubr.f32.gmra.mrb[0].mxu0 %v1154
    %v5175 = vpop.f32.mrb[0].mxu0
    %v5176 = vadd.f32 0.0, %v5175
    %v5177 = vpop.f32.mrb[0].mxu0
    %5178 = vmatprep.mubr.f32.mxu0 0.0
    %5179 = vmatmul.mubr.f32.gmra.mrb[0].mxu0 %v1155
    %v5180 = vpop.f32.mrb[0].mxu0
    %v5181 = vadd.f32 0.0, %v5180
    %v5182 = vpop.f32.mrb[0].mxu0
    %5183 = vmatprep.mubr.f32.mxu0 0.0
    %5184 = vmatmul.mubr.f32.gmra.mrb[0].mxu0 %v1158
    %v5185 = vpop.f32.mrb[0].mxu0
    %v5186 = vadd.f32 0.0, %v5185
    %v5187 = vpop.f32.mrb[0].mxu0
    %5188 = vmatprep.mubr.f32.mxu0 0.0
    %5189 = vmatmul.mubr.f32.gmra.mrb[0].mxu0 %v1159
    %v5190 = vpop.f32.mrb[0].mxu0
    %v5191 = vadd.f32 0.0, %v5190
    %v5192 = vpop.f32.mrb[0].mxu0
    %5193 = vmatprep.mubr.f32.mxu0 0.0
    %5194 = vmatmul.mubr.f32.gmra.mrb[0].mxu0 %v1162
    %v5195 = vpop.f32.mrb[0].mxu0
    %v5196 = vadd.f32 0.0, %v5195
    %v5197 = vpop.f32.mrb[0].mxu0
    %5198 = vmatprep.mubr.f32.mxu0 0.0
    %5199 = vmatmul.mubr.f32.gmra.mrb[0].mxu0 %v1163
    %v5200 = vpop.f32.mrb[0].mxu0
    %v5201 = vadd.f32 0.0, %v5200
    %v5202 = vpop.f32.mrb[0].mxu0
    %5203 = vmatprep.mubr.f32.mxu0 0.0
    %5204 = vmatmul.mubr.f32.gmra.mrb[0].mxu0 %v1166
    %v5205 = vpop.f32.mrb[0].mxu0
    %v5206 = vadd.f32 0.0, %v5205
    %v5207 = vpop.f32.mrb[0].mxu0
    %5208 = vmatprep.mubr.f32.mxu0 0.0
    %5209 = vmatmul.mubr.f32.gmra.mrb[0].mxu0 %v1167
    %v5210 = vpop.f32.mrb[0].mxu0
    %v5211 = vadd.f32 0.0, %v5210
    %v5212 = vpop.f32.mrb[0].mxu0
    %5213 = vmatprep.mubr.f32.mxu0 0.0
    %5214 = vmatmul.mubr.f32.gmra.mrb[0].mxu0 %v1170
    %v5215 = vpop.f32.mrb[0].mxu0
    %v5216 = vadd.f32 0.0, %v5215
    %v5217 = vpop.f32.mrb[0].mxu0
    %5218 = vmatprep.mubr.f32.mxu0 0.0
    %5219 = vmatmul.mubr.f32.gmra.mrb[0].mxu0 %v1171
    %v5220 = vpop.f32.mrb[0].mxu0
    %v5221 = vadd.f32 0.0, %v5220
    %v5222 = vpop.f32.mrb[0].mxu0
    %5223 = vmatprep.mubr.f32.mxu0 0.0
    %5224 = vmatmul.mubr.f32.gmra.mrb[0].mxu0 %v1174
    %v5225 = vpop.f32.mrb[0].mxu0
    %v5226 = vadd.f32 0.0, %v5225
    %v5227 = vpop.f32.mrb[0].mxu0
    %5228 = vmatprep.mubr.f32.mxu0 0.0
    %5229 = vmatmul.mubr.f32.gmra.mrb[0].mxu0 %v1175
    %v5230 = vpop.f32.mrb[0].mxu0
    %v5231 = vadd.f32 0.0, %v5230
    %v5232 = vpop.f32.mrb[0].mxu0
    %5233 = vmatprep.mubr.f32.mxu0 0.0
    %5234 = vmatmul.mubr.f32.gmra.mrb[0].mxu0 %v1178
    %v5235 = vpop.f32.mrb[0].mxu0
    %v5236 = vadd.f32 0.0, %v5235
    %v5237 = vpop.f32.mrb[0].mxu0
    %5238 = vmatprep.mubr.f32.mxu0 0.0
    %5239 = vmatmul.mubr.f32.gmra.mrb[0].mxu0 %v1179
    %v5240 = vpop.f32.mrb[0].mxu0
    %v5241 = vadd.f32 0.0, %v5240
    %v5242 = vpop.f32.mrb[0].mxu0
    %5243 = vmatprep.mubr.f32.mxu0 0.0
    %5244 = vmatmul.mubr.f32.gmra.mrb[0].mxu0 %v1182
    %v5245 = vpop.f32.mrb[0].mxu0
    %v5246 = vadd.f32 0.0, %v5245
    %v5247 = vpop.f32.mrb[0].mxu0
    %5248 = vmatprep.mubr.f32.mxu0 0.0
    %5249 = vmatmul.mubr.f32.gmra.mrb[0].mxu0 %v1183
    %v5250 = vpop.f32.mrb[0].mxu0
    %v5251 = vadd.f32 0.0, %v5250
    %v5252 = vpop.f32.mrb[0].mxu0
    %5253 = vmatprep.mubr.f32.mxu0 0.0
    %5254 = vmatmul.mubr.f32.gmra.mrb[0].mxu0 %v1186
    %v5255 = vpop.f32.mrb[0].mxu0
    %v5256 = vadd.f32 0.0, %v5255
    %v5257 = vpop.f32.mrb[0].mxu0
    %5258 = vmatprep.mubr.f32.mxu0 0.0
    %5259 = vmatmul.mubr.f32.gmra.mrb[0].mxu0 %v1187
    %v5260 = vpop.f32.mrb[0].mxu0
    %v5261 = vadd.f32 0.0, %v5260
    %v5262 = vpop.f32.mrb[0].mxu0
    %5263 = vmatprep.mubr.f32.mxu0 0.0
    %5264 = vmatmul.mubr.f32.gmra.mrb[0].mxu0 %v1190
    %v5265 = vpop.f32.mrb[0].mxu0
    %v5266 = vadd.f32 0.0, %v5265
    %v5267 = vpop.f32.mrb[0].mxu0
    %5268 = vmatprep.mubr.f32.mxu0 0.0
    %5269 = vmatmul.mubr.f32.gmra.mrb[0].mxu0 %v1191
    %v5270 = vpop.f32.mrb[0].mxu0
    %v5271 = vadd.f32 0.0, %v5270
    %v5272 = vpop.f32.mrb[0].mxu0
    %5273 = vmatprep.mubr.f32.mxu0 0.0
    %5274 = vmatmul.mubr.f32.gmra.mrb[0].mxu0 %v1202
    %v5275 = vpop.f32.mrb[0].mxu0
    %v5276 = vadd.f32 0.0, %v5275
    %v5277 = vpop.f32.mrb[0].mxu0
    %5278 = vmatprep.mubr.f32.mxu0 0.0
    %5279 = vmatmul.mubr.f32.gmra.mrb[0].mxu0 %v1203
    %v5280 = vpop.f32.mrb[0].mxu0
    %v5281 = vadd.f32 0.0, %v5280
    %v5282 = vpop.f32.mrb[0].mxu0
    %5283 = vmatprep.mubr.f32.mxu0 0.0
    %5284 = vmatmul.mubr.f32.gmra.mrb[0].mxu0 %v1206
    %v5285 = vpop.f32.mrb[0].mxu0
    %v5286 = vadd.f32 0.0, %v5285
    %v5287 = vpop.f32.mrb[0].mxu0
    %5288 = vmatprep.mubr.f32.mxu0 0.0
    %5289 = vmatmul.mubr.f32.gmra.mrb[0].mxu0 %v1207
    %v5290 = vpop.f32.mrb[0].mxu0
    %v5291 = vadd.f32 0.0, %v5290
    %v5292 = vpop.f32.mrb[0].mxu0
    %5293 = vmatprep.mubr.f32.mxu0 0.0
    %5294 = vmatmul.mubr.f32.gmra.mrb[0].mxu0 %v1210
    %v5295 = vpop.f32.mrb[0].mxu0
    %v5296 = vadd.f32 0.0, %v5295
    %v5297 = vpop.f32.mrb[0].mxu0
    %5298 = vmatprep.mubr.f32.mxu0 0.0
    %5299 = vmatmul.mubr.f32.gmra.mrb[0].mxu0 %v1211
    %v5300 = vpop.f32.mrb[0].mxu0
    %v5301 = vadd.f32 0.0, %v5300
    %v5302 = vpop.f32.mrb[0].mxu0
    %5303 = vmatprep.mubr.f32.mxu0 0.0
    %5304 = vmatmul.mubr.f32.gmra.mrb[0].mxu0 %v1214
    %v5305 = vpop.f32.mrb[0].mxu0
    %v5306 = vadd.f32 0.0, %v5305
    %v5307 = vpop.f32.mrb[0].mxu0
    %5308 = vmatprep.mubr.f32.mxu0 0.0
    %5309 = vmatmul.mubr.f32.gmra.mrb[0].mxu0 %v1215
    %v5310 = vpop.f32.mrb[0].mxu0
    %v5311 = vadd.f32 0.0, %v5310
    %v5312 = vpop.f32.mrb[0].mxu0
    %5313 = vmatprep.mubr.f32.mxu0 0.0
    %5314 = vmatmul.mubr.f32.gmra.mrb[0].mxu0 %v1218
    %v5315 = vpop.f32.mrb[0].mxu0
    %v5316 = vadd.f32 0.0, %v5315
    %v5317 = vpop.f32.mrb[0].mxu0
    %5318 = vmatprep.mubr.f32.mxu0 0.0
    %5319 = vmatmul.mubr.f32.gmra.mrb[0].mxu0 %v1219
    %v5320 = vpop.f32.mrb[0].mxu0
    %v5321 = vadd.f32 0.0, %v5320
    %v5322 = vpop.f32.mrb[0].mxu0
    %5323 = vmatprep.mubr.f32.mxu0 0.0
    %5324 = vmatmul.mubr.f32.gmra.mrb[0].mxu0 %v1222
    %v5325 = vpop.f32.mrb[0].mxu0
    %v5326 = vadd.f32 0.0, %v5325
    %v5327 = vpop.f32.mrb[0].mxu0
    %5328 = vmatprep.mubr.f32.mxu0 0.0
    %5329 = vmatmul.mubr.f32.gmra.mrb[0].mxu0 %v1223
    %v5330 = vpop.f32.mrb[0].mxu0
    %v5331 = vadd.f32 0.0, %v5330
    %v5332 = vpop.f32.mrb[0].mxu0
    %5333 = vmatprep.mubr.f32.mxu0 0.0
    %5334 = vmatmul.mubr.f32.gmra.mrb[0].mxu0 %v1226
    %v5335 = vpop.f32.mrb[0].mxu0
    %v5336 = vadd.f32 0.0, %v5335
    %v5337 = vpop.f32.mrb[0].mxu0
    %5338 = vmatprep.mubr.f32.mxu0 0.0
    %5339 = vmatmul.mubr.f32.gmra.mrb[0].mxu0 %v1227
    %v5340 = vpop.f32.mrb[0].mxu0
    %v5341 = vadd.f32 0.0, %v5340
    %v5342 = vpop.f32.mrb[0].mxu0
    %5343 = vmatprep.mubr.f32.mxu0 0.0
    %5344 = vmatmul.mubr.f32.gmra.mrb[0].mxu0 %v1230
    %v5345 = vpop.f32.mrb[0].mxu0
    %v5346 = vadd.f32 0.0, %v5345
    %v5347 = vpop.f32.mrb[0].mxu0
    %5348 = vmatprep.mubr.f32.mxu0 0.0
    %5349 = vmatmul.mubr.f32.gmra.mrb[0].mxu0 %v1231
    %v5350 = vpop.f32.mrb[0].mxu0
    %v5351 = vadd.f32 0.0, %v5350
    %v5352 = vpop.f32.mrb[0].mxu0
    %5353 = vmatprep.mubr.f32.mxu0 0.0
    %5354 = vmatmul.mubr.f32.gmra.mrb[0].mxu0 %v1234
    %v5355 = vpop.f32.mrb[0].mxu0
    %v5356 = vadd.f32 0.0, %v5355
    %v5357 = vpop.f32.mrb[0].mxu0
    %5358 = vmatprep.mubr.f32.mxu0 0.0
    %5359 = vmatmul.mubr.f32.gmra.mrb[0].mxu0 %v1235
    %v5360 = vpop.f32.mrb[0].mxu0
    %v5361 = vadd.f32 0.0, %v5360
    %v5362 = vpop.f32.mrb[0].mxu0
    %5363 = vmatprep.mubr.f32.mxu0 0.0
    %5364 = vmatmul.mubr.f32.gmra.mrb[0].mxu0 %v1238
    %v5365 = vpop.f32.mrb[0].mxu0
    %v5366 = vadd.f32 0.0, %v5365
    %v5367 = vpop.f32.mrb[0].mxu0
    %5368 = vmatprep.mubr.f32.mxu0 0.0
    %5369 = vmatmul.mubr.f32.gmra.mrb[0].mxu0 %v1239
    %v5370 = vpop.f32.mrb[0].mxu0
    %v5371 = vadd.f32 0.0, %v5370
    %v5372 = vpop.f32.mrb[0].mxu0
    %5373 = vmatprep.mubr.f32.mxu0 0.0
    %5374 = vmatmul.mubr.f32.gmra.mrb[0].mxu0 %v1242
    %v5375 = vpop.f32.mrb[0].mxu0
    %v5376 = vadd.f32 0.0, %v5375
    %v5377 = vpop.f32.mrb[0].mxu0
    %5378 = vmatprep.mubr.f32.mxu0 0.0
    %5379 = vmatmul.mubr.f32.gmra.mrb[0].mxu0 %v1243
    %v5380 = vpop.f32.mrb[0].mxu0
    %v5381 = vadd.f32 0.0, %v5380
    %v5382 = vpop.f32.mrb[0].mxu0
    %5383 = vmatprep.mubr.f32.mxu0 0.0
    %5384 = vmatmul.mubr.f32.gmra.mrb[0].mxu0 %v1246
    %v5385 = vpop.f32.mrb[0].mxu0
    %v5386 = vadd.f32 0.0, %v5385
    %v5387 = vpop.f32.mrb[0].mxu0
    %5388 = vmatprep.mubr.f32.mxu0 0.0
    %5389 = vmatmul.mubr.f32.gmra.mrb[0].mxu0 %v1247
    %v5390 = vpop.f32.mrb[0].mxu0
    %v5391 = vadd.f32 0.0, %v5390
    %v5392 = vpop.f32.mrb[0].mxu0
    %5393 = vmatprep.mubr.f32.mxu0 0.0
    %5394 = vmatmul.mubr.f32.gmra.mrb[0].mxu0 %v1250
    %v5395 = vpop.f32.mrb[0].mxu0
    %v5396 = vadd.f32 0.0, %v5395
    %v5397 = vpop.f32.mrb[0].mxu0
    %5398 = vmatprep.mubr.f32.mxu0 0.0
    %5399 = vmatmul.mubr.f32.gmra.mrb[0].mxu0 %v1251
    %v5400 = vpop.f32.mrb[0].mxu0
    %v5401 = vadd.f32 0.0, %v5400
    %v5402 = vpop.f32.mrb[0].mxu0
    %5403 = vmatprep.mubr.f32.mxu0 0.0
    %5404 = vmatmul.mubr.f32.gmra.mrb[0].mxu0 %v1254
    %v5405 = vpop.f32.mrb[0].mxu0
    %v5406 = vadd.f32 0.0, %v5405
    %v5407 = vpop.f32.mrb[0].mxu0
    %5408 = vmatprep.mubr.f32.mxu0 0.0
    %5409 = vmatmul.mubr.f32.gmra.mrb[0].mxu0 %v1255
    %v5410 = vpop.f32.mrb[0].mxu0
    %v5411 = vadd.f32 0.0, %v5410
    %v5412 = vpop.f32.mrb[0].mxu0
    %5413 = vmatprep.mubr.f32.mxu0 0.0
    %5414 = vmatmul.mubr.f32.gmra.mrb[0].mxu0 %v1258
    %v5415 = vpop.f32.mrb[0].mxu0
    %v5416 = vadd.f32 0.0, %v5415
    %v5417 = vpop.f32.mrb[0].mxu0
    %5418 = vmatprep.mubr.f32.mxu0 0.0
    %5419 = vmatmul.mubr.f32.gmra.mrb[0].mxu0 %v1259
    %v5420 = vpop.f32.mrb[0].mxu0
    %v5421 = vadd.f32 0.0, %v5420
    %v5422 = vpop.f32.mrb[0].mxu0
    %5423 = vmatprep.mubr.f32.mxu0 0.0
    %5424 = vmatmul.mubr.f32.gmra.mrb[0].mxu0 %v1262
    %v5425 = vpop.f32.mrb[0].mxu0
    %v5426 = vadd.f32 0.0, %v5425
    %v5427 = vpop.f32.mrb[0].mxu0
    %5428 = vmatprep.mubr.f32.mxu0 0.0
    %5429 = vmatmul.mubr.f32.gmra.mrb[0].mxu0 %v1263
    %v5430 = vpop.f32.mrb[0].mxu0
    %v5431 = vadd.f32 0.0, %v5430
    %v5432 = vpop.f32.mrb[0].mxu0
    %5433 = vdwg.mxu0
    %v5434 = vadd.f32 %v4968, %v5116
    %v5435 = vadd.f32 %v4969, %v5121
    %v5436 = vadd.f32 %v4970, %v5126
    %v5437 = vadd.f32 %v4971, %v5131
    %v5438 = vadd.f32 %v4972, %v5136
    %v5439 = vadd.f32 %v4973, %v5141
    %v5440 = vadd.f32 %v4974, %v5146
    %v5441 = vadd.f32 %v4975, %v5151
    %v5442 = vadd.f32 %v4976, %v5156
    %v5443 = vadd.f32 %v4977, %v5161
    %v5444 = vadd.f32 %v4978, %v5166
    %v5445 = vadd.f32 %v4979, %v5171
    %v5446 = vadd.f32 %v4980, %v5176
    %v5447 = vadd.f32 %v4981, %v5181
    %v5448 = vadd.f32 %v4982, %v5186
    %v5449 = vadd.f32 %v4983, %v5191
    %v5450 = vadd.f32 %v4984, %v5196
    %v5451 = vadd.f32 %v4985, %v5201
    %v5452 = vadd.f32 %v4986, %v5206
    %v5453 = vadd.f32 %v4987, %v5211
    %v5454 = vadd.f32 %v4988, %v5216
    %v5455 = vadd.f32 %v4989, %v5221
    %v5456 = vadd.f32 %v4990, %v5226
    %v5457 = vadd.f32 %v4991, %v5231
    %v5458 = vadd.f32 %v4992, %v5236
    %v5459 = vadd.f32 %v4993, %v5241
    %v5460 = vadd.f32 %v4994, %v5246
    %v5461 = vadd.f32 %v4995, %v5251
    %v5462 = vadd.f32 %v4996, %v5256
    %v5463 = vadd.f32 %v4997, %v5261
    %v5464 = vadd.f32 %v4998, %v5266
    %v5465 = vadd.f32 %v4999, %v5271
    %v5466 = vadd.f32 %v5000, %v5276
    %v5467 = vadd.f32 %v5001, %v5281
    %v5468 = vadd.f32 %v5002, %v5286
    %v5469 = vadd.f32 %v5003, %v5291
    %v5470 = vadd.f32 %v5004, %v5296
    %v5471 = vadd.f32 %v5005, %v5301
    %v5472 = vadd.f32 %v5006, %v5306
    %v5473 = vadd.f32 %v5007, %v5311
    %v5474 = vadd.f32 %v5008, %v5316
    %v5475 = vadd.f32 %v5009, %v5321
    %v5476 = vadd.f32 %v5010, %v5326
    %v5477 = vadd.f32 %v5011, %v5331
    %v5478 = vadd.f32 %v5012, %v5336
    %v5479 = vadd.f32 %v5013, %v5341
    %v5480 = vadd.f32 %v5014, %v5346
    %v5481 = vadd.f32 %v5015, %v5351
    %v5482 = vadd.f32 %v5016, %v5356
    %v5483 = vadd.f32 %v5017, %v5361
    %v5484 = vadd.f32 %v5018, %v5366
    %v5485 = vadd.f32 %v5019, %v5371
    %v5486 = vadd.f32 %v5020, %v5376
    %v5487 = vadd.f32 %v5021, %v5381
    %v5488 = vadd.f32 %v5022, %v5386
    %v5489 = vadd.f32 %v5023, %v5391
    %v5490 = vadd.f32 %v5024, %v5396
    %v5491 = vadd.f32 %v5025, %v5401
    %v5492 = vadd.f32 %v5026, %v5406
    %v5493 = vadd.f32 %v5027, %v5411
    %v5494 = vadd.f32 %v5028, %v5416
    %v5495 = vadd.f32 %v5029, %v5421
    %v5496 = vadd.f32 %v5030, %v5426
    %v5497 = vadd.f32 %v5031, %v5431
    %v5500 = vrot.slane %v1190, 1
    %v5501 = vrot.slane %v1191, 1
    %v5502 = vsel %vm2421, %v5500, %v5501
    %v5503 = vrot.slane %v1192, 1
    %v5504 = vsel %vm2421, %v5501, %v5503
    %v5505 = vrot.slane %v1262, 1
    %v5506 = vrot.slane %v1263, 1
    %v5507 = vsel %vm2421, %v5505, %v5506
    %v5508 = vrot.slane %v1264, 1
    %v5509 = vsel %vm2421, %v5506, %v5508
    %s5514 = scalar_lea.vmem [#allocation9], 1024
    %v5515 = vld [vmem:[%s5514] sm:$0xff]
    %v5516 = vld [vmem:[%s5514 + $0x8] sm:$0xff]
    %v5517 = vld [vmem:[%s5514 + $0x10] sm:$0xff]
    %v5518 = vld [vmem:[%s5514 + $0x18] sm:$0xff]
    %v5519 = vld [vmem:[%s5514 + $0x20] sm:$0xff]
    %v5520 = vld [vmem:[%s5514 + $0x28] sm:$0xff]
    %v5521 = vld [vmem:[%s5514 + $0x30] sm:$0xff]
    %v5522 = vld [vmem:[%s5514 + $0x38] sm:$0xff]
    %v5523 = vld [vmem:[%s5514 + $0x40] sm:$0xff]
    %v5524 = vld [vmem:[%s5514 + $0x48] sm:$0xff]
    %v5525 = vld [vmem:[%s5514 + $0x50] sm:$0xff]
    %v5526 = vld [vmem:[%s5514 + $0x58] sm:$0xff]
    %v5527 = vld [vmem:[%s5514 + $0x60] sm:$0xff]
    %v5528 = vld [vmem:[%s5514 + $0x68] sm:$0xff]
    %v5529 = vld [vmem:[%s5514 + $0x70] sm:$0xff]
    %v5530 = vld [vmem:[%s5514 + $0x78] sm:$0xff]
    %5531 = vmatprep.subr.mxu0 0.0
    %5532 = vmatpush1.msra.mxu0 %v5515
    %5533 = vmatprep.subr.mxu0 0.0
    %5534 = vmatpush1.msra.mxu0 %v5516
    %5535 = vmatprep.subr.mxu0 0.0
    %5536 = vmatpush1.msra.mxu0 %v5517
    %5537 = vmatprep.subr.mxu0 0.0
    %5538 = vmatpush1.msra.mxu0 %v5518
    %5539 = vmatprep.subr.mxu0 0.0
    %5540 = vmatpush1.msra.mxu0 %v5519
    %5541 = vmatprep.subr.mxu0 0.0
    %5542 = vmatpush1.msra.mxu0 %v5520
    %5543 = vmatprep.subr.mxu0 0.0
    %5544 = vmatpush1.msra.mxu0 %v5521
    %5545 = vmatprep.subr.mxu0 0.0
    %5546 = vmatpush1.msra.mxu0 %v5522
    %5547 = vmatprep.subr.mxu0 0.0
    %5548 = vmatpush1.msra.mxu0 %v5523
    %5549 = vmatprep.subr.mxu0 0.0
    %5550 = vmatpush1.msra.mxu0 %v5524
    %5551 = vmatprep.subr.mxu0 0.0
    %5552 = vmatpush1.msra.mxu0 %v5525
    %5553 = vmatprep.subr.mxu0 0.0
    %5554 = vmatpush1.msra.mxu0 %v5526
    %5555 = vmatprep.subr.mxu0 0.0
    %5556 = vmatpush1.msra.mxu0 %v5527
    %5557 = vmatprep.subr.mxu0 0.0
    %5558 = vmatpush1.msra.mxu0 %v5528
    %5559 = vmatprep.subr.mxu0 0.0
    %5560 = vmatpush1.msra.mxu0 %v5529
    %5561 = vmatprep.subr.mxu0 0.0
    %5562 = vmatpush1.msra.mxu0 %v5530
    %5563 = vmatprep.subr.mxu0 0.0
    %5564 = vmatpush1.msra.mxu0 0.0
    %5565 = vmatprep.subr.mxu0 0.0
    %5566 = vmatpush1.msra.mxu0 0.0
    %5567 = vmatprep.subr.mxu0 0.0
    %5568 = vmatpush1.msra.mxu0 0.0
    %5569 = vmatprep.subr.mxu0 0.0
    %5570 = vmatpush1.msra.mxu0 0.0
    %5571 = vmatprep.subr.mxu0 0.0
    %5572 = vmatpush1.msra.mxu0 0.0
    %5573 = vmatprep.subr.mxu0 0.0
    %5574 = vmatpush1.msra.mxu0 0.0
    %5575 = vmatprep.subr.mxu0 0.0
    %5576 = vmatpush1.msra.mxu0 0.0
    %5577 = vmatprep.subr.mxu0 0.0
    %5578 = vmatpush1.msra.mxu0 0.0
    %5579 = vmatprep.subr.mxu0 0.0
    %5580 = vmatpush1.msra.mxu0 0.0
    %5581 = vmatprep.subr.mxu0 0.0
    %5582 = vmatpush1.msra.mxu0 0.0
    %5583 = vmatprep.subr.mxu0 0.0
    %5584 = vmatpush1.msra.mxu0 0.0
    %5585 = vmatprep.subr.mxu0 0.0
    %5586 = vmatpush1.msra.mxu0 0.0
    %5587 = vmatprep.subr.mxu0 0.0
    %5588 = vmatpush1.msra.mxu0 0.0
    %5589 = vmatprep.subr.mxu0 0.0
    %5590 = vmatpush1.msra.mxu0 0.0
    %5591 = vmatprep.subr.mxu0 0.0
    %5592 = vmatpush1.msra.mxu0 0.0
    %5593 = vmatprep.subr.mxu0 0.0
    %5594 = vmatpush1.msra.mxu0 0.0
    %5595 = vmatprep.mubr.f32.mxu0 0.0
    %5596 = vmatmul.mubr.f32.gmra.mrb[0].mxu0 %v2434
    %v5597 = vpop.f32.mrb[0].mxu0
    %v5598 = vadd.f32 0.0, %v5597
    %v5599 = vpop.f32.mrb[0].mxu0
    %5600 = vmatprep.mubr.f32.mxu0 0.0
    %5601 = vmatmul.mubr.f32.gmra.mrb[0].mxu0 %v2436
    %v5602 = vpop.f32.mrb[0].mxu0
    %v5603 = vadd.f32 0.0, %v5602
    %v5604 = vpop.f32.mrb[0].mxu0
    %5605 = vmatprep.mubr.f32.mxu0 0.0
    %5606 = vmatmul.mubr.f32.gmra.mrb[0].mxu0 %v2439
    %v5607 = vpop.f32.mrb[0].mxu0
    %v5608 = vadd.f32 0.0, %v5607
    %v5609 = vpop.f32.mrb[0].mxu0
    %5610 = vmatprep.mubr.f32.mxu0 0.0
    %5611 = vmatmul.mubr.f32.gmra.mrb[0].mxu0 %v2441
    %v5612 = vpop.f32.mrb[0].mxu0
    %v5613 = vadd.f32 0.0, %v5612
    %v5614 = vpop.f32.mrb[0].mxu0
    %5615 = vmatprep.mubr.f32.mxu0 0.0
    %5616 = vmatmul.mubr.f32.gmra.mrb[0].mxu0 %v2444
    %v5617 = vpop.f32.mrb[0].mxu0
    %v5618 = vadd.f32 0.0, %v5617
    %v5619 = vpop.f32.mrb[0].mxu0
    %5620 = vmatprep.mubr.f32.mxu0 0.0
    %5621 = vmatmul.mubr.f32.gmra.mrb[0].mxu0 %v2446
    %v5622 = vpop.f32.mrb[0].mxu0
    %v5623 = vadd.f32 0.0, %v5622
    %v5624 = vpop.f32.mrb[0].mxu0
    %5625 = vmatprep.mubr.f32.mxu0 0.0
    %5626 = vmatmul.mubr.f32.gmra.mrb[0].mxu0 %v2449
    %v5627 = vpop.f32.mrb[0].mxu0
    %v5628 = vadd.f32 0.0, %v5627
    %v5629 = vpop.f32.mrb[0].mxu0
    %5630 = vmatprep.mubr.f32.mxu0 0.0
    %5631 = vmatmul.mubr.f32.gmra.mrb[0].mxu0 %v2451
    %v5632 = vpop.f32.mrb[0].mxu0
    %v5633 = vadd.f32 0.0, %v5632
    %v5634 = vpop.f32.mrb[0].mxu0
    %5635 = vmatprep.mubr.f32.mxu0 0.0
    %5636 = vmatmul.mubr.f32.gmra.mrb[0].mxu0 %v2454
    %v5637 = vpop.f32.mrb[0].mxu0
    %v5638 = vadd.f32 0.0, %v5637
    %v5639 = vpop.f32.mrb[0].mxu0
    %5640 = vmatprep.mubr.f32.mxu0 0.0
    %5641 = vmatmul.mubr.f32.gmra.mrb[0].mxu0 %v2456
    %v5642 = vpop.f32.mrb[0].mxu0
    %v5643 = vadd.f32 0.0, %v5642
    %v5644 = vpop.f32.mrb[0].mxu0
    %5645 = vmatprep.mubr.f32.mxu0 0.0
    %5646 = vmatmul.mubr.f32.gmra.mrb[0].mxu0 %v2459
    %v5647 = vpop.f32.mrb[0].mxu0
    %v5648 = vadd.f32 0.0, %v5647
    %v5649 = vpop.f32.mrb[0].mxu0
    %5650 = vmatprep.mubr.f32.mxu0 0.0
    %5651 = vmatmul.mubr.f32.gmra.mrb[0].mxu0 %v2461
    %v5652 = vpop.f32.mrb[0].mxu0
    %v5653 = vadd.f32 0.0, %v5652
    %v5654 = vpop.f32.mrb[0].mxu0
    %5655 = vmatprep.mubr.f32.mxu0 0.0
    %5656 = vmatmul.mubr.f32.gmra.mrb[0].mxu0 %v2464
    %v5657 = vpop.f32.mrb[0].mxu0
    %v5658 = vadd.f32 0.0, %v5657
    %v5659 = vpop.f32.mrb[0].mxu0
    %5660 = vmatprep.mubr.f32.mxu0 0.0
    %5661 = vmatmul.mubr.f32.gmra.mrb[0].mxu0 %v2466
    %v5662 = vpop.f32.mrb[0].mxu0
    %v5663 = vadd.f32 0.0, %v5662
    %v5664 = vpop.f32.mrb[0].mxu0
    %5665 = vmatprep.mubr.f32.mxu0 0.0
    %5666 = vmatmul.mubr.f32.gmra.mrb[0].mxu0 %v2469
    %v5667 = vpop.f32.mrb[0].mxu0
    %v5668 = vadd.f32 0.0, %v5667
    %v5669 = vpop.f32.mrb[0].mxu0
    %5670 = vmatprep.mubr.f32.mxu0 0.0
    %5671 = vmatmul.mubr.f32.gmra.mrb[0].mxu0 %v2471
    %v5672 = vpop.f32.mrb[0].mxu0
    %v5673 = vadd.f32 0.0, %v5672
    %v5674 = vpop.f32.mrb[0].mxu0
    %5675 = vmatprep.mubr.f32.mxu0 0.0
    %5676 = vmatmul.mubr.f32.gmra.mrb[0].mxu0 %v2474
    %v5677 = vpop.f32.mrb[0].mxu0
    %v5678 = vadd.f32 0.0, %v5677
    %v5679 = vpop.f32.mrb[0].mxu0
    %5680 = vmatprep.mubr.f32.mxu0 0.0
    %5681 = vmatmul.mubr.f32.gmra.mrb[0].mxu0 %v2476
    %v5682 = vpop.f32.mrb[0].mxu0
    %v5683 = vadd.f32 0.0, %v5682
    %v5684 = vpop.f32.mrb[0].mxu0
    %5685 = vmatprep.mubr.f32.mxu0 0.0
    %5686 = vmatmul.mubr.f32.gmra.mrb[0].mxu0 %v2479
    %v5687 = vpop.f32.mrb[0].mxu0
    %v5688 = vadd.f32 0.0, %v5687
    %v5689 = vpop.f32.mrb[0].mxu0
    %5690 = vmatprep.mubr.f32.mxu0 0.0
    %5691 = vmatmul.mubr.f32.gmra.mrb[0].mxu0 %v2481
    %v5692 = vpop.f32.mrb[0].mxu0
    %v5693 = vadd.f32 0.0, %v5692
    %v5694 = vpop.f32.mrb[0].mxu0
    %5695 = vmatprep.mubr.f32.mxu0 0.0
    %5696 = vmatmul.mubr.f32.gmra.mrb[0].mxu0 %v2484
    %v5697 = vpop.f32.mrb[0].mxu0
    %v5698 = vadd.f32 0.0, %v5697
    %v5699 = vpop.f32.mrb[0].mxu0
    %5700 = vmatprep.mubr.f32.mxu0 0.0
    %5701 = vmatmul.mubr.f32.gmra.mrb[0].mxu0 %v2486
    %v5702 = vpop.f32.mrb[0].mxu0
    %v5703 = vadd.f32 0.0, %v5702
    %v5704 = vpop.f32.mrb[0].mxu0
    %5705 = vmatprep.mubr.f32.mxu0 0.0
    %5706 = vmatmul.mubr.f32.gmra.mrb[0].mxu0 %v2489
    %v5707 = vpop.f32.mrb[0].mxu0
    %v5708 = vadd.f32 0.0, %v5707
    %v5709 = vpop.f32.mrb[0].mxu0
    %5710 = vmatprep.mubr.f32.mxu0 0.0
    %5711 = vmatmul.mubr.f32.gmra.mrb[0].mxu0 %v2491
    %v5712 = vpop.f32.mrb[0].mxu0
    %v5713 = vadd.f32 0.0, %v5712
    %v5714 = vpop.f32.mrb[0].mxu0
    %5715 = vmatprep.mubr.f32.mxu0 0.0
    %5716 = vmatmul.mubr.f32.gmra.mrb[0].mxu0 %v2494
    %v5717 = vpop.f32.mrb[0].mxu0
    %v5718 = vadd.f32 0.0, %v5717
    %v5719 = vpop.f32.mrb[0].mxu0
    %5720 = vmatprep.mubr.f32.mxu0 0.0
    %5721 = vmatmul.mubr.f32.gmra.mrb[0].mxu0 %v2496
    %v5722 = vpop.f32.mrb[0].mxu0
    %v5723 = vadd.f32 0.0, %v5722
    %v5724 = vpop.f32.mrb[0].mxu0
    %5725 = vmatprep.mubr.f32.mxu0 0.0
    %5726 = vmatmul.mubr.f32.gmra.mrb[0].mxu0 %v2499
    %v5727 = vpop.f32.mrb[0].mxu0
    %v5728 = vadd.f32 0.0, %v5727
    %v5729 = vpop.f32.mrb[0].mxu0
    %5730 = vmatprep.mubr.f32.mxu0 0.0
    %5731 = vmatmul.mubr.f32.gmra.mrb[0].mxu0 %v2501
    %v5732 = vpop.f32.mrb[0].mxu0
    %v5733 = vadd.f32 0.0, %v5732
    %v5734 = vpop.f32.mrb[0].mxu0
    %5735 = vmatprep.mubr.f32.mxu0 0.0
    %5736 = vmatmul.mubr.f32.gmra.mrb[0].mxu0 %v4068
    %v5737 = vpop.f32.mrb[0].mxu0
    %v5738 = vadd.f32 0.0, %v5737
    %v5739 = vpop.f32.mrb[0].mxu0
    %5740 = vmatprep.mubr.f32.mxu0 0.0
    %5741 = vmatmul.mubr.f32.gmra.mrb[0].mxu0 %v4070
    %v5742 = vpop.f32.mrb[0].mxu0
    %v5743 = vadd.f32 0.0, %v5742
    %v5744 = vpop.f32.mrb[0].mxu0
    %5745 = vmatprep.mubr.f32.mxu0 0.0
    %5746 = vmatmul.mubr.f32.gmra.mrb[0].mxu0 %v5502
    %v5747 = vpop.f32.mrb[0].mxu0
    %v5748 = vadd.f32 0.0, %v5747
    %v5749 = vpop.f32.mrb[0].mxu0
    %5750 = vmatprep.mubr.f32.mxu0 0.0
    %5751 = vmatmul.mubr.f32.gmra.mrb[0].mxu0 %v5504
    %v5752 = vpop.f32.mrb[0].mxu0
    %v5753 = vadd.f32 0.0, %v5752
    %v5754 = vpop.f32.mrb[0].mxu0
    %5755 = vmatprep.mubr.f32.mxu0 0.0
    %5756 = vmatmul.mubr.f32.gmra.mrb[0].mxu0 %v2514
    %v5757 = vpop.f32.mrb[0].mxu0
    %v5758 = vadd.f32 0.0, %v5757
    %v5759 = vpop.f32.mrb[0].mxu0
    %5760 = vmatprep.mubr.f32.mxu0 0.0
    %5761 = vmatmul.mubr.f32.gmra.mrb[0].mxu0 %v2516
    %v5762 = vpop.f32.mrb[0].mxu0
    %v5763 = vadd.f32 0.0, %v5762
    %v5764 = vpop.f32.mrb[0].mxu0
    %5765 = vmatprep.mubr.f32.mxu0 0.0
    %5766 = vmatmul.mubr.f32.gmra.mrb[0].mxu0 %v2519
    %v5767 = vpop.f32.mrb[0].mxu0
    %v5768 = vadd.f32 0.0, %v5767
    %v5769 = vpop.f32.mrb[0].mxu0
    %5770 = vmatprep.mubr.f32.mxu0 0.0
    %5771 = vmatmul.mubr.f32.gmra.mrb[0].mxu0 %v2521
    %v5772 = vpop.f32.mrb[0].mxu0
    %v5773 = vadd.f32 0.0, %v5772
    %v5774 = vpop.f32.mrb[0].mxu0
    %5775 = vmatprep.mubr.f32.mxu0 0.0
    %5776 = vmatmul.mubr.f32.gmra.mrb[0].mxu0 %v2524
    %v5777 = vpop.f32.mrb[0].mxu0
    %v5778 = vadd.f32 0.0, %v5777
    %v5779 = vpop.f32.mrb[0].mxu0
    %5780 = vmatprep.mubr.f32.mxu0 0.0
    %5781 = vmatmul.mubr.f32.gmra.mrb[0].mxu0 %v2526
    %v5782 = vpop.f32.mrb[0].mxu0
    %v5783 = vadd.f32 0.0, %v5782
    %v5784 = vpop.f32.mrb[0].mxu0
    %5785 = vmatprep.mubr.f32.mxu0 0.0
    %5786 = vmatmul.mubr.f32.gmra.mrb[0].mxu0 %v2529
    %v5787 = vpop.f32.mrb[0].mxu0
    %v5788 = vadd.f32 0.0, %v5787
    %v5789 = vpop.f32.mrb[0].mxu0
    %5790 = vmatprep.mubr.f32.mxu0 0.0
    %5791 = vmatmul.mubr.f32.gmra.mrb[0].mxu0 %v2531
    %v5792 = vpop.f32.mrb[0].mxu0
    %v5793 = vadd.f32 0.0, %v5792
    %v5794 = vpop.f32.mrb[0].mxu0
    %5795 = vmatprep.mubr.f32.mxu0 0.0
    %5796 = vmatmul.mubr.f32.gmra.mrb[0].mxu0 %v2534
    %v5797 = vpop.f32.mrb[0].mxu0
    %v5798 = vadd.f32 0.0, %v5797
    %v5799 = vpop.f32.mrb[0].mxu0
    %5800 = vmatprep.mubr.f32.mxu0 0.0
    %5801 = vmatmul.mubr.f32.gmra.mrb[0].mxu0 %v2536
    %v5802 = vpop.f32.mrb[0].mxu0
    %v5803 = vadd.f32 0.0, %v5802
    %v5804 = vpop.f32.mrb[0].mxu0
    %5805 = vmatprep.mubr.f32.mxu0 0.0
    %5806 = vmatmul.mubr.f32.gmra.mrb[0].mxu0 %v2539
    %v5807 = vpop.f32.mrb[0].mxu0
    %v5808 = vadd.f32 0.0, %v5807
    %v5809 = vpop.f32.mrb[0].mxu0
    %5810 = vmatprep.mubr.f32.mxu0 0.0
    %5811 = vmatmul.mubr.f32.gmra.mrb[0].mxu0 %v2541
    %v5812 = vpop.f32.mrb[0].mxu0
    %v5813 = vadd.f32 0.0, %v5812
    %v5814 = vpop.f32.mrb[0].mxu0
    %5815 = vmatprep.mubr.f32.mxu0 0.0
    %5816 = vmatmul.mubr.f32.gmra.mrb[0].mxu0 %v2544
    %v5817 = vpop.f32.mrb[0].mxu0
    %v5818 = vadd.f32 0.0, %v5817
    %v5819 = vpop.f32.mrb[0].mxu0
    %5820 = vmatprep.mubr.f32.mxu0 0.0
    %5821 = vmatmul.mubr.f32.gmra.mrb[0].mxu0 %v2546
    %v5822 = vpop.f32.mrb[0].mxu0
    %v5823 = vadd.f32 0.0, %v5822
    %v5824 = vpop.f32.mrb[0].mxu0
    %5825 = vmatprep.mubr.f32.mxu0 0.0
    %5826 = vmatmul.mubr.f32.gmra.mrb[0].mxu0 %v2549
    %v5827 = vpop.f32.mrb[0].mxu0
    %v5828 = vadd.f32 0.0, %v5827
    %v5829 = vpop.f32.mrb[0].mxu0
    %5830 = vmatprep.mubr.f32.mxu0 0.0
    %5831 = vmatmul.mubr.f32.gmra.mrb[0].mxu0 %v2551
    %v5832 = vpop.f32.mrb[0].mxu0
    %v5833 = vadd.f32 0.0, %v5832
    %v5834 = vpop.f32.mrb[0].mxu0
    %5835 = vmatprep.mubr.f32.mxu0 0.0
    %5836 = vmatmul.mubr.f32.gmra.mrb[0].mxu0 %v2554
    %v5837 = vpop.f32.mrb[0].mxu0
    %v5838 = vadd.f32 0.0, %v5837
    %v5839 = vpop.f32.mrb[0].mxu0
    %5840 = vmatprep.mubr.f32.mxu0 0.0
    %5841 = vmatmul.mubr.f32.gmra.mrb[0].mxu0 %v2556
    %v5842 = vpop.f32.mrb[0].mxu0
    %v5843 = vadd.f32 0.0, %v5842
    %v5844 = vpop.f32.mrb[0].mxu0
    %5845 = vmatprep.mubr.f32.mxu0 0.0
    %5846 = vmatmul.mubr.f32.gmra.mrb[0].mxu0 %v2559
    %v5847 = vpop.f32.mrb[0].mxu0
    %v5848 = vadd.f32 0.0, %v5847
    %v5849 = vpop.f32.mrb[0].mxu0
    %5850 = vmatprep.mubr.f32.mxu0 0.0
    %5851 = vmatmul.mubr.f32.gmra.mrb[0].mxu0 %v2561
    %v5852 = vpop.f32.mrb[0].mxu0
    %v5853 = vadd.f32 0.0, %v5852
    %v5854 = vpop.f32.mrb[0].mxu0
    %5855 = vmatprep.mubr.f32.mxu0 0.0
    %5856 = vmatmul.mubr.f32.gmra.mrb[0].mxu0 %v2564
    %v5857 = vpop.f32.mrb[0].mxu0
    %v5858 = vadd.f32 0.0, %v5857
    %v5859 = vpop.f32.mrb[0].mxu0
    %5860 = vmatprep.mubr.f32.mxu0 0.0
    %5861 = vmatmul.mubr.f32.gmra.mrb[0].mxu0 %v2566
    %v5862 = vpop.f32.mrb[0].mxu0
    %v5863 = vadd.f32 0.0, %v5862
    %v5864 = vpop.f32.mrb[0].mxu0
    %5865 = vmatprep.mubr.f32.mxu0 0.0
    %5866 = vmatmul.mubr.f32.gmra.mrb[0].mxu0 %v2569
    %v5867 = vpop.f32.mrb[0].mxu0
    %v5868 = vadd.f32 0.0, %v5867
    %v5869 = vpop.f32.mrb[0].mxu0
    %5870 = vmatprep.mubr.f32.mxu0 0.0
    %5871 = vmatmul.mubr.f32.gmra.mrb[0].mxu0 %v2571
    %v5872 = vpop.f32.mrb[0].mxu0
    %v5873 = vadd.f32 0.0, %v5872
    %v5874 = vpop.f32.mrb[0].mxu0
    %5875 = vmatprep.mubr.f32.mxu0 0.0
    %5876 = vmatmul.mubr.f32.gmra.mrb[0].mxu0 %v2574
    %v5877 = vpop.f32.mrb[0].mxu0
    %v5878 = vadd.f32 0.0, %v5877
    %v5879 = vpop.f32.mrb[0].mxu0
    %5880 = vmatprep.mubr.f32.mxu0 0.0
    %5881 = vmatmul.mubr.f32.gmra.mrb[0].mxu0 %v2576
    %v5882 = vpop.f32.mrb[0].mxu0
    %v5883 = vadd.f32 0.0, %v5882
    %v5884 = vpop.f32.mrb[0].mxu0
    %5885 = vmatprep.mubr.f32.mxu0 0.0
    %5886 = vmatmul.mubr.f32.gmra.mrb[0].mxu0 %v2579
    %v5887 = vpop.f32.mrb[0].mxu0
    %v5888 = vadd.f32 0.0, %v5887
    %v5889 = vpop.f32.mrb[0].mxu0
    %5890 = vmatprep.mubr.f32.mxu0 0.0
    %5891 = vmatmul.mubr.f32.gmra.mrb[0].mxu0 %v2581
    %v5892 = vpop.f32.mrb[0].mxu0
    %v5893 = vadd.f32 0.0, %v5892
    %v5894 = vpop.f32.mrb[0].mxu0
    %5895 = vmatprep.mubr.f32.mxu0 0.0
    %5896 = vmatmul.mubr.f32.gmra.mrb[0].mxu0 %v4073
    %v5897 = vpop.f32.mrb[0].mxu0
    %v5898 = vadd.f32 0.0, %v5897
    %v5899 = vpop.f32.mrb[0].mxu0
    %5900 = vmatprep.mubr.f32.mxu0 0.0
    %5901 = vmatmul.mubr.f32.gmra.mrb[0].mxu0 %v4075
    %v5902 = vpop.f32.mrb[0].mxu0
    %v5903 = vadd.f32 0.0, %v5902
    %v5904 = vpop.f32.mrb[0].mxu0
    %5905 = vmatprep.mubr.f32.mxu0 0.0
    %5906 = vmatmul.mubr.f32.gmra.mrb[0].mxu0 %v5507
    %v5907 = vpop.f32.mrb[0].mxu0
    %v5908 = vadd.f32 0.0, %v5907
    %v5909 = vpop.f32.mrb[0].mxu0
    %5910 = vmatprep.mubr.f32.mxu0 0.0
    %5911 = vmatmul.mubr.f32.gmra.mrb[0].mxu0 %v5509
    %v5912 = vpop.f32.mrb[0].mxu0
    %v5913 = vadd.f32 0.0, %v5912
    %v5914 = vpop.f32.mrb[0].mxu0
    %5915 = vdwg.mxu0
    %v5916 = vadd.f32 %v5434, %v5598
    %v5917 = vadd.f32 %v5435, %v5603
    %v5918 = vadd.f32 %v5436, %v5608
    %v5919 = vadd.f32 %v5437, %v5613
    %v5920 = vadd.f32 %v5438, %v5618
    %v5921 = vadd.f32 %v5439, %v5623
    %v5922 = vadd.f32 %v5440, %v5628
    %v5923 = vadd.f32 %v5441, %v5633
    %v5924 = vadd.f32 %v5442, %v5638
    %v5925 = vadd.f32 %v5443, %v5643
    %v5926 = vadd.f32 %v5444, %v5648
    %v5927 = vadd.f32 %v5445, %v5653
    %v5928 = vadd.f32 %v5446, %v5658
    %v5929 = vadd.f32 %v5447, %v5663
    %v5930 = vadd.f32 %v5448, %v5668
    %v5931 = vadd.f32 %v5449, %v5673
    %v5932 = vadd.f32 %v5450, %v5678
    %v5933 = vadd.f32 %v5451, %v5683
    %v5934 = vadd.f32 %v5452, %v5688
    %v5935 = vadd.f32 %v5453, %v5693
    %v5936 = vadd.f32 %v5454, %v5698
    %v5937 = vadd.f32 %v5455, %v5703
    %v5938 = vadd.f32 %v5456, %v5708
    %v5939 = vadd.f32 %v5457, %v5713
    %v5940 = vadd.f32 %v5458, %v5718
    %v5941 = vadd.f32 %v5459, %v5723
    %v5942 = vadd.f32 %v5460, %v5728
    %v5943 = vadd.f32 %v5461, %v5733
    %v5944 = vadd.f32 %v5462, %v5738
    %v5945 = vadd.f32 %v5463, %v5743
    %v5946 = vadd.f32 %v5464, %v5748
    %v5947 = vadd.f32 %v5465, %v5753
    %v5948 = vadd.f32 %v5466, %v5758
    %v5949 = vadd.f32 %v5467, %v5763
    %v5950 = vadd.f32 %v5468, %v5768
    %v5951 = vadd.f32 %v5469, %v5773
    %v5952 = vadd.f32 %v5470, %v5778
    %v5953 = vadd.f32 %v5471, %v5783
    %v5954 = vadd.f32 %v5472, %v5788
    %v5955 = vadd.f32 %v5473, %v5793
    %v5956 = vadd.f32 %v5474, %v5798
    %v5957 = vadd.f32 %v5475, %v5803
    %v5958 = vadd.f32 %v5476, %v5808
    %v5959 = vadd.f32 %v5477, %v5813
    %v5960 = vadd.f32 %v5478, %v5818
    %v5961 = vadd.f32 %v5479, %v5823
    %v5962 = vadd.f32 %v5480, %v5828
    %v5963 = vadd.f32 %v5481, %v5833
    %v5964 = vadd.f32 %v5482, %v5838
    %v5965 = vadd.f32 %v5483, %v5843
    %v5966 = vadd.f32 %v5484, %v5848
    %v5967 = vadd.f32 %v5485, %v5853
    %v5968 = vadd.f32 %v5486, %v5858
    %v5969 = vadd.f32 %v5487, %v5863
    %v5970 = vadd.f32 %v5488, %v5868
    %v5971 = vadd.f32 %v5489, %v5873
    %v5972 = vadd.f32 %v5490, %v5878
    %v5973 = vadd.f32 %v5491, %v5883
    %v5974 = vadd.f32 %v5492, %v5888
    %v5975 = vadd.f32 %v5493, %v5893
    %v5976 = vadd.f32 %v5494, %v5898
    %v5977 = vadd.f32 %v5495, %v5903
    %v5978 = vadd.f32 %v5496, %v5908
    %v5979 = vadd.f32 %v5497, %v5913
    %v5980 = vadd.f32 %v5916, %v5917
    %v5981 = vadd.f32 %v5980, %v5918
    %v5982 = vadd.f32 %v5981, %v5919
    %v5983 = vadd.f32 %v5982, %v5920
    %v5984 = vadd.f32 %v5983, %v5921
    %v5985 = vadd.f32 %v5984, %v5922
    %v5986 = vadd.f32 %v5985, %v5923
    %v5987 = vadd.f32 %v5986, %v5924
    %v5988 = vadd.f32 %v5987, %v5925
    %v5989 = vadd.f32 %v5988, %v5926
    %v5990 = vadd.f32 %v5989, %v5927
    %v5991 = vadd.f32 %v5990, %v5928
    %v5992 = vadd.f32 %v5991, %v5929
    %v5993 = vadd.f32 %v5992, %v5930
    %v5994 = vadd.f32 %v5993, %v5931
    %v5995 = vadd.f32 %v5994, %v5932
    %v5996 = vadd.f32 %v5995, %v5933
    %v5997 = vadd.f32 %v5996, %v5934
    %v5998 = vadd.f32 %v5997, %v5935
    %v5999 = vadd.f32 %v5998, %v5936
    %v6000 = vadd.f32 %v5999, %v5937
    %v6001 = vadd.f32 %v6000, %v5938
    %v6002 = vadd.f32 %v6001, %v5939
    %v6003 = vadd.f32 %v6002, %v5940
    %v6004 = vadd.f32 %v6003, %v5941
    %v6005 = vadd.f32 %v6004, %v5942
    %v6006 = vadd.f32 %v6005, %v5943
    %v6007 = vadd.f32 %v6006, %v5944
    %v6008 = vadd.f32 %v6007, %v5945
    %v6009 = vadd.f32 %v6008, %v5946
    %v6010 = vadd.f32 %v6009, %v5947
    %v6011 = vadd.f32 %v6010, %v5948
    %v6012 = vadd.f32 %v6011, %v5949
    %v6013 = vadd.f32 %v6012, %v5950
    %v6014 = vadd.f32 %v6013, %v5951
    %v6015 = vadd.f32 %v6014, %v5952
    %v6016 = vadd.f32 %v6015, %v5953
    %v6017 = vadd.f32 %v6016, %v5954
    %v6018 = vadd.f32 %v6017, %v5955
    %v6019 = vadd.f32 %v6018, %v5956
    %v6020 = vadd.f32 %v6019, %v5957
    %v6021 = vadd.f32 %v6020, %v5958
    %v6022 = vadd.f32 %v6021, %v5959
    %v6023 = vadd.f32 %v6022, %v5960
    %v6024 = vadd.f32 %v6023, %v5961
    %v6025 = vadd.f32 %v6024, %v5962
    %v6026 = vadd.f32 %v6025, %v5963
    %v6027 = vadd.f32 %v6026, %v5964
    %v6028 = vadd.f32 %v6027, %v5965
    %v6029 = vadd.f32 %v6028, %v5966
    %v6030 = vadd.f32 %v6029, %v5967
    %v6031 = vadd.f32 %v6030, %v5968
    %v6032 = vadd.f32 %v6031, %v5969
    %v6033 = vadd.f32 %v6032, %v5970
    %v6034 = vadd.f32 %v6033, %v5971
    %v6035 = vadd.f32 %v6034, %v5972
    %v6036 = vadd.f32 %v6035, %v5973
    %v6037 = vadd.f32 %v6036, %v5974
    %v6038 = vadd.f32 %v6037, %v5975
    %v6039 = vadd.f32 %v6038, %v5976
    %v6040 = vadd.f32 %v6039, %v5977
    %v6041 = vadd.f32 %v6040, %v5978
    %v6042 = vadd.f32 %v6041, %v5979
    %v6043 = vrot.slane %v6042, 4
    %v6044 = vadd.f32 %v6042, %v6043
    %v6045 = vrot.slane %v6044, 2
    %v6046 = vadd.f32 %v6044, %v6045
    %v6047 = vrot.slane %v6046, 1
    %v6048 = vadd.f32 %v6046, %v6047
    %v6049 = vmul.f32 %v5916, %v5916
    %v6050 = vmul.f32 %v5917, %v5917
    %v6051 = vmul.f32 %v5918, %v5918
    %v6052 = vmul.f32 %v5919, %v5919
    %v6053 = vmul.f32 %v5920, %v5920
    %v6054 = vmul.f32 %v5921, %v5921
    %v6055 = vmul.f32 %v5922, %v5922
    %v6056 = vmul.f32 %v5923, %v5923
    %v6057 = vmul.f32 %v5924, %v5924
    %v6058 = vmul.f32 %v5925, %v5925
    %v6059 = vmul.f32 %v5926, %v5926
    %v6060 = vmul.f32 %v5927, %v5927
    %v6061 = vmul.f32 %v5928, %v5928
    %v6062 = vmul.f32 %v5929, %v5929
    %v6063 = vmul.f32 %v5930, %v5930
    %v6064 = vmul.f32 %v5931, %v5931
    %v6065 = vmul.f32 %v5932, %v5932
    %v6066 = vmul.f32 %v5933, %v5933
    %v6067 = vmul.f32 %v5934, %v5934
    %v6068 = vmul.f32 %v5935, %v5935
    %v6069 = vmul.f32 %v5936, %v5936
    %v6070 = vmul.f32 %v5937, %v5937
    %v6071 = vmul.f32 %v5938, %v5938
    %v6072 = vmul.f32 %v5939, %v5939
    %v6073 = vmul.f32 %v5940, %v5940
    %v6074 = vmul.f32 %v5941, %v5941
    %v6075 = vmul.f32 %v5942, %v5942
    %v6076 = vmul.f32 %v5943, %v5943
    %v6077 = vmul.f32 %v5944, %v5944
    %v6078 = vmul.f32 %v5945, %v5945
    %v6079 = vmul.f32 %v5946, %v5946
    %v6080 = vmul.f32 %v5947, %v5947
    %v6081 = vmul.f32 %v5948, %v5948
    %v6082 = vmul.f32 %v5949, %v5949
    %v6083 = vmul.f32 %v5950, %v5950
    %v6084 = vmul.f32 %v5951, %v5951
    %v6085 = vmul.f32 %v5952, %v5952
    %v6086 = vmul.f32 %v5953, %v5953
    %v6087 = vmul.f32 %v5954, %v5954
    %v6088 = vmul.f32 %v5955, %v5955
    %v6089 = vmul.f32 %v5956, %v5956
    %v6090 = vmul.f32 %v5957, %v5957
    %v6091 = vmul.f32 %v5958, %v5958
    %v6092 = vmul.f32 %v5959, %v5959
    %v6093 = vmul.f32 %v5960, %v5960
    %v6094 = vmul.f32 %v5961, %v5961
    %v6095 = vmul.f32 %v5962, %v5962
    %v6096 = vmul.f32 %v5963, %v5963
    %v6097 = vmul.f32 %v5964, %v5964
    %v6098 = vmul.f32 %v5965, %v5965
    %v6099 = vmul.f32 %v5966, %v5966
    %v6100 = vmul.f32 %v5967, %v5967
    %v6101 = vmul.f32 %v5968, %v5968
    %v6102 = vmul.f32 %v5969, %v5969
    %v6103 = vmul.f32 %v5970, %v5970
    %v6104 = vmul.f32 %v5971, %v5971
    %v6105 = vmul.f32 %v5972, %v5972
    %v6106 = vmul.f32 %v5973, %v5973
    %v6107 = vmul.f32 %v5974, %v5974
    %v6108 = vmul.f32 %v5975, %v5975
    %v6109 = vmul.f32 %v5976, %v5976
    %v6110 = vmul.f32 %v5977, %v5977
    %v6111 = vmul.f32 %v5978, %v5978
    %v6112 = vmul.f32 %v5979, %v5979
    %v6113 = vadd.f32 %v6049, %v6050
    %v6114 = vadd.f32 %v6113, %v6051
    %v6115 = vadd.f32 %v6114, %v6052
    %v6116 = vadd.f32 %v6115, %v6053
    %v6117 = vadd.f32 %v6116, %v6054
    %v6118 = vadd.f32 %v6117, %v6055
    %v6119 = vadd.f32 %v6118, %v6056
    %v6120 = vadd.f32 %v6119, %v6057
    %v6121 = vadd.f32 %v6120, %v6058
    %v6122 = vadd.f32 %v6121, %v6059
    %v6123 = vadd.f32 %v6122, %v6060
    %v6124 = vadd.f32 %v6123, %v6061
    %v6125 = vadd.f32 %v6124, %v6062
    %v6126 = vadd.f32 %v6125, %v6063
    %v6127 = vadd.f32 %v6126, %v6064
    %v6128 = vadd.f32 %v6127, %v6065
    %v6129 = vadd.f32 %v6128, %v6066
    %v6130 = vadd.f32 %v6129, %v6067
    %v6131 = vadd.f32 %v6130, %v6068
    %v6132 = vadd.f32 %v6131, %v6069
    %v6133 = vadd.f32 %v6132, %v6070
    %v6134 = vadd.f32 %v6133, %v6071
    %v6135 = vadd.f32 %v6134, %v6072
    %v6136 = vadd.f32 %v6135, %v6073
    %v6137 = vadd.f32 %v6136, %v6074
    %v6138 = vadd.f32 %v6137, %v6075
    %v6139 = vadd.f32 %v6138, %v6076
    %v6140 = vadd.f32 %v6139, %v6077
    %v6141 = vadd.f32 %v6140, %v6078
    %v6142 = vadd.f32 %v6141, %v6079
    %v6143 = vadd.f32 %v6142, %v6080
    %v6144 = vadd.f32 %v6143, %v6081
    %v6145 = vadd.f32 %v6144, %v6082
    %v6146 = vadd.f32 %v6145, %v6083
    %v6147 = vadd.f32 %v6146, %v6084
    %v6148 = vadd.f32 %v6147, %v6085
    %v6149 = vadd.f32 %v6148, %v6086
    %v6150 = vadd.f32 %v6149, %v6087
    %v6151 = vadd.f32 %v6150, %v6088
    %v6152 = vadd.f32 %v6151, %v6089
    %v6153 = vadd.f32 %v6152, %v6090
    %v6154 = vadd.f32 %v6153, %v6091
    %v6155 = vadd.f32 %v6154, %v6092
    %v6156 = vadd.f32 %v6155, %v6093
    %v6157 = vadd.f32 %v6156, %v6094
    %v6158 = vadd.f32 %v6157, %v6095
    %v6159 = vadd.f32 %v6158, %v6096
    %v6160 = vadd.f32 %v6159, %v6097
    %v6161 = vadd.f32 %v6160, %v6098
    %v6162 = vadd.f32 %v6161, %v6099
    %v6163 = vadd.f32 %v6162, %v6100
    %v6164 = vadd.f32 %v6163, %v6101
    %v6165 = vadd.f32 %v6164, %v6102
    %v6166 = vadd.f32 %v6165, %v6103
    %v6167 = vadd.f32 %v6166, %v6104
    %v6168 = vadd.f32 %v6167, %v6105
    %v6169 = vadd.f32 %v6168, %v6106
    %v6170 = vadd.f32 %v6169, %v6107
    %v6171 = vadd.f32 %v6170, %v6108
    %v6172 = vadd.f32 %v6171, %v6109
    %v6173 = vadd.f32 %v6172, %v6110
    %v6174 = vadd.f32 %v6173, %v6111
    %v6175 = vadd.f32 %v6174, %v6112
    %v6176 = vrot.slane %v6175, 4
    %v6177 = vadd.f32 %v6175, %v6176
    %v6178 = vrot.slane %v6177, 2
    %v6179 = vadd.f32 %v6177, %v6178
    %v6180 = vrot.slane %v6179, 1
    %v6181 = vadd.f32 %v6179, %v6180
    %v6182 = vmul.f32 %v6048, 0.001953125
    %v6183 = vmul.f32 %v6181, 0.001953125
    %v6184 = vmul.f32 %v6182, %v6182
    %v6185 = vsub.f32 %v6183, %v6184
    %v6186 = vadd.f32 %v6185, 1e-05
    %v6187 = vrsqrt.pop %v6186
    %v6188 = vld [vmem:[%s6] sm:$0x1]
    %v6189 = vmul.f32 %v6188, %v6187
    %v6190 = vld [vmem:[%s7] sm:$0x1]
    %v6191 = vmul.f32 %v6182, %v6189
    %v6192 = vsub.f32 %v6190, %v6191
    %v6194 = vlaneseq
    %v6195 = vshrl.u32 %v6194, 7
    %v6196 = vsub.s32 0, %v6195
    %v6197 = vrot.slane %v6189, %v6196
    %v6199 = vmul.f32 %v5916, %v6197
    %v6200 = vmul.f32 %v5917, %v6197
    %v6201 = vmul.f32 %v5918, %v6197
    %v6202 = vmul.f32 %v5919, %v6197
    %v6203 = vmul.f32 %v5920, %v6197
    %v6204 = vmul.f32 %v5921, %v6197
    %v6205 = vmul.f32 %v5922, %v6197
    %v6206 = vmul.f32 %v5923, %v6197
    %v6207 = vmul.f32 %v5924, %v6197
    %v6208 = vmul.f32 %v5925, %v6197
    %v6209 = vmul.f32 %v5926, %v6197
    %v6210 = vmul.f32 %v5927, %v6197
    %v6211 = vmul.f32 %v5928, %v6197
    %v6212 = vmul.f32 %v5929, %v6197
    %v6213 = vmul.f32 %v5930, %v6197
    %v6214 = vmul.f32 %v5931, %v6197
    %v6215 = vmul.f32 %v5932, %v6197
    %v6216 = vmul.f32 %v5933, %v6197
    %v6217 = vmul.f32 %v5934, %v6197
    %v6218 = vmul.f32 %v5935, %v6197
    %v6219 = vmul.f32 %v5936, %v6197
    %v6220 = vmul.f32 %v5937, %v6197
    %v6221 = vmul.f32 %v5938, %v6197
    %v6222 = vmul.f32 %v5939, %v6197
    %v6223 = vmul.f32 %v5940, %v6197
    %v6224 = vmul.f32 %v5941, %v6197
    %v6225 = vmul.f32 %v5942, %v6197
    %v6226 = vmul.f32 %v5943, %v6197
    %v6227 = vmul.f32 %v5944, %v6197
    %v6228 = vmul.f32 %v5945, %v6197
    %v6229 = vmul.f32 %v5946, %v6197
    %v6230 = vmul.f32 %v5947, %v6197
    %v6231 = vmul.f32 %v5948, %v6197
    %v6232 = vmul.f32 %v5949, %v6197
    %v6233 = vmul.f32 %v5950, %v6197
    %v6234 = vmul.f32 %v5951, %v6197
    %v6235 = vmul.f32 %v5952, %v6197
    %v6236 = vmul.f32 %v5953, %v6197
    %v6237 = vmul.f32 %v5954, %v6197
    %v6238 = vmul.f32 %v5955, %v6197
    %v6239 = vmul.f32 %v5956, %v6197
    %v6240 = vmul.f32 %v5957, %v6197
    %v6241 = vmul.f32 %v5958, %v6197
    %v6242 = vmul.f32 %v5959, %v6197
    %v6243 = vmul.f32 %v5960, %v6197
    %v6244 = vmul.f32 %v5961, %v6197
    %v6245 = vmul.f32 %v5962, %v6197
    %v6246 = vmul.f32 %v5963, %v6197
    %v6247 = vmul.f32 %v5964, %v6197
    %v6248 = vmul.f32 %v5965, %v6197
    %v6249 = vmul.f32 %v5966, %v6197
    %v6250 = vmul.f32 %v5967, %v6197
    %v6251 = vmul.f32 %v5968, %v6197
    %v6252 = vmul.f32 %v5969, %v6197
    %v6253 = vmul.f32 %v5970, %v6197
    %v6254 = vmul.f32 %v5971, %v6197
    %v6255 = vmul.f32 %v5972, %v6197
    %v6256 = vmul.f32 %v5973, %v6197
    %v6257 = vmul.f32 %v5974, %v6197
    %v6258 = vmul.f32 %v5975, %v6197
    %v6259 = vmul.f32 %v5976, %v6197
    %v6260 = vmul.f32 %v5977, %v6197
    %v6261 = vmul.f32 %v5978, %v6197
    %v6262 = vmul.f32 %v5979, %v6197
    %v6264 = vlaneseq
    %v6265 = vshrl.u32 %v6264, 7
    %v6266 = vsub.s32 0, %v6265
    %v6267 = vrot.slane %v6192, %v6266
    %v6269 = vadd.f32 %v6199, %v6267
    %v6270 = vadd.f32 %v6200, %v6267
    %v6271 = vadd.f32 %v6201, %v6267
    %v6272 = vadd.f32 %v6202, %v6267
    %v6273 = vadd.f32 %v6203, %v6267
    %v6274 = vadd.f32 %v6204, %v6267
    %v6275 = vadd.f32 %v6205, %v6267
    %v6276 = vadd.f32 %v6206, %v6267
    %v6277 = vadd.f32 %v6207, %v6267
    %v6278 = vadd.f32 %v6208, %v6267
    %v6279 = vadd.f32 %v6209, %v6267
    %v6280 = vadd.f32 %v6210, %v6267
    %v6281 = vadd.f32 %v6211, %v6267
    %v6282 = vadd.f32 %v6212, %v6267
    %v6283 = vadd.f32 %v6213, %v6267
    %v6284 = vadd.f32 %v6214, %v6267
    %v6285 = vadd.f32 %v6215, %v6267
    %v6286 = vadd.f32 %v6216, %v6267
    %v6287 = vadd.f32 %v6217, %v6267
    %v6288 = vadd.f32 %v6218, %v6267
    %v6289 = vadd.f32 %v6219, %v6267
    %v6290 = vadd.f32 %v6220, %v6267
    %v6291 = vadd.f32 %v6221, %v6267
    %v6292 = vadd.f32 %v6222, %v6267
    %v6293 = vadd.f32 %v6223, %v6267
    %v6294 = vadd.f32 %v6224, %v6267
    %v6295 = vadd.f32 %v6225, %v6267
    %v6296 = vadd.f32 %v6226, %v6267
    %v6297 = vadd.f32 %v6227, %v6267
    %v6298 = vadd.f32 %v6228, %v6267
    %v6299 = vadd.f32 %v6229, %v6267
    %v6300 = vadd.f32 %v6230, %v6267
    %v6301 = vadd.f32 %v6231, %v6267
    %v6302 = vadd.f32 %v6232, %v6267
    %v6303 = vadd.f32 %v6233, %v6267
    %v6304 = vadd.f32 %v6234, %v6267
    %v6305 = vadd.f32 %v6235, %v6267
    %v6306 = vadd.f32 %v6236, %v6267
    %v6307 = vadd.f32 %v6237, %v6267
    %v6308 = vadd.f32 %v6238, %v6267
    %v6309 = vadd.f32 %v6239, %v6267
    %v6310 = vadd.f32 %v6240, %v6267
    %v6311 = vadd.f32 %v6241, %v6267
    %v6312 = vadd.f32 %v6242, %v6267
    %v6313 = vadd.f32 %v6243, %v6267
    %v6314 = vadd.f32 %v6244, %v6267
    %v6315 = vadd.f32 %v6245, %v6267
    %v6316 = vadd.f32 %v6246, %v6267
    %v6317 = vadd.f32 %v6247, %v6267
    %v6318 = vadd.f32 %v6248, %v6267
    %v6319 = vadd.f32 %v6249, %v6267
    %v6320 = vadd.f32 %v6250, %v6267
    %v6321 = vadd.f32 %v6251, %v6267
    %v6322 = vadd.f32 %v6252, %v6267
    %v6323 = vadd.f32 %v6253, %v6267
    %v6324 = vadd.f32 %v6254, %v6267
    %v6325 = vadd.f32 %v6255, %v6267
    %v6326 = vadd.f32 %v6256, %v6267
    %v6327 = vadd.f32 %v6257, %v6267
    %v6328 = vadd.f32 %v6258, %v6267
    %v6329 = vadd.f32 %v6259, %v6267
    %v6330 = vadd.f32 %v6260, %v6267
    %v6331 = vadd.f32 %v6261, %v6267
    %v6332 = vadd.f32 %v6262, %v6267
    %v6333 = vld [vmem:[#allocation6] sm:$0xff]
    %v6334 = vld [vmem:[#allocation6 + $0x8] sm:$0xff]
    %v6335 = vld [vmem:[#allocation6 + $0x10] sm:$0xff]
    %v6336 = vld [vmem:[#allocation6 + $0x18] sm:$0xff]
    %v6337 = vld [vmem:[#allocation6 + $0x20] sm:$0xff]
    %v6338 = vld [vmem:[#allocation6 + $0x28] sm:$0xff]
    %v6339 = vld [vmem:[#allocation6 + $0x30] sm:$0xff]
    %v6340 = vld [vmem:[#allocation6 + $0x38] sm:$0xff]
    %v6341 = vld [vmem:[#allocation6 + $0x40] sm:$0xff]
    %v6342 = vld [vmem:[#allocation6 + $0x48] sm:$0xff]
    %v6343 = vld [vmem:[#allocation6 + $0x50] sm:$0xff]
    %v6344 = vld [vmem:[#allocation6 + $0x58] sm:$0xff]
    %v6345 = vld [vmem:[#allocation6 + $0x60] sm:$0xff]
    %v6346 = vld [vmem:[#allocation6 + $0x68] sm:$0xff]
    %v6347 = vld [vmem:[#allocation6 + $0x70] sm:$0xff]
    %v6348 = vld [vmem:[#allocation6 + $0x78] sm:$0xff]
    %v6349 = vld [vmem:[#allocation6 + $0x80] sm:$0xff]
    %v6350 = vld [vmem:[#allocation6 + $0x88] sm:$0xff]
    %v6351 = vld [vmem:[#allocation6 + $0x90] sm:$0xff]
    %v6352 = vld [vmem:[#allocation6 + $0x98] sm:$0xff]
    %v6353 = vld [vmem:[#allocation6 + $0xa0] sm:$0xff]
    %v6354 = vld [vmem:[#allocation6 + $0xa8] sm:$0xff]
    %v6355 = vld [vmem:[#allocation6 + $0xb0] sm:$0xff]
    %v6356 = vld [vmem:[#allocation6 + $0xb8] sm:$0xff]
    %v6357 = vld [vmem:[#allocation6 + $0xc0] sm:$0xff]
    %v6358 = vld [vmem:[#allocation6 + $0xc8] sm:$0xff]
    %v6359 = vld [vmem:[#allocation6 + $0xd0] sm:$0xff]
    %v6360 = vld [vmem:[#allocation6 + $0xd8] sm:$0xff]
    %v6361 = vld [vmem:[#allocation6 + $0xe0] sm:$0xff]
    %v6362 = vld [vmem:[#allocation6 + $0xe8] sm:$0xff]
    %v6363 = vld [vmem:[#allocation6 + $0xf0] sm:$0xff]
    %v6364 = vld [vmem:[#allocation6 + $0xf8] sm:$0xff]
    %v6365 = vld [vmem:[#allocation6 + $0x100] sm:$0xff]
    %v6366 = vld [vmem:[#allocation6 + $0x108] sm:$0xff]
    %v6367 = vld [vmem:[#allocation6 + $0x110] sm:$0xff]
    %v6368 = vld [vmem:[#allocation6 + $0x118] sm:$0xff]
    %v6369 = vld [vmem:[#allocation6 + $0x120] sm:$0xff]
    %v6370 = vld [vmem:[#allocation6 + $0x128] sm:$0xff]
    %v6371 = vld [vmem:[#allocation6 + $0x130] sm:$0xff]
    %v6372 = vld [vmem:[#allocation6 + $0x138] sm:$0xff]
    %v6373 = vld [vmem:[#allocation6 + $0x140] sm:$0xff]
    %v6374 = vld [vmem:[#allocation6 + $0x148] sm:$0xff]
    %v6375 = vld [vmem:[#allocation6 + $0x150] sm:$0xff]
    %v6376 = vld [vmem:[#allocation6 + $0x158] sm:$0xff]
    %v6377 = vld [vmem:[#allocation6 + $0x160] sm:$0xff]
    %v6378 = vld [vmem:[#allocation6 + $0x168] sm:$0xff]
    %v6379 = vld [vmem:[#allocation6 + $0x170] sm:$0xff]
    %v6380 = vld [vmem:[#allocation6 + $0x178] sm:$0xff]
    %v6381 = vld [vmem:[#allocation6 + $0x180] sm:$0xff]
    %v6382 = vld [vmem:[#allocation6 + $0x188] sm:$0xff]
    %v6383 = vld [vmem:[#allocation6 + $0x190] sm:$0xff]
    %v6384 = vld [vmem:[#allocation6 + $0x198] sm:$0xff]
    %v6385 = vld [vmem:[#allocation6 + $0x1a0] sm:$0xff]
    %v6386 = vld [vmem:[#allocation6 + $0x1a8] sm:$0xff]
    %v6387 = vld [vmem:[#allocation6 + $0x1b0] sm:$0xff]
    %v6388 = vld [vmem:[#allocation6 + $0x1b8] sm:$0xff]
    %v6389 = vld [vmem:[#allocation6 + $0x1c0] sm:$0xff]
    %v6390 = vld [vmem:[#allocation6 + $0x1c8] sm:$0xff]
    %v6391 = vld [vmem:[#allocation6 + $0x1d0] sm:$0xff]
    %v6392 = vld [vmem:[#allocation6 + $0x1d8] sm:$0xff]
    %v6393 = vld [vmem:[#allocation6 + $0x1e0] sm:$0xff]
    %v6394 = vld [vmem:[#allocation6 + $0x1e8] sm:$0xff]
    %v6395 = vld [vmem:[#allocation6 + $0x1f0] sm:$0xff]
    %v6396 = vld [vmem:[#allocation6 + $0x1f8] sm:$0xff]
    %v6397 = vadd.f32 %v6269, %v6333
    %v6398 = vadd.f32 %v6270, %v6334
    %v6399 = vadd.f32 %v6271, %v6335
    %v6400 = vadd.f32 %v6272, %v6336
    %v6401 = vadd.f32 %v6273, %v6337
    %v6402 = vadd.f32 %v6274, %v6338
    %v6403 = vadd.f32 %v6275, %v6339
    %v6404 = vadd.f32 %v6276, %v6340
    %v6405 = vadd.f32 %v6277, %v6341
    %v6406 = vadd.f32 %v6278, %v6342
    %v6407 = vadd.f32 %v6279, %v6343
    %v6408 = vadd.f32 %v6280, %v6344
    %v6409 = vadd.f32 %v6281, %v6345
    %v6410 = vadd.f32 %v6282, %v6346
    %v6411 = vadd.f32 %v6283, %v6347
    %v6412 = vadd.f32 %v6284, %v6348
    %v6413 = vadd.f32 %v6285, %v6349
    %v6414 = vadd.f32 %v6286, %v6350
    %v6415 = vadd.f32 %v6287, %v6351
    %v6416 = vadd.f32 %v6288, %v6352
    %v6417 = vadd.f32 %v6289, %v6353
    %v6418 = vadd.f32 %v6290, %v6354
    %v6419 = vadd.f32 %v6291, %v6355
    %v6420 = vadd.f32 %v6292, %v6356
    %v6421 = vadd.f32 %v6293, %v6357
    %v6422 = vadd.f32 %v6294, %v6358
    %v6423 = vadd.f32 %v6295, %v6359
    %v6424 = vadd.f32 %v6296, %v6360
    %v6425 = vadd.f32 %v6297, %v6361
    %v6426 = vadd.f32 %v6298, %v6362
    %v6427 = vadd.f32 %v6299, %v6363
    %v6428 = vadd.f32 %v6300, %v6364
    %v6429 = vadd.f32 %v6301, %v6365
    %v6430 = vadd.f32 %v6302, %v6366
    %v6431 = vadd.f32 %v6303, %v6367
    %v6432 = vadd.f32 %v6304, %v6368
    %v6433 = vadd.f32 %v6305, %v6369
    %v6434 = vadd.f32 %v6306, %v6370
    %v6435 = vadd.f32 %v6307, %v6371
    %v6436 = vadd.f32 %v6308, %v6372
    %v6437 = vadd.f32 %v6309, %v6373
    %v6438 = vadd.f32 %v6310, %v6374
    %v6439 = vadd.f32 %v6311, %v6375
    %v6440 = vadd.f32 %v6312, %v6376
    %v6441 = vadd.f32 %v6313, %v6377
    %v6442 = vadd.f32 %v6314, %v6378
    %v6443 = vadd.f32 %v6315, %v6379
    %v6444 = vadd.f32 %v6316, %v6380
    %v6445 = vadd.f32 %v6317, %v6381
    %v6446 = vadd.f32 %v6318, %v6382
    %v6447 = vadd.f32 %v6319, %v6383
    %v6448 = vadd.f32 %v6320, %v6384
    %v6449 = vadd.f32 %v6321, %v6385
    %v6450 = vadd.f32 %v6322, %v6386
    %v6451 = vadd.f32 %v6323, %v6387
    %v6452 = vadd.f32 %v6324, %v6388
    %v6453 = vadd.f32 %v6325, %v6389
    %v6454 = vadd.f32 %v6326, %v6390
    %v6455 = vadd.f32 %v6327, %v6391
    %v6456 = vadd.f32 %v6328, %v6392
    %v6457 = vadd.f32 %v6329, %v6393
    %v6458 = vadd.f32 %v6330, %v6394
    %v6459 = vadd.f32 %v6331, %v6395
    %v6460 = vadd.f32 %v6332, %v6396
    %v6461 = vmax.f32 %v6397, 0.0
    %v6462 = vmax.f32 %v6398, 0.0
    %v6463 = vmax.f32 %v6399, 0.0
    %v6464 = vmax.f32 %v6400, 0.0
    %v6465 = vmax.f32 %v6401, 0.0
    %v6466 = vmax.f32 %v6402, 0.0
    %v6467 = vmax.f32 %v6403, 0.0
    %v6468 = vmax.f32 %v6404, 0.0
    %v6469 = vmax.f32 %v6405, 0.0
    %v6470 = vmax.f32 %v6406, 0.0
    %v6471 = vmax.f32 %v6407, 0.0
    %v6472 = vmax.f32 %v6408, 0.0
    %v6473 = vmax.f32 %v6409, 0.0
    %v6474 = vmax.f32 %v6410, 0.0
    %v6475 = vmax.f32 %v6411, 0.0
    %v6476 = vmax.f32 %v6412, 0.0
    %v6477 = vmax.f32 %v6413, 0.0
    %v6478 = vmax.f32 %v6414, 0.0
    %v6479 = vmax.f32 %v6415, 0.0
    %v6480 = vmax.f32 %v6416, 0.0
    %v6481 = vmax.f32 %v6417, 0.0
    %v6482 = vmax.f32 %v6418, 0.0
    %v6483 = vmax.f32 %v6419, 0.0
    %v6484 = vmax.f32 %v6420, 0.0
    %v6485 = vmax.f32 %v6421, 0.0
    %v6486 = vmax.f32 %v6422, 0.0
    %v6487 = vmax.f32 %v6423, 0.0
    %v6488 = vmax.f32 %v6424, 0.0
    %v6489 = vmax.f32 %v6425, 0.0
    %v6490 = vmax.f32 %v6426, 0.0
    %v6491 = vmax.f32 %v6427, 0.0
    %v6492 = vmax.f32 %v6428, 0.0
    %v6493 = vmax.f32 %v6429, 0.0
    %v6494 = vmax.f32 %v6430, 0.0
    %v6495 = vmax.f32 %v6431, 0.0
    %v6496 = vmax.f32 %v6432, 0.0
    %v6497 = vmax.f32 %v6433, 0.0
    %v6498 = vmax.f32 %v6434, 0.0
    %v6499 = vmax.f32 %v6435, 0.0
    %v6500 = vmax.f32 %v6436, 0.0
    %v6501 = vmax.f32 %v6437, 0.0
    %v6502 = vmax.f32 %v6438, 0.0
    %v6503 = vmax.f32 %v6439, 0.0
    %v6504 = vmax.f32 %v6440, 0.0
    %v6505 = vmax.f32 %v6441, 0.0
    %v6506 = vmax.f32 %v6442, 0.0
    %v6507 = vmax.f32 %v6443, 0.0
    %v6508 = vmax.f32 %v6444, 0.0
    %v6509 = vmax.f32 %v6445, 0.0
    %v6510 = vmax.f32 %v6446, 0.0
    %v6511 = vmax.f32 %v6447, 0.0
    %v6512 = vmax.f32 %v6448, 0.0
    %v6513 = vmax.f32 %v6449, 0.0
    %v6514 = vmax.f32 %v6450, 0.0
    %v6515 = vmax.f32 %v6451, 0.0
    %v6516 = vmax.f32 %v6452, 0.0
    %v6517 = vmax.f32 %v6453, 0.0
    %v6518 = vmax.f32 %v6454, 0.0
    %v6519 = vmax.f32 %v6455, 0.0
    %v6520 = vmax.f32 %v6456, 0.0
    %v6521 = vmax.f32 %v6457, 0.0
    %v6522 = vmax.f32 %v6458, 0.0
    %v6523 = vmax.f32 %v6459, 0.0
    %v6524 = vmax.f32 %v6460, 0.0
    %6525 = vst [vmem:[#allocation11] sm:$0xff] %v6461
    %6526 = vst [vmem:[#allocation11 + $0x8] sm:$0xff] %v6462
    %6527 = vst [vmem:[#allocation11 + $0x10] sm:$0xff] %v6463
    %6528 = vst [vmem:[#allocation11 + $0x18] sm:$0xff] %v6464
    %6529 = vst [vmem:[#allocation11 + $0x20] sm:$0xff] %v6465
    %6530 = vst [vmem:[#allocation11 + $0x28] sm:$0xff] %v6466
    %6531 = vst [vmem:[#allocation11 + $0x30] sm:$0xff] %v6467
    %6532 = vst [vmem:[#allocation11 + $0x38] sm:$0xff] %v6468
    %6533 = vst [vmem:[#allocation11 + $0x40] sm:$0xff] %v6469
    %6534 = vst [vmem:[#allocation11 + $0x48] sm:$0xff] %v6470
    %6535 = vst [vmem:[#allocation11 + $0x50] sm:$0xff] %v6471
    %6536 = vst [vmem:[#allocation11 + $0x58] sm:$0xff] %v6472
    %6537 = vst [vmem:[#allocation11 + $0x60] sm:$0xff] %v6473
    %6538 = vst [vmem:[#allocation11 + $0x68] sm:$0xff] %v6474
    %6539 = vst [vmem:[#allocation11 + $0x70] sm:$0xff] %v6475
    %6540 = vst [vmem:[#allocation11 + $0x78] sm:$0xff] %v6476
    %6541 = vst [vmem:[#allocation11 + $0x80] sm:$0xff] %v6477
    %6542 = vst [vmem:[#allocation11 + $0x88] sm:$0xff] %v6478
    %6543 = vst [vmem:[#allocation11 + $0x90] sm:$0xff] %v6479
    %6544 = vst [vmem:[#allocation11 + $0x98] sm:$0xff] %v6480
    %6545 = vst [vmem:[#allocation11 + $0xa0] sm:$0xff] %v6481
    %6546 = vst [vmem:[#allocation11 + $0xa8] sm:$0xff] %v6482
    %6547 = vst [vmem:[#allocation11 + $0xb0] sm:$0xff] %v6483
    %6548 = vst [vmem:[#allocation11 + $0xb8] sm:$0xff] %v6484
    %6549 = vst [vmem:[#allocation11 + $0xc0] sm:$0xff] %v6485
    %6550 = vst [vmem:[#allocation11 + $0xc8] sm:$0xff] %v6486
    %6551 = vst [vmem:[#allocation11 + $0xd0] sm:$0xff] %v6487
    %6552 = vst [vmem:[#allocation11 + $0xd8] sm:$0xff] %v6488
    %6553 = vst [vmem:[#allocation11 + $0xe0] sm:$0xff] %v6489
    %6554 = vst [vmem:[#allocation11 + $0xe8] sm:$0xff] %v6490
    %6555 = vst [vmem:[#allocation11 + $0xf0] sm:$0xff] %v6491
    %6556 = vst [vmem:[#allocation11 + $0xf8] sm:$0xff] %v6492
    %6557 = vst [vmem:[#allocation11 + $0x100] sm:$0xff] %v6493
    %6558 = vst [vmem:[#allocation11 + $0x108] sm:$0xff] %v6494
    %6559 = vst [vmem:[#allocation11 + $0x110] sm:$0xff] %v6495
    %6560 = vst [vmem:[#allocation11 + $0x118] sm:$0xff] %v6496
    %6561 = vst [vmem:[#allocation11 + $0x120] sm:$0xff] %v6497
    %6562 = vst [vmem:[#allocation11 + $0x128] sm:$0xff] %v6498
    %6563 = vst [vmem:[#allocation11 + $0x130] sm:$0xff] %v6499
    %6564 = vst [vmem:[#allocation11 + $0x138] sm:$0xff] %v6500
    %6565 = vst [vmem:[#allocation11 + $0x140] sm:$0xff] %v6501
    %6566 = vst [vmem:[#allocation11 + $0x148] sm:$0xff] %v6502
    %6567 = vst [vmem:[#allocation11 + $0x150] sm:$0xff] %v6503
    %6568 = vst [vmem:[#allocation11 + $0x158] sm:$0xff] %v6504
    %6569 = vst [vmem:[#allocation11 + $0x160] sm:$0xff] %v6505
    %6570 = vst [vmem:[#allocation11 + $0x168] sm:$0xff] %v6506
    %6571 = vst [vmem:[#allocation11 + $0x170] sm:$0xff] %v6507
    %6572 = vst [vmem:[#allocation11 + $0x178] sm:$0xff] %v6508
    %6573 = vst [vmem:[#allocation11 + $0x180] sm:$0xff] %v6509
    %6574 = vst [vmem:[#allocation11 + $0x188] sm:$0xff] %v6510
    %6575 = vst [vmem:[#allocation11 + $0x190] sm:$0xff] %v6511
    %6576 = vst [vmem:[#allocation11 + $0x198] sm:$0xff] %v6512
    %6577 = vst [vmem:[#allocation11 + $0x1a0] sm:$0xff] %v6513
    %6578 = vst [vmem:[#allocation11 + $0x1a8] sm:$0xff] %v6514
    %6579 = vst [vmem:[#allocation11 + $0x1b0] sm:$0xff] %v6515
    %6580 = vst [vmem:[#allocation11 + $0x1b8] sm:$0xff] %v6516
    %6581 = vst [vmem:[#allocation11 + $0x1c0] sm:$0xff] %v6517
    %6582 = vst [vmem:[#allocation11 + $0x1c8] sm:$0xff] %v6518
    %6583 = vst [vmem:[#allocation11 + $0x1d0] sm:$0xff] %v6519
    %6584 = vst [vmem:[#allocation11 + $0x1d8] sm:$0xff] %v6520
    %6585 = vst [vmem:[#allocation11 + $0x1e0] sm:$0xff] %v6521
    %6586 = vst [vmem:[#allocation11 + $0x1e8] sm:$0xff] %v6522
    %6587 = vst [vmem:[#allocation11 + $0x1f0] sm:$0xff] %v6523
    %6588 = vst [vmem:[#allocation11 + $0x1f8] sm:$0xff] %v6524
    // Predicated region
    $region50: #{tpu_custom_call.1} parent=1 // pred_check
      _
    $region51: #{tpu_custom_call.1} parent=1 // pred_check_branch
      %6590 = sbr.rel (0) target = $region53
    $region52: #{tpu_custom_call.1} parent=1 // pred_region
      %s6592 = ssub.s32 8192, 8192
      %6593 = vsyncadd [#allocation5], %s6592
      %s6594 = sshll.u32 [#allocation11], 4
      %s6595 = int_to_ptr.vmem [resolvable:$true] %s6594
      %6600 = dma.vmem_to_hbm [thread:$0]  %s6595, 8192, %s8, [#allocation5], 128, 128, 8
    $region53: #{tpu_custom_call.1} parent=1 // pred_fallthru
      _
    // Predicated region
    $region54: #{tpu_custom_call.1} parent=1 // pred_check
      _
    $region55: #{tpu_custom_call.1} parent=1 // pred_check_branch
      %6602 = sbr.rel (0) target = $region57
    $region56: #{tpu_custom_call.1} parent=1 // pred_region
      %6603 = dma.done [#allocation5], 8192
    $region57: #{tpu_custom_call.1} parent=1 // pred_fallthru
      _
    %6604 = vsyncpa [#allocation4], 1
    %6605 = vsyncpa [#allocation7], 1
    %6606 = vsyncpa [#allocation10], 1
    %6607 = vsyncpa [#allocation5], 1

</llo_original>
